<compile_context>
chip_gen: v6e
topology: v6e:2x2x1
jax: 0.10.0
libtpu: 0.0.40
codegen_flags: <defaults>
</compile_context>

<pallas_src>
import functools

import numpy as np
import jax
import jax.numpy as jnp
from jax.experimental import pallas as pl
from jax.experimental.pallas import tpu as pltpu


# ---------------------------------------------------------------------------
# Fused kernel: one grid step = G packed images.
#
# Layout: activations are channel-major with spatial dims flattened into the
# lane axis ("junk-column" layout): position q = y*Wp + x, Wp = W+2, with the
# two extra columns per row kept at zero.  Packed images are separated by a
# Wp-wide zero gap (vertical halo), so one conv tap for ALL images is a single
# lane-shifted slice of the slab; junk/gap columns are re-zeroed by the mask
# after every ReLU so the zero-padding invariant is maintained layer to layer.
# ---------------------------------------------------------------------------
def _adfnet_fused_kernel(xin_ref, mask_ref, wh_ref, bh_ref, wb_ref, bb_ref,
                         wt_ref, bt_ref, o_ref, slab_ref,
                         *, W, Cin, Cinp, C, A, L):
    Wp = W + 2
    SLAB_W = slab_ref.shape[1]
    # tap offsets relative to an output column (dy, dx in row-major order,
    # matching the (9, Cout, K) weight layout built by the wrapper)
    doffs = [(dy - 1) * Wp + (dx - 1) for dy in range(3) for dx in range(3)]

    # Zero ONLY the halo strips: the interior [A, A+L) is fully rewritten each
    # layer and its junk/gap columns are re-zeroed by the mask, so no state is
    # carried across grid steps (safe under megacore grid sharding).
    slab_ref[:, 0:A] = jnp.zeros((C, A), slab_ref.dtype)
    if SLAB_W > A + L:
        slab_ref[:, A + L:SLAB_W] = jnp.zeros((C, SLAB_W - A - L),
                                              slab_ref.dtype)

    mask = mask_ref[...]                                  # (1, L) f32, once

    def conv3x3(kc, w_ref, b_ref):
        # 9 per-tap matmuls accumulated in f32; no im2col scratch.  Each rhs
        # is a lane-shifted Ref slice (loads scheduled tap-by-tap, bounded
        # vreg pressure).  On v7x the chained adds can become MRB in-place
        # accumulation; on v5e/v6e they land on otherwise-idle VALU slots.
        acc = None
        for k, doff in enumerate(doffs):
            rhs = slab_ref[0:kc, A + doff:A + doff + L]   # (kc, L) bf16
            t = jnp.dot(w_ref[k], rhs, preferred_element_type=jnp.float32)
            acc = t if acc is None else acc + t
        return acc + b_ref[...]

    # Place the compact f32 input into the slab as bf16.  The head-conv K is
    # padded to Cinp rows; zero them explicitly so the matmul never reads
    # stale (possibly non-finite) VMEM on the first step.
    slab_ref[0:Cinp, A:A + L] = jnp.zeros((Cinp, L), slab_ref.dtype)
    slab_ref[0:Cin, A:A + L] = xin_ref[...].astype(jnp.bfloat16)

    # head conv (Cin -> C) + ReLU; junk/gap columns forced back to zero
    h = jnp.maximum(conv3x3(Cinp, wh_ref, bh_ref), 0.0) * mask
    slab_ref[:, A:A + L] = h.astype(jnp.bfloat16)

    # body conv (C -> C) + ReLU
    h = jnp.maximum(conv3x3(C, wb_ref, bb_ref), 0.0) * mask
    slab_ref[:, A:A + L] = h.astype(jnp.bfloat16)

    # tail conv (C -> Cin) + global residual (exact f32 input, re-read from
    # the ref so no long-lived full-block value is kept across the kernel)
    y = conv3x3(C, wt_ref, bt_ref)
    o_ref[...] = (y + xin_ref[...]).astype(o_ref.dtype)


def _pick_group(n, stride, target_lanes=1024, cap=8):
    """Largest divisor of n (<= cap) whose packed lane count ~ target_lanes."""
    g_max = max(1, min(n, cap, -(-target_lanes // stride)))
    for g in range(g_max, 0, -1):
        if n % g == 0:
            return g
    return 1


def adfnet_forward(params, x_nchw):
    """ADFNet-like RGB->RGB body (scale = 1); NCHW in, NCHW out."""
    N, Cin, H, W = x_nchw.shape
    C = params["w_head"].shape[-1]
    assert C % 8 == 0
    Wp = W + 2                                  # junk-column row stride
    PJ = H * Wp                                 # flattened image (junk layout)
    S = PJ + Wp                                 # per-image stride (halo gap)
    A = ((Wp + 1 + 127) // 128) * 128           # lane-aligned leading halo
    Cinp = 8                                    # head-conv K padded for MXU
    assert Cin <= Cinp

    # pack G images per grid step along the lane axis
    G = _pick_group(N, S)
    L = G * S
    NB = N // G
    SLAB_W = ((A + L + Wp + 1 + 127) // 128) * 128

    # compact packed input (NB, Cin, L) f32: no channel padding, no slab-wide
    # zero padding -- only junk columns + one zero halo row per image.
    xf = x_nchw.astype(jnp.float32)
    xs = jnp.pad(xf, ((0, 0), (0, 0), (0, 0), (0, 2))).reshape(N, Cin, PJ)
    xs = jnp.pad(xs, ((0, 0), (0, 0), (0, S - PJ)))
    xp = xs.reshape(NB, G, Cin, S).transpose(0, 2, 1, 3).reshape(NB, Cin, L)

    # validity mask over packed columns (1 at real pixels, 0 at junk/gap)
    r = np.arange(L) % S
    mask = jnp.asarray(((r < PJ) & (r % Wp < W)).astype(np.float32)
                       ).reshape(1, L)

    # weights as per-tap (9, Cout, K) bf16; biases (Cout, 1) f32
    wh = jnp.pad(params["w_head"], ((0, 0), (0, 0), (0, Cinp - Cin), (0, 0)))
    wh = wh.reshape(9, Cinp, C).transpose(0, 2, 1).astype(jnp.bfloat16)
    wb = params["w_body"].reshape(9, C, C).transpose(0, 2, 1).astype(jnp.bfloat16)
    wt = params["w_tail"].reshape(9, C, Cin).transpose(0, 2, 1).astype(jnp.bfloat16)
    bh = params["b_head"].reshape(C, 1).astype(jnp.float32)
    bb = params["b_body"].reshape(C, 1).astype(jnp.float32)
    bt = params["b_tail"].reshape(Cin, 1).astype(jnp.float32)

    # explicit scoped-VMEM limit sized from the working-set estimate
    est = (C * SLAB_W * 2                       # activation slab (bf16)
           + 2 * 2 * Cin * L * 4                # in/out blocks, double-buffered
           + 2 * (9 * C * (Cinp + C) + 9 * Cin * C)   # bf16 weights
           + 6 * C * L * 4)                     # f32 conv temporaries
    vmem_limit = int(min(max(4 * est, 32 * 1024 * 1024), 48 * 1024 * 1024))

    kernel = functools.partial(_adfnet_fused_kernel, W=W, Cin=Cin, Cinp=Cinp,
                               C=C, A=A, L=L)
    out = pl.pallas_call(
        kernel,
        out_shape=jax.ShapeDtypeStruct((NB, Cin, L), jnp.float32),
        grid=(NB,),
        in_specs=[
            pl.BlockSpec((None, Cin, L), lambda n: (n, 0, 0)),
            pl.BlockSpec((1, L), lambda n: (0, 0)),
            pl.BlockSpec((9, C, Cinp), lambda n: (0, 0, 0)),
            pl.BlockSpec((C, 1), lambda n: (0, 0)),
            pl.BlockSpec((9, C, C), lambda n: (0, 0, 0)),
            pl.BlockSpec((C, 1), lambda n: (0, 0)),
            pl.BlockSpec((9, Cin, C), lambda n: (0, 0, 0)),
            pl.BlockSpec((Cin, 1), lambda n: (0, 0)),
        ],
        out_specs=pl.BlockSpec((None, Cin, L), lambda n: (n, 0, 0)),
        scratch_shapes=[pltpu.VMEM((C, SLAB_W), jnp.bfloat16)],
        compiler_params=pltpu.CompilerParams(
            dimension_semantics=("parallel",),
            vmem_limit_bytes=vmem_limit),
    )(xp, mask, wh, bh, wb, bb, wt, bt)

    # unpack: (NB, Cin, L) -> NCHW, dropping halo gaps and junk columns
    out = out.reshape(NB, Cin, G, S).transpose(0, 2, 1, 3).reshape(N, Cin, S)
    out = out[:, :, :PJ].reshape(N, Cin, H, Wp)[:, :, :, :W]
    return out.astype(x_nchw.dtype)


_adfnet_forward_jit = jax.jit(adfnet_forward)


# ---------------------------------------------------------------------------
# Wrapper reproducing ADFNet_RGB `Model.forward` dispatch semantics.
# ---------------------------------------------------------------------------
class Model:
    def __init__(self, params, scale=(1,), self_ensemble=False, chop=False):
        self.params = params
        self.scale = scale
        self.idx_scale = 0
        self.self_ensemble = self_ensemble
        self.chop = chop
        self.training = False

    def _model_forward(self, x):
        return _adfnet_forward_jit(self.params, x)

    def forward(self, x, idx_scale):
        self.idx_scale = idx_scale
        if self.self_ensemble and (not self.training):
            # chop and non-chop both reduce to the same callable here.
            return self.forward_x8(x, self._model_forward)
        elif self.chop and (not self.training):
            # TODO(synk): forward_chop patch-tiling glue only matters for huge
            # inputs (min_size=400000); at these sizes it equals model(x).
            return self._model_forward(x)
        else:
            return self._model_forward(x)

    def forward_x8(self, x, forward_function):
        # All 8 augmentations are batched along dim 0 and run through a single
        # fused pallas_call (G images packed per grid step).
        def _transform(v, op):
            if op == "v":
                return v[:, :, :, ::-1]
            elif op == "h":
                return v[:, :, ::-1, :]
            elif op == "t":
                return jnp.transpose(v, (0, 1, 3, 2))   # assumes square input

        lr_list = [x]
        for tf in ("v", "h", "t"):
            lr_list.extend([_transform(t, tf) for t in lr_list])
        n = x.shape[0]
        sr_all = forward_function(jnp.concatenate(lr_list, axis=0))
        sr_list = [sr_all[i * n:(i + 1) * n] for i in range(8)]
        for i in range(len(sr_list)):
            if i > 3:
                sr_list[i] = _transform(sr_list[i], "t")
            if i % 4 > 1:
                sr_list[i] = _transform(sr_list[i], "h")
            if i % 4 % 2 == 1:
                sr_list[i] = _transform(sr_list[i], "v")
        output_cat = jnp.concatenate(sr_list, axis=0)
        return output_cat.mean(axis=0, keepdims=True)


# ---------------------------------------------------------------------------
# Pure-JAX references (correctness check of the fused Pallas path)
# ---------------------------------------------------------------------------
def _ref_conv3x3(x_nhwc, w, b, relu=False, residual=None):
    out = jax.lax.conv_general_dilated(
        x_nhwc, w, (1, 1), "SAME",
        dimension_numbers=("NHWC", "HWIO", "NHWC"),
        precision=jax.lax.Precision.HIGHEST)
    out = out + b
    if relu:
        out = jnp.maximum(out, 0.0)
    if residual is not None:
        out = out + residual
    return out


def _ref_forward(params, x_nchw):
    x = jnp.transpose(x_nchw, (0, 2, 3, 1))
    h = _ref_conv3x3(x, params["w_head"], params["b_head"], relu=True)
    h = _ref_conv3x3(h, params["w_body"], params["b_body"], relu=True)
    y = _ref_conv3x3(h, params["w_tail"], params["b_tail"], residual=x)
    return jnp.transpose(y, (0, 3, 1, 2))


def _ref_forward_x8(params, x):
    def _t(v, op):
        if op == "v":
            return v[:, :, :, ::-1]
        elif op == "h":
            return v[:, :, ::-1, :]
        return jnp.transpose(v, (0, 1, 3, 2))

    lr_list = [x]
    for tf in ("v", "h", "t"):
        lr_list.extend([_t(t, tf) for t in lr_list])
    sr_list = [_ref_forward(params, a) for a in lr_list]
    for i in range(len(sr_list)):
        if i > 3:
            sr_list[i] = _t(sr_list[i], "t")
        if i % 4 > 1:
            sr_list[i] = _t(sr_list[i], "h")
        if i % 4 % 2 == 1:
            sr_list[i] = _t(sr_list[i], "v")
    return jnp.concatenate(sr_list, axis=0).mean(axis=0, keepdims=True)


if __name__ == "__main__":
    key = jax.random.PRNGKey(0)
    N, Cin, H, W = 2, 3, 16, 16   # RGB denoising: scale = 1, in/out both RGB
    C = 32                        # hidden feature width

    k = jax.random.split(key, 7)
    params = {
        "w_head": 0.05 * jax.random.normal(k[0], (3, 3, Cin, C), jnp.float32),
        "b_head": 0.01 * jax.random.normal(k[1], (C,), jnp.float32),
        "w_body": 0.05 * jax.random.normal(k[2], (3, 3, C, C), jnp.float32),
        "b_body": 0.01 * jax.random.normal(k[3], (C,), jnp.float32),
        "w_tail": 0.05 * jax.random.normal(k[4], (3, 3, C, Cin), jnp.float32),
        "b_tail": 0.01 * jax.random.normal(k[5], (Cin,), jnp.float32),
    }
    x = jax.random.normal(k[6], (N, Cin, H, W), jnp.float32)

    # plain forward (single fused pallas_call, 2 images packed per step)
    model = Model(params, scale=(1,), self_ensemble=False, chop=False)
    out = jax.block_until_ready(model.forward(x, 0))
    ref = jax.block_until_ready(_ref_forward(params, x))
    np.testing.assert_allclose(np.asarray(out), np.asarray(ref),
                               rtol=5e-3, atol=5e-3)
    assert out.shape == (N, Cin, H, W)

    # self-ensemble x8 (batch of 16 -> 4 images packed per grid step)
    model_e = Model(params, scale=(1,), self_ensemble=True, chop=False)
    out_e = jax.block_until_ready(model_e.forward(x, 0))
    ref_e = jax.block_until_ready(_ref_forward_x8(params, x))
    np.testing.assert_allclose(np.asarray(out_e), np.asarray(ref_e),
                               rtol=5e-3, atol=5e-3)
    assert out_e.shape == (1, Cin, H, W)

    print("KERNEL_OK")
</pallas_src>

<mosaic_0001>
module attributes {stable_mosaic.version = 11 : i64} {
  func.func @_adfnet_fused_kernel(%arg0: i32, %arg1: memref<1x3x612xf32, #tpu.memory_space<vmem>>, %arg2: memref<1x612xf32, #tpu.memory_space<vmem>>, %arg3: memref<9x32x8xbf16, #tpu.memory_space<vmem>>, %arg4: memref<32x1xf32, #tpu.memory_space<vmem>>, %arg5: memref<9x32x32xbf16, #tpu.memory_space<vmem>>, %arg6: memref<32x1xf32, #tpu.memory_space<vmem>>, %arg7: memref<9x3x32xbf16, #tpu.memory_space<vmem>>, %arg8: memref<3x1xf32, #tpu.memory_space<vmem>>, %arg9: memref<1x3x612xf32, #tpu.memory_space<vmem>>, %arg10: memref<32x768xbf16, #tpu.memory_space<vmem>>) attributes {dimension_semantics = [#tpu.dimension_semantics<parallel>], iteration_bounds = array<i64: 1>, scalar_prefetch = 0 : i64, scratch_operands = 1 : i64, tpu.core_type = #tpu.core_type<tc>, window_params = [{transform_indices = @transform_0, window_bounds = array<i64: 1, 3, 612>}, {pipeline_mode = #tpu.pipeline_mode<synchronous>, transform_indices = @transform_1, window_bounds = array<i64: 1, 612>}, {pipeline_mode = #tpu.pipeline_mode<synchronous>, transform_indices = @transform_2, window_bounds = array<i64: 9, 32, 8>}, {pipeline_mode = #tpu.pipeline_mode<synchronous>, transform_indices = @transform_3, window_bounds = array<i64: 32, 1>}, {pipeline_mode = #tpu.pipeline_mode<synchronous>, transform_indices = @transform_4, window_bounds = array<i64: 9, 32, 32>}, {pipeline_mode = #tpu.pipeline_mode<synchronous>, transform_indices = @transform_5, window_bounds = array<i64: 32, 1>}, {pipeline_mode = #tpu.pipeline_mode<synchronous>, transform_indices = @transform_6, window_bounds = array<i64: 9, 3, 32>}, {pipeline_mode = #tpu.pipeline_mode<synchronous>, transform_indices = @transform_7, window_bounds = array<i64: 3, 1>}, {transform_indices = @transform_8, window_bounds = array<i64: 1, 3, 612>}]} {
    %cst = arith.constant 0.000000e+00 : bf16
    %0 = vector.broadcast %cst : bf16 to vector<32x128xbf16>
    %c0 = arith.constant 0 : index
    %c0_0 = arith.constant 0 : index
    %1 = vector.load %arg10[%c0, %c0_0] : memref<32x768xbf16, #tpu.memory_space<vmem>>, vector<32x128xbf16>
    tpu.vector_store %arg10[%c0, %c0_0], %0 {strides = array<i32>} : memref<32x768xbf16, #tpu.memory_space<vmem>>, vector<32x128xbf16>,
    %cst_1 = arith.constant 0.000000e+00 : bf16
    %2 = vector.broadcast %cst_1 : bf16 to vector<32x28xbf16>
    %c0_2 = arith.constant 0 : index
    %c740 = arith.constant 740 : index
    %3 = vector.load %arg10[%c0_2, %c740] : memref<32x768xbf16, #tpu.memory_space<vmem>>, vector<32x28xbf16>
    tpu.vector_store %arg10[%c0_2, %c740], %2 {strides = array<i32>} : memref<32x768xbf16, #tpu.memory_space<vmem>>, vector<32x28xbf16>,
    %c0_3 = arith.constant 0 : index
    %c0_4 = arith.constant 0 : index
    %4 = vector.load %arg2[%c0_3, %c0_4] : memref<1x612xf32, #tpu.memory_space<vmem>>, vector<1x612xf32>
    %cst_5 = arith.constant 0.000000e+00 : bf16
    %5 = vector.broadcast %cst_5 : bf16 to vector<8x612xbf16>
    %c0_6 = arith.constant 0 : index
    %c128 = arith.constant 128 : index
    %6 = vector.load %arg10[%c0_6, %c128] : memref<32x768xbf16, #tpu.memory_space<vmem>>, vector<8x612xbf16>
    tpu.vector_store %arg10[%c0_6, %c128], %5 {strides = array<i32>} : memref<32x768xbf16, #tpu.memory_space<vmem>>, vector<8x612xbf16>,
    %c0_7 = arith.constant 0 : index
    %c0_8 = arith.constant 0 : index
    %c0_9 = arith.constant 0 : index
    %7 = vector.load %arg1[%c0_7, %c0_8, %c0_9] : memref<1x3x612xf32, #tpu.memory_space<vmem>>, vector<1x3x612xf32>
    %8 = vector.shape_cast %7 : vector<1x3x612xf32> to vector<3x612xf32>
    %9 = arith.truncf %8 : vector<3x612xf32> to vector<3x612xbf16>
    %c0_10 = arith.constant 0 : index
    %c128_11 = arith.constant 128 : index
    %10 = vector.load %arg10[%c0_10, %c128_11] : memref<32x768xbf16, #tpu.memory_space<vmem>>, vector<3x612xbf16>
    tpu.vector_store %arg10[%c0_10, %c128_11], %9 {strides = array<i32>} : memref<32x768xbf16, #tpu.memory_space<vmem>>, vector<3x612xbf16>,
    %c0_12 = arith.constant 0 : index
    %c109 = arith.constant 109 : index
    %11 = vector.load %arg10[%c0_12, %c109] : memref<32x768xbf16, #tpu.memory_space<vmem>>, vector<8x612xbf16>
    %c0_13 = arith.constant 0 : index
    %c0_14 = arith.constant 0 : index
    %c0_15 = arith.constant 0 : index
    %12 = vector.load %arg3[%c0_13, %c0_14, %c0_15] : memref<9x32x8xbf16, #tpu.memory_space<vmem>>, vector<1x32x8xbf16>
    %13 = vector.shape_cast %12 : vector<1x32x8xbf16> to vector<32x8xbf16>
    %cst_16 = arith.constant dense<0.000000e+00> : vector<32x612xf32>
    %14 = tpu.matmul %13, %11, %cst_16 {dimension_numbers = #tpu.dot_dimension_numbers<[1], [0], [0], [1], [0, 0, 1, 1], [], []>} : vector<32x8xbf16>, vector<8x612xbf16>, vector<32x612xf32> -> vector<32x612xf32>
    %c0_17 = arith.constant 0 : index
    %c110 = arith.constant 110 : index
    %15 = vector.load %arg10[%c0_17, %c110] : memref<32x768xbf16, #tpu.memory_space<vmem>>, vector<8x612xbf16>
    %c1 = arith.constant 1 : index
    %c0_18 = arith.constant 0 : index
    %c0_19 = arith.constant 0 : index
    %16 = vector.load %arg3[%c1, %c0_18, %c0_19] : memref<9x32x8xbf16, #tpu.memory_space<vmem>>, vector<1x32x8xbf16>
    %17 = vector.shape_cast %16 : vector<1x32x8xbf16> to vector<32x8xbf16>
    %cst_20 = arith.constant dense<0.000000e+00> : vector<32x612xf32>
    %18 = tpu.matmul %17, %15, %cst_20 {dimension_numbers = #tpu.dot_dimension_numbers<[1], [0], [0], [1], [0, 0, 1, 1], [], []>} : vector<32x8xbf16>, vector<8x612xbf16>, vector<32x612xf32> -> vector<32x612xf32>
    %19 = arith.addf %14, %18 : vector<32x612xf32>
    %c0_21 = arith.constant 0 : index
    %c111 = arith.constant 111 : index
    %20 = vector.load %arg10[%c0_21, %c111] : memref<32x768xbf16, #tpu.memory_space<vmem>>, vector<8x612xbf16>
    %c2 = arith.constant 2 : index
    %c0_22 = arith.constant 0 : index
    %c0_23 = arith.constant 0 : index
    %21 = vector.load %arg3[%c2, %c0_22, %c0_23] : memref<9x32x8xbf16, #tpu.memory_space<vmem>>, vector<1x32x8xbf16>
    %22 = vector.shape_cast %21 : vector<1x32x8xbf16> to vector<32x8xbf16>
    %cst_24 = arith.constant dense<0.000000e+00> : vector<32x612xf32>
    %23 = tpu.matmul %22, %20, %cst_24 {dimension_numbers = #tpu.dot_dimension_numbers<[1], [0], [0], [1], [0, 0, 1, 1], [], []>} : vector<32x8xbf16>, vector<8x612xbf16>, vector<32x612xf32> -> vector<32x612xf32>
    %24 = arith.addf %19, %23 : vector<32x612xf32>
    %c0_25 = arith.constant 0 : index
    %c127 = arith.constant 127 : index
    %25 = vector.load %arg10[%c0_25, %c127] : memref<32x768xbf16, #tpu.memory_space<vmem>>, vector<8x612xbf16>
    %c3 = arith.constant 3 : index
    %c0_26 = arith.constant 0 : index
    %c0_27 = arith.constant 0 : index
    %26 = vector.load %arg3[%c3, %c0_26, %c0_27] : memref<9x32x8xbf16, #tpu.memory_space<vmem>>, vector<1x32x8xbf16>
    %27 = vector.shape_cast %26 : vector<1x32x8xbf16> to vector<32x8xbf16>
    %cst_28 = arith.constant dense<0.000000e+00> : vector<32x612xf32>
    %28 = tpu.matmul %27, %25, %cst_28 {dimension_numbers = #tpu.dot_dimension_numbers<[1], [0], [0], [1], [0, 0, 1, 1], [], []>} : vector<32x8xbf16>, vector<8x612xbf16>, vector<32x612xf32> -> vector<32x612xf32>
    %29 = arith.addf %24, %28 : vector<32x612xf32>
    %c0_29 = arith.constant 0 : index
    %c128_30 = arith.constant 128 : index
    %30 = vector.load %arg10[%c0_29, %c128_30] : memref<32x768xbf16, #tpu.memory_space<vmem>>, vector<8x612xbf16>
    %c4 = arith.constant 4 : index
    %c0_31 = arith.constant 0 : index
    %c0_32 = arith.constant 0 : index
    %31 = vector.load %arg3[%c4, %c0_31, %c0_32] : memref<9x32x8xbf16, #tpu.memory_space<vmem>>, vector<1x32x8xbf16>
    %32 = vector.shape_cast %31 : vector<1x32x8xbf16> to vector<32x8xbf16>
    %cst_33 = arith.constant dense<0.000000e+00> : vector<32x612xf32>
    %33 = tpu.matmul %32, %30, %cst_33 {dimension_numbers = #tpu.dot_dimension_numbers<[1], [0], [0], [1], [0, 0, 1, 1], [], []>} : vector<32x8xbf16>, vector<8x612xbf16>, vector<32x612xf32> -> vector<32x612xf32>
    %34 = arith.addf %29, %33 : vector<32x612xf32>
    %c0_34 = arith.constant 0 : index
    %c129 = arith.constant 129 : index
    %35 = vector.load %arg10[%c0_34, %c129] : memref<32x768xbf16, #tpu.memory_space<vmem>>, vector<8x612xbf16>
    %c5 = arith.constant 5 : index
    %c0_35 = arith.constant 0 : index
    %c0_36 = arith.constant 0 : index
    %36 = vector.load %arg3[%c5, %c0_35, %c0_36] : memref<9x32x8xbf16, #tpu.memory_space<vmem>>, vector<1x32x8xbf16>
    %37 = vector.shape_cast %36 : vector<1x32x8xbf16> to vector<32x8xbf16>
    %cst_37 = arith.constant dense<0.000000e+00> : vector<32x612xf32>
    %38 = tpu.matmul %37, %35, %cst_37 {dimension_numbers = #tpu.dot_dimension_numbers<[1], [0], [0], [1], [0, 0, 1, 1], [], []>} : vector<32x8xbf16>, vector<8x612xbf16>, vector<32x612xf32> -> vector<32x612xf32>
    %39 = arith.addf %34, %38 : vector<32x612xf32>
    %c0_38 = arith.constant 0 : index
    %c145 = arith.constant 145 : index
    %40 = vector.load %arg10[%c0_38, %c145] : memref<32x768xbf16, #tpu.memory_space<vmem>>, vector<8x612xbf16>
    %c6 = arith.constant 6 : index
    %c0_39 = arith.constant 0 : index
    %c0_40 = arith.constant 0 : index
    %41 = vector.load %arg3[%c6, %c0_39, %c0_40] : memref<9x32x8xbf16, #tpu.memory_space<vmem>>, vector<1x32x8xbf16>
    %42 = vector.shape_cast %41 : vector<1x32x8xbf16> to vector<32x8xbf16>
    %cst_41 = arith.constant dense<0.000000e+00> : vector<32x612xf32>
    %43 = tpu.matmul %42, %40, %cst_41 {dimension_numbers = #tpu.dot_dimension_numbers<[1], [0], [0], [1], [0, 0, 1, 1], [], []>} : vector<32x8xbf16>, vector<8x612xbf16>, vector<32x612xf32> -> vector<32x612xf32>
    %44 = arith.addf %39, %43 : vector<32x612xf32>
    %c0_42 = arith.constant 0 : index
    %c146 = arith.constant 146 : index
    %45 = vector.load %arg10[%c0_42, %c146] : memref<32x768xbf16, #tpu.memory_space<vmem>>, vector<8x612xbf16>
    %c7 = arith.constant 7 : index
    %c0_43 = arith.constant 0 : index
    %c0_44 = arith.constant 0 : index
    %46 = vector.load %arg3[%c7, %c0_43, %c0_44] : memref<9x32x8xbf16, #tpu.memory_space<vmem>>, vector<1x32x8xbf16>
    %47 = vector.shape_cast %46 : vector<1x32x8xbf16> to vector<32x8xbf16>
    %cst_45 = arith.constant dense<0.000000e+00> : vector<32x612xf32>
    %48 = tpu.matmul %47, %45, %cst_45 {dimension_numbers = #tpu.dot_dimension_numbers<[1], [0], [0], [1], [0, 0, 1, 1], [], []>} : vector<32x8xbf16>, vector<8x612xbf16>, vector<32x612xf32> -> vector<32x612xf32>
    %49 = arith.addf %44, %48 : vector<32x612xf32>
    %c0_46 = arith.constant 0 : index
    %c147 = arith.constant 147 : index
    %50 = vector.load %arg10[%c0_46, %c147] : memref<32x768xbf16, #tpu.memory_space<vmem>>, vector<8x612xbf16>
    %c8 = arith.constant 8 : index
    %c0_47 = arith.constant 0 : index
    %c0_48 = arith.constant 0 : index
    %51 = vector.load %arg3[%c8, %c0_47, %c0_48] : memref<9x32x8xbf16, #tpu.memory_space<vmem>>, vector<1x32x8xbf16>
    %52 = vector.shape_cast %51 : vector<1x32x8xbf16> to vector<32x8xbf16>
    %cst_49 = arith.constant dense<0.000000e+00> : vector<32x612xf32>
    %53 = tpu.matmul %52, %50, %cst_49 {dimension_numbers = #tpu.dot_dimension_numbers<[1], [0], [0], [1], [0, 0, 1, 1], [], []>} : vector<32x8xbf16>, vector<8x612xbf16>, vector<32x612xf32> -> vector<32x612xf32>
    %54 = arith.addf %49, %53 : vector<32x612xf32>
    %c0_50 = arith.constant 0 : index
    %c0_51 = arith.constant 0 : index
    %55 = vector.load %arg4[%c0_50, %c0_51] : memref<32x1xf32, #tpu.memory_space<vmem>>, vector<32x1xf32>
    %56 = vector.broadcast %55 : vector<32x1xf32> to vector<32x612xf32>
    %57 = arith.addf %54, %56 : vector<32x612xf32>
    %cst_52 = arith.constant 0.000000e+00 : f32
    %58 = vector.broadcast %cst_52 : f32 to vector<32x612xf32>
    %59 = arith.maximumf %57, %58 : vector<32x612xf32>
    %60 = vector.broadcast %4 : vector<1x612xf32> to vector<32x612xf32>
    %61 = arith.mulf %59, %60 : vector<32x612xf32>
    %62 = arith.truncf %61 : vector<32x612xf32> to vector<32x612xbf16>
    %c0_53 = arith.constant 0 : index
    %c128_54 = arith.constant 128 : index
    %63 = vector.load %arg10[%c0_53, %c128_54] : memref<32x768xbf16, #tpu.memory_space<vmem>>, vector<32x612xbf16>
    tpu.vector_store %arg10[%c0_53, %c128_54], %62 {strides = array<i32>} : memref<32x768xbf16, #tpu.memory_space<vmem>>, vector<32x612xbf16>,
    %c0_55 = arith.constant 0 : index
    %c109_56 = arith.constant 109 : index
    %64 = vector.load %arg10[%c0_55, %c109_56] : memref<32x768xbf16, #tpu.memory_space<vmem>>, vector<32x612xbf16>
    %c0_57 = arith.constant 0 : index
    %c0_58 = arith.constant 0 : index
    %c0_59 = arith.constant 0 : index
    %65 = vector.load %arg5[%c0_57, %c0_58, %c0_59] : memref<9x32x32xbf16, #tpu.memory_space<vmem>>, vector<1x32x32xbf16>
    %66 = vector.shape_cast %65 : vector<1x32x32xbf16> to vector<32x32xbf16>
    %cst_60 = arith.constant dense<0.000000e+00> : vector<32x612xf32>
    %67 = tpu.matmul %66, %64, %cst_60 {dimension_numbers = #tpu.dot_dimension_numbers<[1], [0], [0], [1], [0, 0, 1, 1], [], []>} : vector<32x32xbf16>, vector<32x612xbf16>, vector<32x612xf32> -> vector<32x612xf32>
    %c0_61 = arith.constant 0 : index
    %c110_62 = arith.constant 110 : index
    %68 = vector.load %arg10[%c0_61, %c110_62] : memref<32x768xbf16, #tpu.memory_space<vmem>>, vector<32x612xbf16>
    %c1_63 = arith.constant 1 : index
    %c0_64 = arith.constant 0 : index
    %c0_65 = arith.constant 0 : index
    %69 = vector.load %arg5[%c1_63, %c0_64, %c0_65] : memref<9x32x32xbf16, #tpu.memory_space<vmem>>, vector<1x32x32xbf16>
    %70 = vector.shape_cast %69 : vector<1x32x32xbf16> to vector<32x32xbf16>
    %cst_66 = arith.constant dense<0.000000e+00> : vector<32x612xf32>
    %71 = tpu.matmul %70, %68, %cst_66 {dimension_numbers = #tpu.dot_dimension_numbers<[1], [0], [0], [1], [0, 0, 1, 1], [], []>} : vector<32x32xbf16>, vector<32x612xbf16>, vector<32x612xf32> -> vector<32x612xf32>
    %72 = arith.addf %67, %71 : vector<32x612xf32>
    %c0_67 = arith.constant 0 : index
    %c111_68 = arith.constant 111 : index
    %73 = vector.load %arg10[%c0_67, %c111_68] : memref<32x768xbf16, #tpu.memory_space<vmem>>, vector<32x612xbf16>
    %c2_69 = arith.constant 2 : index
    %c0_70 = arith.constant 0 : index
    %c0_71 = arith.constant 0 : index
    %74 = vector.load %arg5[%c2_69, %c0_70, %c0_71] : memref<9x32x32xbf16, #tpu.memory_space<vmem>>, vector<1x32x32xbf16>
    %75 = vector.shape_cast %74 : vector<1x32x32xbf16> to vector<32x32xbf16>
    %cst_72 = arith.constant dense<0.000000e+00> : vector<32x612xf32>
    %76 = tpu.matmul %75, %73, %cst_72 {dimension_numbers = #tpu.dot_dimension_numbers<[1], [0], [0], [1], [0, 0, 1, 1], [], []>} : vector<32x32xbf16>, vector<32x612xbf16>, vector<32x612xf32> -> vector<32x612xf32>
    %77 = arith.addf %72, %76 : vector<32x612xf32>
    %c0_73 = arith.constant 0 : index
    %c127_74 = arith.constant 127 : index
    %78 = vector.load %arg10[%c0_73, %c127_74] : memref<32x768xbf16, #tpu.memory_space<vmem>>, vector<32x612xbf16>
    %c3_75 = arith.constant 3 : index
    %c0_76 = arith.constant 0 : index
    %c0_77 = arith.constant 0 : index
    %79 = vector.load %arg5[%c3_75, %c0_76, %c0_77] : memref<9x32x32xbf16, #tpu.memory_space<vmem>>, vector<1x32x32xbf16>
    %80 = vector.shape_cast %79 : vector<1x32x32xbf16> to vector<32x32xbf16>
    %cst_78 = arith.constant dense<0.000000e+00> : vector<32x612xf32>
    %81 = tpu.matmul %80, %78, %cst_78 {dimension_numbers = #tpu.dot_dimension_numbers<[1], [0], [0], [1], [0, 0, 1, 1], [], []>} : vector<32x32xbf16>, vector<32x612xbf16>, vector<32x612xf32> -> vector<32x612xf32>
    %82 = arith.addf %77, %81 : vector<32x612xf32>
    %c0_79 = arith.constant 0 : index
    %c128_80 = arith.constant 128 : index
    %83 = vector.load %arg10[%c0_79, %c128_80] : memref<32x768xbf16, #tpu.memory_space<vmem>>, vector<32x612xbf16>
    %c4_81 = arith.constant 4 : index
    %c0_82 = arith.constant 0 : index
    %c0_83 = arith.constant 0 : index
    %84 = vector.load %arg5[%c4_81, %c0_82, %c0_83] : memref<9x32x32xbf16, #tpu.memory_space<vmem>>, vector<1x32x32xbf16>
    %85 = vector.shape_cast %84 : vector<1x32x32xbf16> to vector<32x32xbf16>
    %cst_84 = arith.constant dense<0.000000e+00> : vector<32x612xf32>
    %86 = tpu.matmul %85, %83, %cst_84 {dimension_numbers = #tpu.dot_dimension_numbers<[1], [0], [0], [1], [0, 0, 1, 1], [], []>} : vector<32x32xbf16>, vector<32x612xbf16>, vector<32x612xf32> -> vector<32x612xf32>
    %87 = arith.addf %82, %86 : vector<32x612xf32>
    %c0_85 = arith.constant 0 : index
    %c129_86 = arith.constant 129 : index
    %88 = vector.load %arg10[%c0_85, %c129_86] : memref<32x768xbf16, #tpu.memory_space<vmem>>, vector<32x612xbf16>
    %c5_87 = arith.constant 5 : index
    %c0_88 = arith.constant 0 : index
    %c0_89 = arith.constant 0 : index
    %89 = vector.load %arg5[%c5_87, %c0_88, %c0_89] : memref<9x32x32xbf16, #tpu.memory_space<vmem>>, vector<1x32x32xbf16>
    %90 = vector.shape_cast %89 : vector<1x32x32xbf16> to vector<32x32xbf16>
    %cst_90 = arith.constant dense<0.000000e+00> : vector<32x612xf32>
    %91 = tpu.matmul %90, %88, %cst_90 {dimension_numbers = #tpu.dot_dimension_numbers<[1], [0], [0], [1], [0, 0, 1, 1], [], []>} : vector<32x32xbf16>, vector<32x612xbf16>, vector<32x612xf32> -> vector<32x612xf32>
    %92 = arith.addf %87, %91 : vector<32x612xf32>
    %c0_91 = arith.constant 0 : index
    %c145_92 = arith.constant 145 : index
    %93 = vector.load %arg10[%c0_91, %c145_92] : memref<32x768xbf16, #tpu.memory_space<vmem>>, vector<32x612xbf16>
    %c6_93 = arith.constant 6 : index
    %c0_94 = arith.constant 0 : index
    %c0_95 = arith.constant 0 : index
    %94 = vector.load %arg5[%c6_93, %c0_94, %c0_95] : memref<9x32x32xbf16, #tpu.memory_space<vmem>>, vector<1x32x32xbf16>
    %95 = vector.shape_cast %94 : vector<1x32x32xbf16> to vector<32x32xbf16>
    %cst_96 = arith.constant dense<0.000000e+00> : vector<32x612xf32>
    %96 = tpu.matmul %95, %93, %cst_96 {dimension_numbers = #tpu.dot_dimension_numbers<[1], [0], [0], [1], [0, 0, 1, 1], [], []>} : vector<32x32xbf16>, vector<32x612xbf16>, vector<32x612xf32> -> vector<32x612xf32>
    %97 = arith.addf %92, %96 : vector<32x612xf32>
    %c0_97 = arith.constant 0 : index
    %c146_98 = arith.constant 146 : index
    %98 = vector.load %arg10[%c0_97, %c146_98] : memref<32x768xbf16, #tpu.memory_space<vmem>>, vector<32x612xbf16>
    %c7_99 = arith.constant 7 : index
    %c0_100 = arith.constant 0 : index
    %c0_101 = arith.constant 0 : index
    %99 = vector.load %arg5[%c7_99, %c0_100, %c0_101] : memref<9x32x32xbf16, #tpu.memory_space<vmem>>, vector<1x32x32xbf16>
    %100 = vector.shape_cast %99 : vector<1x32x32xbf16> to vector<32x32xbf16>
    %cst_102 = arith.constant dense<0.000000e+00> : vector<32x612xf32>
    %101 = tpu.matmul %100, %98, %cst_102 {dimension_numbers = #tpu.dot_dimension_numbers<[1], [0], [0], [1], [0, 0, 1, 1], [], []>} : vector<32x32xbf16>, vector<32x612xbf16>, vector<32x612xf32> -> vector<32x612xf32>
    %102 = arith.addf %97, %101 : vector<32x612xf32>
    %c0_103 = arith.constant 0 : index
    %c147_104 = arith.constant 147 : index
    %103 = vector.load %arg10[%c0_103, %c147_104] : memref<32x768xbf16, #tpu.memory_space<vmem>>, vector<32x612xbf16>
    %c8_105 = arith.constant 8 : index
    %c0_106 = arith.constant 0 : index
    %c0_107 = arith.constant 0 : index
    %104 = vector.load %arg5[%c8_105, %c0_106, %c0_107] : memref<9x32x32xbf16, #tpu.memory_space<vmem>>, vector<1x32x32xbf16>
    %105 = vector.shape_cast %104 : vector<1x32x32xbf16> to vector<32x32xbf16>
    %cst_108 = arith.constant dense<0.000000e+00> : vector<32x612xf32>
    %106 = tpu.matmul %105, %103, %cst_108 {dimension_numbers = #tpu.dot_dimension_numbers<[1], [0], [0], [1], [0, 0, 1, 1], [], []>} : vector<32x32xbf16>, vector<32x612xbf16>, vector<32x612xf32> -> vector<32x612xf32>
    %107 = arith.addf %102, %106 : vector<32x612xf32>
    %c0_109 = arith.constant 0 : index
    %c0_110 = arith.constant 0 : index
    %108 = vector.load %arg6[%c0_109, %c0_110] : memref<32x1xf32, #tpu.memory_space<vmem>>, vector<32x1xf32>
    %109 = vector.broadcast %108 : vector<32x1xf32> to vector<32x612xf32>
    %110 = arith.addf %107, %109 : vector<32x612xf32>
    %cst_111 = arith.constant 0.000000e+00 : f32
    %111 = vector.broadcast %cst_111 : f32 to vector<32x612xf32>
    %112 = arith.maximumf %110, %111 : vector<32x612xf32>
    %113 = vector.broadcast %4 : vector<1x612xf32> to vector<32x612xf32>
    %114 = arith.mulf %112, %113 : vector<32x612xf32>
    %115 = arith.truncf %114 : vector<32x612xf32> to vector<32x612xbf16>
    %c0_112 = arith.constant 0 : index
    %c128_113 = arith.constant 128 : index
    %116 = vector.load %arg10[%c0_112, %c128_113] : memref<32x768xbf16, #tpu.memory_space<vmem>>, vector<32x612xbf16>
    tpu.vector_store %arg10[%c0_112, %c128_113], %115 {strides = array<i32>} : memref<32x768xbf16, #tpu.memory_space<vmem>>, vector<32x612xbf16>,
    %c0_114 = arith.constant 0 : index
    %c109_115 = arith.constant 109 : index
    %117 = vector.load %arg10[%c0_114, %c109_115] : memref<32x768xbf16, #tpu.memory_space<vmem>>, vector<32x612xbf16>
    %c0_116 = arith.constant 0 : index
    %c0_117 = arith.constant 0 : index
    %c0_118 = arith.constant 0 : index
    %118 = vector.load %arg7[%c0_116, %c0_117, %c0_118] : memref<9x3x32xbf16, #tpu.memory_space<vmem>>, vector<1x3x32xbf16>
    %119 = vector.shape_cast %118 : vector<1x3x32xbf16> to vector<3x32xbf16>
    %cst_119 = arith.constant dense<0.000000e+00> : vector<3x612xf32>
    %120 = tpu.matmul %119, %117, %cst_119 {dimension_numbers = #tpu.dot_dimension_numbers<[1], [0], [0], [1], [0, 0, 1, 1], [], []>} : vector<3x32xbf16>, vector<32x612xbf16>, vector<3x612xf32> -> vector<3x612xf32>
    %c0_120 = arith.constant 0 : index
    %c110_121 = arith.constant 110 : index
    %121 = vector.load %arg10[%c0_120, %c110_121] : memref<32x768xbf16, #tpu.memory_space<vmem>>, vector<32x612xbf16>
    %c1_122 = arith.constant 1 : index
    %c0_123 = arith.constant 0 : index
    %c0_124 = arith.constant 0 : index
    %122 = vector.load %arg7[%c1_122, %c0_123, %c0_124] : memref<9x3x32xbf16, #tpu.memory_space<vmem>>, vector<1x3x32xbf16>
    %123 = vector.shape_cast %122 : vector<1x3x32xbf16> to vector<3x32xbf16>
    %cst_125 = arith.constant dense<0.000000e+00> : vector<3x612xf32>
    %124 = tpu.matmul %123, %121, %cst_125 {dimension_numbers = #tpu.dot_dimension_numbers<[1], [0], [0], [1], [0, 0, 1, 1], [], []>} : vector<3x32xbf16>, vector<32x612xbf16>, vector<3x612xf32> -> vector<3x612xf32>
    %125 = arith.addf %120, %124 : vector<3x612xf32>
    %c0_126 = arith.constant 0 : index
    %c111_127 = arith.constant 111 : index
    %126 = vector.load %arg10[%c0_126, %c111_127] : memref<32x768xbf16, #tpu.memory_space<vmem>>, vector<32x612xbf16>
    %c2_128 = arith.constant 2 : index
    %c0_129 = arith.constant 0 : index
    %c0_130 = arith.constant 0 : index
    %127 = vector.load %arg7[%c2_128, %c0_129, %c0_130] : memref<9x3x32xbf16, #tpu.memory_space<vmem>>, vector<1x3x32xbf16>
    %128 = vector.shape_cast %127 : vector<1x3x32xbf16> to vector<3x32xbf16>
    %cst_131 = arith.constant dense<0.000000e+00> : vector<3x612xf32>
    %129 = tpu.matmul %128, %126, %cst_131 {dimension_numbers = #tpu.dot_dimension_numbers<[1], [0], [0], [1], [0, 0, 1, 1], [], []>} : vector<3x32xbf16>, vector<32x612xbf16>, vector<3x612xf32> -> vector<3x612xf32>
    %130 = arith.addf %125, %129 : vector<3x612xf32>
    %c0_132 = arith.constant 0 : index
    %c127_133 = arith.constant 127 : index
    %131 = vector.load %arg10[%c0_132, %c127_133] : memref<32x768xbf16, #tpu.memory_space<vmem>>, vector<32x612xbf16>
    %c3_134 = arith.constant 3 : index
    %c0_135 = arith.constant 0 : index
    %c0_136 = arith.constant 0 : index
    %132 = vector.load %arg7[%c3_134, %c0_135, %c0_136] : memref<9x3x32xbf16, #tpu.memory_space<vmem>>, vector<1x3x32xbf16>
    %133 = vector.shape_cast %132 : vector<1x3x32xbf16> to vector<3x32xbf16>
    %cst_137 = arith.constant dense<0.000000e+00> : vector<3x612xf32>
    %134 = tpu.matmul %133, %131, %cst_137 {dimension_numbers = #tpu.dot_dimension_numbers<[1], [0], [0], [1], [0, 0, 1, 1], [], []>} : vector<3x32xbf16>, vector<32x612xbf16>, vector<3x612xf32> -> vector<3x612xf32>
    %135 = arith.addf %130, %134 : vector<3x612xf32>
    %c0_138 = arith.constant 0 : index
    %c128_139 = arith.constant 128 : index
    %136 = vector.load %arg10[%c0_138, %c128_139] : memref<32x768xbf16, #tpu.memory_space<vmem>>, vector<32x612xbf16>
    %c4_140 = arith.constant 4 : index
    %c0_141 = arith.constant 0 : index
    %c0_142 = arith.constant 0 : index
    %137 = vector.load %arg7[%c4_140, %c0_141, %c0_142] : memref<9x3x32xbf16, #tpu.memory_space<vmem>>, vector<1x3x32xbf16>
    %138 = vector.shape_cast %137 : vector<1x3x32xbf16> to vector<3x32xbf16>
    %cst_143 = arith.constant dense<0.000000e+00> : vector<3x612xf32>
    %139 = tpu.matmul %138, %136, %cst_143 {dimension_numbers = #tpu.dot_dimension_numbers<[1], [0], [0], [1], [0, 0, 1, 1], [], []>} : vector<3x32xbf16>, vector<32x612xbf16>, vector<3x612xf32> -> vector<3x612xf32>
    %140 = arith.addf %135, %139 : vector<3x612xf32>
    %c0_144 = arith.constant 0 : index
    %c129_145 = arith.constant 129 : index
    %141 = vector.load %arg10[%c0_144, %c129_145] : memref<32x768xbf16, #tpu.memory_space<vmem>>, vector<32x612xbf16>
    %c5_146 = arith.constant 5 : index
    %c0_147 = arith.constant 0 : index
    %c0_148 = arith.constant 0 : index
    %142 = vector.load %arg7[%c5_146, %c0_147, %c0_148] : memref<9x3x32xbf16, #tpu.memory_space<vmem>>, vector<1x3x32xbf16>
    %143 = vector.shape_cast %142 : vector<1x3x32xbf16> to vector<3x32xbf16>
    %cst_149 = arith.constant dense<0.000000e+00> : vector<3x612xf32>
    %144 = tpu.matmul %143, %141, %cst_149 {dimension_numbers = #tpu.dot_dimension_numbers<[1], [0], [0], [1], [0, 0, 1, 1], [], []>} : vector<3x32xbf16>, vector<32x612xbf16>, vector<3x612xf32> -> vector<3x612xf32>
    %145 = arith.addf %140, %144 : vector<3x612xf32>
    %c0_150 = arith.constant 0 : index
    %c145_151 = arith.constant 145 : index
    %146 = vector.load %arg10[%c0_150, %c145_151] : memref<32x768xbf16, #tpu.memory_space<vmem>>, vector<32x612xbf16>
    %c6_152 = arith.constant 6 : index
    %c0_153 = arith.constant 0 : index
    %c0_154 = arith.constant 0 : index
    %147 = vector.load %arg7[%c6_152, %c0_153, %c0_154] : memref<9x3x32xbf16, #tpu.memory_space<vmem>>, vector<1x3x32xbf16>
    %148 = vector.shape_cast %147 : vector<1x3x32xbf16> to vector<3x32xbf16>
    %cst_155 = arith.constant dense<0.000000e+00> : vector<3x612xf32>
    %149 = tpu.matmul %148, %146, %cst_155 {dimension_numbers = #tpu.dot_dimension_numbers<[1], [0], [0], [1], [0, 0, 1, 1], [], []>} : vector<3x32xbf16>, vector<32x612xbf16>, vector<3x612xf32> -> vector<3x612xf32>
    %150 = arith.addf %145, %149 : vector<3x612xf32>
    %c0_156 = arith.constant 0 : index
    %c146_157 = arith.constant 146 : index
    %151 = vector.load %arg10[%c0_156, %c146_157] : memref<32x768xbf16, #tpu.memory_space<vmem>>, vector<32x612xbf16>
    %c7_158 = arith.constant 7 : index
    %c0_159 = arith.constant 0 : index
    %c0_160 = arith.constant 0 : index
    %152 = vector.load %arg7[%c7_158, %c0_159, %c0_160] : memref<9x3x32xbf16, #tpu.memory_space<vmem>>, vector<1x3x32xbf16>
    %153 = vector.shape_cast %152 : vector<1x3x32xbf16> to vector<3x32xbf16>
    %cst_161 = arith.constant dense<0.000000e+00> : vector<3x612xf32>
    %154 = tpu.matmul %153, %151, %cst_161 {dimension_numbers = #tpu.dot_dimension_numbers<[1], [0], [0], [1], [0, 0, 1, 1], [], []>} : vector<3x32xbf16>, vector<32x612xbf16>, vector<3x612xf32> -> vector<3x612xf32>
    %155 = arith.addf %150, %154 : vector<3x612xf32>
    %c0_162 = arith.constant 0 : index
    %c147_163 = arith.constant 147 : index
    %156 = vector.load %arg10[%c0_162, %c147_163] : memref<32x768xbf16, #tpu.memory_space<vmem>>, vector<32x612xbf16>
    %c8_164 = arith.constant 8 : index
    %c0_165 = arith.constant 0 : index
    %c0_166 = arith.constant 0 : index
    %157 = vector.load %arg7[%c8_164, %c0_165, %c0_166] : memref<9x3x32xbf16, #tpu.memory_space<vmem>>, vector<1x3x32xbf16>
    %158 = vector.shape_cast %157 : vector<1x3x32xbf16> to vector<3x32xbf16>
    %cst_167 = arith.constant dense<0.000000e+00> : vector<3x612xf32>
    %159 = tpu.matmul %158, %156, %cst_167 {dimension_numbers = #tpu.dot_dimension_numbers<[1], [0], [0], [1], [0, 0, 1, 1], [], []>} : vector<3x32xbf16>, vector<32x612xbf16>, vector<3x612xf32> -> vector<3x612xf32>
    %160 = arith.addf %155, %159 : vector<3x612xf32>
    %c0_168 = arith.constant 0 : index
    %c0_169 = arith.constant 0 : index
    %161 = vector.load %arg8[%c0_168, %c0_169] : memref<3x1xf32, #tpu.memory_space<vmem>>, vector<3x1xf32>
    %162 = vector.broadcast %161 : vector<3x1xf32> to vector<3x612xf32>
    %163 = arith.addf %160, %162 : vector<3x612xf32>
    %c0_170 = arith.constant 0 : index
    %c0_171 = arith.constant 0 : index
    %c0_172 = arith.constant 0 : index
    %164 = vector.load %arg1[%c0_170, %c0_171, %c0_172] : memref<1x3x612xf32, #tpu.memory_space<vmem>>, vector<1x3x612xf32>
    %165 = vector.shape_cast %164 : vector<1x3x612xf32> to vector<3x612xf32>
    %166 = arith.addf %163, %165 : vector<3x612xf32>
    %c0_173 = arith.constant 0 : index
    %c0_174 = arith.constant 0 : index
    %c0_175 = arith.constant 0 : index
    %167 = vector.load %arg9[%c0_173, %c0_174, %c0_175] : memref<1x3x612xf32, #tpu.memory_space<vmem>>, vector<1x3x612xf32>
    %168 = vector.shape_cast %167 : vector<1x3x612xf32> to vector<3x612xf32>
    %169 = vector.shape_cast %166 : vector<3x612xf32> to vector<1x3x612xf32>
    tpu.vector_store %arg9[%c0_173, %c0_174, %c0_175], %169 {strides = array<i32>} : memref<1x3x612xf32, #tpu.memory_space<vmem>>, vector<1x3x612xf32>,
    return
  }
  func.func @transform_0(%arg0: i32) -> (i32, i32, i32) {
    %c0_i32 = arith.constant 0 : i32
    %c0_i32_0 = arith.constant 0 : i32
    %c0_i32_1 = arith.constant 0 : i32
    return %arg0, %c0_i32, %c0_i32_0 : i32, i32, i32
  }
  func.func @transform_1(%arg0: i32) -> (i32, i32) {
    %c0_i32 = arith.constant 0 : i32
    %c0_i32_0 = arith.constant 0 : i32
    %c0_i32_1 = arith.constant 0 : i32
    return %c0_i32, %c0_i32_0 : i32, i32
  }
  func.func @transform_2(%arg0: i32) -> (i32, i32, i32) {
    %c0_i32 = arith.constant 0 : i32
    %c0_i32_0 = arith.constant 0 : i32
    %c0_i32_1 = arith.constant 0 : i32
    %c0_i32_2 = arith.constant 0 : i32
    return %c0_i32, %c0_i32_0, %c0_i32_1 : i32, i32, i32
  }
  func.func @transform_3(%arg0: i32) -> (i32, i32) {
    %c0_i32 = arith.constant 0 : i32
    %c0_i32_0 = arith.constant 0 : i32
    %c0_i32_1 = arith.constant 0 : i32
    return %c0_i32, %c0_i32_0 : i32, i32
  }
  func.func @transform_4(%arg0: i32) -> (i32, i32, i32) {
    %c0_i32 = arith.constant 0 : i32
    %c0_i32_0 = arith.constant 0 : i32
    %c0_i32_1 = arith.constant 0 : i32
    %c0_i32_2 = arith.constant 0 : i32
    return %c0_i32, %c0_i32_0, %c0_i32_1 : i32, i32, i32
  }
  func.func @transform_5(%arg0: i32) -> (i32, i32) {
    %c0_i32 = arith.constant 0 : i32
    %c0_i32_0 = arith.constant 0 : i32
    %c0_i32_1 = arith.constant 0 : i32
    return %c0_i32, %c0_i32_0 : i32, i32
  }
  func.func @transform_6(%arg0: i32) -> (i32, i32, i32) {
    %c0_i32 = arith.constant 0 : i32
    %c0_i32_0 = arith.constant 0 : i32
    %c0_i32_1 = arith.constant 0 : i32
    %c0_i32_2 = arith.constant 0 : i32
    return %c0_i32, %c0_i32_0, %c0_i32_1 : i32, i32, i32
  }
  func.func @transform_7(%arg0: i32) -> (i32, i32) {
    %c0_i32 = arith.constant 0 : i32
    %c0_i32_0 = arith.constant 0 : i32
    %c0_i32_1 = arith.constant 0 : i32
    return %c0_i32, %c0_i32_0 : i32, i32
  }
  func.func @transform_8(%arg0: i32) -> (i32, i32, i32) {
    %c0_i32 = arith.constant 0 : i32
    %c0_i32_0 = arith.constant 0 : i32
    %c0_i32_1 = arith.constant 0 : i32
    return %arg0, %c0_i32, %c0_i32_0 : i32, i32, i32
  }
}

</mosaic_0001>

<llo_original>
// kernel: adfnet_forward.1
$region0: #{adfnet_forward.1}
  #allocation0 [shape = 'u32[]', space=smem, size = 0x4, offset = 0x4, fixed_abs, tag = 'smem constant byte address 0x4 - core index']
  #allocation1 [shape = 'u32[144,128]{1,0:T(1,128)}', space=vmem, size = 0x12000, scoped, tag = 'internal scratch']
  #allocation2 [shape = 'bf16[32,768]{1,0:T(8,128)(2,1)}', space=vmem, size = 0xc000, scoped, tag = 'scratch operand']
  %s0 = inlined_call_operand.vmem [shape: f32[1,3,612], index: 0, kind: input, shape index: {}]
  %s1 = inlined_call_operand.vmem [shape: f32[1,612], index: 1, kind: input, shape index: {}]
  %s2 = inlined_call_operand.vmem [shape: bf16[9,32,8], index: 2, kind: input, shape index: {}]
  %s3 = inlined_call_operand.vmem [shape: f32[32,1], index: 3, kind: input, shape index: {}]
  %s4 = inlined_call_operand.vmem [shape: bf16[9,32,32], index: 4, kind: input, shape index: {}]
  %s5 = inlined_call_operand.vmem [shape: f32[32,1], index: 5, kind: input, shape index: {}]
  %s6 = inlined_call_operand.vmem [shape: bf16[9,3,32], index: 6, kind: input, shape index: {}]
  %s7 = inlined_call_operand.vmem [shape: f32[3,1], index: 7, kind: input, shape index: {}]
  %s8 = inlined_call_operand.vmem [shape: f32[1,3,612], index: 8, kind: output, shape index: {}]
  %s9 = sld [smem:[#allocation0]]
  $region42: #{adfnet_forward.1} parent=0
    _
  %s11 = ssub.s32 1, %s9
  %s12 = scalar_select 0, %s11, %s9
  // Predicated region
  $region2: #{adfnet_forward.1} parent=0 // pred_check
    _
  $region3: #{adfnet_forward.1} parent=0 // pred_check_branch
    %14 = sbr.rel (0) target = $region5
  $region4: #{adfnet_forward.1} parent=0 // pred_region
    _
  $region5: #{adfnet_forward.1} parent=0 // pred_fallthru
    _
  // Predicated region
  $region6: #{adfnet_forward.1} parent=0 // pred_check
    _
  $region7: #{adfnet_forward.1} parent=0 // pred_check_branch
    %16 = sbr.rel (0) target = $region9
  $region8: #{adfnet_forward.1} parent=0 // pred_region
    _
  $region9: #{adfnet_forward.1} parent=0 // pred_fallthru
    _
  // Predicated region
  $region10: #{adfnet_forward.1} parent=0 // pred_check
    _
  $region11: #{adfnet_forward.1} parent=0 // pred_check_branch
    %18 = sbr.rel (0) target = $region13
  $region12: #{adfnet_forward.1} parent=0 // pred_region
    _
  $region13: #{adfnet_forward.1} parent=0 // pred_fallthru
    _
  // Predicated region
  $region14: #{adfnet_forward.1} parent=0 // pred_check
    _
  $region15: #{adfnet_forward.1} parent=0 // pred_check_branch
    %20 = sbr.rel (0) target = $region17
  $region16: #{adfnet_forward.1} parent=0 // pred_region
    _
  $region17: #{adfnet_forward.1} parent=0 // pred_fallthru
    _
  // Predicated region
  $region18: #{adfnet_forward.1} parent=0 // pred_check
    _
  $region19: #{adfnet_forward.1} parent=0 // pred_check_branch
    %22 = sbr.rel (0) target = $region21
  $region20: #{adfnet_forward.1} parent=0 // pred_region
    _
  $region21: #{adfnet_forward.1} parent=0 // pred_fallthru
    _
  // Predicated region
  $region22: #{adfnet_forward.1} parent=0 // pred_check
    _
  $region23: #{adfnet_forward.1} parent=0 // pred_check_branch
    %24 = sbr.rel (0) target = $region25
  $region24: #{adfnet_forward.1} parent=0 // pred_region
    _
  $region25: #{adfnet_forward.1} parent=0 // pred_fallthru
    _
  // Predicated region
  $region26: #{adfnet_forward.1} parent=0 // pred_check
    _
  $region27: #{adfnet_forward.1} parent=0 // pred_check_branch
    %26 = sbr.rel (0) target = $region29
  $region28: #{adfnet_forward.1} parent=0 // pred_region
    _
  $region29: #{adfnet_forward.1} parent=0 // pred_fallthru
    _
  // Predicated region
  $region30: #{adfnet_forward.1} parent=0 // pred_check
    _
  $region31: #{adfnet_forward.1} parent=0 // pred_check_branch
    %28 = sbr.rel (0) target = $region33
  $region32: #{adfnet_forward.1} parent=0 // pred_region
    _
  $region33: #{adfnet_forward.1} parent=0 // pred_fallthru
    _
  %30 = vst [vmem:[#allocation2] sm:$0xf] 0
  %31 = vst [vmem:[#allocation2 + $0x18] sm:$0xf] 0
  %32 = vst [vmem:[#allocation2 + $0x30] sm:$0xf] 0
  %33 = vst [vmem:[#allocation2 + $0x48] sm:$0xf] 0
  %vm34 = vcmask 1044256
  %35 = vst.msk [vmem:[#allocation2 + $0x14] sm:$0xf] %vm34, 0
  %36 = vst.msk [vmem:[#allocation2 + $0x2c] sm:$0xf] %vm34, 0
  %37 = vst.msk [vmem:[#allocation2 + $0x44] sm:$0xf] %vm34, 0
  %38 = vst.msk [vmem:[#allocation2 + $0x5c] sm:$0xf] %vm34, 0
  %v39 = vld [vmem:[%s1] sm:$0x1f]
  %40 = vst [vmem:[#allocation2 + $0x4] sm:$0xff] 0
  %41 = vst [vmem:[#allocation2 + $0xc] sm:$0xff] 0
  %vm42 = vcmask 814080
  %43 = vst.msk [vmem:[#allocation2 + $0x14] sm:$0xf] %vm42, 0
  %v44 = vld [vmem:[%s0] sm:$0x77]
  %v45 = vld [vmem:[%s0 + $0x8] sm:$0x77]
  %v46 = vld [vmem:[%s0 + $0x10] sm:$0x7]
  %v49 = vcombine.high %v44, %v44
  %v50 = vcombine.high %v45, %v45
  %v53 = vpack.c.bf16 %v44, %v44
  %v54 = vpack.c.bf16 %v49, %v49
  %v55 = vpack.c.bf16 %v45, %v45
  %v56 = vpack.c.bf16 %v50, %v50
  %v57 = vpack.c.bf16 %v46, %v46
  %v63 = vunpack.c.l.b16 %v53
  %v64 = vunpack.c.l.b16 %v54
  %v65 = vunpack.c.l.b16 %v55
  %v66 = vunpack.c.l.b16 %v56
  %v67 = vunpack.c.l.b16 %v57
  %v68 = vpack.c.b16 %v64, %v63
  %v69 = vpack.c.b16 %v66, %v65
  %v70 = vpack.c.b16 %v67, %v67
  %vm74 = vcmask 1041408
  %vm75 = vsmask.f32 1280
  %vm76 = vmand %vm74, %vm75
  %vm77 = vcmask 1045508
  %vm78 = vsmask.f32 5376
  %vm79 = vmand %vm77, %vm78
  %vm80 = vmor %vm79, %vm76
  %v81 = vld [vmem:[#allocation2 + $0x4] sm:$0x33]
  %v82 = vsel %vm80, %v68, %v81
  %83 = vst [vmem:[#allocation2 + $0x4] sm:$0x33] %v82
  %v84 = vld [vmem:[#allocation2 + $0xc] sm:$0x33]
  %v85 = vsel %vm80, %v69, %v84
  %86 = vst [vmem:[#allocation2 + $0xc] sm:$0x33] %v85
  %vm87 = vcmask 812032
  %vm88 = vmand %vm87, %vm75
  %v89 = vld [vmem:[#allocation2 + $0x14] sm:$0x3]
  %v90 = vsel %vm88, %v70, %v89
  %91 = vst [vmem:[#allocation2 + $0x14] sm:$0x3] %v90
  %v92 = vld [vmem:[#allocation2] sm:$0xff]
  %v93 = vld [vmem:[#allocation2 + $0x8] sm:$0xff]
  %v94 = vld [vmem:[#allocation2 + $0x10] sm:$0xff]
  %v95 = vld [vmem:[%s2] sm:$0xf]
  %v96 = vld [vmem:[%s2 + $0x4] sm:$0xf]
  %v97 = vld [vmem:[%s2 + $0x8] sm:$0xf]
  %v98 = vld [vmem:[%s2 + $0xc] sm:$0xf]
  %s99 = scalar_lea.vmem %s2, 16
  %v100 = vld [vmem:[%s99] sm:$0xf]
  %v101 = vld [vmem:[%s99 + $0x4] sm:$0xf]
  %v102 = vld [vmem:[%s99 + $0x8] sm:$0xf]
  %v103 = vld [vmem:[%s99 + $0xc] sm:$0xf]
  %v108 = vunpack.c.l.b16 %v100
  %v109 = vunpack.c.l.b16 %v101
  %v110 = vunpack.c.l.b16 %v102
  %v111 = vunpack.c.l.b16 %v103
  %v112 = vpack.c.b16 %v109, %v108
  %v113 = vpack.c.b16 %v111, %v110
  %v117 = vunpack.c.l.b16 %v92
  %v118 = vunpack.c.h.b16 %v92
  %v119 = vunpack.c.l.b16 %v93
  %v120 = vunpack.c.h.b16 %v93
  %v121 = vunpack.c.l.b16 %v94
  %v122 = vunpack.c.h.b16 %v94
  %v123 = vpack.c.b16 %v117, %v117
  %v124 = vpack.c.b16 %v118, %v118
  %v125 = vpack.c.b16 %v119, %v119
  %v126 = vpack.c.b16 %v120, %v120
  %v127 = vpack.c.b16 %v121, %v121
  %v128 = vpack.c.b16 %v122, %v122
  %129 = vrot.lane.b32.xlu0 %v123, 18
  %v130 = vpop.permute.xlu0 %129
  %131 = vrot.lane.b32.xlu0 %v124, 18
  %v132 = vpop.permute.xlu0 %131
  %133 = vrot.lane.b32.xlu0 %v125, 18
  %v134 = vpop.permute.xlu0 %133
  %135 = vrot.lane.b32.xlu0 %v126, 18
  %v136 = vpop.permute.xlu0 %135
  %137 = vrot.lane.b32.xlu0 %v127, 18
  %v138 = vpop.permute.xlu0 %137
  %139 = vrot.lane.b32.xlu0 %v128, 18
  %v140 = vpop.permute.xlu0 %139
  %vm141 = vcmask 146432
  %v142 = vsel %vm141, %v130, %v132
  %v143 = vsel %vm141, %v132, %v134
  %v144 = vsel %vm141, %v134, %v136
  %v145 = vsel %vm141, %v136, %v138
  %v146 = vsel %vm141, %v138, %v140
  %vm147 = vcmask 64512
  %v149 = vsel %vm147, %v112, 0
  %v152 = vsel %vm147, %v113, 0
  %vm154 = vcmask 1043456
  %v156 = vsel %vm154, %v142, 0
  %v159 = vsel %vm154, %v143, 0
  %v162 = vsel %vm154, %v144, 0
  %v165 = vsel %vm154, %v145, 0
  %v168 = vsel %vm154, %v146, 0
  %170 = vmatprep.subr.bf16.mxu0 0
  %171 = vmatpush1.bf16.msra.mxu0 0
  %172 = vmatprep.subr.bf16.mxu0 0
  %173 = vmatpush1.bf16.msra.mxu0 0
  %174 = vmatprep.subr.bf16.mxu0 0
  %175 = vmatpush1.bf16.msra.mxu0 0
  %176 = vmatprep.subr.bf16.mxu0 0
  %177 = vmatpush1.bf16.msra.mxu0 0
  %178 = vmatprep.subr.bf16.mxu0 0
  %179 = vmatpush1.bf16.msra.mxu0 0
  %180 = vmatprep.subr.bf16.mxu0 0
  %181 = vmatpush1.bf16.msra.mxu0 0
  %182 = vmatprep.subr.bf16.mxu0 0
  %183 = vmatpush1.bf16.msra.mxu0 0
  %184 = vmatprep.subr.bf16.mxu0 %v159
  %185 = vmatpush1.bf16.msra.mxu0 %v156
  %186 = vmatprep.subr.bf16.mxu0 0
  %187 = vmatpush2.bf16.msra.mxu0 0
  %188 = vmatprep.subr.bf16.mxu0 0
  %189 = vmatpush2.bf16.msra.mxu0 0
  %190 = vmatprep.subr.bf16.mxu0 0
  %191 = vmatpush2.bf16.msra.mxu0 0
  %192 = vmatprep.subr.bf16.mxu0 0
  %193 = vmatpush2.bf16.msra.mxu0 0
  %194 = vmatprep.subr.bf16.mxu0 0
  %195 = vmatpush2.bf16.msra.mxu0 0
  %196 = vmatprep.subr.bf16.mxu0 0
  %197 = vmatpush2.bf16.msra.mxu0 0
  %198 = vmatprep.subr.bf16.mxu0 0
  %199 = vmatpush2.bf16.msra.mxu0 0
  %200 = vmatprep.subr.bf16.mxu0 0
  %201 = vmatpush2.bf16.msra.mxu0 0
  %202 = vmatprep.mubr.bf16.mxu0 0
  %203 = vmatmul.mubr.bf16.gmra.mxu0 %v149
  %v204 = vpop.f32.mrf.mxu0
  %v205 = vadd.f32 0.0, %v204
  %v206 = vpop.f32.mrf.mxu0
  %v207 = vadd.f32 0.0, %v206
  %v208 = vpop.f32.mrf.mxu0
  %v209 = vadd.f32 0.0, %v208
  %v210 = vpop.f32.mrf.mxu0
  %v211 = vadd.f32 0.0, %v210
  %212 = vmatprep.mubr.bf16.mxu0 0
  %213 = vmatmul.mubr.bf16.gmra.mxu0 %v152
  %v214 = vpop.f32.mrf.mxu0
  %v215 = vadd.f32 0.0, %v214
  %v216 = vpop.f32.mrf.mxu0
  %v217 = vadd.f32 0.0, %v216
  %v218 = vpop.f32.mrf.mxu0
  %v219 = vadd.f32 0.0, %v218
  %v220 = vpop.f32.mrf.mxu0
  %v221 = vadd.f32 0.0, %v220
  %222 = vdwg.mxu0
  %223 = vmatprep.subr.bf16.mxu0 0
  %224 = vmatpush1.bf16.msra.mxu0 0
  %225 = vmatprep.subr.bf16.mxu0 0
  %226 = vmatpush1.bf16.msra.mxu0 0
  %227 = vmatprep.subr.bf16.mxu0 0
  %228 = vmatpush1.bf16.msra.mxu0 0
  %229 = vmatprep.subr.bf16.mxu0 0
  %230 = vmatpush1.bf16.msra.mxu0 0
  %231 = vmatprep.subr.bf16.mxu0 0
  %232 = vmatpush1.bf16.msra.mxu0 0
  %233 = vmatprep.subr.bf16.mxu0 0
  %234 = vmatpush1.bf16.msra.mxu0 0
  %235 = vmatprep.subr.bf16.mxu0 0
  %236 = vmatpush1.bf16.msra.mxu0 0
  %237 = vmatprep.subr.bf16.mxu0 %v165
  %238 = vmatpush1.bf16.msra.mxu0 %v162
  %239 = vmatprep.subr.bf16.mxu0 0
  %240 = vmatpush2.bf16.msra.mxu0 0
  %241 = vmatprep.subr.bf16.mxu0 0
  %242 = vmatpush2.bf16.msra.mxu0 0
  %243 = vmatprep.subr.bf16.mxu0 0
  %244 = vmatpush2.bf16.msra.mxu0 0
  %245 = vmatprep.subr.bf16.mxu0 0
  %246 = vmatpush2.bf16.msra.mxu0 0
  %247 = vmatprep.subr.bf16.mxu0 0
  %248 = vmatpush2.bf16.msra.mxu0 0
  %249 = vmatprep.subr.bf16.mxu0 0
  %250 = vmatpush2.bf16.msra.mxu0 0
  %251 = vmatprep.subr.bf16.mxu0 0
  %252 = vmatpush2.bf16.msra.mxu0 0
  %253 = vmatprep.subr.bf16.mxu0 0
  %254 = vmatpush2.bf16.msra.mxu0 0
  %255 = vmatprep.mubr.bf16.mxu0 0
  %256 = vmatmul.mubr.bf16.gmra.mxu0 %v149
  %v257 = vpop.f32.mrf.mxu0
  %v258 = vadd.f32 0.0, %v257
  %v259 = vpop.f32.mrf.mxu0
  %v260 = vadd.f32 0.0, %v259
  %v261 = vpop.f32.mrf.mxu0
  %v262 = vadd.f32 0.0, %v261
  %v263 = vpop.f32.mrf.mxu0
  %v264 = vadd.f32 0.0, %v263
  %265 = vmatprep.mubr.bf16.mxu0 0
  %266 = vmatmul.mubr.bf16.gmra.mxu0 %v152
  %v267 = vpop.f32.mrf.mxu0
  %v268 = vadd.f32 0.0, %v267
  %v269 = vpop.f32.mrf.mxu0
  %v270 = vadd.f32 0.0, %v269
  %v271 = vpop.f32.mrf.mxu0
  %v272 = vadd.f32 0.0, %v271
  %v273 = vpop.f32.mrf.mxu0
  %v274 = vadd.f32 0.0, %v273
  %275 = vdwg.mxu0
  %276 = vmatprep.subr.bf16.mxu0 0
  %277 = vmatpush1.bf16.msra.mxu0 0
  %278 = vmatprep.subr.bf16.mxu0 0
  %279 = vmatpush1.bf16.msra.mxu0 0
  %280 = vmatprep.subr.bf16.mxu0 0
  %281 = vmatpush1.bf16.msra.mxu0 0
  %282 = vmatprep.subr.bf16.mxu0 0
  %283 = vmatpush1.bf16.msra.mxu0 0
  %284 = vmatprep.subr.bf16.mxu0 0
  %285 = vmatpush1.bf16.msra.mxu0 0
  %286 = vmatprep.subr.bf16.mxu0 0
  %287 = vmatpush1.bf16.msra.mxu0 0
  %288 = vmatprep.subr.bf16.mxu0 0
  %289 = vmatpush1.bf16.msra.mxu0 0
  %290 = vmatprep.subr.bf16.mxu0 0
  %291 = vmatpush1.bf16.msra.mxu0 %v168
  %292 = vmatprep.subr.bf16.mxu0 0
  %293 = vmatpush2.bf16.msra.mxu0 0
  %294 = vmatprep.subr.bf16.mxu0 0
  %295 = vmatpush2.bf16.msra.mxu0 0
  %296 = vmatprep.subr.bf16.mxu0 0
  %297 = vmatpush2.bf16.msra.mxu0 0
  %298 = vmatprep.subr.bf16.mxu0 0
  %299 = vmatpush2.bf16.msra.mxu0 0
  %300 = vmatprep.subr.bf16.mxu0 0
  %301 = vmatpush2.bf16.msra.mxu0 0
  %302 = vmatprep.subr.bf16.mxu0 0
  %303 = vmatpush2.bf16.msra.mxu0 0
  %304 = vmatprep.subr.bf16.mxu0 0
  %305 = vmatpush2.bf16.msra.mxu0 0
  %306 = vmatprep.subr.bf16.mxu0 0
  %307 = vmatpush2.bf16.msra.mxu0 0
  %308 = vmatprep.mubr.bf16.mxu0 0
  %309 = vmatmul.mubr.bf16.gmra.mxu0 %v149
  %v310 = vpop.f32.mrf.mxu0
  %v311 = vadd.f32 0.0, %v310
  %v312 = vpop.f32.mrf.mxu0
  %v313 = vpop.f32.mrf.mxu0
  %v314 = vadd.f32 0.0, %v313
  %v315 = vpop.f32.mrf.mxu0
  %316 = vmatprep.mubr.bf16.mxu0 0
  %317 = vmatmul.mubr.bf16.gmra.mxu0 %v152
  %v318 = vpop.f32.mrf.mxu0
  %v319 = vadd.f32 0.0, %v318
  %v320 = vpop.f32.mrf.mxu0
  %v321 = vpop.f32.mrf.mxu0
  %v322 = vadd.f32 0.0, %v321
  %v323 = vpop.f32.mrf.mxu0
  %324 = vdwg.mxu0
  %v329 = vunpack.c.l.b16 %v95
  %v330 = vunpack.c.l.b16 %v96
  %v331 = vunpack.c.l.b16 %v97
  %v332 = vunpack.c.l.b16 %v98
  %v333 = vpack.c.b16 %v330, %v329
  %v334 = vpack.c.b16 %v332, %v331
  %335 = vrot.lane.b32.xlu0 %v123, 19
  %v336 = vpop.permute.xlu0 %335
  %337 = vrot.lane.b32.xlu0 %v124, 19
  %v338 = vpop.permute.xlu0 %337
  %339 = vrot.lane.b32.xlu0 %v125, 19
  %v340 = vpop.permute.xlu0 %339
  %341 = vrot.lane.b32.xlu0 %v126, 19
  %v342 = vpop.permute.xlu0 %341
  %343 = vrot.lane.b32.xlu0 %v127, 19
  %v344 = vpop.permute.xlu0 %343
  %345 = vrot.lane.b32.xlu0 %v128, 19
  %v346 = vpop.permute.xlu0 %345
  %vm347 = vcmask 154624
  %v348 = vsel %vm347, %v336, %v338
  %v349 = vsel %vm347, %v338, %v340
  %v350 = vsel %vm347, %v340, %v342
  %v351 = vsel %vm347, %v342, %v344
  %v352 = vsel %vm347, %v344, %v346
  %v354 = vsel %vm147, %v333, 0
  %v357 = vsel %vm147, %v334, 0
  %v360 = vsel %vm154, %v348, 0
  %v363 = vsel %vm154, %v349, 0
  %v366 = vsel %vm154, %v350, 0
  %v369 = vsel %vm154, %v351, 0
  %v372 = vsel %vm154, %v352, 0
  %374 = vmatprep.subr.bf16.mxu0 0
  %375 = vmatpush1.bf16.msra.mxu0 0
  %376 = vmatprep.subr.bf16.mxu0 0
  %377 = vmatpush1.bf16.msra.mxu0 0
  %378 = vmatprep.subr.bf16.mxu0 0
  %379 = vmatpush1.bf16.msra.mxu0 0
  %380 = vmatprep.subr.bf16.mxu0 0
  %381 = vmatpush1.bf16.msra.mxu0 0
  %382 = vmatprep.subr.bf16.mxu0 0
  %383 = vmatpush1.bf16.msra.mxu0 0
  %384 = vmatprep.subr.bf16.mxu0 0
  %385 = vmatpush1.bf16.msra.mxu0 0
  %386 = vmatprep.subr.bf16.mxu0 0
  %387 = vmatpush1.bf16.msra.mxu0 0
  %388 = vmatprep.subr.bf16.mxu0 %v363
  %389 = vmatpush1.bf16.msra.mxu0 %v360
  %390 = vmatprep.subr.bf16.mxu0 0
  %391 = vmatpush2.bf16.msra.mxu0 0
  %392 = vmatprep.subr.bf16.mxu0 0
  %393 = vmatpush2.bf16.msra.mxu0 0
  %394 = vmatprep.subr.bf16.mxu0 0
  %395 = vmatpush2.bf16.msra.mxu0 0
  %396 = vmatprep.subr.bf16.mxu0 0
  %397 = vmatpush2.bf16.msra.mxu0 0
  %398 = vmatprep.subr.bf16.mxu0 0
  %399 = vmatpush2.bf16.msra.mxu0 0
  %400 = vmatprep.subr.bf16.mxu0 0
  %401 = vmatpush2.bf16.msra.mxu0 0
  %402 = vmatprep.subr.bf16.mxu0 0
  %403 = vmatpush2.bf16.msra.mxu0 0
  %404 = vmatprep.subr.bf16.mxu0 0
  %405 = vmatpush2.bf16.msra.mxu0 0
  %406 = vmatprep.mubr.bf16.mxu0 0
  %407 = vmatmul.mubr.bf16.gmra.mxu0 %v354
  %v408 = vpop.f32.mrf.mxu0
  %v409 = vadd.f32 %v205, %v408
  %v410 = vpop.f32.mrf.mxu0
  %v411 = vadd.f32 %v207, %v410
  %v412 = vpop.f32.mrf.mxu0
  %v413 = vadd.f32 %v209, %v412
  %v414 = vpop.f32.mrf.mxu0
  %v415 = vadd.f32 %v211, %v414
  %416 = vmatprep.mubr.bf16.mxu0 0
  %417 = vmatmul.mubr.bf16.gmra.mxu0 %v357
  %v418 = vpop.f32.mrf.mxu0
  %v419 = vadd.f32 %v215, %v418
  %v420 = vpop.f32.mrf.mxu0
  %v421 = vadd.f32 %v217, %v420
  %v422 = vpop.f32.mrf.mxu0
  %v423 = vadd.f32 %v219, %v422
  %v424 = vpop.f32.mrf.mxu0
  %v425 = vadd.f32 %v221, %v424
  %426 = vdwg.mxu0
  %427 = vmatprep.subr.bf16.mxu0 0
  %428 = vmatpush1.bf16.msra.mxu0 0
  %429 = vmatprep.subr.bf16.mxu0 0
  %430 = vmatpush1.bf16.msra.mxu0 0
  %431 = vmatprep.subr.bf16.mxu0 0
  %432 = vmatpush1.bf16.msra.mxu0 0
  %433 = vmatprep.subr.bf16.mxu0 0
  %434 = vmatpush1.bf16.msra.mxu0 0
  %435 = vmatprep.subr.bf16.mxu0 0
  %436 = vmatpush1.bf16.msra.mxu0 0
  %437 = vmatprep.subr.bf16.mxu0 0
  %438 = vmatpush1.bf16.msra.mxu0 0
  %439 = vmatprep.subr.bf16.mxu0 0
  %440 = vmatpush1.bf16.msra.mxu0 0
  %441 = vmatprep.subr.bf16.mxu0 %v369
  %442 = vmatpush1.bf16.msra.mxu0 %v366
  %443 = vmatprep.subr.bf16.mxu0 0
  %444 = vmatpush2.bf16.msra.mxu0 0
  %445 = vmatprep.subr.bf16.mxu0 0
  %446 = vmatpush2.bf16.msra.mxu0 0
  %447 = vmatprep.subr.bf16.mxu0 0
  %448 = vmatpush2.bf16.msra.mxu0 0
  %449 = vmatprep.subr.bf16.mxu0 0
  %450 = vmatpush2.bf16.msra.mxu0 0
  %451 = vmatprep.subr.bf16.mxu0 0
  %452 = vmatpush2.bf16.msra.mxu0 0
  %453 = vmatprep.subr.bf16.mxu0 0
  %454 = vmatpush2.bf16.msra.mxu0 0
  %455 = vmatprep.subr.bf16.mxu0 0
  %456 = vmatpush2.bf16.msra.mxu0 0
  %457 = vmatprep.subr.bf16.mxu0 0
  %458 = vmatpush2.bf16.msra.mxu0 0
  %459 = vmatprep.mubr.bf16.mxu0 0
  %460 = vmatmul.mubr.bf16.gmra.mxu0 %v354
  %v461 = vpop.f32.mrf.mxu0
  %v462 = vadd.f32 %v258, %v461
  %v463 = vpop.f32.mrf.mxu0
  %v464 = vadd.f32 %v260, %v463
  %v465 = vpop.f32.mrf.mxu0
  %v466 = vadd.f32 %v262, %v465
  %v467 = vpop.f32.mrf.mxu0
  %v468 = vadd.f32 %v264, %v467
  %469 = vmatprep.mubr.bf16.mxu0 0
  %470 = vmatmul.mubr.bf16.gmra.mxu0 %v357
  %v471 = vpop.f32.mrf.mxu0
  %v472 = vadd.f32 %v268, %v471
  %v473 = vpop.f32.mrf.mxu0
  %v474 = vadd.f32 %v270, %v473
  %v475 = vpop.f32.mrf.mxu0
  %v476 = vadd.f32 %v272, %v475
  %v477 = vpop.f32.mrf.mxu0
  %v478 = vadd.f32 %v274, %v477
  %479 = vdwg.mxu0
  %480 = vmatprep.subr.bf16.mxu0 0
  %481 = vmatpush1.bf16.msra.mxu0 0
  %482 = vmatprep.subr.bf16.mxu0 0
  %483 = vmatpush1.bf16.msra.mxu0 0
  %484 = vmatprep.subr.bf16.mxu0 0
  %485 = vmatpush1.bf16.msra.mxu0 0
  %486 = vmatprep.subr.bf16.mxu0 0
  %487 = vmatpush1.bf16.msra.mxu0 0
  %488 = vmatprep.subr.bf16.mxu0 0
  %489 = vmatpush1.bf16.msra.mxu0 0
  %490 = vmatprep.subr.bf16.mxu0 0
  %491 = vmatpush1.bf16.msra.mxu0 0
  %492 = vmatprep.subr.bf16.mxu0 0
  %493 = vmatpush1.bf16.msra.mxu0 0
  %494 = vmatprep.subr.bf16.mxu0 0
  %495 = vmatpush1.bf16.msra.mxu0 %v372
  %496 = vmatprep.subr.bf16.mxu0 0
  %497 = vmatpush2.bf16.msra.mxu0 0
  %498 = vmatprep.subr.bf16.mxu0 0
  %499 = vmatpush2.bf16.msra.mxu0 0
  %500 = vmatprep.subr.bf16.mxu0 0
  %501 = vmatpush2.bf16.msra.mxu0 0
  %502 = vmatprep.subr.bf16.mxu0 0
  %503 = vmatpush2.bf16.msra.mxu0 0
  %504 = vmatprep.subr.bf16.mxu0 0
  %505 = vmatpush2.bf16.msra.mxu0 0
  %506 = vmatprep.subr.bf16.mxu0 0
  %507 = vmatpush2.bf16.msra.mxu0 0
  %508 = vmatprep.subr.bf16.mxu0 0
  %509 = vmatpush2.bf16.msra.mxu0 0
  %510 = vmatprep.subr.bf16.mxu0 0
  %511 = vmatpush2.bf16.msra.mxu0 0
  %512 = vmatprep.mubr.bf16.mxu0 0
  %513 = vmatmul.mubr.bf16.gmra.mxu0 %v354
  %v514 = vpop.f32.mrf.mxu0
  %v515 = vadd.f32 %v311, %v514
  %v516 = vpop.f32.mrf.mxu0
  %v517 = vpop.f32.mrf.mxu0
  %v518 = vadd.f32 %v314, %v517
  %v519 = vpop.f32.mrf.mxu0
  %520 = vmatprep.mubr.bf16.mxu0 0
  %521 = vmatmul.mubr.bf16.gmra.mxu0 %v357
  %v522 = vpop.f32.mrf.mxu0
  %v523 = vadd.f32 %v319, %v522
  %v524 = vpop.f32.mrf.mxu0
  %v525 = vpop.f32.mrf.mxu0
  %v526 = vadd.f32 %v322, %v525
  %v527 = vpop.f32.mrf.mxu0
  %528 = vdwg.mxu0
  %s529 = scalar_lea.vmem %s2, 32
  %v530 = vld [vmem:[%s529] sm:$0xf]
  %v531 = vld [vmem:[%s529 + $0x4] sm:$0xf]
  %v532 = vld [vmem:[%s529 + $0x8] sm:$0xf]
  %v533 = vld [vmem:[%s529 + $0xc] sm:$0xf]
  %v538 = vunpack.c.l.b16 %v530
  %v539 = vunpack.c.l.b16 %v531
  %v540 = vunpack.c.l.b16 %v532
  %v541 = vunpack.c.l.b16 %v533
  %v542 = vpack.c.b16 %v539, %v538
  %v543 = vpack.c.b16 %v541, %v540
  %544 = vrot.lane.b32.xlu0 %v123, 17
  %v545 = vpop.permute.xlu0 %544
  %546 = vrot.lane.b32.xlu0 %v124, 17
  %v547 = vpop.permute.xlu0 %546
  %548 = vrot.lane.b32.xlu0 %v125, 17
  %v549 = vpop.permute.xlu0 %548
  %550 = vrot.lane.b32.xlu0 %v126, 17
  %v551 = vpop.permute.xlu0 %550
  %552 = vrot.lane.b32.xlu0 %v127, 17
  %v553 = vpop.permute.xlu0 %552
  %554 = vrot.lane.b32.xlu0 %v128, 17
  %v555 = vpop.permute.xlu0 %554
  %vm556 = vcmask 138240
  %v557 = vsel %vm556, %v545, %v547
  %v558 = vsel %vm556, %v547, %v549
  %v559 = vsel %vm556, %v549, %v551
  %v560 = vsel %vm556, %v551, %v553
  %v561 = vsel %vm556, %v553, %v555
  %v563 = vsel %vm147, %v542, 0
  %v566 = vsel %vm147, %v543, 0
  %v569 = vsel %vm154, %v557, 0
  %v572 = vsel %vm154, %v558, 0
  %v575 = vsel %vm154, %v559, 0
  %v578 = vsel %vm154, %v560, 0
  %v581 = vsel %vm154, %v561, 0
  %583 = vmatprep.subr.bf16.mxu0 0
  %584 = vmatpush1.bf16.msra.mxu0 0
  %585 = vmatprep.subr.bf16.mxu0 0
  %586 = vmatpush1.bf16.msra.mxu0 0
  %587 = vmatprep.subr.bf16.mxu0 0
  %588 = vmatpush1.bf16.msra.mxu0 0
  %589 = vmatprep.subr.bf16.mxu0 0
  %590 = vmatpush1.bf16.msra.mxu0 0
  %591 = vmatprep.subr.bf16.mxu0 0
  %592 = vmatpush1.bf16.msra.mxu0 0
  %593 = vmatprep.subr.bf16.mxu0 0
  %594 = vmatpush1.bf16.msra.mxu0 0
  %595 = vmatprep.subr.bf16.mxu0 0
  %596 = vmatpush1.bf16.msra.mxu0 0
  %597 = vmatprep.subr.bf16.mxu0 %v572
  %598 = vmatpush1.bf16.msra.mxu0 %v569
  %599 = vmatprep.subr.bf16.mxu0 0
  %600 = vmatpush2.bf16.msra.mxu0 0
  %601 = vmatprep.subr.bf16.mxu0 0
  %602 = vmatpush2.bf16.msra.mxu0 0
  %603 = vmatprep.subr.bf16.mxu0 0
  %604 = vmatpush2.bf16.msra.mxu0 0
  %605 = vmatprep.subr.bf16.mxu0 0
  %606 = vmatpush2.bf16.msra.mxu0 0
  %607 = vmatprep.subr.bf16.mxu0 0
  %608 = vmatpush2.bf16.msra.mxu0 0
  %609 = vmatprep.subr.bf16.mxu0 0
  %610 = vmatpush2.bf16.msra.mxu0 0
  %611 = vmatprep.subr.bf16.mxu0 0
  %612 = vmatpush2.bf16.msra.mxu0 0
  %613 = vmatprep.subr.bf16.mxu0 0
  %614 = vmatpush2.bf16.msra.mxu0 0
  %615 = vmatprep.mubr.bf16.mxu0 0
  %616 = vmatmul.mubr.bf16.gmra.mxu0 %v563
  %v617 = vpop.f32.mrf.mxu0
  %v618 = vadd.f32 0.0, %v617
  %v619 = vpop.f32.mrf.mxu0
  %v620 = vadd.f32 0.0, %v619
  %v621 = vpop.f32.mrf.mxu0
  %v622 = vadd.f32 0.0, %v621
  %v623 = vpop.f32.mrf.mxu0
  %v624 = vadd.f32 0.0, %v623
  %625 = vmatprep.mubr.bf16.mxu0 0
  %626 = vmatmul.mubr.bf16.gmra.mxu0 %v566
  %v627 = vpop.f32.mrf.mxu0
  %v628 = vadd.f32 0.0, %v627
  %v629 = vpop.f32.mrf.mxu0
  %v630 = vadd.f32 0.0, %v629
  %v631 = vpop.f32.mrf.mxu0
  %v632 = vadd.f32 0.0, %v631
  %v633 = vpop.f32.mrf.mxu0
  %v634 = vadd.f32 0.0, %v633
  %635 = vdwg.mxu0
  %636 = vmatprep.subr.bf16.mxu0 0
  %637 = vmatpush1.bf16.msra.mxu0 0
  %638 = vmatprep.subr.bf16.mxu0 0
  %639 = vmatpush1.bf16.msra.mxu0 0
  %640 = vmatprep.subr.bf16.mxu0 0
  %641 = vmatpush1.bf16.msra.mxu0 0
  %642 = vmatprep.subr.bf16.mxu0 0
  %643 = vmatpush1.bf16.msra.mxu0 0
  %644 = vmatprep.subr.bf16.mxu0 0
  %645 = vmatpush1.bf16.msra.mxu0 0
  %646 = vmatprep.subr.bf16.mxu0 0
  %647 = vmatpush1.bf16.msra.mxu0 0
  %648 = vmatprep.subr.bf16.mxu0 0
  %649 = vmatpush1.bf16.msra.mxu0 0
  %650 = vmatprep.subr.bf16.mxu0 %v578
  %651 = vmatpush1.bf16.msra.mxu0 %v575
  %652 = vmatprep.subr.bf16.mxu0 0
  %653 = vmatpush2.bf16.msra.mxu0 0
  %654 = vmatprep.subr.bf16.mxu0 0
  %655 = vmatpush2.bf16.msra.mxu0 0
  %656 = vmatprep.subr.bf16.mxu0 0
  %657 = vmatpush2.bf16.msra.mxu0 0
  %658 = vmatprep.subr.bf16.mxu0 0
  %659 = vmatpush2.bf16.msra.mxu0 0
  %660 = vmatprep.subr.bf16.mxu0 0
  %661 = vmatpush2.bf16.msra.mxu0 0
  %662 = vmatprep.subr.bf16.mxu0 0
  %663 = vmatpush2.bf16.msra.mxu0 0
  %664 = vmatprep.subr.bf16.mxu0 0
  %665 = vmatpush2.bf16.msra.mxu0 0
  %666 = vmatprep.subr.bf16.mxu0 0
  %667 = vmatpush2.bf16.msra.mxu0 0
  %668 = vmatprep.mubr.bf16.mxu0 0
  %669 = vmatmul.mubr.bf16.gmra.mxu0 %v563
  %v670 = vpop.f32.mrf.mxu0
  %v671 = vadd.f32 0.0, %v670
  %v672 = vpop.f32.mrf.mxu0
  %v673 = vadd.f32 0.0, %v672
  %v674 = vpop.f32.mrf.mxu0
  %v675 = vadd.f32 0.0, %v674
  %v676 = vpop.f32.mrf.mxu0
  %v677 = vadd.f32 0.0, %v676
  %678 = vmatprep.mubr.bf16.mxu0 0
  %679 = vmatmul.mubr.bf16.gmra.mxu0 %v566
  %v680 = vpop.f32.mrf.mxu0
  %v681 = vadd.f32 0.0, %v680
  %v682 = vpop.f32.mrf.mxu0
  %v683 = vadd.f32 0.0, %v682
  %v684 = vpop.f32.mrf.mxu0
  %v685 = vadd.f32 0.0, %v684
  %v686 = vpop.f32.mrf.mxu0
  %v687 = vadd.f32 0.0, %v686
  %688 = vdwg.mxu0
  %689 = vmatprep.subr.bf16.mxu0 0
  %690 = vmatpush1.bf16.msra.mxu0 0
  %691 = vmatprep.subr.bf16.mxu0 0
  %692 = vmatpush1.bf16.msra.mxu0 0
  %693 = vmatprep.subr.bf16.mxu0 0
  %694 = vmatpush1.bf16.msra.mxu0 0
  %695 = vmatprep.subr.bf16.mxu0 0
  %696 = vmatpush1.bf16.msra.mxu0 0
  %697 = vmatprep.subr.bf16.mxu0 0
  %698 = vmatpush1.bf16.msra.mxu0 0
  %699 = vmatprep.subr.bf16.mxu0 0
  %700 = vmatpush1.bf16.msra.mxu0 0
  %701 = vmatprep.subr.bf16.mxu0 0
  %702 = vmatpush1.bf16.msra.mxu0 0
  %703 = vmatprep.subr.bf16.mxu0 0
  %704 = vmatpush1.bf16.msra.mxu0 %v581
  %705 = vmatprep.subr.bf16.mxu0 0
  %706 = vmatpush2.bf16.msra.mxu0 0
  %707 = vmatprep.subr.bf16.mxu0 0
  %708 = vmatpush2.bf16.msra.mxu0 0
  %709 = vmatprep.subr.bf16.mxu0 0
  %710 = vmatpush2.bf16.msra.mxu0 0
  %711 = vmatprep.subr.bf16.mxu0 0
  %712 = vmatpush2.bf16.msra.mxu0 0
  %713 = vmatprep.subr.bf16.mxu0 0
  %714 = vmatpush2.bf16.msra.mxu0 0
  %715 = vmatprep.subr.bf16.mxu0 0
  %716 = vmatpush2.bf16.msra.mxu0 0
  %717 = vmatprep.subr.bf16.mxu0 0
  %718 = vmatpush2.bf16.msra.mxu0 0
  %719 = vmatprep.subr.bf16.mxu0 0
  %720 = vmatpush2.bf16.msra.mxu0 0
  %721 = vmatprep.mubr.bf16.mxu0 0
  %722 = vmatmul.mubr.bf16.gmra.mxu0 %v563
  %v723 = vpop.f32.mrf.mxu0
  %v724 = vadd.f32 0.0, %v723
  %v725 = vpop.f32.mrf.mxu0
  %v726 = vpop.f32.mrf.mxu0
  %v727 = vadd.f32 0.0, %v726
  %v728 = vpop.f32.mrf.mxu0
  %729 = vmatprep.mubr.bf16.mxu0 0
  %730 = vmatmul.mubr.bf16.gmra.mxu0 %v566
  %v731 = vpop.f32.mrf.mxu0
  %v732 = vadd.f32 0.0, %v731
  %v733 = vpop.f32.mrf.mxu0
  %v734 = vpop.f32.mrf.mxu0
  %v735 = vadd.f32 0.0, %v734
  %v736 = vpop.f32.mrf.mxu0
  %737 = vdwg.mxu0
  %v738 = vadd.f32 %v409, %v618
  %v739 = vadd.f32 %v411, %v620
  %v740 = vadd.f32 %v462, %v671
  %v741 = vadd.f32 %v464, %v673
  %v742 = vadd.f32 %v515, %v724
  %v743 = vadd.f32 %v413, %v622
  %v744 = vadd.f32 %v415, %v624
  %v745 = vadd.f32 %v466, %v675
  %v746 = vadd.f32 %v468, %v677
  %v747 = vadd.f32 %v518, %v727
  %v748 = vadd.f32 %v419, %v628
  %v749 = vadd.f32 %v421, %v630
  %v750 = vadd.f32 %v472, %v681
  %v751 = vadd.f32 %v474, %v683
  %v752 = vadd.f32 %v523, %v732
  %v753 = vadd.f32 %v423, %v632
  %v754 = vadd.f32 %v425, %v634
  %v755 = vadd.f32 %v476, %v685
  %v756 = vadd.f32 %v478, %v687
  %v757 = vadd.f32 %v526, %v735
  %s758 = scalar_lea.vmem %s2, 48
  %v759 = vld [vmem:[%s758] sm:$0xf]
  %v760 = vld [vmem:[%s758 + $0x4] sm:$0xf]
  %v761 = vld [vmem:[%s758 + $0x8] sm:$0xf]
  %v762 = vld [vmem:[%s758 + $0xc] sm:$0xf]
  %v767 = vunpack.c.l.b16 %v759
  %v768 = vunpack.c.l.b16 %v760
  %v769 = vunpack.c.l.b16 %v761
  %v770 = vunpack.c.l.b16 %v762
  %v771 = vpack.c.b16 %v768, %v767
  %v772 = vpack.c.b16 %v770, %v769
  %773 = vrot.lane.b32.xlu0 %v123, 1
  %v774 = vpop.permute.xlu0 %773
  %775 = vrot.lane.b32.xlu0 %v124, 1
  %v776 = vpop.permute.xlu0 %775
  %777 = vrot.lane.b32.xlu0 %v125, 1
  %v778 = vpop.permute.xlu0 %777
  %779 = vrot.lane.b32.xlu0 %v126, 1
  %v780 = vpop.permute.xlu0 %779
  %781 = vrot.lane.b32.xlu0 %v127, 1
  %v782 = vpop.permute.xlu0 %781
  %783 = vrot.lane.b32.xlu0 %v128, 1
  %v784 = vpop.permute.xlu0 %783
  %vm785 = vcmask 7168
  %v786 = vsel %vm785, %v774, %v776
  %v787 = vsel %vm785, %v776, %v778
  %v788 = vsel %vm785, %v778, %v780
  %v789 = vsel %vm785, %v780, %v782
  %v790 = vsel %vm785, %v782, %v784
  %v792 = vsel %vm147, %v771, 0
  %v795 = vsel %vm147, %v772, 0
  %v798 = vsel %vm154, %v786, 0
  %v801 = vsel %vm154, %v787, 0
  %v804 = vsel %vm154, %v788, 0
  %v807 = vsel %vm154, %v789, 0
  %v810 = vsel %vm154, %v790, 0
  %812 = vmatprep.subr.bf16.mxu0 0
  %813 = vmatpush1.bf16.msra.mxu0 0
  %814 = vmatprep.subr.bf16.mxu0 0
  %815 = vmatpush1.bf16.msra.mxu0 0
  %816 = vmatprep.subr.bf16.mxu0 0
  %817 = vmatpush1.bf16.msra.mxu0 0
  %818 = vmatprep.subr.bf16.mxu0 0
  %819 = vmatpush1.bf16.msra.mxu0 0
  %820 = vmatprep.subr.bf16.mxu0 0
  %821 = vmatpush1.bf16.msra.mxu0 0
  %822 = vmatprep.subr.bf16.mxu0 0
  %823 = vmatpush1.bf16.msra.mxu0 0
  %824 = vmatprep.subr.bf16.mxu0 0
  %825 = vmatpush1.bf16.msra.mxu0 0
  %826 = vmatprep.subr.bf16.mxu0 %v801
  %827 = vmatpush1.bf16.msra.mxu0 %v798
  %828 = vmatprep.subr.bf16.mxu0 0
  %829 = vmatpush2.bf16.msra.mxu0 0
  %830 = vmatprep.subr.bf16.mxu0 0
  %831 = vmatpush2.bf16.msra.mxu0 0
  %832 = vmatprep.subr.bf16.mxu0 0
  %833 = vmatpush2.bf16.msra.mxu0 0
  %834 = vmatprep.subr.bf16.mxu0 0
  %835 = vmatpush2.bf16.msra.mxu0 0
  %836 = vmatprep.subr.bf16.mxu0 0
  %837 = vmatpush2.bf16.msra.mxu0 0
  %838 = vmatprep.subr.bf16.mxu0 0
  %839 = vmatpush2.bf16.msra.mxu0 0
  %840 = vmatprep.subr.bf16.mxu0 0
  %841 = vmatpush2.bf16.msra.mxu0 0
  %842 = vmatprep.subr.bf16.mxu0 0
  %843 = vmatpush2.bf16.msra.mxu0 0
  %844 = vmatprep.mubr.bf16.mxu0 0
  %845 = vmatmul.mubr.bf16.gmra.mxu0 %v792
  %v846 = vpop.f32.mrf.mxu0
  %v847 = vadd.f32 0.0, %v846
  %v848 = vpop.f32.mrf.mxu0
  %v849 = vadd.f32 0.0, %v848
  %v850 = vpop.f32.mrf.mxu0
  %v851 = vadd.f32 0.0, %v850
  %v852 = vpop.f32.mrf.mxu0
  %v853 = vadd.f32 0.0, %v852
  %854 = vmatprep.mubr.bf16.mxu0 0
  %855 = vmatmul.mubr.bf16.gmra.mxu0 %v795
  %v856 = vpop.f32.mrf.mxu0
  %v857 = vadd.f32 0.0, %v856
  %v858 = vpop.f32.mrf.mxu0
  %v859 = vadd.f32 0.0, %v858
  %v860 = vpop.f32.mrf.mxu0
  %v861 = vadd.f32 0.0, %v860
  %v862 = vpop.f32.mrf.mxu0
  %v863 = vadd.f32 0.0, %v862
  %864 = vdwg.mxu0
  %865 = vmatprep.subr.bf16.mxu0 0
  %866 = vmatpush1.bf16.msra.mxu0 0
  %867 = vmatprep.subr.bf16.mxu0 0
  %868 = vmatpush1.bf16.msra.mxu0 0
  %869 = vmatprep.subr.bf16.mxu0 0
  %870 = vmatpush1.bf16.msra.mxu0 0
  %871 = vmatprep.subr.bf16.mxu0 0
  %872 = vmatpush1.bf16.msra.mxu0 0
  %873 = vmatprep.subr.bf16.mxu0 0
  %874 = vmatpush1.bf16.msra.mxu0 0
  %875 = vmatprep.subr.bf16.mxu0 0
  %876 = vmatpush1.bf16.msra.mxu0 0
  %877 = vmatprep.subr.bf16.mxu0 0
  %878 = vmatpush1.bf16.msra.mxu0 0
  %879 = vmatprep.subr.bf16.mxu0 %v807
  %880 = vmatpush1.bf16.msra.mxu0 %v804
  %881 = vmatprep.subr.bf16.mxu0 0
  %882 = vmatpush2.bf16.msra.mxu0 0
  %883 = vmatprep.subr.bf16.mxu0 0
  %884 = vmatpush2.bf16.msra.mxu0 0
  %885 = vmatprep.subr.bf16.mxu0 0
  %886 = vmatpush2.bf16.msra.mxu0 0
  %887 = vmatprep.subr.bf16.mxu0 0
  %888 = vmatpush2.bf16.msra.mxu0 0
  %889 = vmatprep.subr.bf16.mxu0 0
  %890 = vmatpush2.bf16.msra.mxu0 0
  %891 = vmatprep.subr.bf16.mxu0 0
  %892 = vmatpush2.bf16.msra.mxu0 0
  %893 = vmatprep.subr.bf16.mxu0 0
  %894 = vmatpush2.bf16.msra.mxu0 0
  %895 = vmatprep.subr.bf16.mxu0 0
  %896 = vmatpush2.bf16.msra.mxu0 0
  %897 = vmatprep.mubr.bf16.mxu0 0
  %898 = vmatmul.mubr.bf16.gmra.mxu0 %v792
  %v899 = vpop.f32.mrf.mxu0
  %v900 = vadd.f32 0.0, %v899
  %v901 = vpop.f32.mrf.mxu0
  %v902 = vadd.f32 0.0, %v901
  %v903 = vpop.f32.mrf.mxu0
  %v904 = vadd.f32 0.0, %v903
  %v905 = vpop.f32.mrf.mxu0
  %v906 = vadd.f32 0.0, %v905
  %907 = vmatprep.mubr.bf16.mxu0 0
  %908 = vmatmul.mubr.bf16.gmra.mxu0 %v795
  %v909 = vpop.f32.mrf.mxu0
  %v910 = vadd.f32 0.0, %v909
  %v911 = vpop.f32.mrf.mxu0
  %v912 = vadd.f32 0.0, %v911
  %v913 = vpop.f32.mrf.mxu0
  %v914 = vadd.f32 0.0, %v913
  %v915 = vpop.f32.mrf.mxu0
  %v916 = vadd.f32 0.0, %v915
  %917 = vdwg.mxu0
  %918 = vmatprep.subr.bf16.mxu0 0
  %919 = vmatpush1.bf16.msra.mxu0 0
  %920 = vmatprep.subr.bf16.mxu0 0
  %921 = vmatpush1.bf16.msra.mxu0 0
  %922 = vmatprep.subr.bf16.mxu0 0
  %923 = vmatpush1.bf16.msra.mxu0 0
  %924 = vmatprep.subr.bf16.mxu0 0
  %925 = vmatpush1.bf16.msra.mxu0 0
  %926 = vmatprep.subr.bf16.mxu0 0
  %927 = vmatpush1.bf16.msra.mxu0 0
  %928 = vmatprep.subr.bf16.mxu0 0
  %929 = vmatpush1.bf16.msra.mxu0 0
  %930 = vmatprep.subr.bf16.mxu0 0
  %931 = vmatpush1.bf16.msra.mxu0 0
  %932 = vmatprep.subr.bf16.mxu0 0
  %933 = vmatpush1.bf16.msra.mxu0 %v810
  %934 = vmatprep.subr.bf16.mxu0 0
  %935 = vmatpush2.bf16.msra.mxu0 0
  %936 = vmatprep.subr.bf16.mxu0 0
  %937 = vmatpush2.bf16.msra.mxu0 0
  %938 = vmatprep.subr.bf16.mxu0 0
  %939 = vmatpush2.bf16.msra.mxu0 0
  %940 = vmatprep.subr.bf16.mxu0 0
  %941 = vmatpush2.bf16.msra.mxu0 0
  %942 = vmatprep.subr.bf16.mxu0 0
  %943 = vmatpush2.bf16.msra.mxu0 0
  %944 = vmatprep.subr.bf16.mxu0 0
  %945 = vmatpush2.bf16.msra.mxu0 0
  %946 = vmatprep.subr.bf16.mxu0 0
  %947 = vmatpush2.bf16.msra.mxu0 0
  %948 = vmatprep.subr.bf16.mxu0 0
  %949 = vmatpush2.bf16.msra.mxu0 0
  %950 = vmatprep.mubr.bf16.mxu0 0
  %951 = vmatmul.mubr.bf16.gmra.mxu0 %v792
  %v952 = vpop.f32.mrf.mxu0
  %v953 = vadd.f32 0.0, %v952
  %v954 = vpop.f32.mrf.mxu0
  %v955 = vpop.f32.mrf.mxu0
  %v956 = vadd.f32 0.0, %v955
  %v957 = vpop.f32.mrf.mxu0
  %958 = vmatprep.mubr.bf16.mxu0 0
  %959 = vmatmul.mubr.bf16.gmra.mxu0 %v795
  %v960 = vpop.f32.mrf.mxu0
  %v961 = vadd.f32 0.0, %v960
  %v962 = vpop.f32.mrf.mxu0
  %v963 = vpop.f32.mrf.mxu0
  %v964 = vadd.f32 0.0, %v963
  %v965 = vpop.f32.mrf.mxu0
  %966 = vdwg.mxu0
  %v967 = vadd.f32 %v738, %v847
  %v968 = vadd.f32 %v739, %v849
  %v969 = vadd.f32 %v740, %v900
  %v970 = vadd.f32 %v741, %v902
  %v971 = vadd.f32 %v742, %v953
  %v972 = vadd.f32 %v743, %v851
  %v973 = vadd.f32 %v744, %v853
  %v974 = vadd.f32 %v745, %v904
  %v975 = vadd.f32 %v746, %v906
  %v976 = vadd.f32 %v747, %v956
  %v977 = vadd.f32 %v748, %v857
  %v978 = vadd.f32 %v749, %v859
  %v979 = vadd.f32 %v750, %v910
  %v980 = vadd.f32 %v751, %v912
  %v981 = vadd.f32 %v752, %v961
  %v982 = vadd.f32 %v753, %v861
  %v983 = vadd.f32 %v754, %v863
  %v984 = vadd.f32 %v755, %v914
  %v985 = vadd.f32 %v756, %v916
  %v986 = vadd.f32 %v757, %v964
  %v987 = vld [vmem:[#allocation2 + $0x4] sm:$0xff]
  %v988 = vld [vmem:[#allocation2 + $0xc] sm:$0xff]
  %v989 = vld [vmem:[#allocation2 + $0x14] sm:$0xf]
  %s990 = scalar_lea.vmem %s2, 64
  %v991 = vld [vmem:[%s990] sm:$0xf]
  %v992 = vld [vmem:[%s990 + $0x4] sm:$0xf]
  %v993 = vld [vmem:[%s990 + $0x8] sm:$0xf]
  %v994 = vld [vmem:[%s990 + $0xc] sm:$0xf]
  %v999 = vunpack.c.l.b16 %v991
  %v1000 = vunpack.c.l.b16 %v992
  %v1001 = vunpack.c.l.b16 %v993
  %v1002 = vunpack.c.l.b16 %v994
  %v1003 = vpack.c.b16 %v1000, %v999
  %v1004 = vpack.c.b16 %v1002, %v1001
  %v1008 = vunpack.c.l.b16 %v987
  %v1009 = vunpack.c.h.b16 %v987
  %v1010 = vunpack.c.l.b16 %v988
  %v1011 = vunpack.c.h.b16 %v988
  %v1012 = vunpack.c.l.b16 %v989
  %v1013 = vpack.c.b16 %v1008, %v1008
  %v1014 = vpack.c.b16 %v1009, %v1009
  %v1015 = vpack.c.b16 %v1010, %v1010
  %v1016 = vpack.c.b16 %v1011, %v1011
  %v1017 = vpack.c.b16 %v1012, %v1012
  %v1019 = vsel %vm147, %v1003, 0
  %v1022 = vsel %vm147, %v1004, 0
  %v1025 = vsel %vm154, %v1013, 0
  %v1028 = vsel %vm154, %v1014, 0
  %v1031 = vsel %vm154, %v1015, 0
  %v1034 = vsel %vm154, %v1016, 0
  %v1037 = vsel %vm154, %v1017, 0
  %1039 = vmatprep.subr.bf16.mxu0 0
  %1040 = vmatpush1.bf16.msra.mxu0 0
  %1041 = vmatprep.subr.bf16.mxu0 0
  %1042 = vmatpush1.bf16.msra.mxu0 0
  %1043 = vmatprep.subr.bf16.mxu0 0
  %1044 = vmatpush1.bf16.msra.mxu0 0
  %1045 = vmatprep.subr.bf16.mxu0 0
  %1046 = vmatpush1.bf16.msra.mxu0 0
  %1047 = vmatprep.subr.bf16.mxu0 0
  %1048 = vmatpush1.bf16.msra.mxu0 0
  %1049 = vmatprep.subr.bf16.mxu0 0
  %1050 = vmatpush1.bf16.msra.mxu0 0
  %1051 = vmatprep.subr.bf16.mxu0 0
  %1052 = vmatpush1.bf16.msra.mxu0 0
  %1053 = vmatprep.subr.bf16.mxu0 %v1028
  %1054 = vmatpush1.bf16.msra.mxu0 %v1025
  %1055 = vmatprep.subr.bf16.mxu0 0
  %1056 = vmatpush2.bf16.msra.mxu0 0
  %1057 = vmatprep.subr.bf16.mxu0 0
  %1058 = vmatpush2.bf16.msra.mxu0 0
  %1059 = vmatprep.subr.bf16.mxu0 0
  %1060 = vmatpush2.bf16.msra.mxu0 0
  %1061 = vmatprep.subr.bf16.mxu0 0
  %1062 = vmatpush2.bf16.msra.mxu0 0
  %1063 = vmatprep.subr.bf16.mxu0 0
  %1064 = vmatpush2.bf16.msra.mxu0 0
  %1065 = vmatprep.subr.bf16.mxu0 0
  %1066 = vmatpush2.bf16.msra.mxu0 0
  %1067 = vmatprep.subr.bf16.mxu0 0
  %1068 = vmatpush2.bf16.msra.mxu0 0
  %1069 = vmatprep.subr.bf16.mxu0 0
  %1070 = vmatpush2.bf16.msra.mxu0 0
  %1071 = vmatprep.mubr.bf16.mxu0 0
  %1072 = vmatmul.mubr.bf16.gmra.mxu0 %v1019
  %v1073 = vpop.f32.mrf.mxu0
  %v1074 = vadd.f32 0.0, %v1073
  %v1075 = vpop.f32.mrf.mxu0
  %v1076 = vadd.f32 0.0, %v1075
  %v1077 = vpop.f32.mrf.mxu0
  %v1078 = vadd.f32 0.0, %v1077
  %v1079 = vpop.f32.mrf.mxu0
  %v1080 = vadd.f32 0.0, %v1079
  %1081 = vmatprep.mubr.bf16.mxu0 0
  %1082 = vmatmul.mubr.bf16.gmra.mxu0 %v1022
  %v1083 = vpop.f32.mrf.mxu0
  %v1084 = vadd.f32 0.0, %v1083
  %v1085 = vpop.f32.mrf.mxu0
  %v1086 = vadd.f32 0.0, %v1085
  %v1087 = vpop.f32.mrf.mxu0
  %v1088 = vadd.f32 0.0, %v1087
  %v1089 = vpop.f32.mrf.mxu0
  %v1090 = vadd.f32 0.0, %v1089
  %1091 = vdwg.mxu0
  %1092 = vmatprep.subr.bf16.mxu0 0
  %1093 = vmatpush1.bf16.msra.mxu0 0
  %1094 = vmatprep.subr.bf16.mxu0 0
  %1095 = vmatpush1.bf16.msra.mxu0 0
  %1096 = vmatprep.subr.bf16.mxu0 0
  %1097 = vmatpush1.bf16.msra.mxu0 0
  %1098 = vmatprep.subr.bf16.mxu0 0
  %1099 = vmatpush1.bf16.msra.mxu0 0
  %1100 = vmatprep.subr.bf16.mxu0 0
  %1101 = vmatpush1.bf16.msra.mxu0 0
  %1102 = vmatprep.subr.bf16.mxu0 0
  %1103 = vmatpush1.bf16.msra.mxu0 0
  %1104 = vmatprep.subr.bf16.mxu0 0
  %1105 = vmatpush1.bf16.msra.mxu0 0
  %1106 = vmatprep.subr.bf16.mxu0 %v1034
  %1107 = vmatpush1.bf16.msra.mxu0 %v1031
  %1108 = vmatprep.subr.bf16.mxu0 0
  %1109 = vmatpush2.bf16.msra.mxu0 0
  %1110 = vmatprep.subr.bf16.mxu0 0
  %1111 = vmatpush2.bf16.msra.mxu0 0
  %1112 = vmatprep.subr.bf16.mxu0 0
  %1113 = vmatpush2.bf16.msra.mxu0 0
  %1114 = vmatprep.subr.bf16.mxu0 0
  %1115 = vmatpush2.bf16.msra.mxu0 0
  %1116 = vmatprep.subr.bf16.mxu0 0
  %1117 = vmatpush2.bf16.msra.mxu0 0
  %1118 = vmatprep.subr.bf16.mxu0 0
  %1119 = vmatpush2.bf16.msra.mxu0 0
  %1120 = vmatprep.subr.bf16.mxu0 0
  %1121 = vmatpush2.bf16.msra.mxu0 0
  %1122 = vmatprep.subr.bf16.mxu0 0
  %1123 = vmatpush2.bf16.msra.mxu0 0
  %1124 = vmatprep.mubr.bf16.mxu0 0
  %1125 = vmatmul.mubr.bf16.gmra.mxu0 %v1019
  %v1126 = vpop.f32.mrf.mxu0
  %v1127 = vadd.f32 0.0, %v1126
  %v1128 = vpop.f32.mrf.mxu0
  %v1129 = vadd.f32 0.0, %v1128
  %v1130 = vpop.f32.mrf.mxu0
  %v1131 = vadd.f32 0.0, %v1130
  %v1132 = vpop.f32.mrf.mxu0
  %v1133 = vadd.f32 0.0, %v1132
  %1134 = vmatprep.mubr.bf16.mxu0 0
  %1135 = vmatmul.mubr.bf16.gmra.mxu0 %v1022
  %v1136 = vpop.f32.mrf.mxu0
  %v1137 = vadd.f32 0.0, %v1136
  %v1138 = vpop.f32.mrf.mxu0
  %v1139 = vadd.f32 0.0, %v1138
  %v1140 = vpop.f32.mrf.mxu0
  %v1141 = vadd.f32 0.0, %v1140
  %v1142 = vpop.f32.mrf.mxu0
  %v1143 = vadd.f32 0.0, %v1142
  %1144 = vdwg.mxu0
  %1145 = vmatprep.subr.bf16.mxu0 0
  %1146 = vmatpush1.bf16.msra.mxu0 0
  %1147 = vmatprep.subr.bf16.mxu0 0
  %1148 = vmatpush1.bf16.msra.mxu0 0
  %1149 = vmatprep.subr.bf16.mxu0 0
  %1150 = vmatpush1.bf16.msra.mxu0 0
  %1151 = vmatprep.subr.bf16.mxu0 0
  %1152 = vmatpush1.bf16.msra.mxu0 0
  %1153 = vmatprep.subr.bf16.mxu0 0
  %1154 = vmatpush1.bf16.msra.mxu0 0
  %1155 = vmatprep.subr.bf16.mxu0 0
  %1156 = vmatpush1.bf16.msra.mxu0 0
  %1157 = vmatprep.subr.bf16.mxu0 0
  %1158 = vmatpush1.bf16.msra.mxu0 0
  %1159 = vmatprep.subr.bf16.mxu0 0
  %1160 = vmatpush1.bf16.msra.mxu0 %v1037
  %1161 = vmatprep.subr.bf16.mxu0 0
  %1162 = vmatpush2.bf16.msra.mxu0 0
  %1163 = vmatprep.subr.bf16.mxu0 0
  %1164 = vmatpush2.bf16.msra.mxu0 0
  %1165 = vmatprep.subr.bf16.mxu0 0
  %1166 = vmatpush2.bf16.msra.mxu0 0
  %1167 = vmatprep.subr.bf16.mxu0 0
  %1168 = vmatpush2.bf16.msra.mxu0 0
  %1169 = vmatprep.subr.bf16.mxu0 0
  %1170 = vmatpush2.bf16.msra.mxu0 0
  %1171 = vmatprep.subr.bf16.mxu0 0
  %1172 = vmatpush2.bf16.msra.mxu0 0
  %1173 = vmatprep.subr.bf16.mxu0 0
  %1174 = vmatpush2.bf16.msra.mxu0 0
  %1175 = vmatprep.subr.bf16.mxu0 0
  %1176 = vmatpush2.bf16.msra.mxu0 0
  %1177 = vmatprep.mubr.bf16.mxu0 0
  %1178 = vmatmul.mubr.bf16.gmra.mxu0 %v1019
  %v1179 = vpop.f32.mrf.mxu0
  %v1180 = vadd.f32 0.0, %v1179
  %v1181 = vpop.f32.mrf.mxu0
  %v1182 = vpop.f32.mrf.mxu0
  %v1183 = vadd.f32 0.0, %v1182
  %v1184 = vpop.f32.mrf.mxu0
  %1185 = vmatprep.mubr.bf16.mxu0 0
  %1186 = vmatmul.mubr.bf16.gmra.mxu0 %v1022
  %v1187 = vpop.f32.mrf.mxu0
  %v1188 = vadd.f32 0.0, %v1187
  %v1189 = vpop.f32.mrf.mxu0
  %v1190 = vpop.f32.mrf.mxu0
  %v1191 = vadd.f32 0.0, %v1190
  %v1192 = vpop.f32.mrf.mxu0
  %1193 = vdwg.mxu0
  %v1194 = vadd.f32 %v967, %v1074
  %v1195 = vadd.f32 %v968, %v1076
  %v1196 = vadd.f32 %v969, %v1127
  %v1197 = vadd.f32 %v970, %v1129
  %v1198 = vadd.f32 %v971, %v1180
  %v1199 = vadd.f32 %v972, %v1078
  %v1200 = vadd.f32 %v973, %v1080
  %v1201 = vadd.f32 %v974, %v1131
  %v1202 = vadd.f32 %v975, %v1133
  %v1203 = vadd.f32 %v976, %v1183
  %v1204 = vadd.f32 %v977, %v1084
  %v1205 = vadd.f32 %v978, %v1086
  %v1206 = vadd.f32 %v979, %v1137
  %v1207 = vadd.f32 %v980, %v1139
  %v1208 = vadd.f32 %v981, %v1188
  %v1209 = vadd.f32 %v982, %v1088
  %v1210 = vadd.f32 %v983, %v1090
  %v1211 = vadd.f32 %v984, %v1141
  %v1212 = vadd.f32 %v985, %v1143
  %v1213 = vadd.f32 %v986, %v1191
  %s1214 = scalar_lea.vmem %s2, 80
  %v1215 = vld [vmem:[%s1214] sm:$0xf]
  %v1216 = vld [vmem:[%s1214 + $0x4] sm:$0xf]
  %v1217 = vld [vmem:[%s1214 + $0x8] sm:$0xf]
  %v1218 = vld [vmem:[%s1214 + $0xc] sm:$0xf]
  %v1223 = vunpack.c.l.b16 %v1215
  %v1224 = vunpack.c.l.b16 %v1216
  %v1225 = vunpack.c.l.b16 %v1217
  %v1226 = vunpack.c.l.b16 %v1218
  %v1227 = vpack.c.b16 %v1224, %v1223
  %v1228 = vpack.c.b16 %v1226, %v1225
  %1229 = vrot.lane.b32.xlu0 %v1013, 127
  %v1230 = vpop.permute.xlu0 %1229
  %1231 = vrot.lane.b32.xlu0 %v1014, 127
  %v1232 = vpop.permute.xlu0 %1231
  %1233 = vrot.lane.b32.xlu0 %v1015, 127
  %v1234 = vpop.permute.xlu0 %1233
  %1235 = vrot.lane.b32.xlu0 %v1016, 127
  %v1236 = vpop.permute.xlu0 %1235
  %1237 = vrot.lane.b32.xlu0 %v1017, 127
  %v1238 = vpop.permute.xlu0 %1237
  %vm1239 = vcmask 1039360
  %v1240 = vsel %vm1239, %v1230, %v1232
  %v1241 = vsel %vm1239, %v1232, %v1234
  %v1242 = vsel %vm1239, %v1234, %v1236
  %v1243 = vsel %vm1239, %v1236, %v1238
  %v1245 = vsel %vm147, %v1227, 0
  %v1248 = vsel %vm147, %v1228, 0
  %v1251 = vsel %vm154, %v1240, 0
  %v1254 = vsel %vm154, %v1241, 0
  %v1257 = vsel %vm154, %v1242, 0
  %v1260 = vsel %vm154, %v1243, 0
  %v1263 = vsel %vm154, %v1238, 0
  %1265 = vmatprep.subr.bf16.mxu0 0
  %1266 = vmatpush1.bf16.msra.mxu0 0
  %1267 = vmatprep.subr.bf16.mxu0 0
  %1268 = vmatpush1.bf16.msra.mxu0 0
  %1269 = vmatprep.subr.bf16.mxu0 0
  %1270 = vmatpush1.bf16.msra.mxu0 0
  %1271 = vmatprep.subr.bf16.mxu0 0
  %1272 = vmatpush1.bf16.msra.mxu0 0
  %1273 = vmatprep.subr.bf16.mxu0 0
  %1274 = vmatpush1.bf16.msra.mxu0 0
  %1275 = vmatprep.subr.bf16.mxu0 0
  %1276 = vmatpush1.bf16.msra.mxu0 0
  %1277 = vmatprep.subr.bf16.mxu0 0
  %1278 = vmatpush1.bf16.msra.mxu0 0
  %1279 = vmatprep.subr.bf16.mxu0 %v1254
  %1280 = vmatpush1.bf16.msra.mxu0 %v1251
  %1281 = vmatprep.subr.bf16.mxu0 0
  %1282 = vmatpush2.bf16.msra.mxu0 0
  %1283 = vmatprep.subr.bf16.mxu0 0
  %1284 = vmatpush2.bf16.msra.mxu0 0
  %1285 = vmatprep.subr.bf16.mxu0 0
  %1286 = vmatpush2.bf16.msra.mxu0 0
  %1287 = vmatprep.subr.bf16.mxu0 0
  %1288 = vmatpush2.bf16.msra.mxu0 0
  %1289 = vmatprep.subr.bf16.mxu0 0
  %1290 = vmatpush2.bf16.msra.mxu0 0
  %1291 = vmatprep.subr.bf16.mxu0 0
  %1292 = vmatpush2.bf16.msra.mxu0 0
  %1293 = vmatprep.subr.bf16.mxu0 0
  %1294 = vmatpush2.bf16.msra.mxu0 0
  %1295 = vmatprep.subr.bf16.mxu0 0
  %1296 = vmatpush2.bf16.msra.mxu0 0
  %1297 = vmatprep.mubr.bf16.mxu0 0
  %1298 = vmatmul.mubr.bf16.gmra.mxu0 %v1245
  %v1299 = vpop.f32.mrf.mxu0
  %v1300 = vadd.f32 0.0, %v1299
  %v1301 = vpop.f32.mrf.mxu0
  %v1302 = vadd.f32 0.0, %v1301
  %v1303 = vpop.f32.mrf.mxu0
  %v1304 = vadd.f32 0.0, %v1303
  %v1305 = vpop.f32.mrf.mxu0
  %v1306 = vadd.f32 0.0, %v1305
  %1307 = vmatprep.mubr.bf16.mxu0 0
  %1308 = vmatmul.mubr.bf16.gmra.mxu0 %v1248
  %v1309 = vpop.f32.mrf.mxu0
  %v1310 = vadd.f32 0.0, %v1309
  %v1311 = vpop.f32.mrf.mxu0
  %v1312 = vadd.f32 0.0, %v1311
  %v1313 = vpop.f32.mrf.mxu0
  %v1314 = vadd.f32 0.0, %v1313
  %v1315 = vpop.f32.mrf.mxu0
  %v1316 = vadd.f32 0.0, %v1315
  %1317 = vdwg.mxu0
  %1318 = vmatprep.subr.bf16.mxu0 0
  %1319 = vmatpush1.bf16.msra.mxu0 0
  %1320 = vmatprep.subr.bf16.mxu0 0
  %1321 = vmatpush1.bf16.msra.mxu0 0
  %1322 = vmatprep.subr.bf16.mxu0 0
  %1323 = vmatpush1.bf16.msra.mxu0 0
  %1324 = vmatprep.subr.bf16.mxu0 0
  %1325 = vmatpush1.bf16.msra.mxu0 0
  %1326 = vmatprep.subr.bf16.mxu0 0
  %1327 = vmatpush1.bf16.msra.mxu0 0
  %1328 = vmatprep.subr.bf16.mxu0 0
  %1329 = vmatpush1.bf16.msra.mxu0 0
  %1330 = vmatprep.subr.bf16.mxu0 0
  %1331 = vmatpush1.bf16.msra.mxu0 0
  %1332 = vmatprep.subr.bf16.mxu0 %v1260
  %1333 = vmatpush1.bf16.msra.mxu0 %v1257
  %1334 = vmatprep.subr.bf16.mxu0 0
  %1335 = vmatpush2.bf16.msra.mxu0 0
  %1336 = vmatprep.subr.bf16.mxu0 0
  %1337 = vmatpush2.bf16.msra.mxu0 0
  %1338 = vmatprep.subr.bf16.mxu0 0
  %1339 = vmatpush2.bf16.msra.mxu0 0
  %1340 = vmatprep.subr.bf16.mxu0 0
  %1341 = vmatpush2.bf16.msra.mxu0 0
  %1342 = vmatprep.subr.bf16.mxu0 0
  %1343 = vmatpush2.bf16.msra.mxu0 0
  %1344 = vmatprep.subr.bf16.mxu0 0
  %1345 = vmatpush2.bf16.msra.mxu0 0
  %1346 = vmatprep.subr.bf16.mxu0 0
  %1347 = vmatpush2.bf16.msra.mxu0 0
  %1348 = vmatprep.subr.bf16.mxu0 0
  %1349 = vmatpush2.bf16.msra.mxu0 0
  %1350 = vmatprep.mubr.bf16.mxu0 0
  %1351 = vmatmul.mubr.bf16.gmra.mxu0 %v1245
  %v1352 = vpop.f32.mrf.mxu0
  %v1353 = vadd.f32 0.0, %v1352
  %v1354 = vpop.f32.mrf.mxu0
  %v1355 = vadd.f32 0.0, %v1354
  %v1356 = vpop.f32.mrf.mxu0
  %v1357 = vadd.f32 0.0, %v1356
  %v1358 = vpop.f32.mrf.mxu0
  %v1359 = vadd.f32 0.0, %v1358
  %1360 = vmatprep.mubr.bf16.mxu0 0
  %1361 = vmatmul.mubr.bf16.gmra.mxu0 %v1248
  %v1362 = vpop.f32.mrf.mxu0
  %v1363 = vadd.f32 0.0, %v1362
  %v1364 = vpop.f32.mrf.mxu0
  %v1365 = vadd.f32 0.0, %v1364
  %v1366 = vpop.f32.mrf.mxu0
  %v1367 = vadd.f32 0.0, %v1366
  %v1368 = vpop.f32.mrf.mxu0
  %v1369 = vadd.f32 0.0, %v1368
  %1370 = vdwg.mxu0
  %1371 = vmatprep.subr.bf16.mxu0 0
  %1372 = vmatpush1.bf16.msra.mxu0 0
  %1373 = vmatprep.subr.bf16.mxu0 0
  %1374 = vmatpush1.bf16.msra.mxu0 0
  %1375 = vmatprep.subr.bf16.mxu0 0
  %1376 = vmatpush1.bf16.msra.mxu0 0
  %1377 = vmatprep.subr.bf16.mxu0 0
  %1378 = vmatpush1.bf16.msra.mxu0 0
  %1379 = vmatprep.subr.bf16.mxu0 0
  %1380 = vmatpush1.bf16.msra.mxu0 0
  %1381 = vmatprep.subr.bf16.mxu0 0
  %1382 = vmatpush1.bf16.msra.mxu0 0
  %1383 = vmatprep.subr.bf16.mxu0 0
  %1384 = vmatpush1.bf16.msra.mxu0 0
  %1385 = vmatprep.subr.bf16.mxu0 0
  %1386 = vmatpush1.bf16.msra.mxu0 %v1263
  %1387 = vmatprep.subr.bf16.mxu0 0
  %1388 = vmatpush2.bf16.msra.mxu0 0
  %1389 = vmatprep.subr.bf16.mxu0 0
  %1390 = vmatpush2.bf16.msra.mxu0 0
  %1391 = vmatprep.subr.bf16.mxu0 0
  %1392 = vmatpush2.bf16.msra.mxu0 0
  %1393 = vmatprep.subr.bf16.mxu0 0
  %1394 = vmatpush2.bf16.msra.mxu0 0
  %1395 = vmatprep.subr.bf16.mxu0 0
  %1396 = vmatpush2.bf16.msra.mxu0 0
  %1397 = vmatprep.subr.bf16.mxu0 0
  %1398 = vmatpush2.bf16.msra.mxu0 0
  %1399 = vmatprep.subr.bf16.mxu0 0
  %1400 = vmatpush2.bf16.msra.mxu0 0
  %1401 = vmatprep.subr.bf16.mxu0 0
  %1402 = vmatpush2.bf16.msra.mxu0 0
  %1403 = vmatprep.mubr.bf16.mxu0 0
  %1404 = vmatmul.mubr.bf16.gmra.mxu0 %v1245
  %v1405 = vpop.f32.mrf.mxu0
  %v1406 = vadd.f32 0.0, %v1405
  %v1407 = vpop.f32.mrf.mxu0
  %v1408 = vpop.f32.mrf.mxu0
  %v1409 = vadd.f32 0.0, %v1408
  %v1410 = vpop.f32.mrf.mxu0
  %1411 = vmatprep.mubr.bf16.mxu0 0
  %1412 = vmatmul.mubr.bf16.gmra.mxu0 %v1248
  %v1413 = vpop.f32.mrf.mxu0
  %v1414 = vadd.f32 0.0, %v1413
  %v1415 = vpop.f32.mrf.mxu0
  %v1416 = vpop.f32.mrf.mxu0
  %v1417 = vadd.f32 0.0, %v1416
  %v1418 = vpop.f32.mrf.mxu0
  %1419 = vdwg.mxu0
  %v1420 = vadd.f32 %v1194, %v1300
  %v1421 = vadd.f32 %v1195, %v1302
  %v1422 = vadd.f32 %v1196, %v1353
  %v1423 = vadd.f32 %v1197, %v1355
  %v1424 = vadd.f32 %v1198, %v1406
  %v1425 = vadd.f32 %v1199, %v1304
  %v1426 = vadd.f32 %v1200, %v1306
  %v1427 = vadd.f32 %v1201, %v1357
  %v1428 = vadd.f32 %v1202, %v1359
  %v1429 = vadd.f32 %v1203, %v1409
  %v1430 = vadd.f32 %v1204, %v1310
  %v1431 = vadd.f32 %v1205, %v1312
  %v1432 = vadd.f32 %v1206, %v1363
  %v1433 = vadd.f32 %v1207, %v1365
  %v1434 = vadd.f32 %v1208, %v1414
  %v1435 = vadd.f32 %v1209, %v1314
  %v1436 = vadd.f32 %v1210, %v1316
  %v1437 = vadd.f32 %v1211, %v1367
  %v1438 = vadd.f32 %v1212, %v1369
  %v1439 = vadd.f32 %v1213, %v1417
  %s1440 = scalar_lea.vmem %s2, 96
  %v1441 = vld [vmem:[%s1440] sm:$0xf]
  %v1442 = vld [vmem:[%s1440 + $0x4] sm:$0xf]
  %v1443 = vld [vmem:[%s1440 + $0x8] sm:$0xf]
  %v1444 = vld [vmem:[%s1440 + $0xc] sm:$0xf]
  %v1449 = vunpack.c.l.b16 %v1441
  %v1450 = vunpack.c.l.b16 %v1442
  %v1451 = vunpack.c.l.b16 %v1443
  %v1452 = vunpack.c.l.b16 %v1444
  %v1453 = vpack.c.b16 %v1450, %v1449
  %v1454 = vpack.c.b16 %v1452, %v1451
  %1455 = vrot.lane.b32.xlu0 %v1013, 111
  %v1456 = vpop.permute.xlu0 %1455
  %1457 = vrot.lane.b32.xlu0 %v1014, 111
  %v1458 = vpop.permute.xlu0 %1457
  %1459 = vrot.lane.b32.xlu0 %v1015, 111
  %v1460 = vpop.permute.xlu0 %1459
  %1461 = vrot.lane.b32.xlu0 %v1016, 111
  %v1462 = vpop.permute.xlu0 %1461
  %1463 = vrot.lane.b32.xlu0 %v1017, 111
  %v1464 = vpop.permute.xlu0 %1463
  %vm1465 = vcmask 908288
  %v1466 = vsel %vm1465, %v1456, %v1458
  %v1467 = vsel %vm1465, %v1458, %v1460
  %v1468 = vsel %vm1465, %v1460, %v1462
  %v1469 = vsel %vm1465, %v1462, %v1464
  %v1471 = vsel %vm147, %v1453, 0
  %v1474 = vsel %vm147, %v1454, 0
  %v1477 = vsel %vm154, %v1466, 0
  %v1480 = vsel %vm154, %v1467, 0
  %v1483 = vsel %vm154, %v1468, 0
  %v1486 = vsel %vm154, %v1469, 0
  %v1489 = vsel %vm154, %v1464, 0
  %1491 = vmatprep.subr.bf16.mxu0 0
  %1492 = vmatpush1.bf16.msra.mxu0 0
  %1493 = vmatprep.subr.bf16.mxu0 0
  %1494 = vmatpush1.bf16.msra.mxu0 0
  %1495 = vmatprep.subr.bf16.mxu0 0
  %1496 = vmatpush1.bf16.msra.mxu0 0
  %1497 = vmatprep.subr.bf16.mxu0 0
  %1498 = vmatpush1.bf16.msra.mxu0 0
  %1499 = vmatprep.subr.bf16.mxu0 0
  %1500 = vmatpush1.bf16.msra.mxu0 0
  %1501 = vmatprep.subr.bf16.mxu0 0
  %1502 = vmatpush1.bf16.msra.mxu0 0
  %1503 = vmatprep.subr.bf16.mxu0 0
  %1504 = vmatpush1.bf16.msra.mxu0 0
  %1505 = vmatprep.subr.bf16.mxu0 %v1480
  %1506 = vmatpush1.bf16.msra.mxu0 %v1477
  %1507 = vmatprep.subr.bf16.mxu0 0
  %1508 = vmatpush2.bf16.msra.mxu0 0
  %1509 = vmatprep.subr.bf16.mxu0 0
  %1510 = vmatpush2.bf16.msra.mxu0 0
  %1511 = vmatprep.subr.bf16.mxu0 0
  %1512 = vmatpush2.bf16.msra.mxu0 0
  %1513 = vmatprep.subr.bf16.mxu0 0
  %1514 = vmatpush2.bf16.msra.mxu0 0
  %1515 = vmatprep.subr.bf16.mxu0 0
  %1516 = vmatpush2.bf16.msra.mxu0 0
  %1517 = vmatprep.subr.bf16.mxu0 0
  %1518 = vmatpush2.bf16.msra.mxu0 0
  %1519 = vmatprep.subr.bf16.mxu0 0
  %1520 = vmatpush2.bf16.msra.mxu0 0
  %1521 = vmatprep.subr.bf16.mxu0 0
  %1522 = vmatpush2.bf16.msra.mxu0 0
  %1523 = vmatprep.mubr.bf16.mxu0 0
  %1524 = vmatmul.mubr.bf16.gmra.mxu0 %v1471
  %v1525 = vpop.f32.mrf.mxu0
  %v1526 = vadd.f32 0.0, %v1525
  %v1527 = vpop.f32.mrf.mxu0
  %v1528 = vadd.f32 0.0, %v1527
  %v1529 = vpop.f32.mrf.mxu0
  %v1530 = vadd.f32 0.0, %v1529
  %v1531 = vpop.f32.mrf.mxu0
  %v1532 = vadd.f32 0.0, %v1531
  %1533 = vmatprep.mubr.bf16.mxu0 0
  %1534 = vmatmul.mubr.bf16.gmra.mxu0 %v1474
  %v1535 = vpop.f32.mrf.mxu0
  %v1536 = vadd.f32 0.0, %v1535
  %v1537 = vpop.f32.mrf.mxu0
  %v1538 = vadd.f32 0.0, %v1537
  %v1539 = vpop.f32.mrf.mxu0
  %v1540 = vadd.f32 0.0, %v1539
  %v1541 = vpop.f32.mrf.mxu0
  %v1542 = vadd.f32 0.0, %v1541
  %1543 = vdwg.mxu0
  %1544 = vmatprep.subr.bf16.mxu0 0
  %1545 = vmatpush1.bf16.msra.mxu0 0
  %1546 = vmatprep.subr.bf16.mxu0 0
  %1547 = vmatpush1.bf16.msra.mxu0 0
  %1548 = vmatprep.subr.bf16.mxu0 0
  %1549 = vmatpush1.bf16.msra.mxu0 0
  %1550 = vmatprep.subr.bf16.mxu0 0
  %1551 = vmatpush1.bf16.msra.mxu0 0
  %1552 = vmatprep.subr.bf16.mxu0 0
  %1553 = vmatpush1.bf16.msra.mxu0 0
  %1554 = vmatprep.subr.bf16.mxu0 0
  %1555 = vmatpush1.bf16.msra.mxu0 0
  %1556 = vmatprep.subr.bf16.mxu0 0
  %1557 = vmatpush1.bf16.msra.mxu0 0
  %1558 = vmatprep.subr.bf16.mxu0 %v1486
  %1559 = vmatpush1.bf16.msra.mxu0 %v1483
  %1560 = vmatprep.subr.bf16.mxu0 0
  %1561 = vmatpush2.bf16.msra.mxu0 0
  %1562 = vmatprep.subr.bf16.mxu0 0
  %1563 = vmatpush2.bf16.msra.mxu0 0
  %1564 = vmatprep.subr.bf16.mxu0 0
  %1565 = vmatpush2.bf16.msra.mxu0 0
  %1566 = vmatprep.subr.bf16.mxu0 0
  %1567 = vmatpush2.bf16.msra.mxu0 0
  %1568 = vmatprep.subr.bf16.mxu0 0
  %1569 = vmatpush2.bf16.msra.mxu0 0
  %1570 = vmatprep.subr.bf16.mxu0 0
  %1571 = vmatpush2.bf16.msra.mxu0 0
  %1572 = vmatprep.subr.bf16.mxu0 0
  %1573 = vmatpush2.bf16.msra.mxu0 0
  %1574 = vmatprep.subr.bf16.mxu0 0
  %1575 = vmatpush2.bf16.msra.mxu0 0
  %1576 = vmatprep.mubr.bf16.mxu0 0
  %1577 = vmatmul.mubr.bf16.gmra.mxu0 %v1471
  %v1578 = vpop.f32.mrf.mxu0
  %v1579 = vadd.f32 0.0, %v1578
  %v1580 = vpop.f32.mrf.mxu0
  %v1581 = vadd.f32 0.0, %v1580
  %v1582 = vpop.f32.mrf.mxu0
  %v1583 = vadd.f32 0.0, %v1582
  %v1584 = vpop.f32.mrf.mxu0
  %v1585 = vadd.f32 0.0, %v1584
  %1586 = vmatprep.mubr.bf16.mxu0 0
  %1587 = vmatmul.mubr.bf16.gmra.mxu0 %v1474
  %v1588 = vpop.f32.mrf.mxu0
  %v1589 = vadd.f32 0.0, %v1588
  %v1590 = vpop.f32.mrf.mxu0
  %v1591 = vadd.f32 0.0, %v1590
  %v1592 = vpop.f32.mrf.mxu0
  %v1593 = vadd.f32 0.0, %v1592
  %v1594 = vpop.f32.mrf.mxu0
  %v1595 = vadd.f32 0.0, %v1594
  %1596 = vdwg.mxu0
  %1597 = vmatprep.subr.bf16.mxu0 0
  %1598 = vmatpush1.bf16.msra.mxu0 0
  %1599 = vmatprep.subr.bf16.mxu0 0
  %1600 = vmatpush1.bf16.msra.mxu0 0
  %1601 = vmatprep.subr.bf16.mxu0 0
  %1602 = vmatpush1.bf16.msra.mxu0 0
  %1603 = vmatprep.subr.bf16.mxu0 0
  %1604 = vmatpush1.bf16.msra.mxu0 0
  %1605 = vmatprep.subr.bf16.mxu0 0
  %1606 = vmatpush1.bf16.msra.mxu0 0
  %1607 = vmatprep.subr.bf16.mxu0 0
  %1608 = vmatpush1.bf16.msra.mxu0 0
  %1609 = vmatprep.subr.bf16.mxu0 0
  %1610 = vmatpush1.bf16.msra.mxu0 0
  %1611 = vmatprep.subr.bf16.mxu0 0
  %1612 = vmatpush1.bf16.msra.mxu0 %v1489
  %1613 = vmatprep.subr.bf16.mxu0 0
  %1614 = vmatpush2.bf16.msra.mxu0 0
  %1615 = vmatprep.subr.bf16.mxu0 0
  %1616 = vmatpush2.bf16.msra.mxu0 0
  %1617 = vmatprep.subr.bf16.mxu0 0
  %1618 = vmatpush2.bf16.msra.mxu0 0
  %1619 = vmatprep.subr.bf16.mxu0 0
  %1620 = vmatpush2.bf16.msra.mxu0 0
  %1621 = vmatprep.subr.bf16.mxu0 0
  %1622 = vmatpush2.bf16.msra.mxu0 0
  %1623 = vmatprep.subr.bf16.mxu0 0
  %1624 = vmatpush2.bf16.msra.mxu0 0
  %1625 = vmatprep.subr.bf16.mxu0 0
  %1626 = vmatpush2.bf16.msra.mxu0 0
  %1627 = vmatprep.subr.bf16.mxu0 0
  %1628 = vmatpush2.bf16.msra.mxu0 0
  %1629 = vmatprep.mubr.bf16.mxu0 0
  %1630 = vmatmul.mubr.bf16.gmra.mxu0 %v1471
  %v1631 = vpop.f32.mrf.mxu0
  %v1632 = vadd.f32 0.0, %v1631
  %v1633 = vpop.f32.mrf.mxu0
  %v1634 = vpop.f32.mrf.mxu0
  %v1635 = vadd.f32 0.0, %v1634
  %v1636 = vpop.f32.mrf.mxu0
  %1637 = vmatprep.mubr.bf16.mxu0 0
  %1638 = vmatmul.mubr.bf16.gmra.mxu0 %v1474
  %v1639 = vpop.f32.mrf.mxu0
  %v1640 = vadd.f32 0.0, %v1639
  %v1641 = vpop.f32.mrf.mxu0
  %v1642 = vpop.f32.mrf.mxu0
  %v1643 = vadd.f32 0.0, %v1642
  %v1644 = vpop.f32.mrf.mxu0
  %1645 = vdwg.mxu0
  %v1646 = vadd.f32 %v1420, %v1526
  %v1647 = vadd.f32 %v1421, %v1528
  %v1648 = vadd.f32 %v1422, %v1579
  %v1649 = vadd.f32 %v1423, %v1581
  %v1650 = vadd.f32 %v1424, %v1632
  %v1651 = vadd.f32 %v1425, %v1530
  %v1652 = vadd.f32 %v1426, %v1532
  %v1653 = vadd.f32 %v1427, %v1583
  %v1654 = vadd.f32 %v1428, %v1585
  %v1655 = vadd.f32 %v1429, %v1635
  %v1656 = vadd.f32 %v1430, %v1536
  %v1657 = vadd.f32 %v1431, %v1538
  %v1658 = vadd.f32 %v1432, %v1589
  %v1659 = vadd.f32 %v1433, %v1591
  %v1660 = vadd.f32 %v1434, %v1640
  %v1661 = vadd.f32 %v1435, %v1540
  %v1662 = vadd.f32 %v1436, %v1542
  %v1663 = vadd.f32 %v1437, %v1593
  %v1664 = vadd.f32 %v1438, %v1595
  %v1665 = vadd.f32 %v1439, %v1643
  %s1666 = scalar_lea.vmem %s2, 112
  %v1667 = vld [vmem:[%s1666] sm:$0xf]
  %v1668 = vld [vmem:[%s1666 + $0x4] sm:$0xf]
  %v1669 = vld [vmem:[%s1666 + $0x8] sm:$0xf]
  %v1670 = vld [vmem:[%s1666 + $0xc] sm:$0xf]
  %v1675 = vunpack.c.l.b16 %v1667
  %v1676 = vunpack.c.l.b16 %v1668
  %v1677 = vunpack.c.l.b16 %v1669
  %v1678 = vunpack.c.l.b16 %v1670
  %v1679 = vpack.c.b16 %v1676, %v1675
  %v1680 = vpack.c.b16 %v1678, %v1677
  %1681 = vrot.lane.b32.xlu0 %v1013, 110
  %v1682 = vpop.permute.xlu0 %1681
  %1683 = vrot.lane.b32.xlu0 %v1014, 110
  %v1684 = vpop.permute.xlu0 %1683
  %1685 = vrot.lane.b32.xlu0 %v1015, 110
  %v1686 = vpop.permute.xlu0 %1685
  %1687 = vrot.lane.b32.xlu0 %v1016, 110
  %v1688 = vpop.permute.xlu0 %1687
  %1689 = vrot.lane.b32.xlu0 %v1017, 110
  %v1690 = vpop.permute.xlu0 %1689
  %vm1691 = vcmask 900096
  %v1692 = vsel %vm1691, %v1682, %v1684
  %v1693 = vsel %vm1691, %v1684, %v1686
  %v1694 = vsel %vm1691, %v1686, %v1688
  %v1695 = vsel %vm1691, %v1688, %v1690
  %v1697 = vsel %vm147, %v1679, 0
  %v1700 = vsel %vm147, %v1680, 0
  %v1703 = vsel %vm154, %v1692, 0
  %v1706 = vsel %vm154, %v1693, 0
  %v1709 = vsel %vm154, %v1694, 0
  %v1712 = vsel %vm154, %v1695, 0
  %v1715 = vsel %vm154, %v1690, 0
  %1717 = vmatprep.subr.bf16.mxu0 0
  %1718 = vmatpush1.bf16.msra.mxu0 0
  %1719 = vmatprep.subr.bf16.mxu0 0
  %1720 = vmatpush1.bf16.msra.mxu0 0
  %1721 = vmatprep.subr.bf16.mxu0 0
  %1722 = vmatpush1.bf16.msra.mxu0 0
  %1723 = vmatprep.subr.bf16.mxu0 0
  %1724 = vmatpush1.bf16.msra.mxu0 0
  %1725 = vmatprep.subr.bf16.mxu0 0
  %1726 = vmatpush1.bf16.msra.mxu0 0
  %1727 = vmatprep.subr.bf16.mxu0 0
  %1728 = vmatpush1.bf16.msra.mxu0 0
  %1729 = vmatprep.subr.bf16.mxu0 0
  %1730 = vmatpush1.bf16.msra.mxu0 0
  %1731 = vmatprep.subr.bf16.mxu0 %v1706
  %1732 = vmatpush1.bf16.msra.mxu0 %v1703
  %1733 = vmatprep.subr.bf16.mxu0 0
  %1734 = vmatpush2.bf16.msra.mxu0 0
  %1735 = vmatprep.subr.bf16.mxu0 0
  %1736 = vmatpush2.bf16.msra.mxu0 0
  %1737 = vmatprep.subr.bf16.mxu0 0
  %1738 = vmatpush2.bf16.msra.mxu0 0
  %1739 = vmatprep.subr.bf16.mxu0 0
  %1740 = vmatpush2.bf16.msra.mxu0 0
  %1741 = vmatprep.subr.bf16.mxu0 0
  %1742 = vmatpush2.bf16.msra.mxu0 0
  %1743 = vmatprep.subr.bf16.mxu0 0
  %1744 = vmatpush2.bf16.msra.mxu0 0
  %1745 = vmatprep.subr.bf16.mxu0 0
  %1746 = vmatpush2.bf16.msra.mxu0 0
  %1747 = vmatprep.subr.bf16.mxu0 0
  %1748 = vmatpush2.bf16.msra.mxu0 0
  %1749 = vmatprep.mubr.bf16.mxu0 0
  %1750 = vmatmul.mubr.bf16.gmra.mxu0 %v1697
  %v1751 = vpop.f32.mrf.mxu0
  %v1752 = vadd.f32 0.0, %v1751
  %v1753 = vpop.f32.mrf.mxu0
  %v1754 = vadd.f32 0.0, %v1753
  %v1755 = vpop.f32.mrf.mxu0
  %v1756 = vadd.f32 0.0, %v1755
  %v1757 = vpop.f32.mrf.mxu0
  %v1758 = vadd.f32 0.0, %v1757
  %1759 = vmatprep.mubr.bf16.mxu0 0
  %1760 = vmatmul.mubr.bf16.gmra.mxu0 %v1700
  %v1761 = vpop.f32.mrf.mxu0
  %v1762 = vadd.f32 0.0, %v1761
  %v1763 = vpop.f32.mrf.mxu0
  %v1764 = vadd.f32 0.0, %v1763
  %v1765 = vpop.f32.mrf.mxu0
  %v1766 = vadd.f32 0.0, %v1765
  %v1767 = vpop.f32.mrf.mxu0
  %v1768 = vadd.f32 0.0, %v1767
  %1769 = vdwg.mxu0
  %1770 = vmatprep.subr.bf16.mxu0 0
  %1771 = vmatpush1.bf16.msra.mxu0 0
  %1772 = vmatprep.subr.bf16.mxu0 0
  %1773 = vmatpush1.bf16.msra.mxu0 0
  %1774 = vmatprep.subr.bf16.mxu0 0
  %1775 = vmatpush1.bf16.msra.mxu0 0
  %1776 = vmatprep.subr.bf16.mxu0 0
  %1777 = vmatpush1.bf16.msra.mxu0 0
  %1778 = vmatprep.subr.bf16.mxu0 0
  %1779 = vmatpush1.bf16.msra.mxu0 0
  %1780 = vmatprep.subr.bf16.mxu0 0
  %1781 = vmatpush1.bf16.msra.mxu0 0
  %1782 = vmatprep.subr.bf16.mxu0 0
  %1783 = vmatpush1.bf16.msra.mxu0 0
  %1784 = vmatprep.subr.bf16.mxu0 %v1712
  %1785 = vmatpush1.bf16.msra.mxu0 %v1709
  %1786 = vmatprep.subr.bf16.mxu0 0
  %1787 = vmatpush2.bf16.msra.mxu0 0
  %1788 = vmatprep.subr.bf16.mxu0 0
  %1789 = vmatpush2.bf16.msra.mxu0 0
  %1790 = vmatprep.subr.bf16.mxu0 0
  %1791 = vmatpush2.bf16.msra.mxu0 0
  %1792 = vmatprep.subr.bf16.mxu0 0
  %1793 = vmatpush2.bf16.msra.mxu0 0
  %1794 = vmatprep.subr.bf16.mxu0 0
  %1795 = vmatpush2.bf16.msra.mxu0 0
  %1796 = vmatprep.subr.bf16.mxu0 0
  %1797 = vmatpush2.bf16.msra.mxu0 0
  %1798 = vmatprep.subr.bf16.mxu0 0
  %1799 = vmatpush2.bf16.msra.mxu0 0
  %1800 = vmatprep.subr.bf16.mxu0 0
  %1801 = vmatpush2.bf16.msra.mxu0 0
  %1802 = vmatprep.mubr.bf16.mxu0 0
  %1803 = vmatmul.mubr.bf16.gmra.mxu0 %v1697
  %v1804 = vpop.f32.mrf.mxu0
  %v1805 = vadd.f32 0.0, %v1804
  %v1806 = vpop.f32.mrf.mxu0
  %v1807 = vadd.f32 0.0, %v1806
  %v1808 = vpop.f32.mrf.mxu0
  %v1809 = vadd.f32 0.0, %v1808
  %v1810 = vpop.f32.mrf.mxu0
  %v1811 = vadd.f32 0.0, %v1810
  %1812 = vmatprep.mubr.bf16.mxu0 0
  %1813 = vmatmul.mubr.bf16.gmra.mxu0 %v1700
  %v1814 = vpop.f32.mrf.mxu0
  %v1815 = vadd.f32 0.0, %v1814
  %v1816 = vpop.f32.mrf.mxu0
  %v1817 = vadd.f32 0.0, %v1816
  %v1818 = vpop.f32.mrf.mxu0
  %v1819 = vadd.f32 0.0, %v1818
  %v1820 = vpop.f32.mrf.mxu0
  %v1821 = vadd.f32 0.0, %v1820
  %1822 = vdwg.mxu0
  %1823 = vmatprep.subr.bf16.mxu0 0
  %1824 = vmatpush1.bf16.msra.mxu0 0
  %1825 = vmatprep.subr.bf16.mxu0 0
  %1826 = vmatpush1.bf16.msra.mxu0 0
  %1827 = vmatprep.subr.bf16.mxu0 0
  %1828 = vmatpush1.bf16.msra.mxu0 0
  %1829 = vmatprep.subr.bf16.mxu0 0
  %1830 = vmatpush1.bf16.msra.mxu0 0
  %1831 = vmatprep.subr.bf16.mxu0 0
  %1832 = vmatpush1.bf16.msra.mxu0 0
  %1833 = vmatprep.subr.bf16.mxu0 0
  %1834 = vmatpush1.bf16.msra.mxu0 0
  %1835 = vmatprep.subr.bf16.mxu0 0
  %1836 = vmatpush1.bf16.msra.mxu0 0
  %1837 = vmatprep.subr.bf16.mxu0 0
  %1838 = vmatpush1.bf16.msra.mxu0 %v1715
  %1839 = vmatprep.subr.bf16.mxu0 0
  %1840 = vmatpush2.bf16.msra.mxu0 0
  %1841 = vmatprep.subr.bf16.mxu0 0
  %1842 = vmatpush2.bf16.msra.mxu0 0
  %1843 = vmatprep.subr.bf16.mxu0 0
  %1844 = vmatpush2.bf16.msra.mxu0 0
  %1845 = vmatprep.subr.bf16.mxu0 0
  %1846 = vmatpush2.bf16.msra.mxu0 0
  %1847 = vmatprep.subr.bf16.mxu0 0
  %1848 = vmatpush2.bf16.msra.mxu0 0
  %1849 = vmatprep.subr.bf16.mxu0 0
  %1850 = vmatpush2.bf16.msra.mxu0 0
  %1851 = vmatprep.subr.bf16.mxu0 0
  %1852 = vmatpush2.bf16.msra.mxu0 0
  %1853 = vmatprep.subr.bf16.mxu0 0
  %1854 = vmatpush2.bf16.msra.mxu0 0
  %1855 = vmatprep.mubr.bf16.mxu0 0
  %1856 = vmatmul.mubr.bf16.gmra.mxu0 %v1697
  %v1857 = vpop.f32.mrf.mxu0
  %v1858 = vadd.f32 0.0, %v1857
  %v1859 = vpop.f32.mrf.mxu0
  %v1860 = vpop.f32.mrf.mxu0
  %v1861 = vadd.f32 0.0, %v1860
  %v1862 = vpop.f32.mrf.mxu0
  %1863 = vmatprep.mubr.bf16.mxu0 0
  %1864 = vmatmul.mubr.bf16.gmra.mxu0 %v1700
  %v1865 = vpop.f32.mrf.mxu0
  %v1866 = vadd.f32 0.0, %v1865
  %v1867 = vpop.f32.mrf.mxu0
  %v1868 = vpop.f32.mrf.mxu0
  %v1869 = vadd.f32 0.0, %v1868
  %v1870 = vpop.f32.mrf.mxu0
  %1871 = vdwg.mxu0
  %v1872 = vadd.f32 %v1646, %v1752
  %v1873 = vadd.f32 %v1647, %v1754
  %v1874 = vadd.f32 %v1648, %v1805
  %v1875 = vadd.f32 %v1649, %v1807
  %v1876 = vadd.f32 %v1650, %v1858
  %v1877 = vadd.f32 %v1651, %v1756
  %v1878 = vadd.f32 %v1652, %v1758
  %v1879 = vadd.f32 %v1653, %v1809
  %v1880 = vadd.f32 %v1654, %v1811
  %v1881 = vadd.f32 %v1655, %v1861
  %v1882 = vadd.f32 %v1656, %v1762
  %v1883 = vadd.f32 %v1657, %v1764
  %v1884 = vadd.f32 %v1658, %v1815
  %v1885 = vadd.f32 %v1659, %v1817
  %v1886 = vadd.f32 %v1660, %v1866
  %v1887 = vadd.f32 %v1661, %v1766
  %v1888 = vadd.f32 %v1662, %v1768
  %v1889 = vadd.f32 %v1663, %v1819
  %v1890 = vadd.f32 %v1664, %v1821
  %v1891 = vadd.f32 %v1665, %v1869
  %s1892 = scalar_lea.vmem %s2, 128
  %v1893 = vld [vmem:[%s1892] sm:$0xf]
  %v1894 = vld [vmem:[%s1892 + $0x4] sm:$0xf]
  %v1895 = vld [vmem:[%s1892 + $0x8] sm:$0xf]
  %v1896 = vld [vmem:[%s1892 + $0xc] sm:$0xf]
  %v1901 = vunpack.c.l.b16 %v1893
  %v1902 = vunpack.c.l.b16 %v1894
  %v1903 = vunpack.c.l.b16 %v1895
  %v1904 = vunpack.c.l.b16 %v1896
  %v1905 = vpack.c.b16 %v1902, %v1901
  %v1906 = vpack.c.b16 %v1904, %v1903
  %1907 = vrot.lane.b32.xlu0 %v1013, 109
  %v1908 = vpop.permute.xlu0 %1907
  %1909 = vrot.lane.b32.xlu0 %v1014, 109
  %v1910 = vpop.permute.xlu0 %1909
  %1911 = vrot.lane.b32.xlu0 %v1015, 109
  %v1912 = vpop.permute.xlu0 %1911
  %1913 = vrot.lane.b32.xlu0 %v1016, 109
  %v1914 = vpop.permute.xlu0 %1913
  %1915 = vrot.lane.b32.xlu0 %v1017, 109
  %v1916 = vpop.permute.xlu0 %1915
  %vm1917 = vcmask 891904
  %v1918 = vsel %vm1917, %v1908, %v1910
  %v1919 = vsel %vm1917, %v1910, %v1912
  %v1920 = vsel %vm1917, %v1912, %v1914
  %v1921 = vsel %vm1917, %v1914, %v1916
  %v1923 = vsel %vm147, %v1905, 0
  %v1926 = vsel %vm147, %v1906, 0
  %v1929 = vsel %vm154, %v1918, 0
  %v1932 = vsel %vm154, %v1919, 0
  %v1935 = vsel %vm154, %v1920, 0
  %v1938 = vsel %vm154, %v1921, 0
  %v1941 = vsel %vm154, %v1916, 0
  %1943 = vmatprep.subr.bf16.mxu0 0
  %1944 = vmatpush1.bf16.msra.mxu0 0
  %1945 = vmatprep.subr.bf16.mxu0 0
  %1946 = vmatpush1.bf16.msra.mxu0 0
  %1947 = vmatprep.subr.bf16.mxu0 0
  %1948 = vmatpush1.bf16.msra.mxu0 0
  %1949 = vmatprep.subr.bf16.mxu0 0
  %1950 = vmatpush1.bf16.msra.mxu0 0
  %1951 = vmatprep.subr.bf16.mxu0 0
  %1952 = vmatpush1.bf16.msra.mxu0 0
  %1953 = vmatprep.subr.bf16.mxu0 0
  %1954 = vmatpush1.bf16.msra.mxu0 0
  %1955 = vmatprep.subr.bf16.mxu0 0
  %1956 = vmatpush1.bf16.msra.mxu0 0
  %1957 = vmatprep.subr.bf16.mxu0 %v1932
  %1958 = vmatpush1.bf16.msra.mxu0 %v1929
  %1959 = vmatprep.subr.bf16.mxu0 0
  %1960 = vmatpush2.bf16.msra.mxu0 0
  %1961 = vmatprep.subr.bf16.mxu0 0
  %1962 = vmatpush2.bf16.msra.mxu0 0
  %1963 = vmatprep.subr.bf16.mxu0 0
  %1964 = vmatpush2.bf16.msra.mxu0 0
  %1965 = vmatprep.subr.bf16.mxu0 0
  %1966 = vmatpush2.bf16.msra.mxu0 0
  %1967 = vmatprep.subr.bf16.mxu0 0
  %1968 = vmatpush2.bf16.msra.mxu0 0
  %1969 = vmatprep.subr.bf16.mxu0 0
  %1970 = vmatpush2.bf16.msra.mxu0 0
  %1971 = vmatprep.subr.bf16.mxu0 0
  %1972 = vmatpush2.bf16.msra.mxu0 0
  %1973 = vmatprep.subr.bf16.mxu0 0
  %1974 = vmatpush2.bf16.msra.mxu0 0
  %1975 = vmatprep.mubr.bf16.mxu0 0
  %1976 = vmatmul.mubr.bf16.gmra.mxu0 %v1923
  %v1977 = vpop.f32.mrf.mxu0
  %v1978 = vadd.f32 0.0, %v1977
  %v1979 = vpop.f32.mrf.mxu0
  %v1980 = vadd.f32 0.0, %v1979
  %v1981 = vpop.f32.mrf.mxu0
  %v1982 = vadd.f32 0.0, %v1981
  %v1983 = vpop.f32.mrf.mxu0
  %v1984 = vadd.f32 0.0, %v1983
  %1985 = vmatprep.mubr.bf16.mxu0 0
  %1986 = vmatmul.mubr.bf16.gmra.mxu0 %v1926
  %v1987 = vpop.f32.mrf.mxu0
  %v1988 = vadd.f32 0.0, %v1987
  %v1989 = vpop.f32.mrf.mxu0
  %v1990 = vadd.f32 0.0, %v1989
  %v1991 = vpop.f32.mrf.mxu0
  %v1992 = vadd.f32 0.0, %v1991
  %v1993 = vpop.f32.mrf.mxu0
  %v1994 = vadd.f32 0.0, %v1993
  %1995 = vdwg.mxu0
  %1996 = vmatprep.subr.bf16.mxu0 0
  %1997 = vmatpush1.bf16.msra.mxu0 0
  %1998 = vmatprep.subr.bf16.mxu0 0
  %1999 = vmatpush1.bf16.msra.mxu0 0
  %2000 = vmatprep.subr.bf16.mxu0 0
  %2001 = vmatpush1.bf16.msra.mxu0 0
  %2002 = vmatprep.subr.bf16.mxu0 0
  %2003 = vmatpush1.bf16.msra.mxu0 0
  %2004 = vmatprep.subr.bf16.mxu0 0
  %2005 = vmatpush1.bf16.msra.mxu0 0
  %2006 = vmatprep.subr.bf16.mxu0 0
  %2007 = vmatpush1.bf16.msra.mxu0 0
  %2008 = vmatprep.subr.bf16.mxu0 0
  %2009 = vmatpush1.bf16.msra.mxu0 0
  %2010 = vmatprep.subr.bf16.mxu0 %v1938
  %2011 = vmatpush1.bf16.msra.mxu0 %v1935
  %2012 = vmatprep.subr.bf16.mxu0 0
  %2013 = vmatpush2.bf16.msra.mxu0 0
  %2014 = vmatprep.subr.bf16.mxu0 0
  %2015 = vmatpush2.bf16.msra.mxu0 0
  %2016 = vmatprep.subr.bf16.mxu0 0
  %2017 = vmatpush2.bf16.msra.mxu0 0
  %2018 = vmatprep.subr.bf16.mxu0 0
  %2019 = vmatpush2.bf16.msra.mxu0 0
  %2020 = vmatprep.subr.bf16.mxu0 0
  %2021 = vmatpush2.bf16.msra.mxu0 0
  %2022 = vmatprep.subr.bf16.mxu0 0
  %2023 = vmatpush2.bf16.msra.mxu0 0
  %2024 = vmatprep.subr.bf16.mxu0 0
  %2025 = vmatpush2.bf16.msra.mxu0 0
  %2026 = vmatprep.subr.bf16.mxu0 0
  %2027 = vmatpush2.bf16.msra.mxu0 0
  %2028 = vmatprep.mubr.bf16.mxu0 0
  %2029 = vmatmul.mubr.bf16.gmra.mxu0 %v1923
  %v2030 = vpop.f32.mrf.mxu0
  %v2031 = vadd.f32 0.0, %v2030
  %v2032 = vpop.f32.mrf.mxu0
  %v2033 = vadd.f32 0.0, %v2032
  %v2034 = vpop.f32.mrf.mxu0
  %v2035 = vadd.f32 0.0, %v2034
  %v2036 = vpop.f32.mrf.mxu0
  %v2037 = vadd.f32 0.0, %v2036
  %2038 = vmatprep.mubr.bf16.mxu0 0
  %2039 = vmatmul.mubr.bf16.gmra.mxu0 %v1926
  %v2040 = vpop.f32.mrf.mxu0
  %v2041 = vadd.f32 0.0, %v2040
  %v2042 = vpop.f32.mrf.mxu0
  %v2043 = vadd.f32 0.0, %v2042
  %v2044 = vpop.f32.mrf.mxu0
  %v2045 = vadd.f32 0.0, %v2044
  %v2046 = vpop.f32.mrf.mxu0
  %v2047 = vadd.f32 0.0, %v2046
  %2048 = vdwg.mxu0
  %2049 = vmatprep.subr.bf16.mxu0 0
  %2050 = vmatpush1.bf16.msra.mxu0 0
  %2051 = vmatprep.subr.bf16.mxu0 0
  %2052 = vmatpush1.bf16.msra.mxu0 0
  %2053 = vmatprep.subr.bf16.mxu0 0
  %2054 = vmatpush1.bf16.msra.mxu0 0
  %2055 = vmatprep.subr.bf16.mxu0 0
  %2056 = vmatpush1.bf16.msra.mxu0 0
  %2057 = vmatprep.subr.bf16.mxu0 0
  %2058 = vmatpush1.bf16.msra.mxu0 0
  %2059 = vmatprep.subr.bf16.mxu0 0
  %2060 = vmatpush1.bf16.msra.mxu0 0
  %2061 = vmatprep.subr.bf16.mxu0 0
  %2062 = vmatpush1.bf16.msra.mxu0 0
  %2063 = vmatprep.subr.bf16.mxu0 0
  %2064 = vmatpush1.bf16.msra.mxu0 %v1941
  %2065 = vmatprep.subr.bf16.mxu0 0
  %2066 = vmatpush2.bf16.msra.mxu0 0
  %2067 = vmatprep.subr.bf16.mxu0 0
  %2068 = vmatpush2.bf16.msra.mxu0 0
  %2069 = vmatprep.subr.bf16.mxu0 0
  %2070 = vmatpush2.bf16.msra.mxu0 0
  %2071 = vmatprep.subr.bf16.mxu0 0
  %2072 = vmatpush2.bf16.msra.mxu0 0
  %2073 = vmatprep.subr.bf16.mxu0 0
  %2074 = vmatpush2.bf16.msra.mxu0 0
  %2075 = vmatprep.subr.bf16.mxu0 0
  %2076 = vmatpush2.bf16.msra.mxu0 0
  %2077 = vmatprep.subr.bf16.mxu0 0
  %2078 = vmatpush2.bf16.msra.mxu0 0
  %2079 = vmatprep.subr.bf16.mxu0 0
  %2080 = vmatpush2.bf16.msra.mxu0 0
  %2081 = vmatprep.mubr.bf16.mxu0 0
  %2082 = vmatmul.mubr.bf16.gmra.mxu0 %v1923
  %v2083 = vpop.f32.mrf.mxu0
  %v2084 = vadd.f32 0.0, %v2083
  %v2085 = vpop.f32.mrf.mxu0
  %v2086 = vpop.f32.mrf.mxu0
  %v2087 = vadd.f32 0.0, %v2086
  %v2088 = vpop.f32.mrf.mxu0
  %2089 = vmatprep.mubr.bf16.mxu0 0
  %2090 = vmatmul.mubr.bf16.gmra.mxu0 %v1926
  %v2091 = vpop.f32.mrf.mxu0
  %v2092 = vadd.f32 0.0, %v2091
  %v2093 = vpop.f32.mrf.mxu0
  %v2094 = vpop.f32.mrf.mxu0
  %v2095 = vadd.f32 0.0, %v2094
  %v2096 = vpop.f32.mrf.mxu0
  %2097 = vdwg.mxu0
  %v2098 = vadd.f32 %v1872, %v1978
  %v2099 = vadd.f32 %v1873, %v1980
  %v2100 = vadd.f32 %v1874, %v2031
  %v2101 = vadd.f32 %v1875, %v2033
  %v2102 = vadd.f32 %v1876, %v2084
  %v2103 = vadd.f32 %v1877, %v1982
  %v2104 = vadd.f32 %v1878, %v1984
  %v2105 = vadd.f32 %v1879, %v2035
  %v2106 = vadd.f32 %v1880, %v2037
  %v2107 = vadd.f32 %v1881, %v2087
  %v2108 = vadd.f32 %v1882, %v1988
  %v2109 = vadd.f32 %v1883, %v1990
  %v2110 = vadd.f32 %v1884, %v2041
  %v2111 = vadd.f32 %v1885, %v2043
  %v2112 = vadd.f32 %v1886, %v2092
  %v2113 = vadd.f32 %v1887, %v1992
  %v2114 = vadd.f32 %v1888, %v1994
  %v2115 = vadd.f32 %v1889, %v2045
  %v2116 = vadd.f32 %v1890, %v2047
  %v2117 = vadd.f32 %v1891, %v2095
  %v2118 = vld [vmem:[%s3] sm:$0xff]
  %v2119 = vld [vmem:[%s3 + $0x8] sm:$0xff]
  %v2120 = vld [vmem:[%s3 + $0x10] sm:$0xff]
  %v2121 = vld [vmem:[%s3 + $0x18] sm:$0xff]
  %2123 = vset.pattern.permute.xlu0 0
  %2124 = vperm.xlu0 %2123, %v2118
  %v2125 = vpop.permute.xlu0 %2124
  %2128 = vset.pattern.permute.xlu0 0
  %2129 = vperm.xlu0 %2128, %v2119
  %v2130 = vpop.permute.xlu0 %2129
  %2133 = vset.pattern.permute.xlu0 0
  %2134 = vperm.xlu0 %2133, %v2120
  %v2135 = vpop.permute.xlu0 %2134
  %2138 = vset.pattern.permute.xlu0 0
  %2139 = vperm.xlu0 %2138, %v2121
  %v2140 = vpop.permute.xlu0 %2139
  %v2142 = vadd.f32 %v2098, %v2125
  %v2143 = vadd.f32 %v2099, %v2125
  %v2144 = vadd.f32 %v2100, %v2125
  %v2145 = vadd.f32 %v2101, %v2125
  %v2146 = vadd.f32 %v2102, %v2125
  %v2147 = vadd.f32 %v2103, %v2130
  %v2148 = vadd.f32 %v2104, %v2130
  %v2149 = vadd.f32 %v2105, %v2130
  %v2150 = vadd.f32 %v2106, %v2130
  %v2151 = vadd.f32 %v2107, %v2130
  %v2152 = vadd.f32 %v2108, %v2135
  %v2153 = vadd.f32 %v2109, %v2135
  %v2154 = vadd.f32 %v2110, %v2135
  %v2155 = vadd.f32 %v2111, %v2135
  %v2156 = vadd.f32 %v2112, %v2135
  %v2157 = vadd.f32 %v2113, %v2140
  %v2158 = vadd.f32 %v2114, %v2140
  %v2159 = vadd.f32 %v2115, %v2140
  %v2160 = vadd.f32 %v2116, %v2140
  %v2161 = vadd.f32 %v2117, %v2140
  %v2162 = vmax.f32 %v2142, 0.0
  %v2163 = vmax.f32 %v2143, 0.0
  %v2164 = vmax.f32 %v2144, 0.0
  %v2165 = vmax.f32 %v2145, 0.0
  %v2166 = vmax.f32 %v2146, 0.0
  %v2167 = vmax.f32 %v2147, 0.0
  %v2168 = vmax.f32 %v2148, 0.0
  %v2169 = vmax.f32 %v2149, 0.0
  %v2170 = vmax.f32 %v2150, 0.0
  %v2171 = vmax.f32 %v2151, 0.0
  %v2172 = vmax.f32 %v2152, 0.0
  %v2173 = vmax.f32 %v2153, 0.0
  %v2174 = vmax.f32 %v2154, 0.0
  %v2175 = vmax.f32 %v2155, 0.0
  %v2176 = vmax.f32 %v2156, 0.0
  %v2177 = vmax.f32 %v2157, 0.0
  %v2178 = vmax.f32 %v2158, 0.0
  %v2179 = vmax.f32 %v2159, 0.0
  %v2180 = vmax.f32 %v2160, 0.0
  %v2181 = vmax.f32 %v2161, 0.0
  %v2183 = vlaneseq
  %v2184 = vshrl.u32 %v2183, 7
  %v2185 = vsub.s32 0, %v2184
  %v2186 = vrot.slane %v39, %v2185
  %v2187 = vlaneseq
  %v2188 = vshrl.u32 %v2187, 7
  %v2189 = vsub.s32 1, %v2188
  %v2190 = vrot.slane %v39, %v2189
  %v2191 = vlaneseq
  %v2192 = vshrl.u32 %v2191, 7
  %v2193 = vsub.s32 2, %v2192
  %v2194 = vrot.slane %v39, %v2193
  %v2195 = vlaneseq
  %v2196 = vshrl.u32 %v2195, 7
  %v2197 = vsub.s32 3, %v2196
  %v2198 = vrot.slane %v39, %v2197
  %v2199 = vlaneseq
  %v2200 = vshrl.u32 %v2199, 7
  %v2201 = vsub.s32 4, %v2200
  %v2202 = vrot.slane %v39, %v2201
  %v2208 = vmul.f32 %v2162, %v2186
  %v2209 = vmul.f32 %v2163, %v2190
  %v2210 = vmul.f32 %v2164, %v2194
  %v2211 = vmul.f32 %v2165, %v2198
  %v2212 = vmul.f32 %v2166, %v2202
  %v2213 = vmul.f32 %v2167, %v2186
  %v2214 = vmul.f32 %v2168, %v2190
  %v2215 = vmul.f32 %v2169, %v2194
  %v2216 = vmul.f32 %v2170, %v2198
  %v2217 = vmul.f32 %v2171, %v2202
  %v2218 = vmul.f32 %v2172, %v2186
  %v2219 = vmul.f32 %v2173, %v2190
  %v2220 = vmul.f32 %v2174, %v2194
  %v2221 = vmul.f32 %v2175, %v2198
  %v2222 = vmul.f32 %v2176, %v2202
  %v2223 = vmul.f32 %v2177, %v2186
  %v2224 = vmul.f32 %v2178, %v2190
  %v2225 = vmul.f32 %v2179, %v2194
  %v2226 = vmul.f32 %v2180, %v2198
  %v2227 = vmul.f32 %v2181, %v2202
  %v2228 = vpack.c.bf16 %v2213, %v2208
  %v2229 = vpack.c.bf16 %v2214, %v2209
  %v2230 = vpack.c.bf16 %v2215, %v2210
  %v2231 = vpack.c.bf16 %v2216, %v2211
  %v2232 = vpack.c.bf16 %v2217, %v2212
  %v2233 = vpack.c.bf16 %v2223, %v2218
  %v2234 = vpack.c.bf16 %v2224, %v2219
  %v2235 = vpack.c.bf16 %v2225, %v2220
  %v2236 = vpack.c.bf16 %v2226, %v2221
  %v2237 = vpack.c.bf16 %v2227, %v2222
  %v2248 = vunpack.c.l.b16 %v2228
  %v2249 = vunpack.c.l.b16 %v2229
  %v2250 = vunpack.c.l.b16 %v2230
  %v2251 = vunpack.c.l.b16 %v2231
  %v2252 = vunpack.c.l.b16 %v2232
  %v2253 = vunpack.c.h.b16 %v2228
  %v2254 = vunpack.c.h.b16 %v2229
  %v2255 = vunpack.c.h.b16 %v2230
  %v2256 = vunpack.c.h.b16 %v2231
  %v2257 = vunpack.c.h.b16 %v2232
  %v2258 = vunpack.c.l.b16 %v2233
  %v2259 = vunpack.c.l.b16 %v2234
  %v2260 = vunpack.c.l.b16 %v2235
  %v2261 = vunpack.c.l.b16 %v2236
  %v2262 = vunpack.c.l.b16 %v2237
  %v2263 = vunpack.c.h.b16 %v2233
  %v2264 = vunpack.c.h.b16 %v2234
  %v2265 = vunpack.c.h.b16 %v2235
  %v2266 = vunpack.c.h.b16 %v2236
  %v2267 = vunpack.c.h.b16 %v2237
  %v2268 = vpack.c.b16 %v2249, %v2248
  %v2269 = vpack.c.b16 %v2251, %v2250
  %v2270 = vpack.c.b16 %v2252, %v2252
  %v2271 = vpack.c.b16 %v2254, %v2253
  %v2272 = vpack.c.b16 %v2256, %v2255
  %v2273 = vpack.c.b16 %v2257, %v2257
  %v2274 = vpack.c.b16 %v2259, %v2258
  %v2275 = vpack.c.b16 %v2261, %v2260
  %v2276 = vpack.c.b16 %v2262, %v2262
  %v2277 = vpack.c.b16 %v2264, %v2263
  %v2278 = vpack.c.b16 %v2266, %v2265
  %v2279 = vpack.c.b16 %v2267, %v2267
  %2292 = vst [vmem:[#allocation2 + $0x4] sm:$0xff] %v2268
  %2293 = vst [vmem:[#allocation2 + $0xc] sm:$0xff] %v2269
  %2294 = vst.msk [vmem:[#allocation2 + $0x14] sm:$0xf] %vm42, %v2270
  %2295 = vst [vmem:[#allocation2 + $0x1c] sm:$0xff] %v2271
  %2296 = vst [vmem:[#allocation2 + $0x24] sm:$0xff] %v2272
  %2297 = vst.msk [vmem:[#allocation2 + $0x2c] sm:$0xf] %vm42, %v2273
  %2298 = vst [vmem:[#allocation2 + $0x34] sm:$0xff] %v2274
  %2299 = vst [vmem:[#allocation2 + $0x3c] sm:$0xff] %v2275
  %2300 = vst.msk [vmem:[#allocation2 + $0x44] sm:$0xf] %vm42, %v2276
  %2301 = vst [vmem:[#allocation2 + $0x4c] sm:$0xff] %v2277
  %2302 = vst [vmem:[#allocation2 + $0x54] sm:$0xff] %v2278
  %2303 = vst.msk [vmem:[#allocation2 + $0x5c] sm:$0xf] %vm42, %v2279
  %v2304 = vld [vmem:[#allocation2] sm:$0xff]
  %v2305 = vld [vmem:[#allocation2 + $0x8] sm:$0xff]
  %v2306 = vld [vmem:[#allocation2 + $0x10] sm:$0xff]
  %v2307 = vld [vmem:[#allocation2 + $0x18] sm:$0xff]
  %v2308 = vld [vmem:[#allocation2 + $0x20] sm:$0xff]
  %v2309 = vld [vmem:[#allocation2 + $0x28] sm:$0xff]
  %v2310 = vld [vmem:[#allocation2 + $0x30] sm:$0xff]
  %v2311 = vld [vmem:[#allocation2 + $0x38] sm:$0xff]
  %v2312 = vld [vmem:[#allocation2 + $0x40] sm:$0xff]
  %v2313 = vld [vmem:[#allocation2 + $0x48] sm:$0xff]
  %v2314 = vld [vmem:[#allocation2 + $0x50] sm:$0xff]
  %v2315 = vld [vmem:[#allocation2 + $0x58] sm:$0xff]
  %v2316 = vld [vmem:[%s4] sm:$0xf]
  %v2317 = vld [vmem:[%s4 + $0x4] sm:$0xf]
  %v2318 = vld [vmem:[%s4 + $0x8] sm:$0xf]
  %v2319 = vld [vmem:[%s4 + $0xc] sm:$0xf]
  %s2320 = scalar_lea.vmem %s4, 16
  %v2321 = vld [vmem:[%s2320] sm:$0xf]
  %v2322 = vld [vmem:[%s2320 + $0x4] sm:$0xf]
  %v2323 = vld [vmem:[%s2320 + $0x8] sm:$0xf]
  %v2324 = vld [vmem:[%s2320 + $0xc] sm:$0xf]
  %v2329 = vunpack.c.l.b16 %v2321
  %v2330 = vunpack.c.l.b16 %v2322
  %v2331 = vunpack.c.l.b16 %v2323
  %v2332 = vunpack.c.l.b16 %v2324
  %v2333 = vpack.c.b16 %v2330, %v2329
  %v2334 = vpack.c.b16 %v2332, %v2331
  %v2347 = vunpack.c.l.b16 %v2304
  %v2348 = vunpack.c.h.b16 %v2304
  %v2349 = vunpack.c.l.b16 %v2305
  %v2350 = vunpack.c.h.b16 %v2305
  %v2351 = vunpack.c.l.b16 %v2306
  %v2352 = vunpack.c.h.b16 %v2306
  %v2353 = vunpack.c.l.b16 %v2307
  %v2354 = vunpack.c.h.b16 %v2307
  %v2355 = vunpack.c.l.b16 %v2308
  %v2356 = vunpack.c.h.b16 %v2308
  %v2357 = vunpack.c.l.b16 %v2309
  %v2358 = vunpack.c.h.b16 %v2309
  %v2359 = vunpack.c.l.b16 %v2310
  %v2360 = vunpack.c.h.b16 %v2310
  %v2361 = vunpack.c.l.b16 %v2311
  %v2362 = vunpack.c.h.b16 %v2311
  %v2363 = vunpack.c.l.b16 %v2312
  %v2364 = vunpack.c.h.b16 %v2312
  %v2365 = vunpack.c.l.b16 %v2313
  %v2366 = vunpack.c.h.b16 %v2313
  %v2367 = vunpack.c.l.b16 %v2314
  %v2368 = vunpack.c.h.b16 %v2314
  %v2369 = vunpack.c.l.b16 %v2315
  %v2370 = vunpack.c.h.b16 %v2315
  %v2371 = vpack.c.b16 %v2353, %v2347
  %v2372 = vpack.c.b16 %v2354, %v2348
  %v2373 = vpack.c.b16 %v2355, %v2349
  %v2374 = vpack.c.b16 %v2356, %v2350
  %v2375 = vpack.c.b16 %v2357, %v2351
  %v2376 = vpack.c.b16 %v2358, %v2352
  %v2377 = vpack.c.b16 %v2365, %v2359
  %v2378 = vpack.c.b16 %v2366, %v2360
  %v2379 = vpack.c.b16 %v2367, %v2361
  %v2380 = vpack.c.b16 %v2368, %v2362
  %v2381 = vpack.c.b16 %v2369, %v2363
  %v2382 = vpack.c.b16 %v2370, %v2364
  %2383 = vrot.lane.b32.xlu0 %v2371, 18
  %v2384 = vpop.permute.xlu0 %2383
  %2385 = vrot.lane.b32.xlu0 %v2372, 18
  %v2386 = vpop.permute.xlu0 %2385
  %2387 = vrot.lane.b32.xlu0 %v2373, 18
  %v2388 = vpop.permute.xlu0 %2387
  %2389 = vrot.lane.b32.xlu0 %v2374, 18
  %v2390 = vpop.permute.xlu0 %2389
  %2391 = vrot.lane.b32.xlu0 %v2375, 18
  %v2392 = vpop.permute.xlu0 %2391
  %2393 = vrot.lane.b32.xlu0 %v2376, 18
  %v2394 = vpop.permute.xlu0 %2393
  %2395 = vrot.lane.b32.xlu0 %v2377, 18
  %v2396 = vpop.permute.xlu0 %2395
  %2397 = vrot.lane.b32.xlu0 %v2378, 18
  %v2398 = vpop.permute.xlu0 %2397
  %2399 = vrot.lane.b32.xlu0 %v2379, 18
  %v2400 = vpop.permute.xlu0 %2399
  %2401 = vrot.lane.b32.xlu0 %v2380, 18
  %v2402 = vpop.permute.xlu0 %2401
  %2403 = vrot.lane.b32.xlu0 %v2381, 18
  %v2404 = vpop.permute.xlu0 %2403
  %2405 = vrot.lane.b32.xlu0 %v2382, 18
  %v2406 = vpop.permute.xlu0 %2405
  %v2407 = vsel %vm141, %v2384, %v2386
  %v2408 = vsel %vm141, %v2386, %v2388
  %v2409 = vsel %vm141, %v2388, %v2390
  %v2410 = vsel %vm141, %v2390, %v2392
  %v2411 = vsel %vm141, %v2392, %v2394
  %v2412 = vsel %vm141, %v2396, %v2398
  %v2413 = vsel %vm141, %v2398, %v2400
  %v2414 = vsel %vm141, %v2400, %v2402
  %v2415 = vsel %vm141, %v2402, %v2404
  %v2416 = vsel %vm141, %v2404, %v2406
  %vm2427 = vcmask 261120
  %v2429 = vsel %vm2427, %v2333, 0
  %v2432 = vsel %vm2427, %v2334, 0
  %2434 = vmatprep.subr.bf16.mxu0 0
  %2435 = vmatpush1.bf16.msra.mxu0 0
  %2436 = vmatprep.subr.bf16.mxu0 0
  %2437 = vmatpush1.bf16.msra.mxu0 0
  %2438 = vmatprep.subr.bf16.mxu0 0
  %2439 = vmatpush1.bf16.msra.mxu0 0
  %2440 = vmatprep.subr.bf16.mxu0 0
  %2441 = vmatpush1.bf16.msra.mxu0 0
  %2442 = vmatprep.subr.bf16.mxu0 0
  %2443 = vmatpush1.bf16.msra.mxu0 0
  %2444 = vmatprep.subr.bf16.mxu0 0
  %2445 = vmatpush1.bf16.msra.mxu0 0
  %2446 = vmatprep.subr.bf16.mxu0 %v2413
  %2447 = vmatpush1.bf16.msra.mxu0 %v2412
  %2448 = vmatprep.subr.bf16.mxu0 %v2408
  %2449 = vmatpush1.bf16.msra.mxu0 %v2407
  %2450 = vmatprep.subr.bf16.mxu0 0
  %2451 = vmatpush2.bf16.msra.mxu0 0
  %2452 = vmatprep.subr.bf16.mxu0 0
  %2453 = vmatpush2.bf16.msra.mxu0 0
  %2454 = vmatprep.subr.bf16.mxu0 0
  %2455 = vmatpush2.bf16.msra.mxu0 0
  %2456 = vmatprep.subr.bf16.mxu0 0
  %2457 = vmatpush2.bf16.msra.mxu0 0
  %2458 = vmatprep.subr.bf16.mxu0 0
  %2459 = vmatpush2.bf16.msra.mxu0 0
  %2460 = vmatprep.subr.bf16.mxu0 0
  %2461 = vmatpush2.bf16.msra.mxu0 0
  %2462 = vmatprep.subr.bf16.mxu0 0
  %2463 = vmatpush2.bf16.msra.mxu0 0
  %2464 = vmatprep.subr.bf16.mxu0 0
  %2465 = vmatpush2.bf16.msra.mxu0 0
  %2466 = vmatprep.mubr.bf16.mxu0 0
  %2467 = vmatmul.mubr.bf16.gmra.mxu0 %v2429
  %v2468 = vpop.f32.mrf.mxu0
  %v2469 = vadd.f32 0.0, %v2468
  %v2470 = vpop.f32.mrf.mxu0
  %v2471 = vadd.f32 0.0, %v2470
  %v2472 = vpop.f32.mrf.mxu0
  %v2473 = vadd.f32 0.0, %v2472
  %v2474 = vpop.f32.mrf.mxu0
  %v2475 = vadd.f32 0.0, %v2474
  %2476 = vmatprep.mubr.bf16.mxu0 0
  %2477 = vmatmul.mubr.bf16.gmra.mxu0 %v2432
  %v2478 = vpop.f32.mrf.mxu0
  %v2479 = vadd.f32 0.0, %v2478
  %v2480 = vpop.f32.mrf.mxu0
  %v2481 = vadd.f32 0.0, %v2480
  %v2482 = vpop.f32.mrf.mxu0
  %v2483 = vadd.f32 0.0, %v2482
  %v2484 = vpop.f32.mrf.mxu0
  %v2485 = vadd.f32 0.0, %v2484
  %2486 = vdwg.mxu0
  %2487 = vmatprep.subr.bf16.mxu0 0
  %2488 = vmatpush1.bf16.msra.mxu0 0
  %2489 = vmatprep.subr.bf16.mxu0 0
  %2490 = vmatpush1.bf16.msra.mxu0 0
  %2491 = vmatprep.subr.bf16.mxu0 0
  %2492 = vmatpush1.bf16.msra.mxu0 0
  %2493 = vmatprep.subr.bf16.mxu0 0
  %2494 = vmatpush1.bf16.msra.mxu0 0
  %2495 = vmatprep.subr.bf16.mxu0 0
  %2496 = vmatpush1.bf16.msra.mxu0 0
  %2497 = vmatprep.subr.bf16.mxu0 0
  %2498 = vmatpush1.bf16.msra.mxu0 0
  %2499 = vmatprep.subr.bf16.mxu0 %v2415
  %2500 = vmatpush1.bf16.msra.mxu0 %v2414
  %2501 = vmatprep.subr.bf16.mxu0 %v2410
  %2502 = vmatpush1.bf16.msra.mxu0 %v2409
  %2503 = vmatprep.subr.bf16.mxu0 0
  %2504 = vmatpush2.bf16.msra.mxu0 0
  %2505 = vmatprep.subr.bf16.mxu0 0
  %2506 = vmatpush2.bf16.msra.mxu0 0
  %2507 = vmatprep.subr.bf16.mxu0 0
  %2508 = vmatpush2.bf16.msra.mxu0 0
  %2509 = vmatprep.subr.bf16.mxu0 0
  %2510 = vmatpush2.bf16.msra.mxu0 0
  %2511 = vmatprep.subr.bf16.mxu0 0
  %2512 = vmatpush2.bf16.msra.mxu0 0
  %2513 = vmatprep.subr.bf16.mxu0 0
  %2514 = vmatpush2.bf16.msra.mxu0 0
  %2515 = vmatprep.subr.bf16.mxu0 0
  %2516 = vmatpush2.bf16.msra.mxu0 0
  %2517 = vmatprep.subr.bf16.mxu0 0
  %2518 = vmatpush2.bf16.msra.mxu0 0
  %2519 = vmatprep.mubr.bf16.mxu0 0
  %2520 = vmatmul.mubr.bf16.gmra.mxu0 %v2429
  %v2521 = vpop.f32.mrf.mxu0
  %v2522 = vadd.f32 0.0, %v2521
  %v2523 = vpop.f32.mrf.mxu0
  %v2524 = vadd.f32 0.0, %v2523
  %v2525 = vpop.f32.mrf.mxu0
  %v2526 = vadd.f32 0.0, %v2525
  %v2527 = vpop.f32.mrf.mxu0
  %v2528 = vadd.f32 0.0, %v2527
  %2529 = vmatprep.mubr.bf16.mxu0 0
  %2530 = vmatmul.mubr.bf16.gmra.mxu0 %v2432
  %v2531 = vpop.f32.mrf.mxu0
  %v2532 = vadd.f32 0.0, %v2531
  %v2533 = vpop.f32.mrf.mxu0
  %v2534 = vadd.f32 0.0, %v2533
  %v2535 = vpop.f32.mrf.mxu0
  %v2536 = vadd.f32 0.0, %v2535
  %v2537 = vpop.f32.mrf.mxu0
  %v2538 = vadd.f32 0.0, %v2537
  %2539 = vdwg.mxu0
  %2540 = vmatprep.subr.bf16.mxu0 0
  %2541 = vmatpush1.bf16.msra.mxu0 0
  %2542 = vmatprep.subr.bf16.mxu0 0
  %2543 = vmatpush1.bf16.msra.mxu0 0
  %2544 = vmatprep.subr.bf16.mxu0 0
  %2545 = vmatpush1.bf16.msra.mxu0 0
  %2546 = vmatprep.subr.bf16.mxu0 0
  %2547 = vmatpush1.bf16.msra.mxu0 0
  %2548 = vmatprep.subr.bf16.mxu0 0
  %2549 = vmatpush1.bf16.msra.mxu0 0
  %2550 = vmatprep.subr.bf16.mxu0 0
  %2551 = vmatpush1.bf16.msra.mxu0 0
  %2552 = vmatprep.subr.bf16.mxu0 0
  %2553 = vmatpush1.bf16.msra.mxu0 %v2416
  %2554 = vmatprep.subr.bf16.mxu0 0
  %2555 = vmatpush1.bf16.msra.mxu0 %v2411
  %2556 = vmatprep.subr.bf16.mxu0 0
  %2557 = vmatpush2.bf16.msra.mxu0 0
  %2558 = vmatprep.subr.bf16.mxu0 0
  %2559 = vmatpush2.bf16.msra.mxu0 0
  %2560 = vmatprep.subr.bf16.mxu0 0
  %2561 = vmatpush2.bf16.msra.mxu0 0
  %2562 = vmatprep.subr.bf16.mxu0 0
  %2563 = vmatpush2.bf16.msra.mxu0 0
  %2564 = vmatprep.subr.bf16.mxu0 0
  %2565 = vmatpush2.bf16.msra.mxu0 0
  %2566 = vmatprep.subr.bf16.mxu0 0
  %2567 = vmatpush2.bf16.msra.mxu0 0
  %2568 = vmatprep.subr.bf16.mxu0 0
  %2569 = vmatpush2.bf16.msra.mxu0 0
  %2570 = vmatprep.subr.bf16.mxu0 0
  %2571 = vmatpush2.bf16.msra.mxu0 0
  %2572 = vmatprep.mubr.bf16.mxu0 0
  %2573 = vmatmul.mubr.bf16.gmra.mxu0 %v2429
  %v2574 = vpop.f32.mrf.mxu0
  %v2575 = vadd.f32 0.0, %v2574
  %v2576 = vpop.f32.mrf.mxu0
  %v2577 = vpop.f32.mrf.mxu0
  %v2578 = vadd.f32 0.0, %v2577
  %v2579 = vpop.f32.mrf.mxu0
  %2580 = vmatprep.mubr.bf16.mxu0 0
  %2581 = vmatmul.mubr.bf16.gmra.mxu0 %v2432
  %v2582 = vpop.f32.mrf.mxu0
  %v2583 = vadd.f32 0.0, %v2582
  %v2584 = vpop.f32.mrf.mxu0
  %v2585 = vpop.f32.mrf.mxu0
  %v2586 = vadd.f32 0.0, %v2585
  %v2587 = vpop.f32.mrf.mxu0
  %2588 = vdwg.mxu0
  %v2593 = vunpack.c.l.b16 %v2316
  %v2594 = vunpack.c.l.b16 %v2317
  %v2595 = vunpack.c.l.b16 %v2318
  %v2596 = vunpack.c.l.b16 %v2319
  %v2597 = vpack.c.b16 %v2594, %v2593
  %v2598 = vpack.c.b16 %v2596, %v2595
  %2599 = vrot.lane.b32.xlu0 %v2371, 19
  %v2600 = vpop.permute.xlu0 %2599
  %2601 = vrot.lane.b32.xlu0 %v2372, 19
  %v2602 = vpop.permute.xlu0 %2601
  %2603 = vrot.lane.b32.xlu0 %v2373, 19
  %v2604 = vpop.permute.xlu0 %2603
  %2605 = vrot.lane.b32.xlu0 %v2374, 19
  %v2606 = vpop.permute.xlu0 %2605
  %2607 = vrot.lane.b32.xlu0 %v2375, 19
  %v2608 = vpop.permute.xlu0 %2607
  %2609 = vrot.lane.b32.xlu0 %v2376, 19
  %v2610 = vpop.permute.xlu0 %2609
  %2611 = vrot.lane.b32.xlu0 %v2377, 19
  %v2612 = vpop.permute.xlu0 %2611
  %2613 = vrot.lane.b32.xlu0 %v2378, 19
  %v2614 = vpop.permute.xlu0 %2613
  %2615 = vrot.lane.b32.xlu0 %v2379, 19
  %v2616 = vpop.permute.xlu0 %2615
  %2617 = vrot.lane.b32.xlu0 %v2380, 19
  %v2618 = vpop.permute.xlu0 %2617
  %2619 = vrot.lane.b32.xlu0 %v2381, 19
  %v2620 = vpop.permute.xlu0 %2619
  %2621 = vrot.lane.b32.xlu0 %v2382, 19
  %v2622 = vpop.permute.xlu0 %2621
  %v2623 = vsel %vm347, %v2600, %v2602
  %v2624 = vsel %vm347, %v2602, %v2604
  %v2625 = vsel %vm347, %v2604, %v2606
  %v2626 = vsel %vm347, %v2606, %v2608
  %v2627 = vsel %vm347, %v2608, %v2610
  %v2628 = vsel %vm347, %v2612, %v2614
  %v2629 = vsel %vm347, %v2614, %v2616
  %v2630 = vsel %vm347, %v2616, %v2618
  %v2631 = vsel %vm347, %v2618, %v2620
  %v2632 = vsel %vm347, %v2620, %v2622
  %v2644 = vsel %vm2427, %v2597, 0
  %v2647 = vsel %vm2427, %v2598, 0
  %2649 = vmatprep.subr.bf16.mxu0 0
  %2650 = vmatpush1.bf16.msra.mxu0 0
  %2651 = vmatprep.subr.bf16.mxu0 0
  %2652 = vmatpush1.bf16.msra.mxu0 0
  %2653 = vmatprep.subr.bf16.mxu0 0
  %2654 = vmatpush1.bf16.msra.mxu0 0
  %2655 = vmatprep.subr.bf16.mxu0 0
  %2656 = vmatpush1.bf16.msra.mxu0 0
  %2657 = vmatprep.subr.bf16.mxu0 0
  %2658 = vmatpush1.bf16.msra.mxu0 0
  %2659 = vmatprep.subr.bf16.mxu0 0
  %2660 = vmatpush1.bf16.msra.mxu0 0
  %2661 = vmatprep.subr.bf16.mxu0 %v2629
  %2662 = vmatpush1.bf16.msra.mxu0 %v2628
  %2663 = vmatprep.subr.bf16.mxu0 %v2624
  %2664 = vmatpush1.bf16.msra.mxu0 %v2623
  %2665 = vmatprep.subr.bf16.mxu0 0
  %2666 = vmatpush2.bf16.msra.mxu0 0
  %2667 = vmatprep.subr.bf16.mxu0 0
  %2668 = vmatpush2.bf16.msra.mxu0 0
  %2669 = vmatprep.subr.bf16.mxu0 0
  %2670 = vmatpush2.bf16.msra.mxu0 0
  %2671 = vmatprep.subr.bf16.mxu0 0
  %2672 = vmatpush2.bf16.msra.mxu0 0
  %2673 = vmatprep.subr.bf16.mxu0 0
  %2674 = vmatpush2.bf16.msra.mxu0 0
  %2675 = vmatprep.subr.bf16.mxu0 0
  %2676 = vmatpush2.bf16.msra.mxu0 0
  %2677 = vmatprep.subr.bf16.mxu0 0
  %2678 = vmatpush2.bf16.msra.mxu0 0
  %2679 = vmatprep.subr.bf16.mxu0 0
  %2680 = vmatpush2.bf16.msra.mxu0 0
  %2681 = vmatprep.mubr.bf16.mxu0 0
  %2682 = vmatmul.mubr.bf16.gmra.mxu0 %v2644
  %v2683 = vpop.f32.mrf.mxu0
  %v2684 = vadd.f32 %v2469, %v2683
  %v2685 = vpop.f32.mrf.mxu0
  %v2686 = vadd.f32 %v2471, %v2685
  %v2687 = vpop.f32.mrf.mxu0
  %v2688 = vadd.f32 %v2473, %v2687
  %v2689 = vpop.f32.mrf.mxu0
  %v2690 = vadd.f32 %v2475, %v2689
  %2691 = vmatprep.mubr.bf16.mxu0 0
  %2692 = vmatmul.mubr.bf16.gmra.mxu0 %v2647
  %v2693 = vpop.f32.mrf.mxu0
  %v2694 = vadd.f32 %v2479, %v2693
  %v2695 = vpop.f32.mrf.mxu0
  %v2696 = vadd.f32 %v2481, %v2695
  %v2697 = vpop.f32.mrf.mxu0
  %v2698 = vadd.f32 %v2483, %v2697
  %v2699 = vpop.f32.mrf.mxu0
  %v2700 = vadd.f32 %v2485, %v2699
  %2701 = vdwg.mxu0
  %2702 = vmatprep.subr.bf16.mxu0 0
  %2703 = vmatpush1.bf16.msra.mxu0 0
  %2704 = vmatprep.subr.bf16.mxu0 0
  %2705 = vmatpush1.bf16.msra.mxu0 0
  %2706 = vmatprep.subr.bf16.mxu0 0
  %2707 = vmatpush1.bf16.msra.mxu0 0
  %2708 = vmatprep.subr.bf16.mxu0 0
  %2709 = vmatpush1.bf16.msra.mxu0 0
  %2710 = vmatprep.subr.bf16.mxu0 0
  %2711 = vmatpush1.bf16.msra.mxu0 0
  %2712 = vmatprep.subr.bf16.mxu0 0
  %2713 = vmatpush1.bf16.msra.mxu0 0
  %2714 = vmatprep.subr.bf16.mxu0 %v2631
  %2715 = vmatpush1.bf16.msra.mxu0 %v2630
  %2716 = vmatprep.subr.bf16.mxu0 %v2626
  %2717 = vmatpush1.bf16.msra.mxu0 %v2625
  %2718 = vmatprep.subr.bf16.mxu0 0
  %2719 = vmatpush2.bf16.msra.mxu0 0
  %2720 = vmatprep.subr.bf16.mxu0 0
  %2721 = vmatpush2.bf16.msra.mxu0 0
  %2722 = vmatprep.subr.bf16.mxu0 0
  %2723 = vmatpush2.bf16.msra.mxu0 0
  %2724 = vmatprep.subr.bf16.mxu0 0
  %2725 = vmatpush2.bf16.msra.mxu0 0
  %2726 = vmatprep.subr.bf16.mxu0 0
  %2727 = vmatpush2.bf16.msra.mxu0 0
  %2728 = vmatprep.subr.bf16.mxu0 0
  %2729 = vmatpush2.bf16.msra.mxu0 0
  %2730 = vmatprep.subr.bf16.mxu0 0
  %2731 = vmatpush2.bf16.msra.mxu0 0
  %2732 = vmatprep.subr.bf16.mxu0 0
  %2733 = vmatpush2.bf16.msra.mxu0 0
  %2734 = vmatprep.mubr.bf16.mxu0 0
  %2735 = vmatmul.mubr.bf16.gmra.mxu0 %v2644
  %v2736 = vpop.f32.mrf.mxu0
  %v2737 = vadd.f32 %v2522, %v2736
  %v2738 = vpop.f32.mrf.mxu0
  %v2739 = vadd.f32 %v2524, %v2738
  %v2740 = vpop.f32.mrf.mxu0
  %v2741 = vadd.f32 %v2526, %v2740
  %v2742 = vpop.f32.mrf.mxu0
  %v2743 = vadd.f32 %v2528, %v2742
  %2744 = vmatprep.mubr.bf16.mxu0 0
  %2745 = vmatmul.mubr.bf16.gmra.mxu0 %v2647
  %v2746 = vpop.f32.mrf.mxu0
  %v2747 = vadd.f32 %v2532, %v2746
  %v2748 = vpop.f32.mrf.mxu0
  %v2749 = vadd.f32 %v2534, %v2748
  %v2750 = vpop.f32.mrf.mxu0
  %v2751 = vadd.f32 %v2536, %v2750
  %v2752 = vpop.f32.mrf.mxu0
  %v2753 = vadd.f32 %v2538, %v2752
  %2754 = vdwg.mxu0
  %2755 = vmatprep.subr.bf16.mxu0 0
  %2756 = vmatpush1.bf16.msra.mxu0 0
  %2757 = vmatprep.subr.bf16.mxu0 0
  %2758 = vmatpush1.bf16.msra.mxu0 0
  %2759 = vmatprep.subr.bf16.mxu0 0
  %2760 = vmatpush1.bf16.msra.mxu0 0
  %2761 = vmatprep.subr.bf16.mxu0 0
  %2762 = vmatpush1.bf16.msra.mxu0 0
  %2763 = vmatprep.subr.bf16.mxu0 0
  %2764 = vmatpush1.bf16.msra.mxu0 0
  %2765 = vmatprep.subr.bf16.mxu0 0
  %2766 = vmatpush1.bf16.msra.mxu0 0
  %2767 = vmatprep.subr.bf16.mxu0 0
  %2768 = vmatpush1.bf16.msra.mxu0 %v2632
  %2769 = vmatprep.subr.bf16.mxu0 0
  %2770 = vmatpush1.bf16.msra.mxu0 %v2627
  %2771 = vmatprep.subr.bf16.mxu0 0
  %2772 = vmatpush2.bf16.msra.mxu0 0
  %2773 = vmatprep.subr.bf16.mxu0 0
  %2774 = vmatpush2.bf16.msra.mxu0 0
  %2775 = vmatprep.subr.bf16.mxu0 0
  %2776 = vmatpush2.bf16.msra.mxu0 0
  %2777 = vmatprep.subr.bf16.mxu0 0
  %2778 = vmatpush2.bf16.msra.mxu0 0
  %2779 = vmatprep.subr.bf16.mxu0 0
  %2780 = vmatpush2.bf16.msra.mxu0 0
  %2781 = vmatprep.subr.bf16.mxu0 0
  %2782 = vmatpush2.bf16.msra.mxu0 0
  %2783 = vmatprep.subr.bf16.mxu0 0
  %2784 = vmatpush2.bf16.msra.mxu0 0
  %2785 = vmatprep.subr.bf16.mxu0 0
  %2786 = vmatpush2.bf16.msra.mxu0 0
  %2787 = vmatprep.mubr.bf16.mxu0 0
  %2788 = vmatmul.mubr.bf16.gmra.mxu0 %v2644
  %v2789 = vpop.f32.mrf.mxu0
  %v2790 = vadd.f32 %v2575, %v2789
  %v2791 = vpop.f32.mrf.mxu0
  %v2792 = vpop.f32.mrf.mxu0
  %v2793 = vadd.f32 %v2578, %v2792
  %v2794 = vpop.f32.mrf.mxu0
  %2795 = vmatprep.mubr.bf16.mxu0 0
  %2796 = vmatmul.mubr.bf16.gmra.mxu0 %v2647
  %v2797 = vpop.f32.mrf.mxu0
  %v2798 = vadd.f32 %v2583, %v2797
  %v2799 = vpop.f32.mrf.mxu0
  %v2800 = vpop.f32.mrf.mxu0
  %v2801 = vadd.f32 %v2586, %v2800
  %v2802 = vpop.f32.mrf.mxu0
  %2803 = vdwg.mxu0
  %s2804 = scalar_lea.vmem %s4, 32
  %v2805 = vld [vmem:[%s2804] sm:$0xf]
  %v2806 = vld [vmem:[%s2804 + $0x4] sm:$0xf]
  %v2807 = vld [vmem:[%s2804 + $0x8] sm:$0xf]
  %v2808 = vld [vmem:[%s2804 + $0xc] sm:$0xf]
  %v2813 = vunpack.c.l.b16 %v2805
  %v2814 = vunpack.c.l.b16 %v2806
  %v2815 = vunpack.c.l.b16 %v2807
  %v2816 = vunpack.c.l.b16 %v2808
  %v2817 = vpack.c.b16 %v2814, %v2813
  %v2818 = vpack.c.b16 %v2816, %v2815
  %2819 = vrot.lane.b32.xlu0 %v2371, 17
  %v2820 = vpop.permute.xlu0 %2819
  %2821 = vrot.lane.b32.xlu0 %v2372, 17
  %v2822 = vpop.permute.xlu0 %2821
  %2823 = vrot.lane.b32.xlu0 %v2373, 17
  %v2824 = vpop.permute.xlu0 %2823
  %2825 = vrot.lane.b32.xlu0 %v2374, 17
  %v2826 = vpop.permute.xlu0 %2825
  %2827 = vrot.lane.b32.xlu0 %v2375, 17
  %v2828 = vpop.permute.xlu0 %2827
  %2829 = vrot.lane.b32.xlu0 %v2376, 17
  %v2830 = vpop.permute.xlu0 %2829
  %2831 = vrot.lane.b32.xlu0 %v2377, 17
  %v2832 = vpop.permute.xlu0 %2831
  %2833 = vrot.lane.b32.xlu0 %v2378, 17
  %v2834 = vpop.permute.xlu0 %2833
  %2835 = vrot.lane.b32.xlu0 %v2379, 17
  %v2836 = vpop.permute.xlu0 %2835
  %2837 = vrot.lane.b32.xlu0 %v2380, 17
  %v2838 = vpop.permute.xlu0 %2837
  %2839 = vrot.lane.b32.xlu0 %v2381, 17
  %v2840 = vpop.permute.xlu0 %2839
  %2841 = vrot.lane.b32.xlu0 %v2382, 17
  %v2842 = vpop.permute.xlu0 %2841
  %v2843 = vsel %vm556, %v2820, %v2822
  %v2844 = vsel %vm556, %v2822, %v2824
  %v2845 = vsel %vm556, %v2824, %v2826
  %v2846 = vsel %vm556, %v2826, %v2828
  %v2847 = vsel %vm556, %v2828, %v2830
  %v2848 = vsel %vm556, %v2832, %v2834
  %v2849 = vsel %vm556, %v2834, %v2836
  %v2850 = vsel %vm556, %v2836, %v2838
  %v2851 = vsel %vm556, %v2838, %v2840
  %v2852 = vsel %vm556, %v2840, %v2842
  %v2864 = vsel %vm2427, %v2817, 0
  %v2867 = vsel %vm2427, %v2818, 0
  %2869 = vmatprep.subr.bf16.mxu0 0
  %2870 = vmatpush1.bf16.msra.mxu0 0
  %2871 = vmatprep.subr.bf16.mxu0 0
  %2872 = vmatpush1.bf16.msra.mxu0 0
  %2873 = vmatprep.subr.bf16.mxu0 0
  %2874 = vmatpush1.bf16.msra.mxu0 0
  %2875 = vmatprep.subr.bf16.mxu0 0
  %2876 = vmatpush1.bf16.msra.mxu0 0
  %2877 = vmatprep.subr.bf16.mxu0 0
  %2878 = vmatpush1.bf16.msra.mxu0 0
  %2879 = vmatprep.subr.bf16.mxu0 0
  %2880 = vmatpush1.bf16.msra.mxu0 0
  %2881 = vmatprep.subr.bf16.mxu0 %v2849
  %2882 = vmatpush1.bf16.msra.mxu0 %v2848
  %2883 = vmatprep.subr.bf16.mxu0 %v2844
  %2884 = vmatpush1.bf16.msra.mxu0 %v2843
  %2885 = vmatprep.subr.bf16.mxu0 0
  %2886 = vmatpush2.bf16.msra.mxu0 0
  %2887 = vmatprep.subr.bf16.mxu0 0
  %2888 = vmatpush2.bf16.msra.mxu0 0
  %2889 = vmatprep.subr.bf16.mxu0 0
  %2890 = vmatpush2.bf16.msra.mxu0 0
  %2891 = vmatprep.subr.bf16.mxu0 0
  %2892 = vmatpush2.bf16.msra.mxu0 0
  %2893 = vmatprep.subr.bf16.mxu0 0
  %2894 = vmatpush2.bf16.msra.mxu0 0
  %2895 = vmatprep.subr.bf16.mxu0 0
  %2896 = vmatpush2.bf16.msra.mxu0 0
  %2897 = vmatprep.subr.bf16.mxu0 0
  %2898 = vmatpush2.bf16.msra.mxu0 0
  %2899 = vmatprep.subr.bf16.mxu0 0
  %2900 = vmatpush2.bf16.msra.mxu0 0
  %2901 = vmatprep.mubr.bf16.mxu0 0
  %2902 = vmatmul.mubr.bf16.gmra.mxu0 %v2864
  %v2903 = vpop.f32.mrf.mxu0
  %v2904 = vadd.f32 0.0, %v2903
  %v2905 = vpop.f32.mrf.mxu0
  %v2906 = vadd.f32 0.0, %v2905
  %v2907 = vpop.f32.mrf.mxu0
  %v2908 = vadd.f32 0.0, %v2907
  %v2909 = vpop.f32.mrf.mxu0
  %v2910 = vadd.f32 0.0, %v2909
  %2911 = vmatprep.mubr.bf16.mxu0 0
  %2912 = vmatmul.mubr.bf16.gmra.mxu0 %v2867
  %v2913 = vpop.f32.mrf.mxu0
  %v2914 = vadd.f32 0.0, %v2913
  %v2915 = vpop.f32.mrf.mxu0
  %v2916 = vadd.f32 0.0, %v2915
  %v2917 = vpop.f32.mrf.mxu0
  %v2918 = vadd.f32 0.0, %v2917
  %v2919 = vpop.f32.mrf.mxu0
  %v2920 = vadd.f32 0.0, %v2919
  %2921 = vdwg.mxu0
  %2922 = vmatprep.subr.bf16.mxu0 0
  %2923 = vmatpush1.bf16.msra.mxu0 0
  %2924 = vmatprep.subr.bf16.mxu0 0
  %2925 = vmatpush1.bf16.msra.mxu0 0
  %2926 = vmatprep.subr.bf16.mxu0 0
  %2927 = vmatpush1.bf16.msra.mxu0 0
  %2928 = vmatprep.subr.bf16.mxu0 0
  %2929 = vmatpush1.bf16.msra.mxu0 0
  %2930 = vmatprep.subr.bf16.mxu0 0
  %2931 = vmatpush1.bf16.msra.mxu0 0
  %2932 = vmatprep.subr.bf16.mxu0 0
  %2933 = vmatpush1.bf16.msra.mxu0 0
  %2934 = vmatprep.subr.bf16.mxu0 %v2851
  %2935 = vmatpush1.bf16.msra.mxu0 %v2850
  %2936 = vmatprep.subr.bf16.mxu0 %v2846
  %2937 = vmatpush1.bf16.msra.mxu0 %v2845
  %2938 = vmatprep.subr.bf16.mxu0 0
  %2939 = vmatpush2.bf16.msra.mxu0 0
  %2940 = vmatprep.subr.bf16.mxu0 0
  %2941 = vmatpush2.bf16.msra.mxu0 0
  %2942 = vmatprep.subr.bf16.mxu0 0
  %2943 = vmatpush2.bf16.msra.mxu0 0
  %2944 = vmatprep.subr.bf16.mxu0 0
  %2945 = vmatpush2.bf16.msra.mxu0 0
  %2946 = vmatprep.subr.bf16.mxu0 0
  %2947 = vmatpush2.bf16.msra.mxu0 0
  %2948 = vmatprep.subr.bf16.mxu0 0
  %2949 = vmatpush2.bf16.msra.mxu0 0
  %2950 = vmatprep.subr.bf16.mxu0 0
  %2951 = vmatpush2.bf16.msra.mxu0 0
  %2952 = vmatprep.subr.bf16.mxu0 0
  %2953 = vmatpush2.bf16.msra.mxu0 0
  %2954 = vmatprep.mubr.bf16.mxu0 0
  %2955 = vmatmul.mubr.bf16.gmra.mxu0 %v2864
  %v2956 = vpop.f32.mrf.mxu0
  %v2957 = vadd.f32 0.0, %v2956
  %v2958 = vpop.f32.mrf.mxu0
  %v2959 = vadd.f32 0.0, %v2958
  %v2960 = vpop.f32.mrf.mxu0
  %v2961 = vadd.f32 0.0, %v2960
  %v2962 = vpop.f32.mrf.mxu0
  %v2963 = vadd.f32 0.0, %v2962
  %2964 = vmatprep.mubr.bf16.mxu0 0
  %2965 = vmatmul.mubr.bf16.gmra.mxu0 %v2867
  %v2966 = vpop.f32.mrf.mxu0
  %v2967 = vadd.f32 0.0, %v2966
  %v2968 = vpop.f32.mrf.mxu0
  %v2969 = vadd.f32 0.0, %v2968
  %v2970 = vpop.f32.mrf.mxu0
  %v2971 = vadd.f32 0.0, %v2970
  %v2972 = vpop.f32.mrf.mxu0
  %v2973 = vadd.f32 0.0, %v2972
  %2974 = vdwg.mxu0
  %2975 = vmatprep.subr.bf16.mxu0 0
  %2976 = vmatpush1.bf16.msra.mxu0 0
  %2977 = vmatprep.subr.bf16.mxu0 0
  %2978 = vmatpush1.bf16.msra.mxu0 0
  %2979 = vmatprep.subr.bf16.mxu0 0
  %2980 = vmatpush1.bf16.msra.mxu0 0
  %2981 = vmatprep.subr.bf16.mxu0 0
  %2982 = vmatpush1.bf16.msra.mxu0 0
  %2983 = vmatprep.subr.bf16.mxu0 0
  %2984 = vmatpush1.bf16.msra.mxu0 0
  %2985 = vmatprep.subr.bf16.mxu0 0
  %2986 = vmatpush1.bf16.msra.mxu0 0
  %2987 = vmatprep.subr.bf16.mxu0 0
  %2988 = vmatpush1.bf16.msra.mxu0 %v2852
  %2989 = vmatprep.subr.bf16.mxu0 0
  %2990 = vmatpush1.bf16.msra.mxu0 %v2847
  %2991 = vmatprep.subr.bf16.mxu0 0
  %2992 = vmatpush2.bf16.msra.mxu0 0
  %2993 = vmatprep.subr.bf16.mxu0 0
  %2994 = vmatpush2.bf16.msra.mxu0 0
  %2995 = vmatprep.subr.bf16.mxu0 0
  %2996 = vmatpush2.bf16.msra.mxu0 0
  %2997 = vmatprep.subr.bf16.mxu0 0
  %2998 = vmatpush2.bf16.msra.mxu0 0
  %2999 = vmatprep.subr.bf16.mxu0 0
  %3000 = vmatpush2.bf16.msra.mxu0 0
  %3001 = vmatprep.subr.bf16.mxu0 0
  %3002 = vmatpush2.bf16.msra.mxu0 0
  %3003 = vmatprep.subr.bf16.mxu0 0
  %3004 = vmatpush2.bf16.msra.mxu0 0
  %3005 = vmatprep.subr.bf16.mxu0 0
  %3006 = vmatpush2.bf16.msra.mxu0 0
  %3007 = vmatprep.mubr.bf16.mxu0 0
  %3008 = vmatmul.mubr.bf16.gmra.mxu0 %v2864
  %v3009 = vpop.f32.mrf.mxu0
  %v3010 = vadd.f32 0.0, %v3009
  %v3011 = vpop.f32.mrf.mxu0
  %v3012 = vpop.f32.mrf.mxu0
  %v3013 = vadd.f32 0.0, %v3012
  %v3014 = vpop.f32.mrf.mxu0
  %3015 = vmatprep.mubr.bf16.mxu0 0
  %3016 = vmatmul.mubr.bf16.gmra.mxu0 %v2867
  %v3017 = vpop.f32.mrf.mxu0
  %v3018 = vadd.f32 0.0, %v3017
  %v3019 = vpop.f32.mrf.mxu0
  %v3020 = vpop.f32.mrf.mxu0
  %v3021 = vadd.f32 0.0, %v3020
  %v3022 = vpop.f32.mrf.mxu0
  %3023 = vdwg.mxu0
  %v3024 = vadd.f32 %v2684, %v2904
  %v3025 = vadd.f32 %v2686, %v2906
  %v3026 = vadd.f32 %v2737, %v2957
  %v3027 = vadd.f32 %v2739, %v2959
  %v3028 = vadd.f32 %v2790, %v3010
  %v3029 = vadd.f32 %v2688, %v2908
  %v3030 = vadd.f32 %v2690, %v2910
  %v3031 = vadd.f32 %v2741, %v2961
  %v3032 = vadd.f32 %v2743, %v2963
  %v3033 = vadd.f32 %v2793, %v3013
  %v3034 = vadd.f32 %v2694, %v2914
  %v3035 = vadd.f32 %v2696, %v2916
  %v3036 = vadd.f32 %v2747, %v2967
  %v3037 = vadd.f32 %v2749, %v2969
  %v3038 = vadd.f32 %v2798, %v3018
  %v3039 = vadd.f32 %v2698, %v2918
  %v3040 = vadd.f32 %v2700, %v2920
  %v3041 = vadd.f32 %v2751, %v2971
  %v3042 = vadd.f32 %v2753, %v2973
  %v3043 = vadd.f32 %v2801, %v3021
  %s3044 = scalar_lea.vmem %s4, 48
  %v3045 = vld [vmem:[%s3044] sm:$0xf]
  %v3046 = vld [vmem:[%s3044 + $0x4] sm:$0xf]
  %v3047 = vld [vmem:[%s3044 + $0x8] sm:$0xf]
  %v3048 = vld [vmem:[%s3044 + $0xc] sm:$0xf]
  %v3053 = vunpack.c.l.b16 %v3045
  %v3054 = vunpack.c.l.b16 %v3046
  %v3055 = vunpack.c.l.b16 %v3047
  %v3056 = vunpack.c.l.b16 %v3048
  %v3057 = vpack.c.b16 %v3054, %v3053
  %v3058 = vpack.c.b16 %v3056, %v3055
  %3059 = vrot.lane.b32.xlu0 %v2371, 1
  %v3060 = vpop.permute.xlu0 %3059
  %3061 = vrot.lane.b32.xlu0 %v2372, 1
  %v3062 = vpop.permute.xlu0 %3061
  %3063 = vrot.lane.b32.xlu0 %v2373, 1
  %v3064 = vpop.permute.xlu0 %3063
  %3065 = vrot.lane.b32.xlu0 %v2374, 1
  %v3066 = vpop.permute.xlu0 %3065
  %3067 = vrot.lane.b32.xlu0 %v2375, 1
  %v3068 = vpop.permute.xlu0 %3067
  %3069 = vrot.lane.b32.xlu0 %v2376, 1
  %v3070 = vpop.permute.xlu0 %3069
  %3071 = vrot.lane.b32.xlu0 %v2377, 1
  %v3072 = vpop.permute.xlu0 %3071
  %3073 = vrot.lane.b32.xlu0 %v2378, 1
  %v3074 = vpop.permute.xlu0 %3073
  %3075 = vrot.lane.b32.xlu0 %v2379, 1
  %v3076 = vpop.permute.xlu0 %3075
  %3077 = vrot.lane.b32.xlu0 %v2380, 1
  %v3078 = vpop.permute.xlu0 %3077
  %3079 = vrot.lane.b32.xlu0 %v2381, 1
  %v3080 = vpop.permute.xlu0 %3079
  %3081 = vrot.lane.b32.xlu0 %v2382, 1
  %v3082 = vpop.permute.xlu0 %3081
  %v3083 = vsel %vm785, %v3060, %v3062
  %v3084 = vsel %vm785, %v3062, %v3064
  %v3085 = vsel %vm785, %v3064, %v3066
  %v3086 = vsel %vm785, %v3066, %v3068
  %v3087 = vsel %vm785, %v3068, %v3070
  %v3088 = vsel %vm785, %v3072, %v3074
  %v3089 = vsel %vm785, %v3074, %v3076
  %v3090 = vsel %vm785, %v3076, %v3078
  %v3091 = vsel %vm785, %v3078, %v3080
  %v3092 = vsel %vm785, %v3080, %v3082
  %v3104 = vsel %vm2427, %v3057, 0
  %v3107 = vsel %vm2427, %v3058, 0
  %3109 = vmatprep.subr.bf16.mxu0 0
  %3110 = vmatpush1.bf16.msra.mxu0 0
  %3111 = vmatprep.subr.bf16.mxu0 0
  %3112 = vmatpush1.bf16.msra.mxu0 0
  %3113 = vmatprep.subr.bf16.mxu0 0
  %3114 = vmatpush1.bf16.msra.mxu0 0
  %3115 = vmatprep.subr.bf16.mxu0 0
  %3116 = vmatpush1.bf16.msra.mxu0 0
  %3117 = vmatprep.subr.bf16.mxu0 0
  %3118 = vmatpush1.bf16.msra.mxu0 0
  %3119 = vmatprep.subr.bf16.mxu0 0
  %3120 = vmatpush1.bf16.msra.mxu0 0
  %3121 = vmatprep.subr.bf16.mxu0 %v3089
  %3122 = vmatpush1.bf16.msra.mxu0 %v3088
  %3123 = vmatprep.subr.bf16.mxu0 %v3084
  %3124 = vmatpush1.bf16.msra.mxu0 %v3083
  %3125 = vmatprep.subr.bf16.mxu0 0
  %3126 = vmatpush2.bf16.msra.mxu0 0
  %3127 = vmatprep.subr.bf16.mxu0 0
  %3128 = vmatpush2.bf16.msra.mxu0 0
  %3129 = vmatprep.subr.bf16.mxu0 0
  %3130 = vmatpush2.bf16.msra.mxu0 0
  %3131 = vmatprep.subr.bf16.mxu0 0
  %3132 = vmatpush2.bf16.msra.mxu0 0
  %3133 = vmatprep.subr.bf16.mxu0 0
  %3134 = vmatpush2.bf16.msra.mxu0 0
  %3135 = vmatprep.subr.bf16.mxu0 0
  %3136 = vmatpush2.bf16.msra.mxu0 0
  %3137 = vmatprep.subr.bf16.mxu0 0
  %3138 = vmatpush2.bf16.msra.mxu0 0
  %3139 = vmatprep.subr.bf16.mxu0 0
  %3140 = vmatpush2.bf16.msra.mxu0 0
  %3141 = vmatprep.mubr.bf16.mxu0 0
  %3142 = vmatmul.mubr.bf16.gmra.mxu0 %v3104
  %v3143 = vpop.f32.mrf.mxu0
  %v3144 = vadd.f32 0.0, %v3143
  %v3145 = vpop.f32.mrf.mxu0
  %v3146 = vadd.f32 0.0, %v3145
  %v3147 = vpop.f32.mrf.mxu0
  %v3148 = vadd.f32 0.0, %v3147
  %v3149 = vpop.f32.mrf.mxu0
  %v3150 = vadd.f32 0.0, %v3149
  %3151 = vmatprep.mubr.bf16.mxu0 0
  %3152 = vmatmul.mubr.bf16.gmra.mxu0 %v3107
  %v3153 = vpop.f32.mrf.mxu0
  %v3154 = vadd.f32 0.0, %v3153
  %v3155 = vpop.f32.mrf.mxu0
  %v3156 = vadd.f32 0.0, %v3155
  %v3157 = vpop.f32.mrf.mxu0
  %v3158 = vadd.f32 0.0, %v3157
  %v3159 = vpop.f32.mrf.mxu0
  %v3160 = vadd.f32 0.0, %v3159
  %3161 = vdwg.mxu0
  %3162 = vmatprep.subr.bf16.mxu0 0
  %3163 = vmatpush1.bf16.msra.mxu0 0
  %3164 = vmatprep.subr.bf16.mxu0 0
  %3165 = vmatpush1.bf16.msra.mxu0 0
  %3166 = vmatprep.subr.bf16.mxu0 0
  %3167 = vmatpush1.bf16.msra.mxu0 0
  %3168 = vmatprep.subr.bf16.mxu0 0
  %3169 = vmatpush1.bf16.msra.mxu0 0
  %3170 = vmatprep.subr.bf16.mxu0 0
  %3171 = vmatpush1.bf16.msra.mxu0 0
  %3172 = vmatprep.subr.bf16.mxu0 0
  %3173 = vmatpush1.bf16.msra.mxu0 0
  %3174 = vmatprep.subr.bf16.mxu0 %v3091
  %3175 = vmatpush1.bf16.msra.mxu0 %v3090
  %3176 = vmatprep.subr.bf16.mxu0 %v3086
  %3177 = vmatpush1.bf16.msra.mxu0 %v3085
  %3178 = vmatprep.subr.bf16.mxu0 0
  %3179 = vmatpush2.bf16.msra.mxu0 0
  %3180 = vmatprep.subr.bf16.mxu0 0
  %3181 = vmatpush2.bf16.msra.mxu0 0
  %3182 = vmatprep.subr.bf16.mxu0 0
  %3183 = vmatpush2.bf16.msra.mxu0 0
  %3184 = vmatprep.subr.bf16.mxu0 0
  %3185 = vmatpush2.bf16.msra.mxu0 0
  %3186 = vmatprep.subr.bf16.mxu0 0
  %3187 = vmatpush2.bf16.msra.mxu0 0
  %3188 = vmatprep.subr.bf16.mxu0 0
  %3189 = vmatpush2.bf16.msra.mxu0 0
  %3190 = vmatprep.subr.bf16.mxu0 0
  %3191 = vmatpush2.bf16.msra.mxu0 0
  %3192 = vmatprep.subr.bf16.mxu0 0
  %3193 = vmatpush2.bf16.msra.mxu0 0
  %3194 = vmatprep.mubr.bf16.mxu0 0
  %3195 = vmatmul.mubr.bf16.gmra.mxu0 %v3104
  %v3196 = vpop.f32.mrf.mxu0
  %v3197 = vadd.f32 0.0, %v3196
  %v3198 = vpop.f32.mrf.mxu0
  %v3199 = vadd.f32 0.0, %v3198
  %v3200 = vpop.f32.mrf.mxu0
  %v3201 = vadd.f32 0.0, %v3200
  %v3202 = vpop.f32.mrf.mxu0
  %v3203 = vadd.f32 0.0, %v3202
  %3204 = vmatprep.mubr.bf16.mxu0 0
  %3205 = vmatmul.mubr.bf16.gmra.mxu0 %v3107
  %v3206 = vpop.f32.mrf.mxu0
  %v3207 = vadd.f32 0.0, %v3206
  %v3208 = vpop.f32.mrf.mxu0
  %v3209 = vadd.f32 0.0, %v3208
  %v3210 = vpop.f32.mrf.mxu0
  %v3211 = vadd.f32 0.0, %v3210
  %v3212 = vpop.f32.mrf.mxu0
  %v3213 = vadd.f32 0.0, %v3212
  %3214 = vdwg.mxu0
  %3215 = vmatprep.subr.bf16.mxu0 0
  %3216 = vmatpush1.bf16.msra.mxu0 0
  %3217 = vmatprep.subr.bf16.mxu0 0
  %3218 = vmatpush1.bf16.msra.mxu0 0
  %3219 = vmatprep.subr.bf16.mxu0 0
  %3220 = vmatpush1.bf16.msra.mxu0 0
  %3221 = vmatprep.subr.bf16.mxu0 0
  %3222 = vmatpush1.bf16.msra.mxu0 0
  %3223 = vmatprep.subr.bf16.mxu0 0
  %3224 = vmatpush1.bf16.msra.mxu0 0
  %3225 = vmatprep.subr.bf16.mxu0 0
  %3226 = vmatpush1.bf16.msra.mxu0 0
  %3227 = vmatprep.subr.bf16.mxu0 0
  %3228 = vmatpush1.bf16.msra.mxu0 %v3092
  %3229 = vmatprep.subr.bf16.mxu0 0
  %3230 = vmatpush1.bf16.msra.mxu0 %v3087
  %3231 = vmatprep.subr.bf16.mxu0 0
  %3232 = vmatpush2.bf16.msra.mxu0 0
  %3233 = vmatprep.subr.bf16.mxu0 0
  %3234 = vmatpush2.bf16.msra.mxu0 0
  %3235 = vmatprep.subr.bf16.mxu0 0
  %3236 = vmatpush2.bf16.msra.mxu0 0
  %3237 = vmatprep.subr.bf16.mxu0 0
  %3238 = vmatpush2.bf16.msra.mxu0 0
  %3239 = vmatprep.subr.bf16.mxu0 0
  %3240 = vmatpush2.bf16.msra.mxu0 0
  %3241 = vmatprep.subr.bf16.mxu0 0
  %3242 = vmatpush2.bf16.msra.mxu0 0
  %3243 = vmatprep.subr.bf16.mxu0 0
  %3244 = vmatpush2.bf16.msra.mxu0 0
  %3245 = vmatprep.subr.bf16.mxu0 0
  %3246 = vmatpush2.bf16.msra.mxu0 0
  %3247 = vmatprep.mubr.bf16.mxu0 0
  %3248 = vmatmul.mubr.bf16.gmra.mxu0 %v3104
  %v3249 = vpop.f32.mrf.mxu0
  %v3250 = vadd.f32 0.0, %v3249
  %v3251 = vpop.f32.mrf.mxu0
  %v3252 = vpop.f32.mrf.mxu0
  %v3253 = vadd.f32 0.0, %v3252
  %v3254 = vpop.f32.mrf.mxu0
  %3255 = vmatprep.mubr.bf16.mxu0 0
  %3256 = vmatmul.mubr.bf16.gmra.mxu0 %v3107
  %v3257 = vpop.f32.mrf.mxu0
  %v3258 = vadd.f32 0.0, %v3257
  %v3259 = vpop.f32.mrf.mxu0
  %v3260 = vpop.f32.mrf.mxu0
  %v3261 = vadd.f32 0.0, %v3260
  %v3262 = vpop.f32.mrf.mxu0
  %3263 = vdwg.mxu0
  %v3264 = vadd.f32 %v3024, %v3144
  %v3265 = vadd.f32 %v3025, %v3146
  %v3266 = vadd.f32 %v3026, %v3197
  %v3267 = vadd.f32 %v3027, %v3199
  %v3268 = vadd.f32 %v3028, %v3250
  %v3269 = vadd.f32 %v3029, %v3148
  %v3270 = vadd.f32 %v3030, %v3150
  %v3271 = vadd.f32 %v3031, %v3201
  %v3272 = vadd.f32 %v3032, %v3203
  %v3273 = vadd.f32 %v3033, %v3253
  %v3274 = vadd.f32 %v3034, %v3154
  %v3275 = vadd.f32 %v3035, %v3156
  %v3276 = vadd.f32 %v3036, %v3207
  %v3277 = vadd.f32 %v3037, %v3209
  %v3278 = vadd.f32 %v3038, %v3258
  %v3279 = vadd.f32 %v3039, %v3158
  %v3280 = vadd.f32 %v3040, %v3160
  %v3281 = vadd.f32 %v3041, %v3211
  %v3282 = vadd.f32 %v3042, %v3213
  %v3283 = vadd.f32 %v3043, %v3261
  %v3284 = vld [vmem:[#allocation2 + $0x4] sm:$0xff]
  %v3285 = vld [vmem:[#allocation2 + $0xc] sm:$0xff]
  %v3286 = vld [vmem:[#allocation2 + $0x14] sm:$0xf]
  %v3287 = vld [vmem:[#allocation2 + $0x1c] sm:$0xff]
  %v3288 = vld [vmem:[#allocation2 + $0x24] sm:$0xff]
  %v3289 = vld [vmem:[#allocation2 + $0x2c] sm:$0xf]
  %v3290 = vld [vmem:[#allocation2 + $0x34] sm:$0xff]
  %v3291 = vld [vmem:[#allocation2 + $0x3c] sm:$0xff]
  %v3292 = vld [vmem:[#allocation2 + $0x44] sm:$0xf]
  %v3293 = vld [vmem:[#allocation2 + $0x4c] sm:$0xff]
  %v3294 = vld [vmem:[#allocation2 + $0x54] sm:$0xff]
  %v3295 = vld [vmem:[#allocation2 + $0x5c] sm:$0xf]
  %s3296 = scalar_lea.vmem %s4, 64
  %v3297 = vld [vmem:[%s3296] sm:$0xf]
  %v3298 = vld [vmem:[%s3296 + $0x4] sm:$0xf]
  %v3299 = vld [vmem:[%s3296 + $0x8] sm:$0xf]
  %v3300 = vld [vmem:[%s3296 + $0xc] sm:$0xf]
  %v3305 = vunpack.c.l.b16 %v3297
  %v3306 = vunpack.c.l.b16 %v3298
  %v3307 = vunpack.c.l.b16 %v3299
  %v3308 = vunpack.c.l.b16 %v3300
  %v3309 = vpack.c.b16 %v3306, %v3305
  %v3310 = vpack.c.b16 %v3308, %v3307
  %v3323 = vunpack.c.l.b16 %v3284
  %v3324 = vunpack.c.h.b16 %v3284
  %v3325 = vunpack.c.l.b16 %v3285
  %v3326 = vunpack.c.h.b16 %v3285
  %v3327 = vunpack.c.l.b16 %v3286
  %v3328 = vunpack.c.l.b16 %v3287
  %v3329 = vunpack.c.h.b16 %v3287
  %v3330 = vunpack.c.l.b16 %v3288
  %v3331 = vunpack.c.h.b16 %v3288
  %v3332 = vunpack.c.l.b16 %v3289
  %v3333 = vunpack.c.l.b16 %v3290
  %v3334 = vunpack.c.h.b16 %v3290
  %v3335 = vunpack.c.l.b16 %v3291
  %v3336 = vunpack.c.h.b16 %v3291
  %v3337 = vunpack.c.l.b16 %v3292
  %v3338 = vunpack.c.l.b16 %v3293
  %v3339 = vunpack.c.h.b16 %v3293
  %v3340 = vunpack.c.l.b16 %v3294
  %v3341 = vunpack.c.h.b16 %v3294
  %v3342 = vunpack.c.l.b16 %v3295
  %v3343 = vpack.c.b16 %v3328, %v3323
  %v3344 = vpack.c.b16 %v3329, %v3324
  %v3345 = vpack.c.b16 %v3330, %v3325
  %v3346 = vpack.c.b16 %v3331, %v3326
  %v3347 = vpack.c.b16 %v3332, %v3327
  %v3348 = vpack.c.b16 %v3338, %v3333
  %v3349 = vpack.c.b16 %v3339, %v3334
  %v3350 = vpack.c.b16 %v3340, %v3335
  %v3351 = vpack.c.b16 %v3341, %v3336
  %v3352 = vpack.c.b16 %v3342, %v3337
  %v3364 = vsel %vm2427, %v3309, 0
  %v3367 = vsel %vm2427, %v3310, 0
  %3369 = vmatprep.subr.bf16.mxu0 0
  %3370 = vmatpush1.bf16.msra.mxu0 0
  %3371 = vmatprep.subr.bf16.mxu0 0
  %3372 = vmatpush1.bf16.msra.mxu0 0
  %3373 = vmatprep.subr.bf16.mxu0 0
  %3374 = vmatpush1.bf16.msra.mxu0 0
  %3375 = vmatprep.subr.bf16.mxu0 0
  %3376 = vmatpush1.bf16.msra.mxu0 0
  %3377 = vmatprep.subr.bf16.mxu0 0
  %3378 = vmatpush1.bf16.msra.mxu0 0
  %3379 = vmatprep.subr.bf16.mxu0 0
  %3380 = vmatpush1.bf16.msra.mxu0 0
  %3381 = vmatprep.subr.bf16.mxu0 %v3349
  %3382 = vmatpush1.bf16.msra.mxu0 %v3348
  %3383 = vmatprep.subr.bf16.mxu0 %v3344
  %3384 = vmatpush1.bf16.msra.mxu0 %v3343
  %3385 = vmatprep.subr.bf16.mxu0 0
  %3386 = vmatpush2.bf16.msra.mxu0 0
  %3387 = vmatprep.subr.bf16.mxu0 0
  %3388 = vmatpush2.bf16.msra.mxu0 0
  %3389 = vmatprep.subr.bf16.mxu0 0
  %3390 = vmatpush2.bf16.msra.mxu0 0
  %3391 = vmatprep.subr.bf16.mxu0 0
  %3392 = vmatpush2.bf16.msra.mxu0 0
  %3393 = vmatprep.subr.bf16.mxu0 0
  %3394 = vmatpush2.bf16.msra.mxu0 0
  %3395 = vmatprep.subr.bf16.mxu0 0
  %3396 = vmatpush2.bf16.msra.mxu0 0
  %3397 = vmatprep.subr.bf16.mxu0 0
  %3398 = vmatpush2.bf16.msra.mxu0 0
  %3399 = vmatprep.subr.bf16.mxu0 0
  %3400 = vmatpush2.bf16.msra.mxu0 0
  %3401 = vmatprep.mubr.bf16.mxu0 0
  %3402 = vmatmul.mubr.bf16.gmra.mxu0 %v3364
  %v3403 = vpop.f32.mrf.mxu0
  %v3404 = vadd.f32 0.0, %v3403
  %v3405 = vpop.f32.mrf.mxu0
  %v3406 = vadd.f32 0.0, %v3405
  %v3407 = vpop.f32.mrf.mxu0
  %v3408 = vadd.f32 0.0, %v3407
  %v3409 = vpop.f32.mrf.mxu0
  %v3410 = vadd.f32 0.0, %v3409
  %3411 = vmatprep.mubr.bf16.mxu0 0
  %3412 = vmatmul.mubr.bf16.gmra.mxu0 %v3367
  %v3413 = vpop.f32.mrf.mxu0
  %v3414 = vadd.f32 0.0, %v3413
  %v3415 = vpop.f32.mrf.mxu0
  %v3416 = vadd.f32 0.0, %v3415
  %v3417 = vpop.f32.mrf.mxu0
  %v3418 = vadd.f32 0.0, %v3417
  %v3419 = vpop.f32.mrf.mxu0
  %v3420 = vadd.f32 0.0, %v3419
  %3421 = vdwg.mxu0
  %3422 = vmatprep.subr.bf16.mxu0 0
  %3423 = vmatpush1.bf16.msra.mxu0 0
  %3424 = vmatprep.subr.bf16.mxu0 0
  %3425 = vmatpush1.bf16.msra.mxu0 0
  %3426 = vmatprep.subr.bf16.mxu0 0
  %3427 = vmatpush1.bf16.msra.mxu0 0
  %3428 = vmatprep.subr.bf16.mxu0 0
  %3429 = vmatpush1.bf16.msra.mxu0 0
  %3430 = vmatprep.subr.bf16.mxu0 0
  %3431 = vmatpush1.bf16.msra.mxu0 0
  %3432 = vmatprep.subr.bf16.mxu0 0
  %3433 = vmatpush1.bf16.msra.mxu0 0
  %3434 = vmatprep.subr.bf16.mxu0 %v3351
  %3435 = vmatpush1.bf16.msra.mxu0 %v3350
  %3436 = vmatprep.subr.bf16.mxu0 %v3346
  %3437 = vmatpush1.bf16.msra.mxu0 %v3345
  %3438 = vmatprep.subr.bf16.mxu0 0
  %3439 = vmatpush2.bf16.msra.mxu0 0
  %3440 = vmatprep.subr.bf16.mxu0 0
  %3441 = vmatpush2.bf16.msra.mxu0 0
  %3442 = vmatprep.subr.bf16.mxu0 0
  %3443 = vmatpush2.bf16.msra.mxu0 0
  %3444 = vmatprep.subr.bf16.mxu0 0
  %3445 = vmatpush2.bf16.msra.mxu0 0
  %3446 = vmatprep.subr.bf16.mxu0 0
  %3447 = vmatpush2.bf16.msra.mxu0 0
  %3448 = vmatprep.subr.bf16.mxu0 0
  %3449 = vmatpush2.bf16.msra.mxu0 0
  %3450 = vmatprep.subr.bf16.mxu0 0
  %3451 = vmatpush2.bf16.msra.mxu0 0
  %3452 = vmatprep.subr.bf16.mxu0 0
  %3453 = vmatpush2.bf16.msra.mxu0 0
  %3454 = vmatprep.mubr.bf16.mxu0 0
  %3455 = vmatmul.mubr.bf16.gmra.mxu0 %v3364
  %v3456 = vpop.f32.mrf.mxu0
  %v3457 = vadd.f32 0.0, %v3456
  %v3458 = vpop.f32.mrf.mxu0
  %v3459 = vadd.f32 0.0, %v3458
  %v3460 = vpop.f32.mrf.mxu0
  %v3461 = vadd.f32 0.0, %v3460
  %v3462 = vpop.f32.mrf.mxu0
  %v3463 = vadd.f32 0.0, %v3462
  %3464 = vmatprep.mubr.bf16.mxu0 0
  %3465 = vmatmul.mubr.bf16.gmra.mxu0 %v3367
  %v3466 = vpop.f32.mrf.mxu0
  %v3467 = vadd.f32 0.0, %v3466
  %v3468 = vpop.f32.mrf.mxu0
  %v3469 = vadd.f32 0.0, %v3468
  %v3470 = vpop.f32.mrf.mxu0
  %v3471 = vadd.f32 0.0, %v3470
  %v3472 = vpop.f32.mrf.mxu0
  %v3473 = vadd.f32 0.0, %v3472
  %3474 = vdwg.mxu0
  %3475 = vmatprep.subr.bf16.mxu0 0
  %3476 = vmatpush1.bf16.msra.mxu0 0
  %3477 = vmatprep.subr.bf16.mxu0 0
  %3478 = vmatpush1.bf16.msra.mxu0 0
  %3479 = vmatprep.subr.bf16.mxu0 0
  %3480 = vmatpush1.bf16.msra.mxu0 0
  %3481 = vmatprep.subr.bf16.mxu0 0
  %3482 = vmatpush1.bf16.msra.mxu0 0
  %3483 = vmatprep.subr.bf16.mxu0 0
  %3484 = vmatpush1.bf16.msra.mxu0 0
  %3485 = vmatprep.subr.bf16.mxu0 0
  %3486 = vmatpush1.bf16.msra.mxu0 0
  %3487 = vmatprep.subr.bf16.mxu0 0
  %3488 = vmatpush1.bf16.msra.mxu0 %v3352
  %3489 = vmatprep.subr.bf16.mxu0 0
  %3490 = vmatpush1.bf16.msra.mxu0 %v3347
  %3491 = vmatprep.subr.bf16.mxu0 0
  %3492 = vmatpush2.bf16.msra.mxu0 0
  %3493 = vmatprep.subr.bf16.mxu0 0
  %3494 = vmatpush2.bf16.msra.mxu0 0
  %3495 = vmatprep.subr.bf16.mxu0 0
  %3496 = vmatpush2.bf16.msra.mxu0 0
  %3497 = vmatprep.subr.bf16.mxu0 0
  %3498 = vmatpush2.bf16.msra.mxu0 0
  %3499 = vmatprep.subr.bf16.mxu0 0
  %3500 = vmatpush2.bf16.msra.mxu0 0
  %3501 = vmatprep.subr.bf16.mxu0 0
  %3502 = vmatpush2.bf16.msra.mxu0 0
  %3503 = vmatprep.subr.bf16.mxu0 0
  %3504 = vmatpush2.bf16.msra.mxu0 0
  %3505 = vmatprep.subr.bf16.mxu0 0
  %3506 = vmatpush2.bf16.msra.mxu0 0
  %3507 = vmatprep.mubr.bf16.mxu0 0
  %3508 = vmatmul.mubr.bf16.gmra.mxu0 %v3364
  %v3509 = vpop.f32.mrf.mxu0
  %v3510 = vadd.f32 0.0, %v3509
  %v3511 = vpop.f32.mrf.mxu0
  %v3512 = vpop.f32.mrf.mxu0
  %v3513 = vadd.f32 0.0, %v3512
  %v3514 = vpop.f32.mrf.mxu0
  %3515 = vmatprep.mubr.bf16.mxu0 0
  %3516 = vmatmul.mubr.bf16.gmra.mxu0 %v3367
  %v3517 = vpop.f32.mrf.mxu0
  %v3518 = vadd.f32 0.0, %v3517
  %v3519 = vpop.f32.mrf.mxu0
  %v3520 = vpop.f32.mrf.mxu0
  %v3521 = vadd.f32 0.0, %v3520
  %v3522 = vpop.f32.mrf.mxu0
  %3523 = vdwg.mxu0
  %v3524 = vadd.f32 %v3264, %v3404
  %v3525 = vadd.f32 %v3265, %v3406
  %v3526 = vadd.f32 %v3266, %v3457
  %v3527 = vadd.f32 %v3267, %v3459
  %v3528 = vadd.f32 %v3268, %v3510
  %v3529 = vadd.f32 %v3269, %v3408
  %v3530 = vadd.f32 %v3270, %v3410
  %v3531 = vadd.f32 %v3271, %v3461
  %v3532 = vadd.f32 %v3272, %v3463
  %v3533 = vadd.f32 %v3273, %v3513
  %v3534 = vadd.f32 %v3274, %v3414
  %v3535 = vadd.f32 %v3275, %v3416
  %v3536 = vadd.f32 %v3276, %v3467
  %v3537 = vadd.f32 %v3277, %v3469
  %v3538 = vadd.f32 %v3278, %v3518
  %v3539 = vadd.f32 %v3279, %v3418
  %v3540 = vadd.f32 %v3280, %v3420
  %v3541 = vadd.f32 %v3281, %v3471
  %v3542 = vadd.f32 %v3282, %v3473
  %v3543 = vadd.f32 %v3283, %v3521
  %s3544 = scalar_lea.vmem %s4, 80
  %v3545 = vld [vmem:[%s3544] sm:$0xf]
  %v3546 = vld [vmem:[%s3544 + $0x4] sm:$0xf]
  %v3547 = vld [vmem:[%s3544 + $0x8] sm:$0xf]
  %v3548 = vld [vmem:[%s3544 + $0xc] sm:$0xf]
  %v3553 = vunpack.c.l.b16 %v3545
  %v3554 = vunpack.c.l.b16 %v3546
  %v3555 = vunpack.c.l.b16 %v3547
  %v3556 = vunpack.c.l.b16 %v3548
  %v3557 = vpack.c.b16 %v3554, %v3553
  %v3558 = vpack.c.b16 %v3556, %v3555
  %3559 = vrot.lane.b32.xlu0 %v3343, 127
  %v3560 = vpop.permute.xlu0 %3559
  %3561 = vrot.lane.b32.xlu0 %v3344, 127
  %v3562 = vpop.permute.xlu0 %3561
  %3563 = vrot.lane.b32.xlu0 %v3345, 127
  %v3564 = vpop.permute.xlu0 %3563
  %3565 = vrot.lane.b32.xlu0 %v3346, 127
  %v3566 = vpop.permute.xlu0 %3565
  %3567 = vrot.lane.b32.xlu0 %v3347, 127
  %v3568 = vpop.permute.xlu0 %3567
  %3569 = vrot.lane.b32.xlu0 %v3348, 127
  %v3570 = vpop.permute.xlu0 %3569
  %3571 = vrot.lane.b32.xlu0 %v3349, 127
  %v3572 = vpop.permute.xlu0 %3571
  %3573 = vrot.lane.b32.xlu0 %v3350, 127
  %v3574 = vpop.permute.xlu0 %3573
  %3575 = vrot.lane.b32.xlu0 %v3351, 127
  %v3576 = vpop.permute.xlu0 %3575
  %3577 = vrot.lane.b32.xlu0 %v3352, 127
  %v3578 = vpop.permute.xlu0 %3577
  %v3579 = vsel %vm1239, %v3560, %v3562
  %v3580 = vsel %vm1239, %v3562, %v3564
  %v3581 = vsel %vm1239, %v3564, %v3566
  %v3582 = vsel %vm1239, %v3566, %v3568
  %v3583 = vsel %vm1239, %v3570, %v3572
  %v3584 = vsel %vm1239, %v3572, %v3574
  %v3585 = vsel %vm1239, %v3574, %v3576
  %v3586 = vsel %vm1239, %v3576, %v3578
  %v3598 = vsel %vm2427, %v3557, 0
  %v3601 = vsel %vm2427, %v3558, 0
  %3603 = vmatprep.subr.bf16.mxu0 0
  %3604 = vmatpush1.bf16.msra.mxu0 0
  %3605 = vmatprep.subr.bf16.mxu0 0
  %3606 = vmatpush1.bf16.msra.mxu0 0
  %3607 = vmatprep.subr.bf16.mxu0 0
  %3608 = vmatpush1.bf16.msra.mxu0 0
  %3609 = vmatprep.subr.bf16.mxu0 0
  %3610 = vmatpush1.bf16.msra.mxu0 0
  %3611 = vmatprep.subr.bf16.mxu0 0
  %3612 = vmatpush1.bf16.msra.mxu0 0
  %3613 = vmatprep.subr.bf16.mxu0 0
  %3614 = vmatpush1.bf16.msra.mxu0 0
  %3615 = vmatprep.subr.bf16.mxu0 %v3584
  %3616 = vmatpush1.bf16.msra.mxu0 %v3583
  %3617 = vmatprep.subr.bf16.mxu0 %v3580
  %3618 = vmatpush1.bf16.msra.mxu0 %v3579
  %3619 = vmatprep.subr.bf16.mxu0 0
  %3620 = vmatpush2.bf16.msra.mxu0 0
  %3621 = vmatprep.subr.bf16.mxu0 0
  %3622 = vmatpush2.bf16.msra.mxu0 0
  %3623 = vmatprep.subr.bf16.mxu0 0
  %3624 = vmatpush2.bf16.msra.mxu0 0
  %3625 = vmatprep.subr.bf16.mxu0 0
  %3626 = vmatpush2.bf16.msra.mxu0 0
  %3627 = vmatprep.subr.bf16.mxu0 0
  %3628 = vmatpush2.bf16.msra.mxu0 0
  %3629 = vmatprep.subr.bf16.mxu0 0
  %3630 = vmatpush2.bf16.msra.mxu0 0
  %3631 = vmatprep.subr.bf16.mxu0 0
  %3632 = vmatpush2.bf16.msra.mxu0 0
  %3633 = vmatprep.subr.bf16.mxu0 0
  %3634 = vmatpush2.bf16.msra.mxu0 0
  %3635 = vmatprep.mubr.bf16.mxu0 0
  %3636 = vmatmul.mubr.bf16.gmra.mxu0 %v3598
  %v3637 = vpop.f32.mrf.mxu0
  %v3638 = vadd.f32 0.0, %v3637
  %v3639 = vpop.f32.mrf.mxu0
  %v3640 = vadd.f32 0.0, %v3639
  %v3641 = vpop.f32.mrf.mxu0
  %v3642 = vadd.f32 0.0, %v3641
  %v3643 = vpop.f32.mrf.mxu0
  %v3644 = vadd.f32 0.0, %v3643
  %3645 = vmatprep.mubr.bf16.mxu0 0
  %3646 = vmatmul.mubr.bf16.gmra.mxu0 %v3601
  %v3647 = vpop.f32.mrf.mxu0
  %v3648 = vadd.f32 0.0, %v3647
  %v3649 = vpop.f32.mrf.mxu0
  %v3650 = vadd.f32 0.0, %v3649
  %v3651 = vpop.f32.mrf.mxu0
  %v3652 = vadd.f32 0.0, %v3651
  %v3653 = vpop.f32.mrf.mxu0
  %v3654 = vadd.f32 0.0, %v3653
  %3655 = vdwg.mxu0
  %3656 = vmatprep.subr.bf16.mxu0 0
  %3657 = vmatpush1.bf16.msra.mxu0 0
  %3658 = vmatprep.subr.bf16.mxu0 0
  %3659 = vmatpush1.bf16.msra.mxu0 0
  %3660 = vmatprep.subr.bf16.mxu0 0
  %3661 = vmatpush1.bf16.msra.mxu0 0
  %3662 = vmatprep.subr.bf16.mxu0 0
  %3663 = vmatpush1.bf16.msra.mxu0 0
  %3664 = vmatprep.subr.bf16.mxu0 0
  %3665 = vmatpush1.bf16.msra.mxu0 0
  %3666 = vmatprep.subr.bf16.mxu0 0
  %3667 = vmatpush1.bf16.msra.mxu0 0
  %3668 = vmatprep.subr.bf16.mxu0 %v3586
  %3669 = vmatpush1.bf16.msra.mxu0 %v3585
  %3670 = vmatprep.subr.bf16.mxu0 %v3582
  %3671 = vmatpush1.bf16.msra.mxu0 %v3581
  %3672 = vmatprep.subr.bf16.mxu0 0
  %3673 = vmatpush2.bf16.msra.mxu0 0
  %3674 = vmatprep.subr.bf16.mxu0 0
  %3675 = vmatpush2.bf16.msra.mxu0 0
  %3676 = vmatprep.subr.bf16.mxu0 0
  %3677 = vmatpush2.bf16.msra.mxu0 0
  %3678 = vmatprep.subr.bf16.mxu0 0
  %3679 = vmatpush2.bf16.msra.mxu0 0
  %3680 = vmatprep.subr.bf16.mxu0 0
  %3681 = vmatpush2.bf16.msra.mxu0 0
  %3682 = vmatprep.subr.bf16.mxu0 0
  %3683 = vmatpush2.bf16.msra.mxu0 0
  %3684 = vmatprep.subr.bf16.mxu0 0
  %3685 = vmatpush2.bf16.msra.mxu0 0
  %3686 = vmatprep.subr.bf16.mxu0 0
  %3687 = vmatpush2.bf16.msra.mxu0 0
  %3688 = vmatprep.mubr.bf16.mxu0 0
  %3689 = vmatmul.mubr.bf16.gmra.mxu0 %v3598
  %v3690 = vpop.f32.mrf.mxu0
  %v3691 = vadd.f32 0.0, %v3690
  %v3692 = vpop.f32.mrf.mxu0
  %v3693 = vadd.f32 0.0, %v3692
  %v3694 = vpop.f32.mrf.mxu0
  %v3695 = vadd.f32 0.0, %v3694
  %v3696 = vpop.f32.mrf.mxu0
  %v3697 = vadd.f32 0.0, %v3696
  %3698 = vmatprep.mubr.bf16.mxu0 0
  %3699 = vmatmul.mubr.bf16.gmra.mxu0 %v3601
  %v3700 = vpop.f32.mrf.mxu0
  %v3701 = vadd.f32 0.0, %v3700
  %v3702 = vpop.f32.mrf.mxu0
  %v3703 = vadd.f32 0.0, %v3702
  %v3704 = vpop.f32.mrf.mxu0
  %v3705 = vadd.f32 0.0, %v3704
  %v3706 = vpop.f32.mrf.mxu0
  %v3707 = vadd.f32 0.0, %v3706
  %3708 = vdwg.mxu0
  %3709 = vmatprep.subr.bf16.mxu0 0
  %3710 = vmatpush1.bf16.msra.mxu0 0
  %3711 = vmatprep.subr.bf16.mxu0 0
  %3712 = vmatpush1.bf16.msra.mxu0 0
  %3713 = vmatprep.subr.bf16.mxu0 0
  %3714 = vmatpush1.bf16.msra.mxu0 0
  %3715 = vmatprep.subr.bf16.mxu0 0
  %3716 = vmatpush1.bf16.msra.mxu0 0
  %3717 = vmatprep.subr.bf16.mxu0 0
  %3718 = vmatpush1.bf16.msra.mxu0 0
  %3719 = vmatprep.subr.bf16.mxu0 0
  %3720 = vmatpush1.bf16.msra.mxu0 0
  %3721 = vmatprep.subr.bf16.mxu0 0
  %3722 = vmatpush1.bf16.msra.mxu0 %v3578
  %3723 = vmatprep.subr.bf16.mxu0 0
  %3724 = vmatpush1.bf16.msra.mxu0 %v3568
  %3725 = vmatprep.subr.bf16.mxu0 0
  %3726 = vmatpush2.bf16.msra.mxu0 0
  %3727 = vmatprep.subr.bf16.mxu0 0
  %3728 = vmatpush2.bf16.msra.mxu0 0
  %3729 = vmatprep.subr.bf16.mxu0 0
  %3730 = vmatpush2.bf16.msra.mxu0 0
  %3731 = vmatprep.subr.bf16.mxu0 0
  %3732 = vmatpush2.bf16.msra.mxu0 0
  %3733 = vmatprep.subr.bf16.mxu0 0
  %3734 = vmatpush2.bf16.msra.mxu0 0
  %3735 = vmatprep.subr.bf16.mxu0 0
  %3736 = vmatpush2.bf16.msra.mxu0 0
  %3737 = vmatprep.subr.bf16.mxu0 0
  %3738 = vmatpush2.bf16.msra.mxu0 0
  %3739 = vmatprep.subr.bf16.mxu0 0
  %3740 = vmatpush2.bf16.msra.mxu0 0
  %3741 = vmatprep.mubr.bf16.mxu0 0
  %3742 = vmatmul.mubr.bf16.gmra.mxu0 %v3598
  %v3743 = vpop.f32.mrf.mxu0
  %v3744 = vadd.f32 0.0, %v3743
  %v3745 = vpop.f32.mrf.mxu0
  %v3746 = vpop.f32.mrf.mxu0
  %v3747 = vadd.f32 0.0, %v3746
  %v3748 = vpop.f32.mrf.mxu0
  %3749 = vmatprep.mubr.bf16.mxu0 0
  %3750 = vmatmul.mubr.bf16.gmra.mxu0 %v3601
  %v3751 = vpop.f32.mrf.mxu0
  %v3752 = vadd.f32 0.0, %v3751
  %v3753 = vpop.f32.mrf.mxu0
  %v3754 = vpop.f32.mrf.mxu0
  %v3755 = vadd.f32 0.0, %v3754
  %v3756 = vpop.f32.mrf.mxu0
  %3757 = vdwg.mxu0
  %v3758 = vadd.f32 %v3524, %v3638
  %v3759 = vadd.f32 %v3525, %v3640
  %v3760 = vadd.f32 %v3526, %v3691
  %v3761 = vadd.f32 %v3527, %v3693
  %v3762 = vadd.f32 %v3528, %v3744
  %v3763 = vadd.f32 %v3529, %v3642
  %v3764 = vadd.f32 %v3530, %v3644
  %v3765 = vadd.f32 %v3531, %v3695
  %v3766 = vadd.f32 %v3532, %v3697
  %v3767 = vadd.f32 %v3533, %v3747
  %v3768 = vadd.f32 %v3534, %v3648
  %v3769 = vadd.f32 %v3535, %v3650
  %v3770 = vadd.f32 %v3536, %v3701
  %v3771 = vadd.f32 %v3537, %v3703
  %v3772 = vadd.f32 %v3538, %v3752
  %v3773 = vadd.f32 %v3539, %v3652
  %v3774 = vadd.f32 %v3540, %v3654
  %v3775 = vadd.f32 %v3541, %v3705
  %v3776 = vadd.f32 %v3542, %v3707
  %v3777 = vadd.f32 %v3543, %v3755
  %s3778 = scalar_lea.vmem %s4, 96
  %v3779 = vld [vmem:[%s3778] sm:$0xf]
  %v3780 = vld [vmem:[%s3778 + $0x4] sm:$0xf]
  %v3781 = vld [vmem:[%s3778 + $0x8] sm:$0xf]
  %v3782 = vld [vmem:[%s3778 + $0xc] sm:$0xf]
  %v3787 = vunpack.c.l.b16 %v3779
  %v3788 = vunpack.c.l.b16 %v3780
  %v3789 = vunpack.c.l.b16 %v3781
  %v3790 = vunpack.c.l.b16 %v3782
  %v3791 = vpack.c.b16 %v3788, %v3787
  %v3792 = vpack.c.b16 %v3790, %v3789
  %3793 = vrot.lane.b32.xlu0 %v3343, 111
  %v3794 = vpop.permute.xlu0 %3793
  %3795 = vrot.lane.b32.xlu0 %v3344, 111
  %v3796 = vpop.permute.xlu0 %3795
  %3797 = vrot.lane.b32.xlu0 %v3345, 111
  %v3798 = vpop.permute.xlu0 %3797
  %3799 = vrot.lane.b32.xlu0 %v3346, 111
  %v3800 = vpop.permute.xlu0 %3799
  %3801 = vrot.lane.b32.xlu0 %v3347, 111
  %v3802 = vpop.permute.xlu0 %3801
  %3803 = vrot.lane.b32.xlu0 %v3348, 111
  %v3804 = vpop.permute.xlu0 %3803
  %3805 = vrot.lane.b32.xlu0 %v3349, 111
  %v3806 = vpop.permute.xlu0 %3805
  %3807 = vrot.lane.b32.xlu0 %v3350, 111
  %v3808 = vpop.permute.xlu0 %3807
  %3809 = vrot.lane.b32.xlu0 %v3351, 111
  %v3810 = vpop.permute.xlu0 %3809
  %3811 = vrot.lane.b32.xlu0 %v3352, 111
  %v3812 = vpop.permute.xlu0 %3811
  %v3813 = vsel %vm1465, %v3794, %v3796
  %v3814 = vsel %vm1465, %v3796, %v3798
  %v3815 = vsel %vm1465, %v3798, %v3800
  %v3816 = vsel %vm1465, %v3800, %v3802
  %v3817 = vsel %vm1465, %v3804, %v3806
  %v3818 = vsel %vm1465, %v3806, %v3808
  %v3819 = vsel %vm1465, %v3808, %v3810
  %v3820 = vsel %vm1465, %v3810, %v3812
  %v3832 = vsel %vm2427, %v3791, 0
  %v3835 = vsel %vm2427, %v3792, 0
  %3837 = vmatprep.subr.bf16.mxu0 0
  %3838 = vmatpush1.bf16.msra.mxu0 0
  %3839 = vmatprep.subr.bf16.mxu0 0
  %3840 = vmatpush1.bf16.msra.mxu0 0
  %3841 = vmatprep.subr.bf16.mxu0 0
  %3842 = vmatpush1.bf16.msra.mxu0 0
  %3843 = vmatprep.subr.bf16.mxu0 0
  %3844 = vmatpush1.bf16.msra.mxu0 0
  %3845 = vmatprep.subr.bf16.mxu0 0
  %3846 = vmatpush1.bf16.msra.mxu0 0
  %3847 = vmatprep.subr.bf16.mxu0 0
  %3848 = vmatpush1.bf16.msra.mxu0 0
  %3849 = vmatprep.subr.bf16.mxu0 %v3818
  %3850 = vmatpush1.bf16.msra.mxu0 %v3817
  %3851 = vmatprep.subr.bf16.mxu0 %v3814
  %3852 = vmatpush1.bf16.msra.mxu0 %v3813
  %3853 = vmatprep.subr.bf16.mxu0 0
  %3854 = vmatpush2.bf16.msra.mxu0 0
  %3855 = vmatprep.subr.bf16.mxu0 0
  %3856 = vmatpush2.bf16.msra.mxu0 0
  %3857 = vmatprep.subr.bf16.mxu0 0
  %3858 = vmatpush2.bf16.msra.mxu0 0
  %3859 = vmatprep.subr.bf16.mxu0 0
  %3860 = vmatpush2.bf16.msra.mxu0 0
  %3861 = vmatprep.subr.bf16.mxu0 0
  %3862 = vmatpush2.bf16.msra.mxu0 0
  %3863 = vmatprep.subr.bf16.mxu0 0
  %3864 = vmatpush2.bf16.msra.mxu0 0
  %3865 = vmatprep.subr.bf16.mxu0 0
  %3866 = vmatpush2.bf16.msra.mxu0 0
  %3867 = vmatprep.subr.bf16.mxu0 0
  %3868 = vmatpush2.bf16.msra.mxu0 0
  %3869 = vmatprep.mubr.bf16.mxu0 0
  %3870 = vmatmul.mubr.bf16.gmra.mxu0 %v3832
  %v3871 = vpop.f32.mrf.mxu0
  %v3872 = vadd.f32 0.0, %v3871
  %v3873 = vpop.f32.mrf.mxu0
  %v3874 = vadd.f32 0.0, %v3873
  %v3875 = vpop.f32.mrf.mxu0
  %v3876 = vadd.f32 0.0, %v3875
  %v3877 = vpop.f32.mrf.mxu0
  %v3878 = vadd.f32 0.0, %v3877
  %3879 = vmatprep.mubr.bf16.mxu0 0
  %3880 = vmatmul.mubr.bf16.gmra.mxu0 %v3835
  %v3881 = vpop.f32.mrf.mxu0
  %v3882 = vadd.f32 0.0, %v3881
  %v3883 = vpop.f32.mrf.mxu0
  %v3884 = vadd.f32 0.0, %v3883
  %v3885 = vpop.f32.mrf.mxu0
  %v3886 = vadd.f32 0.0, %v3885
  %v3887 = vpop.f32.mrf.mxu0
  %v3888 = vadd.f32 0.0, %v3887
  %3889 = vdwg.mxu0
  %3890 = vmatprep.subr.bf16.mxu0 0
  %3891 = vmatpush1.bf16.msra.mxu0 0
  %3892 = vmatprep.subr.bf16.mxu0 0
  %3893 = vmatpush1.bf16.msra.mxu0 0
  %3894 = vmatprep.subr.bf16.mxu0 0
  %3895 = vmatpush1.bf16.msra.mxu0 0
  %3896 = vmatprep.subr.bf16.mxu0 0
  %3897 = vmatpush1.bf16.msra.mxu0 0
  %3898 = vmatprep.subr.bf16.mxu0 0
  %3899 = vmatpush1.bf16.msra.mxu0 0
  %3900 = vmatprep.subr.bf16.mxu0 0
  %3901 = vmatpush1.bf16.msra.mxu0 0
  %3902 = vmatprep.subr.bf16.mxu0 %v3820
  %3903 = vmatpush1.bf16.msra.mxu0 %v3819
  %3904 = vmatprep.subr.bf16.mxu0 %v3816
  %3905 = vmatpush1.bf16.msra.mxu0 %v3815
  %3906 = vmatprep.subr.bf16.mxu0 0
  %3907 = vmatpush2.bf16.msra.mxu0 0
  %3908 = vmatprep.subr.bf16.mxu0 0
  %3909 = vmatpush2.bf16.msra.mxu0 0
  %3910 = vmatprep.subr.bf16.mxu0 0
  %3911 = vmatpush2.bf16.msra.mxu0 0
  %3912 = vmatprep.subr.bf16.mxu0 0
  %3913 = vmatpush2.bf16.msra.mxu0 0
  %3914 = vmatprep.subr.bf16.mxu0 0
  %3915 = vmatpush2.bf16.msra.mxu0 0
  %3916 = vmatprep.subr.bf16.mxu0 0
  %3917 = vmatpush2.bf16.msra.mxu0 0
  %3918 = vmatprep.subr.bf16.mxu0 0
  %3919 = vmatpush2.bf16.msra.mxu0 0
  %3920 = vmatprep.subr.bf16.mxu0 0
  %3921 = vmatpush2.bf16.msra.mxu0 0
  %3922 = vmatprep.mubr.bf16.mxu0 0
  %3923 = vmatmul.mubr.bf16.gmra.mxu0 %v3832
  %v3924 = vpop.f32.mrf.mxu0
  %v3925 = vadd.f32 0.0, %v3924
  %v3926 = vpop.f32.mrf.mxu0
  %v3927 = vadd.f32 0.0, %v3926
  %v3928 = vpop.f32.mrf.mxu0
  %v3929 = vadd.f32 0.0, %v3928
  %v3930 = vpop.f32.mrf.mxu0
  %v3931 = vadd.f32 0.0, %v3930
  %3932 = vmatprep.mubr.bf16.mxu0 0
  %3933 = vmatmul.mubr.bf16.gmra.mxu0 %v3835
  %v3934 = vpop.f32.mrf.mxu0
  %v3935 = vadd.f32 0.0, %v3934
  %v3936 = vpop.f32.mrf.mxu0
  %v3937 = vadd.f32 0.0, %v3936
  %v3938 = vpop.f32.mrf.mxu0
  %v3939 = vadd.f32 0.0, %v3938
  %v3940 = vpop.f32.mrf.mxu0
  %v3941 = vadd.f32 0.0, %v3940
  %3942 = vdwg.mxu0
  %3943 = vmatprep.subr.bf16.mxu0 0
  %3944 = vmatpush1.bf16.msra.mxu0 0
  %3945 = vmatprep.subr.bf16.mxu0 0
  %3946 = vmatpush1.bf16.msra.mxu0 0
  %3947 = vmatprep.subr.bf16.mxu0 0
  %3948 = vmatpush1.bf16.msra.mxu0 0
  %3949 = vmatprep.subr.bf16.mxu0 0
  %3950 = vmatpush1.bf16.msra.mxu0 0
  %3951 = vmatprep.subr.bf16.mxu0 0
  %3952 = vmatpush1.bf16.msra.mxu0 0
  %3953 = vmatprep.subr.bf16.mxu0 0
  %3954 = vmatpush1.bf16.msra.mxu0 0
  %3955 = vmatprep.subr.bf16.mxu0 0
  %3956 = vmatpush1.bf16.msra.mxu0 %v3812
  %3957 = vmatprep.subr.bf16.mxu0 0
  %3958 = vmatpush1.bf16.msra.mxu0 %v3802
  %3959 = vmatprep.subr.bf16.mxu0 0
  %3960 = vmatpush2.bf16.msra.mxu0 0
  %3961 = vmatprep.subr.bf16.mxu0 0
  %3962 = vmatpush2.bf16.msra.mxu0 0
  %3963 = vmatprep.subr.bf16.mxu0 0
  %3964 = vmatpush2.bf16.msra.mxu0 0
  %3965 = vmatprep.subr.bf16.mxu0 0
  %3966 = vmatpush2.bf16.msra.mxu0 0
  %3967 = vmatprep.subr.bf16.mxu0 0
  %3968 = vmatpush2.bf16.msra.mxu0 0
  %3969 = vmatprep.subr.bf16.mxu0 0
  %3970 = vmatpush2.bf16.msra.mxu0 0
  %3971 = vmatprep.subr.bf16.mxu0 0
  %3972 = vmatpush2.bf16.msra.mxu0 0
  %3973 = vmatprep.subr.bf16.mxu0 0
  %3974 = vmatpush2.bf16.msra.mxu0 0
  %3975 = vmatprep.mubr.bf16.mxu0 0
  %3976 = vmatmul.mubr.bf16.gmra.mxu0 %v3832
  %v3977 = vpop.f32.mrf.mxu0
  %v3978 = vadd.f32 0.0, %v3977
  %v3979 = vpop.f32.mrf.mxu0
  %v3980 = vpop.f32.mrf.mxu0
  %v3981 = vadd.f32 0.0, %v3980
  %v3982 = vpop.f32.mrf.mxu0
  %3983 = vmatprep.mubr.bf16.mxu0 0
  %3984 = vmatmul.mubr.bf16.gmra.mxu0 %v3835
  %v3985 = vpop.f32.mrf.mxu0
  %v3986 = vadd.f32 0.0, %v3985
  %v3987 = vpop.f32.mrf.mxu0
  %v3988 = vpop.f32.mrf.mxu0
  %v3989 = vadd.f32 0.0, %v3988
  %v3990 = vpop.f32.mrf.mxu0
  %3991 = vdwg.mxu0
  %v3992 = vadd.f32 %v3758, %v3872
  %v3993 = vadd.f32 %v3759, %v3874
  %v3994 = vadd.f32 %v3760, %v3925
  %v3995 = vadd.f32 %v3761, %v3927
  %v3996 = vadd.f32 %v3762, %v3978
  %v3997 = vadd.f32 %v3763, %v3876
  %v3998 = vadd.f32 %v3764, %v3878
  %v3999 = vadd.f32 %v3765, %v3929
  %v4000 = vadd.f32 %v3766, %v3931
  %v4001 = vadd.f32 %v3767, %v3981
  %v4002 = vadd.f32 %v3768, %v3882
  %v4003 = vadd.f32 %v3769, %v3884
  %v4004 = vadd.f32 %v3770, %v3935
  %v4005 = vadd.f32 %v3771, %v3937
  %v4006 = vadd.f32 %v3772, %v3986
  %v4007 = vadd.f32 %v3773, %v3886
  %v4008 = vadd.f32 %v3774, %v3888
  %v4009 = vadd.f32 %v3775, %v3939
  %v4010 = vadd.f32 %v3776, %v3941
  %v4011 = vadd.f32 %v3777, %v3989
  %s4012 = scalar_lea.vmem %s4, 112
  %v4013 = vld [vmem:[%s4012] sm:$0xf]
  %v4014 = vld [vmem:[%s4012 + $0x4] sm:$0xf]
  %v4015 = vld [vmem:[%s4012 + $0x8] sm:$0xf]
  %v4016 = vld [vmem:[%s4012 + $0xc] sm:$0xf]
  %v4021 = vunpack.c.l.b16 %v4013
  %v4022 = vunpack.c.l.b16 %v4014
  %v4023 = vunpack.c.l.b16 %v4015
  %v4024 = vunpack.c.l.b16 %v4016
  %v4025 = vpack.c.b16 %v4022, %v4021
  %v4026 = vpack.c.b16 %v4024, %v4023
  %4027 = vrot.lane.b32.xlu0 %v3343, 110
  %v4028 = vpop.permute.xlu0 %4027
  %4029 = vrot.lane.b32.xlu0 %v3344, 110
  %v4030 = vpop.permute.xlu0 %4029
  %4031 = vrot.lane.b32.xlu0 %v3345, 110
  %v4032 = vpop.permute.xlu0 %4031
  %4033 = vrot.lane.b32.xlu0 %v3346, 110
  %v4034 = vpop.permute.xlu0 %4033
  %4035 = vrot.lane.b32.xlu0 %v3347, 110
  %v4036 = vpop.permute.xlu0 %4035
  %4037 = vrot.lane.b32.xlu0 %v3348, 110
  %v4038 = vpop.permute.xlu0 %4037
  %4039 = vrot.lane.b32.xlu0 %v3349, 110
  %v4040 = vpop.permute.xlu0 %4039
  %4041 = vrot.lane.b32.xlu0 %v3350, 110
  %v4042 = vpop.permute.xlu0 %4041
  %4043 = vrot.lane.b32.xlu0 %v3351, 110
  %v4044 = vpop.permute.xlu0 %4043
  %4045 = vrot.lane.b32.xlu0 %v3352, 110
  %v4046 = vpop.permute.xlu0 %4045
  %v4047 = vsel %vm1691, %v4028, %v4030
  %v4048 = vsel %vm1691, %v4030, %v4032
  %v4049 = vsel %vm1691, %v4032, %v4034
  %v4050 = vsel %vm1691, %v4034, %v4036
  %v4051 = vsel %vm1691, %v4038, %v4040
  %v4052 = vsel %vm1691, %v4040, %v4042
  %v4053 = vsel %vm1691, %v4042, %v4044
  %v4054 = vsel %vm1691, %v4044, %v4046
  %v4066 = vsel %vm2427, %v4025, 0
  %v4069 = vsel %vm2427, %v4026, 0
  %4071 = vmatprep.subr.bf16.mxu0 0
  %4072 = vmatpush1.bf16.msra.mxu0 0
  %4073 = vmatprep.subr.bf16.mxu0 0
  %4074 = vmatpush1.bf16.msra.mxu0 0
  %4075 = vmatprep.subr.bf16.mxu0 0
  %4076 = vmatpush1.bf16.msra.mxu0 0
  %4077 = vmatprep.subr.bf16.mxu0 0
  %4078 = vmatpush1.bf16.msra.mxu0 0
  %4079 = vmatprep.subr.bf16.mxu0 0
  %4080 = vmatpush1.bf16.msra.mxu0 0
  %4081 = vmatprep.subr.bf16.mxu0 0
  %4082 = vmatpush1.bf16.msra.mxu0 0
  %4083 = vmatprep.subr.bf16.mxu0 %v4052
  %4084 = vmatpush1.bf16.msra.mxu0 %v4051
  %4085 = vmatprep.subr.bf16.mxu0 %v4048
  %4086 = vmatpush1.bf16.msra.mxu0 %v4047
  %4087 = vmatprep.subr.bf16.mxu0 0
  %4088 = vmatpush2.bf16.msra.mxu0 0
  %4089 = vmatprep.subr.bf16.mxu0 0
  %4090 = vmatpush2.bf16.msra.mxu0 0
  %4091 = vmatprep.subr.bf16.mxu0 0
  %4092 = vmatpush2.bf16.msra.mxu0 0
  %4093 = vmatprep.subr.bf16.mxu0 0
  %4094 = vmatpush2.bf16.msra.mxu0 0
  %4095 = vmatprep.subr.bf16.mxu0 0
  %4096 = vmatpush2.bf16.msra.mxu0 0
  %4097 = vmatprep.subr.bf16.mxu0 0
  %4098 = vmatpush2.bf16.msra.mxu0 0
  %4099 = vmatprep.subr.bf16.mxu0 0
  %4100 = vmatpush2.bf16.msra.mxu0 0
  %4101 = vmatprep.subr.bf16.mxu0 0
  %4102 = vmatpush2.bf16.msra.mxu0 0
  %4103 = vmatprep.mubr.bf16.mxu0 0
  %4104 = vmatmul.mubr.bf16.gmra.mxu0 %v4066
  %v4105 = vpop.f32.mrf.mxu0
  %v4106 = vadd.f32 0.0, %v4105
  %v4107 = vpop.f32.mrf.mxu0
  %v4108 = vadd.f32 0.0, %v4107
  %v4109 = vpop.f32.mrf.mxu0
  %v4110 = vadd.f32 0.0, %v4109
  %v4111 = vpop.f32.mrf.mxu0
  %v4112 = vadd.f32 0.0, %v4111
  %4113 = vmatprep.mubr.bf16.mxu0 0
  %4114 = vmatmul.mubr.bf16.gmra.mxu0 %v4069
  %v4115 = vpop.f32.mrf.mxu0
  %v4116 = vadd.f32 0.0, %v4115
  %v4117 = vpop.f32.mrf.mxu0
  %v4118 = vadd.f32 0.0, %v4117
  %v4119 = vpop.f32.mrf.mxu0
  %v4120 = vadd.f32 0.0, %v4119
  %v4121 = vpop.f32.mrf.mxu0
  %v4122 = vadd.f32 0.0, %v4121
  %4123 = vdwg.mxu0
  %4124 = vmatprep.subr.bf16.mxu0 0
  %4125 = vmatpush1.bf16.msra.mxu0 0
  %4126 = vmatprep.subr.bf16.mxu0 0
  %4127 = vmatpush1.bf16.msra.mxu0 0
  %4128 = vmatprep.subr.bf16.mxu0 0
  %4129 = vmatpush1.bf16.msra.mxu0 0
  %4130 = vmatprep.subr.bf16.mxu0 0
  %4131 = vmatpush1.bf16.msra.mxu0 0
  %4132 = vmatprep.subr.bf16.mxu0 0
  %4133 = vmatpush1.bf16.msra.mxu0 0
  %4134 = vmatprep.subr.bf16.mxu0 0
  %4135 = vmatpush1.bf16.msra.mxu0 0
  %4136 = vmatprep.subr.bf16.mxu0 %v4054
  %4137 = vmatpush1.bf16.msra.mxu0 %v4053
  %4138 = vmatprep.subr.bf16.mxu0 %v4050
  %4139 = vmatpush1.bf16.msra.mxu0 %v4049
  %4140 = vmatprep.subr.bf16.mxu0 0
  %4141 = vmatpush2.bf16.msra.mxu0 0
  %4142 = vmatprep.subr.bf16.mxu0 0
  %4143 = vmatpush2.bf16.msra.mxu0 0
  %4144 = vmatprep.subr.bf16.mxu0 0
  %4145 = vmatpush2.bf16.msra.mxu0 0
  %4146 = vmatprep.subr.bf16.mxu0 0
  %4147 = vmatpush2.bf16.msra.mxu0 0
  %4148 = vmatprep.subr.bf16.mxu0 0
  %4149 = vmatpush2.bf16.msra.mxu0 0
  %4150 = vmatprep.subr.bf16.mxu0 0
  %4151 = vmatpush2.bf16.msra.mxu0 0
  %4152 = vmatprep.subr.bf16.mxu0 0
  %4153 = vmatpush2.bf16.msra.mxu0 0
  %4154 = vmatprep.subr.bf16.mxu0 0
  %4155 = vmatpush2.bf16.msra.mxu0 0
  %4156 = vmatprep.mubr.bf16.mxu0 0
  %4157 = vmatmul.mubr.bf16.gmra.mxu0 %v4066
  %v4158 = vpop.f32.mrf.mxu0
  %v4159 = vadd.f32 0.0, %v4158
  %v4160 = vpop.f32.mrf.mxu0
  %v4161 = vadd.f32 0.0, %v4160
  %v4162 = vpop.f32.mrf.mxu0
  %v4163 = vadd.f32 0.0, %v4162
  %v4164 = vpop.f32.mrf.mxu0
  %v4165 = vadd.f32 0.0, %v4164
  %4166 = vmatprep.mubr.bf16.mxu0 0
  %4167 = vmatmul.mubr.bf16.gmra.mxu0 %v4069
  %v4168 = vpop.f32.mrf.mxu0
  %v4169 = vadd.f32 0.0, %v4168
  %v4170 = vpop.f32.mrf.mxu0
  %v4171 = vadd.f32 0.0, %v4170
  %v4172 = vpop.f32.mrf.mxu0
  %v4173 = vadd.f32 0.0, %v4172
  %v4174 = vpop.f32.mrf.mxu0
  %v4175 = vadd.f32 0.0, %v4174
  %4176 = vdwg.mxu0
  %4177 = vmatprep.subr.bf16.mxu0 0
  %4178 = vmatpush1.bf16.msra.mxu0 0
  %4179 = vmatprep.subr.bf16.mxu0 0
  %4180 = vmatpush1.bf16.msra.mxu0 0
  %4181 = vmatprep.subr.bf16.mxu0 0
  %4182 = vmatpush1.bf16.msra.mxu0 0
  %4183 = vmatprep.subr.bf16.mxu0 0
  %4184 = vmatpush1.bf16.msra.mxu0 0
  %4185 = vmatprep.subr.bf16.mxu0 0
  %4186 = vmatpush1.bf16.msra.mxu0 0
  %4187 = vmatprep.subr.bf16.mxu0 0
  %4188 = vmatpush1.bf16.msra.mxu0 0
  %4189 = vmatprep.subr.bf16.mxu0 0
  %4190 = vmatpush1.bf16.msra.mxu0 %v4046
  %4191 = vmatprep.subr.bf16.mxu0 0
  %4192 = vmatpush1.bf16.msra.mxu0 %v4036
  %4193 = vmatprep.subr.bf16.mxu0 0
  %4194 = vmatpush2.bf16.msra.mxu0 0
  %4195 = vmatprep.subr.bf16.mxu0 0
  %4196 = vmatpush2.bf16.msra.mxu0 0
  %4197 = vmatprep.subr.bf16.mxu0 0
  %4198 = vmatpush2.bf16.msra.mxu0 0
  %4199 = vmatprep.subr.bf16.mxu0 0
  %4200 = vmatpush2.bf16.msra.mxu0 0
  %4201 = vmatprep.subr.bf16.mxu0 0
  %4202 = vmatpush2.bf16.msra.mxu0 0
  %4203 = vmatprep.subr.bf16.mxu0 0
  %4204 = vmatpush2.bf16.msra.mxu0 0
  %4205 = vmatprep.subr.bf16.mxu0 0
  %4206 = vmatpush2.bf16.msra.mxu0 0
  %4207 = vmatprep.subr.bf16.mxu0 0
  %4208 = vmatpush2.bf16.msra.mxu0 0
  %4209 = vmatprep.mubr.bf16.mxu0 0
  %4210 = vmatmul.mubr.bf16.gmra.mxu0 %v4066
  %v4211 = vpop.f32.mrf.mxu0
  %v4212 = vadd.f32 0.0, %v4211
  %v4213 = vpop.f32.mrf.mxu0
  %v4214 = vpop.f32.mrf.mxu0
  %v4215 = vadd.f32 0.0, %v4214
  %v4216 = vpop.f32.mrf.mxu0
  %4217 = vmatprep.mubr.bf16.mxu0 0
  %4218 = vmatmul.mubr.bf16.gmra.mxu0 %v4069
  %v4219 = vpop.f32.mrf.mxu0
  %v4220 = vadd.f32 0.0, %v4219
  %v4221 = vpop.f32.mrf.mxu0
  %v4222 = vpop.f32.mrf.mxu0
  %v4223 = vadd.f32 0.0, %v4222
  %v4224 = vpop.f32.mrf.mxu0
  %4225 = vdwg.mxu0
  %v4226 = vadd.f32 %v3992, %v4106
  %v4227 = vadd.f32 %v3993, %v4108
  %v4228 = vadd.f32 %v3994, %v4159
  %v4229 = vadd.f32 %v3995, %v4161
  %v4230 = vadd.f32 %v3996, %v4212
  %v4231 = vadd.f32 %v3997, %v4110
  %v4232 = vadd.f32 %v3998, %v4112
  %v4233 = vadd.f32 %v3999, %v4163
  %v4234 = vadd.f32 %v4000, %v4165
  %v4235 = vadd.f32 %v4001, %v4215
  %v4236 = vadd.f32 %v4002, %v4116
  %v4237 = vadd.f32 %v4003, %v4118
  %v4238 = vadd.f32 %v4004, %v4169
  %v4239 = vadd.f32 %v4005, %v4171
  %v4240 = vadd.f32 %v4006, %v4220
  %v4241 = vadd.f32 %v4007, %v4120
  %v4242 = vadd.f32 %v4008, %v4122
  %v4243 = vadd.f32 %v4009, %v4173
  %v4244 = vadd.f32 %v4010, %v4175
  %v4245 = vadd.f32 %v4011, %v4223
  %s4246 = scalar_lea.vmem %s4, 128
  %v4247 = vld [vmem:[%s4246] sm:$0xf]
  %v4248 = vld [vmem:[%s4246 + $0x4] sm:$0xf]
  %v4249 = vld [vmem:[%s4246 + $0x8] sm:$0xf]
  %v4250 = vld [vmem:[%s4246 + $0xc] sm:$0xf]
  %v4255 = vunpack.c.l.b16 %v4247
  %v4256 = vunpack.c.l.b16 %v4248
  %v4257 = vunpack.c.l.b16 %v4249
  %v4258 = vunpack.c.l.b16 %v4250
  %v4259 = vpack.c.b16 %v4256, %v4255
  %v4260 = vpack.c.b16 %v4258, %v4257
  %4261 = vrot.lane.b32.xlu0 %v3343, 109
  %v4262 = vpop.permute.xlu0 %4261
  %4263 = vrot.lane.b32.xlu0 %v3344, 109
  %v4264 = vpop.permute.xlu0 %4263
  %4265 = vrot.lane.b32.xlu0 %v3345, 109
  %v4266 = vpop.permute.xlu0 %4265
  %4267 = vrot.lane.b32.xlu0 %v3346, 109
  %v4268 = vpop.permute.xlu0 %4267
  %4269 = vrot.lane.b32.xlu0 %v3347, 109
  %v4270 = vpop.permute.xlu0 %4269
  %4271 = vrot.lane.b32.xlu0 %v3348, 109
  %v4272 = vpop.permute.xlu0 %4271
  %4273 = vrot.lane.b32.xlu0 %v3349, 109
  %v4274 = vpop.permute.xlu0 %4273
  %4275 = vrot.lane.b32.xlu0 %v3350, 109
  %v4276 = vpop.permute.xlu0 %4275
  %4277 = vrot.lane.b32.xlu0 %v3351, 109
  %v4278 = vpop.permute.xlu0 %4277
  %4279 = vrot.lane.b32.xlu0 %v3352, 109
  %v4280 = vpop.permute.xlu0 %4279
  %v4281 = vsel %vm1917, %v4262, %v4264
  %v4282 = vsel %vm1917, %v4264, %v4266
  %v4283 = vsel %vm1917, %v4266, %v4268
  %v4284 = vsel %vm1917, %v4268, %v4270
  %v4285 = vsel %vm1917, %v4272, %v4274
  %v4286 = vsel %vm1917, %v4274, %v4276
  %v4287 = vsel %vm1917, %v4276, %v4278
  %v4288 = vsel %vm1917, %v4278, %v4280
  %v4300 = vsel %vm2427, %v4259, 0
  %v4303 = vsel %vm2427, %v4260, 0
  %4305 = vmatprep.subr.bf16.mxu0 0
  %4306 = vmatpush1.bf16.msra.mxu0 0
  %4307 = vmatprep.subr.bf16.mxu0 0
  %4308 = vmatpush1.bf16.msra.mxu0 0
  %4309 = vmatprep.subr.bf16.mxu0 0
  %4310 = vmatpush1.bf16.msra.mxu0 0
  %4311 = vmatprep.subr.bf16.mxu0 0
  %4312 = vmatpush1.bf16.msra.mxu0 0
  %4313 = vmatprep.subr.bf16.mxu0 0
  %4314 = vmatpush1.bf16.msra.mxu0 0
  %4315 = vmatprep.subr.bf16.mxu0 0
  %4316 = vmatpush1.bf16.msra.mxu0 0
  %4317 = vmatprep.subr.bf16.mxu0 %v4286
  %4318 = vmatpush1.bf16.msra.mxu0 %v4285
  %4319 = vmatprep.subr.bf16.mxu0 %v4282
  %4320 = vmatpush1.bf16.msra.mxu0 %v4281
  %4321 = vmatprep.subr.bf16.mxu0 0
  %4322 = vmatpush2.bf16.msra.mxu0 0
  %4323 = vmatprep.subr.bf16.mxu0 0
  %4324 = vmatpush2.bf16.msra.mxu0 0
  %4325 = vmatprep.subr.bf16.mxu0 0
  %4326 = vmatpush2.bf16.msra.mxu0 0
  %4327 = vmatprep.subr.bf16.mxu0 0
  %4328 = vmatpush2.bf16.msra.mxu0 0
  %4329 = vmatprep.subr.bf16.mxu0 0
  %4330 = vmatpush2.bf16.msra.mxu0 0
  %4331 = vmatprep.subr.bf16.mxu0 0
  %4332 = vmatpush2.bf16.msra.mxu0 0
  %4333 = vmatprep.subr.bf16.mxu0 0
  %4334 = vmatpush2.bf16.msra.mxu0 0
  %4335 = vmatprep.subr.bf16.mxu0 0
  %4336 = vmatpush2.bf16.msra.mxu0 0
  %4337 = vmatprep.mubr.bf16.mxu0 0
  %4338 = vmatmul.mubr.bf16.gmra.mxu0 %v4300
  %v4339 = vpop.f32.mrf.mxu0
  %v4340 = vadd.f32 0.0, %v4339
  %v4341 = vpop.f32.mrf.mxu0
  %v4342 = vadd.f32 0.0, %v4341
  %v4343 = vpop.f32.mrf.mxu0
  %v4344 = vadd.f32 0.0, %v4343
  %v4345 = vpop.f32.mrf.mxu0
  %v4346 = vadd.f32 0.0, %v4345
  %4347 = vmatprep.mubr.bf16.mxu0 0
  %4348 = vmatmul.mubr.bf16.gmra.mxu0 %v4303
  %v4349 = vpop.f32.mrf.mxu0
  %v4350 = vadd.f32 0.0, %v4349
  %v4351 = vpop.f32.mrf.mxu0
  %v4352 = vadd.f32 0.0, %v4351
  %v4353 = vpop.f32.mrf.mxu0
  %v4354 = vadd.f32 0.0, %v4353
  %v4355 = vpop.f32.mrf.mxu0
  %v4356 = vadd.f32 0.0, %v4355
  %4357 = vdwg.mxu0
  %4358 = vmatprep.subr.bf16.mxu0 0
  %4359 = vmatpush1.bf16.msra.mxu0 0
  %4360 = vmatprep.subr.bf16.mxu0 0
  %4361 = vmatpush1.bf16.msra.mxu0 0
  %4362 = vmatprep.subr.bf16.mxu0 0
  %4363 = vmatpush1.bf16.msra.mxu0 0
  %4364 = vmatprep.subr.bf16.mxu0 0
  %4365 = vmatpush1.bf16.msra.mxu0 0
  %4366 = vmatprep.subr.bf16.mxu0 0
  %4367 = vmatpush1.bf16.msra.mxu0 0
  %4368 = vmatprep.subr.bf16.mxu0 0
  %4369 = vmatpush1.bf16.msra.mxu0 0
  %4370 = vmatprep.subr.bf16.mxu0 %v4288
  %4371 = vmatpush1.bf16.msra.mxu0 %v4287
  %4372 = vmatprep.subr.bf16.mxu0 %v4284
  %4373 = vmatpush1.bf16.msra.mxu0 %v4283
  %4374 = vmatprep.subr.bf16.mxu0 0
  %4375 = vmatpush2.bf16.msra.mxu0 0
  %4376 = vmatprep.subr.bf16.mxu0 0
  %4377 = vmatpush2.bf16.msra.mxu0 0
  %4378 = vmatprep.subr.bf16.mxu0 0
  %4379 = vmatpush2.bf16.msra.mxu0 0
  %4380 = vmatprep.subr.bf16.mxu0 0
  %4381 = vmatpush2.bf16.msra.mxu0 0
  %4382 = vmatprep.subr.bf16.mxu0 0
  %4383 = vmatpush2.bf16.msra.mxu0 0
  %4384 = vmatprep.subr.bf16.mxu0 0
  %4385 = vmatpush2.bf16.msra.mxu0 0
  %4386 = vmatprep.subr.bf16.mxu0 0
  %4387 = vmatpush2.bf16.msra.mxu0 0
  %4388 = vmatprep.subr.bf16.mxu0 0
  %4389 = vmatpush2.bf16.msra.mxu0 0
  %4390 = vmatprep.mubr.bf16.mxu0 0
  %4391 = vmatmul.mubr.bf16.gmra.mxu0 %v4300
  %v4392 = vpop.f32.mrf.mxu0
  %v4393 = vadd.f32 0.0, %v4392
  %v4394 = vpop.f32.mrf.mxu0
  %v4395 = vadd.f32 0.0, %v4394
  %v4396 = vpop.f32.mrf.mxu0
  %v4397 = vadd.f32 0.0, %v4396
  %v4398 = vpop.f32.mrf.mxu0
  %v4399 = vadd.f32 0.0, %v4398
  %4400 = vmatprep.mubr.bf16.mxu0 0
  %4401 = vmatmul.mubr.bf16.gmra.mxu0 %v4303
  %v4402 = vpop.f32.mrf.mxu0
  %v4403 = vadd.f32 0.0, %v4402
  %v4404 = vpop.f32.mrf.mxu0
  %v4405 = vadd.f32 0.0, %v4404
  %v4406 = vpop.f32.mrf.mxu0
  %v4407 = vadd.f32 0.0, %v4406
  %v4408 = vpop.f32.mrf.mxu0
  %v4409 = vadd.f32 0.0, %v4408
  %4410 = vdwg.mxu0
  %4411 = vmatprep.subr.bf16.mxu0 0
  %4412 = vmatpush1.bf16.msra.mxu0 0
  %4413 = vmatprep.subr.bf16.mxu0 0
  %4414 = vmatpush1.bf16.msra.mxu0 0
  %4415 = vmatprep.subr.bf16.mxu0 0
  %4416 = vmatpush1.bf16.msra.mxu0 0
  %4417 = vmatprep.subr.bf16.mxu0 0
  %4418 = vmatpush1.bf16.msra.mxu0 0
  %4419 = vmatprep.subr.bf16.mxu0 0
  %4420 = vmatpush1.bf16.msra.mxu0 0
  %4421 = vmatprep.subr.bf16.mxu0 0
  %4422 = vmatpush1.bf16.msra.mxu0 0
  %4423 = vmatprep.subr.bf16.mxu0 0
  %4424 = vmatpush1.bf16.msra.mxu0 %v4280
  %4425 = vmatprep.subr.bf16.mxu0 0
  %4426 = vmatpush1.bf16.msra.mxu0 %v4270
  %4427 = vmatprep.subr.bf16.mxu0 0
  %4428 = vmatpush2.bf16.msra.mxu0 0
  %4429 = vmatprep.subr.bf16.mxu0 0
  %4430 = vmatpush2.bf16.msra.mxu0 0
  %4431 = vmatprep.subr.bf16.mxu0 0
  %4432 = vmatpush2.bf16.msra.mxu0 0
  %4433 = vmatprep.subr.bf16.mxu0 0
  %4434 = vmatpush2.bf16.msra.mxu0 0
  %4435 = vmatprep.subr.bf16.mxu0 0
  %4436 = vmatpush2.bf16.msra.mxu0 0
  %4437 = vmatprep.subr.bf16.mxu0 0
  %4438 = vmatpush2.bf16.msra.mxu0 0
  %4439 = vmatprep.subr.bf16.mxu0 0
  %4440 = vmatpush2.bf16.msra.mxu0 0
  %4441 = vmatprep.subr.bf16.mxu0 0
  %4442 = vmatpush2.bf16.msra.mxu0 0
  %4443 = vmatprep.mubr.bf16.mxu0 0
  %4444 = vmatmul.mubr.bf16.gmra.mxu0 %v4300
  %v4445 = vpop.f32.mrf.mxu0
  %v4446 = vadd.f32 0.0, %v4445
  %v4447 = vpop.f32.mrf.mxu0
  %v4448 = vpop.f32.mrf.mxu0
  %v4449 = vadd.f32 0.0, %v4448
  %v4450 = vpop.f32.mrf.mxu0
  %4451 = vmatprep.mubr.bf16.mxu0 0
  %4452 = vmatmul.mubr.bf16.gmra.mxu0 %v4303
  %v4453 = vpop.f32.mrf.mxu0
  %v4454 = vadd.f32 0.0, %v4453
  %v4455 = vpop.f32.mrf.mxu0
  %v4456 = vpop.f32.mrf.mxu0
  %v4457 = vadd.f32 0.0, %v4456
  %v4458 = vpop.f32.mrf.mxu0
  %4459 = vdwg.mxu0
  %v4460 = vadd.f32 %v4226, %v4340
  %v4461 = vadd.f32 %v4227, %v4342
  %v4462 = vadd.f32 %v4228, %v4393
  %v4463 = vadd.f32 %v4229, %v4395
  %v4464 = vadd.f32 %v4230, %v4446
  %v4465 = vadd.f32 %v4231, %v4344
  %v4466 = vadd.f32 %v4232, %v4346
  %v4467 = vadd.f32 %v4233, %v4397
  %v4468 = vadd.f32 %v4234, %v4399
  %v4469 = vadd.f32 %v4235, %v4449
  %v4470 = vadd.f32 %v4236, %v4350
  %v4471 = vadd.f32 %v4237, %v4352
  %v4472 = vadd.f32 %v4238, %v4403
  %v4473 = vadd.f32 %v4239, %v4405
  %v4474 = vadd.f32 %v4240, %v4454
  %v4475 = vadd.f32 %v4241, %v4354
  %v4476 = vadd.f32 %v4242, %v4356
  %v4477 = vadd.f32 %v4243, %v4407
  %v4478 = vadd.f32 %v4244, %v4409
  %v4479 = vadd.f32 %v4245, %v4457
  %v4480 = vld [vmem:[%s5] sm:$0xff]
  %v4481 = vld [vmem:[%s5 + $0x8] sm:$0xff]
  %v4482 = vld [vmem:[%s5 + $0x10] sm:$0xff]
  %v4483 = vld [vmem:[%s5 + $0x18] sm:$0xff]
  %4485 = vset.pattern.permute.xlu0 0
  %4486 = vperm.xlu0 %4485, %v4480
  %v4487 = vpop.permute.xlu0 %4486
  %4490 = vset.pattern.permute.xlu0 0
  %4491 = vperm.xlu0 %4490, %v4481
  %v4492 = vpop.permute.xlu0 %4491
  %4495 = vset.pattern.permute.xlu0 0
  %4496 = vperm.xlu0 %4495, %v4482
  %v4497 = vpop.permute.xlu0 %4496
  %4500 = vset.pattern.permute.xlu0 0
  %4501 = vperm.xlu0 %4500, %v4483
  %v4502 = vpop.permute.xlu0 %4501
  %v4504 = vadd.f32 %v4460, %v4487
  %v4505 = vadd.f32 %v4461, %v4487
  %v4506 = vadd.f32 %v4462, %v4487
  %v4507 = vadd.f32 %v4463, %v4487
  %v4508 = vadd.f32 %v4464, %v4487
  %v4509 = vadd.f32 %v4465, %v4492
  %v4510 = vadd.f32 %v4466, %v4492
  %v4511 = vadd.f32 %v4467, %v4492
  %v4512 = vadd.f32 %v4468, %v4492
  %v4513 = vadd.f32 %v4469, %v4492
  %v4514 = vadd.f32 %v4470, %v4497
  %v4515 = vadd.f32 %v4471, %v4497
  %v4516 = vadd.f32 %v4472, %v4497
  %v4517 = vadd.f32 %v4473, %v4497
  %v4518 = vadd.f32 %v4474, %v4497
  %v4519 = vadd.f32 %v4475, %v4502
  %v4520 = vadd.f32 %v4476, %v4502
  %v4521 = vadd.f32 %v4477, %v4502
  %v4522 = vadd.f32 %v4478, %v4502
  %v4523 = vadd.f32 %v4479, %v4502
  %v4524 = vmax.f32 %v4504, 0.0
  %v4525 = vmax.f32 %v4505, 0.0
  %v4526 = vmax.f32 %v4506, 0.0
  %v4527 = vmax.f32 %v4507, 0.0
  %v4528 = vmax.f32 %v4508, 0.0
  %v4529 = vmax.f32 %v4509, 0.0
  %v4530 = vmax.f32 %v4510, 0.0
  %v4531 = vmax.f32 %v4511, 0.0
  %v4532 = vmax.f32 %v4512, 0.0
  %v4533 = vmax.f32 %v4513, 0.0
  %v4534 = vmax.f32 %v4514, 0.0
  %v4535 = vmax.f32 %v4515, 0.0
  %v4536 = vmax.f32 %v4516, 0.0
  %v4537 = vmax.f32 %v4517, 0.0
  %v4538 = vmax.f32 %v4518, 0.0
  %v4539 = vmax.f32 %v4519, 0.0
  %v4540 = vmax.f32 %v4520, 0.0
  %v4541 = vmax.f32 %v4521, 0.0
  %v4542 = vmax.f32 %v4522, 0.0
  %v4543 = vmax.f32 %v4523, 0.0
  %v4544 = vmul.f32 %v4524, %v2186
  %v4545 = vmul.f32 %v4525, %v2190
  %v4546 = vmul.f32 %v4526, %v2194
  %v4547 = vmul.f32 %v4527, %v2198
  %v4548 = vmul.f32 %v4528, %v2202
  %v4549 = vmul.f32 %v4529, %v2186
  %v4550 = vmul.f32 %v4530, %v2190
  %v4551 = vmul.f32 %v4531, %v2194
  %v4552 = vmul.f32 %v4532, %v2198
  %v4553 = vmul.f32 %v4533, %v2202
  %v4554 = vmul.f32 %v4534, %v2186
  %v4555 = vmul.f32 %v4535, %v2190
  %v4556 = vmul.f32 %v4536, %v2194
  %v4557 = vmul.f32 %v4537, %v2198
  %v4558 = vmul.f32 %v4538, %v2202
  %v4559 = vmul.f32 %v4539, %v2186
  %v4560 = vmul.f32 %v4540, %v2190
  %v4561 = vmul.f32 %v4541, %v2194
  %v4562 = vmul.f32 %v4542, %v2198
  %v4563 = vmul.f32 %v4543, %v2202
  %v4564 = vpack.c.bf16 %v4549, %v4544
  %v4565 = vpack.c.bf16 %v4550, %v4545
  %v4566 = vpack.c.bf16 %v4551, %v4546
  %v4567 = vpack.c.bf16 %v4552, %v4547
  %v4568 = vpack.c.bf16 %v4553, %v4548
  %v4569 = vpack.c.bf16 %v4559, %v4554
  %v4570 = vpack.c.bf16 %v4560, %v4555
  %v4571 = vpack.c.bf16 %v4561, %v4556
  %v4572 = vpack.c.bf16 %v4562, %v4557
  %v4573 = vpack.c.bf16 %v4563, %v4558
  %v4584 = vunpack.c.l.b16 %v4564
  %v4585 = vunpack.c.l.b16 %v4565
  %v4586 = vunpack.c.l.b16 %v4566
  %v4587 = vunpack.c.l.b16 %v4567
  %v4588 = vunpack.c.l.b16 %v4568
  %v4589 = vunpack.c.h.b16 %v4564
  %v4590 = vunpack.c.h.b16 %v4565
  %v4591 = vunpack.c.h.b16 %v4566
  %v4592 = vunpack.c.h.b16 %v4567
  %v4593 = vunpack.c.h.b16 %v4568
  %v4594 = vunpack.c.l.b16 %v4569
  %v4595 = vunpack.c.l.b16 %v4570
  %v4596 = vunpack.c.l.b16 %v4571
  %v4597 = vunpack.c.l.b16 %v4572
  %v4598 = vunpack.c.l.b16 %v4573
  %v4599 = vunpack.c.h.b16 %v4569
  %v4600 = vunpack.c.h.b16 %v4570
  %v4601 = vunpack.c.h.b16 %v4571
  %v4602 = vunpack.c.h.b16 %v4572
  %v4603 = vunpack.c.h.b16 %v4573
  %v4604 = vpack.c.b16 %v4585, %v4584
  %v4605 = vpack.c.b16 %v4587, %v4586
  %v4606 = vpack.c.b16 %v4588, %v4588
  %v4607 = vpack.c.b16 %v4590, %v4589
  %v4608 = vpack.c.b16 %v4592, %v4591
  %v4609 = vpack.c.b16 %v4593, %v4593
  %v4610 = vpack.c.b16 %v4595, %v4594
  %v4611 = vpack.c.b16 %v4597, %v4596
  %v4612 = vpack.c.b16 %v4598, %v4598
  %v4613 = vpack.c.b16 %v4600, %v4599
  %v4614 = vpack.c.b16 %v4602, %v4601
  %v4615 = vpack.c.b16 %v4603, %v4603
  %4628 = vst [vmem:[#allocation2 + $0x4] sm:$0xff] %v4604
  %4629 = vst [vmem:[#allocation2 + $0xc] sm:$0xff] %v4605
  %4630 = vst.msk [vmem:[#allocation2 + $0x14] sm:$0xf] %vm42, %v4606
  %4631 = vst [vmem:[#allocation2 + $0x1c] sm:$0xff] %v4607
  %4632 = vst [vmem:[#allocation2 + $0x24] sm:$0xff] %v4608
  %4633 = vst.msk [vmem:[#allocation2 + $0x2c] sm:$0xf] %vm42, %v4609
  %4634 = vst [vmem:[#allocation2 + $0x34] sm:$0xff] %v4610
  %4635 = vst [vmem:[#allocation2 + $0x3c] sm:$0xff] %v4611
  %4636 = vst.msk [vmem:[#allocation2 + $0x44] sm:$0xf] %vm42, %v4612
  %4637 = vst [vmem:[#allocation2 + $0x4c] sm:$0xff] %v4613
  %4638 = vst [vmem:[#allocation2 + $0x54] sm:$0xff] %v4614
  %4639 = vst.msk [vmem:[#allocation2 + $0x5c] sm:$0xf] %vm42, %v4615
  %v4640 = vld [vmem:[#allocation2] sm:$0xff]
  %v4641 = vld [vmem:[#allocation2 + $0x8] sm:$0xff]
  %v4642 = vld [vmem:[#allocation2 + $0x10] sm:$0xff]
  %v4643 = vld [vmem:[#allocation2 + $0x18] sm:$0xff]
  %v4644 = vld [vmem:[#allocation2 + $0x20] sm:$0xff]
  %v4645 = vld [vmem:[#allocation2 + $0x28] sm:$0xff]
  %v4646 = vld [vmem:[#allocation2 + $0x30] sm:$0xff]
  %v4647 = vld [vmem:[#allocation2 + $0x38] sm:$0xff]
  %v4648 = vld [vmem:[#allocation2 + $0x40] sm:$0xff]
  %v4649 = vld [vmem:[#allocation2 + $0x48] sm:$0xff]
  %v4650 = vld [vmem:[#allocation2 + $0x50] sm:$0xff]
  %v4651 = vld [vmem:[#allocation2 + $0x58] sm:$0xff]
  %v4652 = vld [vmem:[%s6] sm:$0x3]
  %s4653 = scalar_lea.vmem %s6, 2
  %v4654 = vld [vmem:[%s4653] sm:$0x3]
  %v4667 = vunpack.c.l.b16 %v4640
  %v4668 = vunpack.c.h.b16 %v4640
  %v4669 = vunpack.c.l.b16 %v4641
  %v4670 = vunpack.c.h.b16 %v4641
  %v4671 = vunpack.c.l.b16 %v4642
  %v4672 = vunpack.c.h.b16 %v4642
  %v4673 = vunpack.c.l.b16 %v4643
  %v4674 = vunpack.c.h.b16 %v4643
  %v4675 = vunpack.c.l.b16 %v4644
  %v4676 = vunpack.c.h.b16 %v4644
  %v4677 = vunpack.c.l.b16 %v4645
  %v4678 = vunpack.c.h.b16 %v4645
  %v4679 = vunpack.c.l.b16 %v4646
  %v4680 = vunpack.c.h.b16 %v4646
  %v4681 = vunpack.c.l.b16 %v4647
  %v4682 = vunpack.c.h.b16 %v4647
  %v4683 = vunpack.c.l.b16 %v4648
  %v4684 = vunpack.c.h.b16 %v4648
  %v4685 = vunpack.c.l.b16 %v4649
  %v4686 = vunpack.c.h.b16 %v4649
  %v4687 = vunpack.c.l.b16 %v4650
  %v4688 = vunpack.c.h.b16 %v4650
  %v4689 = vunpack.c.l.b16 %v4651
  %v4690 = vunpack.c.h.b16 %v4651
  %v4691 = vpack.c.b16 %v4673, %v4667
  %v4692 = vpack.c.b16 %v4674, %v4668
  %v4693 = vpack.c.b16 %v4675, %v4669
  %v4694 = vpack.c.b16 %v4676, %v4670
  %v4695 = vpack.c.b16 %v4677, %v4671
  %v4696 = vpack.c.b16 %v4678, %v4672
  %v4697 = vpack.c.b16 %v4685, %v4679
  %v4698 = vpack.c.b16 %v4686, %v4680
  %v4699 = vpack.c.b16 %v4687, %v4681
  %v4700 = vpack.c.b16 %v4688, %v4682
  %v4701 = vpack.c.b16 %v4689, %v4683
  %v4702 = vpack.c.b16 %v4690, %v4684
  %4703 = vrot.lane.b32.xlu0 %v4691, 18
  %v4704 = vpop.permute.xlu0 %4703
  %4705 = vrot.lane.b32.xlu0 %v4692, 18
  %v4706 = vpop.permute.xlu0 %4705
  %4707 = vrot.lane.b32.xlu0 %v4693, 18
  %v4708 = vpop.permute.xlu0 %4707
  %4709 = vrot.lane.b32.xlu0 %v4694, 18
  %v4710 = vpop.permute.xlu0 %4709
  %4711 = vrot.lane.b32.xlu0 %v4695, 18
  %v4712 = vpop.permute.xlu0 %4711
  %4713 = vrot.lane.b32.xlu0 %v4696, 18
  %v4714 = vpop.permute.xlu0 %4713
  %4715 = vrot.lane.b32.xlu0 %v4697, 18
  %v4716 = vpop.permute.xlu0 %4715
  %4717 = vrot.lane.b32.xlu0 %v4698, 18
  %v4718 = vpop.permute.xlu0 %4717
  %4719 = vrot.lane.b32.xlu0 %v4699, 18
  %v4720 = vpop.permute.xlu0 %4719
  %4721 = vrot.lane.b32.xlu0 %v4700, 18
  %v4722 = vpop.permute.xlu0 %4721
  %4723 = vrot.lane.b32.xlu0 %v4701, 18
  %v4724 = vpop.permute.xlu0 %4723
  %4725 = vrot.lane.b32.xlu0 %v4702, 18
  %v4726 = vpop.permute.xlu0 %4725
  %v4727 = vsel %vm141, %v4704, %v4706
  %v4728 = vsel %vm141, %v4706, %v4708
  %v4729 = vsel %vm141, %v4708, %v4710
  %v4730 = vsel %vm141, %v4710, %v4712
  %v4731 = vsel %vm141, %v4712, %v4714
  %v4732 = vsel %vm141, %v4716, %v4718
  %v4733 = vsel %vm141, %v4718, %v4720
  %v4734 = vsel %vm141, %v4720, %v4722
  %v4735 = vsel %vm141, %v4722, %v4724
  %v4736 = vsel %vm141, %v4724, %v4726
  %v4748 = vsel %vm2427, %v4654, 0
  %4750 = vmatprep.subr.bf16.mxu0 0
  %4751 = vmatpush1.bf16.msra.mxu0 0
  %4752 = vmatprep.subr.bf16.mxu0 0
  %4753 = vmatpush1.bf16.msra.mxu0 0
  %4754 = vmatprep.subr.bf16.mxu0 0
  %4755 = vmatpush1.bf16.msra.mxu0 0
  %4756 = vmatprep.subr.bf16.mxu0 0
  %4757 = vmatpush1.bf16.msra.mxu0 0
  %4758 = vmatprep.subr.bf16.mxu0 0
  %4759 = vmatpush1.bf16.msra.mxu0 0
  %4760 = vmatprep.subr.bf16.mxu0 0
  %4761 = vmatpush1.bf16.msra.mxu0 0
  %4762 = vmatprep.subr.bf16.mxu0 %v4733
  %4763 = vmatpush1.bf16.msra.mxu0 %v4732
  %4764 = vmatprep.subr.bf16.mxu0 %v4728
  %4765 = vmatpush1.bf16.msra.mxu0 %v4727
  %4766 = vmatprep.subr.bf16.mxu0 0
  %4767 = vmatpush2.bf16.msra.mxu0 0
  %4768 = vmatprep.subr.bf16.mxu0 0
  %4769 = vmatpush2.bf16.msra.mxu0 0
  %4770 = vmatprep.subr.bf16.mxu0 0
  %4771 = vmatpush2.bf16.msra.mxu0 0
  %4772 = vmatprep.subr.bf16.mxu0 0
  %4773 = vmatpush2.bf16.msra.mxu0 0
  %4774 = vmatprep.subr.bf16.mxu0 0
  %4775 = vmatpush2.bf16.msra.mxu0 0
  %4776 = vmatprep.subr.bf16.mxu0 0
  %4777 = vmatpush2.bf16.msra.mxu0 0
  %4778 = vmatprep.subr.bf16.mxu0 0
  %4779 = vmatpush2.bf16.msra.mxu0 0
  %4780 = vmatprep.subr.bf16.mxu0 0
  %4781 = vmatpush2.bf16.msra.mxu0 0
  %4782 = vmatprep.mubr.bf16.mxu0 0
  %4783 = vmatmul.mubr.bf16.gmra.mxu0 %v4748
  %v4784 = vpop.f32.mrf.mxu0
  %v4785 = vadd.f32 0.0, %v4784
  %v4786 = vpop.f32.mrf.mxu0
  %v4787 = vadd.f32 0.0, %v4786
  %v4788 = vpop.f32.mrf.mxu0
  %v4789 = vpop.f32.mrf.mxu0
  %4790 = vdwg.mxu0
  %4791 = vmatprep.subr.bf16.mxu0 0
  %4792 = vmatpush1.bf16.msra.mxu0 0
  %4793 = vmatprep.subr.bf16.mxu0 0
  %4794 = vmatpush1.bf16.msra.mxu0 0
  %4795 = vmatprep.subr.bf16.mxu0 0
  %4796 = vmatpush1.bf16.msra.mxu0 0
  %4797 = vmatprep.subr.bf16.mxu0 0
  %4798 = vmatpush1.bf16.msra.mxu0 0
  %4799 = vmatprep.subr.bf16.mxu0 0
  %4800 = vmatpush1.bf16.msra.mxu0 0
  %4801 = vmatprep.subr.bf16.mxu0 0
  %4802 = vmatpush1.bf16.msra.mxu0 0
  %4803 = vmatprep.subr.bf16.mxu0 %v4735
  %4804 = vmatpush1.bf16.msra.mxu0 %v4734
  %4805 = vmatprep.subr.bf16.mxu0 %v4730
  %4806 = vmatpush1.bf16.msra.mxu0 %v4729
  %4807 = vmatprep.subr.bf16.mxu0 0
  %4808 = vmatpush2.bf16.msra.mxu0 0
  %4809 = vmatprep.subr.bf16.mxu0 0
  %4810 = vmatpush2.bf16.msra.mxu0 0
  %4811 = vmatprep.subr.bf16.mxu0 0
  %4812 = vmatpush2.bf16.msra.mxu0 0
  %4813 = vmatprep.subr.bf16.mxu0 0
  %4814 = vmatpush2.bf16.msra.mxu0 0
  %4815 = vmatprep.subr.bf16.mxu0 0
  %4816 = vmatpush2.bf16.msra.mxu0 0
  %4817 = vmatprep.subr.bf16.mxu0 0
  %4818 = vmatpush2.bf16.msra.mxu0 0
  %4819 = vmatprep.subr.bf16.mxu0 0
  %4820 = vmatpush2.bf16.msra.mxu0 0
  %4821 = vmatprep.subr.bf16.mxu0 0
  %4822 = vmatpush2.bf16.msra.mxu0 0
  %4823 = vmatprep.mubr.bf16.mxu0 0
  %4824 = vmatmul.mubr.bf16.gmra.mxu0 %v4748
  %v4825 = vpop.f32.mrf.mxu0
  %v4826 = vadd.f32 0.0, %v4825
  %v4827 = vpop.f32.mrf.mxu0
  %v4828 = vadd.f32 0.0, %v4827
  %v4829 = vpop.f32.mrf.mxu0
  %v4830 = vpop.f32.mrf.mxu0
  %4831 = vdwg.mxu0
  %4832 = vmatprep.subr.bf16.mxu0 0
  %4833 = vmatpush1.bf16.msra.mxu0 0
  %4834 = vmatprep.subr.bf16.mxu0 0
  %4835 = vmatpush1.bf16.msra.mxu0 0
  %4836 = vmatprep.subr.bf16.mxu0 0
  %4837 = vmatpush1.bf16.msra.mxu0 0
  %4838 = vmatprep.subr.bf16.mxu0 0
  %4839 = vmatpush1.bf16.msra.mxu0 0
  %4840 = vmatprep.subr.bf16.mxu0 0
  %4841 = vmatpush1.bf16.msra.mxu0 0
  %4842 = vmatprep.subr.bf16.mxu0 0
  %4843 = vmatpush1.bf16.msra.mxu0 0
  %4844 = vmatprep.subr.bf16.mxu0 0
  %4845 = vmatpush1.bf16.msra.mxu0 %v4736
  %4846 = vmatprep.subr.bf16.mxu0 0
  %4847 = vmatpush1.bf16.msra.mxu0 %v4731
  %4848 = vmatprep.subr.bf16.mxu0 0
  %4849 = vmatpush2.bf16.msra.mxu0 0
  %4850 = vmatprep.subr.bf16.mxu0 0
  %4851 = vmatpush2.bf16.msra.mxu0 0
  %4852 = vmatprep.subr.bf16.mxu0 0
  %4853 = vmatpush2.bf16.msra.mxu0 0
  %4854 = vmatprep.subr.bf16.mxu0 0
  %4855 = vmatpush2.bf16.msra.mxu0 0
  %4856 = vmatprep.subr.bf16.mxu0 0
  %4857 = vmatpush2.bf16.msra.mxu0 0
  %4858 = vmatprep.subr.bf16.mxu0 0
  %4859 = vmatpush2.bf16.msra.mxu0 0
  %4860 = vmatprep.subr.bf16.mxu0 0
  %4861 = vmatpush2.bf16.msra.mxu0 0
  %4862 = vmatprep.subr.bf16.mxu0 0
  %4863 = vmatpush2.bf16.msra.mxu0 0
  %4864 = vmatprep.mubr.bf16.mxu0 0
  %4865 = vmatmul.mubr.bf16.gmra.mxu0 %v4748
  %v4866 = vpop.f32.mrf.mxu0
  %v4867 = vadd.f32 0.0, %v4866
  %v4868 = vpop.f32.mrf.mxu0
  %v4869 = vpop.f32.mrf.mxu0
  %v4870 = vpop.f32.mrf.mxu0
  %4871 = vdwg.mxu0
  %4872 = vrot.lane.b32.xlu0 %v4691, 19
  %v4873 = vpop.permute.xlu0 %4872
  %4874 = vrot.lane.b32.xlu0 %v4692, 19
  %v4875 = vpop.permute.xlu0 %4874
  %4876 = vrot.lane.b32.xlu0 %v4693, 19
  %v4877 = vpop.permute.xlu0 %4876
  %4878 = vrot.lane.b32.xlu0 %v4694, 19
  %v4879 = vpop.permute.xlu0 %4878
  %4880 = vrot.lane.b32.xlu0 %v4695, 19
  %v4881 = vpop.permute.xlu0 %4880
  %4882 = vrot.lane.b32.xlu0 %v4696, 19
  %v4883 = vpop.permute.xlu0 %4882
  %4884 = vrot.lane.b32.xlu0 %v4697, 19
  %v4885 = vpop.permute.xlu0 %4884
  %4886 = vrot.lane.b32.xlu0 %v4698, 19
  %v4887 = vpop.permute.xlu0 %4886
  %4888 = vrot.lane.b32.xlu0 %v4699, 19
  %v4889 = vpop.permute.xlu0 %4888
  %4890 = vrot.lane.b32.xlu0 %v4700, 19
  %v4891 = vpop.permute.xlu0 %4890
  %4892 = vrot.lane.b32.xlu0 %v4701, 19
  %v4893 = vpop.permute.xlu0 %4892
  %4894 = vrot.lane.b32.xlu0 %v4702, 19
  %v4895 = vpop.permute.xlu0 %4894
  %v4896 = vsel %vm347, %v4873, %v4875
  %v4897 = vsel %vm347, %v4875, %v4877
  %v4898 = vsel %vm347, %v4877, %v4879
  %v4899 = vsel %vm347, %v4879, %v4881
  %v4900 = vsel %vm347, %v4881, %v4883
  %v4901 = vsel %vm347, %v4885, %v4887
  %v4902 = vsel %vm347, %v4887, %v4889
  %v4903 = vsel %vm347, %v4889, %v4891
  %v4904 = vsel %vm347, %v4891, %v4893
  %v4905 = vsel %vm347, %v4893, %v4895
  %v4917 = vsel %vm2427, %v4652, 0
  %4919 = vmatprep.subr.bf16.mxu0 0
  %4920 = vmatpush1.bf16.msra.mxu0 0
  %4921 = vmatprep.subr.bf16.mxu0 0
  %4922 = vmatpush1.bf16.msra.mxu0 0
  %4923 = vmatprep.subr.bf16.mxu0 0
  %4924 = vmatpush1.bf16.msra.mxu0 0
  %4925 = vmatprep.subr.bf16.mxu0 0
  %4926 = vmatpush1.bf16.msra.mxu0 0
  %4927 = vmatprep.subr.bf16.mxu0 0
  %4928 = vmatpush1.bf16.msra.mxu0 0
  %4929 = vmatprep.subr.bf16.mxu0 0
  %4930 = vmatpush1.bf16.msra.mxu0 0
  %4931 = vmatprep.subr.bf16.mxu0 %v4902
  %4932 = vmatpush1.bf16.msra.mxu0 %v4901
  %4933 = vmatprep.subr.bf16.mxu0 %v4897
  %4934 = vmatpush1.bf16.msra.mxu0 %v4896
  %4935 = vmatprep.subr.bf16.mxu0 0
  %4936 = vmatpush2.bf16.msra.mxu0 0
  %4937 = vmatprep.subr.bf16.mxu0 0
  %4938 = vmatpush2.bf16.msra.mxu0 0
  %4939 = vmatprep.subr.bf16.mxu0 0
  %4940 = vmatpush2.bf16.msra.mxu0 0
  %4941 = vmatprep.subr.bf16.mxu0 0
  %4942 = vmatpush2.bf16.msra.mxu0 0
  %4943 = vmatprep.subr.bf16.mxu0 0
  %4944 = vmatpush2.bf16.msra.mxu0 0
  %4945 = vmatprep.subr.bf16.mxu0 0
  %4946 = vmatpush2.bf16.msra.mxu0 0
  %4947 = vmatprep.subr.bf16.mxu0 0
  %4948 = vmatpush2.bf16.msra.mxu0 0
  %4949 = vmatprep.subr.bf16.mxu0 0
  %4950 = vmatpush2.bf16.msra.mxu0 0
  %4951 = vmatprep.mubr.bf16.mxu0 0
  %4952 = vmatmul.mubr.bf16.gmra.mxu0 %v4917
  %v4953 = vpop.f32.mrf.mxu0
  %v4954 = vadd.f32 %v4785, %v4953
  %v4955 = vpop.f32.mrf.mxu0
  %v4956 = vadd.f32 %v4787, %v4955
  %v4957 = vpop.f32.mrf.mxu0
  %v4958 = vpop.f32.mrf.mxu0
  %4959 = vdwg.mxu0
  %4960 = vmatprep.subr.bf16.mxu0 0
  %4961 = vmatpush1.bf16.msra.mxu0 0
  %4962 = vmatprep.subr.bf16.mxu0 0
  %4963 = vmatpush1.bf16.msra.mxu0 0
  %4964 = vmatprep.subr.bf16.mxu0 0
  %4965 = vmatpush1.bf16.msra.mxu0 0
  %4966 = vmatprep.subr.bf16.mxu0 0
  %4967 = vmatpush1.bf16.msra.mxu0 0
  %4968 = vmatprep.subr.bf16.mxu0 0
  %4969 = vmatpush1.bf16.msra.mxu0 0
  %4970 = vmatprep.subr.bf16.mxu0 0
  %4971 = vmatpush1.bf16.msra.mxu0 0
  %4972 = vmatprep.subr.bf16.mxu0 %v4904
  %4973 = vmatpush1.bf16.msra.mxu0 %v4903
  %4974 = vmatprep.subr.bf16.mxu0 %v4899
  %4975 = vmatpush1.bf16.msra.mxu0 %v4898
  %4976 = vmatprep.subr.bf16.mxu0 0
  %4977 = vmatpush2.bf16.msra.mxu0 0
  %4978 = vmatprep.subr.bf16.mxu0 0
  %4979 = vmatpush2.bf16.msra.mxu0 0
  %4980 = vmatprep.subr.bf16.mxu0 0
  %4981 = vmatpush2.bf16.msra.mxu0 0
  %4982 = vmatprep.subr.bf16.mxu0 0
  %4983 = vmatpush2.bf16.msra.mxu0 0
  %4984 = vmatprep.subr.bf16.mxu0 0
  %4985 = vmatpush2.bf16.msra.mxu0 0
  %4986 = vmatprep.subr.bf16.mxu0 0
  %4987 = vmatpush2.bf16.msra.mxu0 0
  %4988 = vmatprep.subr.bf16.mxu0 0
  %4989 = vmatpush2.bf16.msra.mxu0 0
  %4990 = vmatprep.subr.bf16.mxu0 0
  %4991 = vmatpush2.bf16.msra.mxu0 0
  %4992 = vmatprep.mubr.bf16.mxu0 0
  %4993 = vmatmul.mubr.bf16.gmra.mxu0 %v4917
  %v4994 = vpop.f32.mrf.mxu0
  %v4995 = vadd.f32 %v4826, %v4994
  %v4996 = vpop.f32.mrf.mxu0
  %v4997 = vadd.f32 %v4828, %v4996
  %v4998 = vpop.f32.mrf.mxu0
  %v4999 = vpop.f32.mrf.mxu0
  %5000 = vdwg.mxu0
  %5001 = vmatprep.subr.bf16.mxu0 0
  %5002 = vmatpush1.bf16.msra.mxu0 0
  %5003 = vmatprep.subr.bf16.mxu0 0
  %5004 = vmatpush1.bf16.msra.mxu0 0
  %5005 = vmatprep.subr.bf16.mxu0 0
  %5006 = vmatpush1.bf16.msra.mxu0 0
  %5007 = vmatprep.subr.bf16.mxu0 0
  %5008 = vmatpush1.bf16.msra.mxu0 0
  %5009 = vmatprep.subr.bf16.mxu0 0
  %5010 = vmatpush1.bf16.msra.mxu0 0
  %5011 = vmatprep.subr.bf16.mxu0 0
  %5012 = vmatpush1.bf16.msra.mxu0 0
  %5013 = vmatprep.subr.bf16.mxu0 0
  %5014 = vmatpush1.bf16.msra.mxu0 %v4905
  %5015 = vmatprep.subr.bf16.mxu0 0
  %5016 = vmatpush1.bf16.msra.mxu0 %v4900
  %5017 = vmatprep.subr.bf16.mxu0 0
  %5018 = vmatpush2.bf16.msra.mxu0 0
  %5019 = vmatprep.subr.bf16.mxu0 0
  %5020 = vmatpush2.bf16.msra.mxu0 0
  %5021 = vmatprep.subr.bf16.mxu0 0
  %5022 = vmatpush2.bf16.msra.mxu0 0
  %5023 = vmatprep.subr.bf16.mxu0 0
  %5024 = vmatpush2.bf16.msra.mxu0 0
  %5025 = vmatprep.subr.bf16.mxu0 0
  %5026 = vmatpush2.bf16.msra.mxu0 0
  %5027 = vmatprep.subr.bf16.mxu0 0
  %5028 = vmatpush2.bf16.msra.mxu0 0
  %5029 = vmatprep.subr.bf16.mxu0 0
  %5030 = vmatpush2.bf16.msra.mxu0 0
  %5031 = vmatprep.subr.bf16.mxu0 0
  %5032 = vmatpush2.bf16.msra.mxu0 0
  %5033 = vmatprep.mubr.bf16.mxu0 0
  %5034 = vmatmul.mubr.bf16.gmra.mxu0 %v4917
  %v5035 = vpop.f32.mrf.mxu0
  %v5036 = vadd.f32 %v4867, %v5035
  %v5037 = vpop.f32.mrf.mxu0
  %v5038 = vpop.f32.mrf.mxu0
  %v5039 = vpop.f32.mrf.mxu0
  %5040 = vdwg.mxu0
  %s5041 = scalar_lea.vmem %s6, 4
  %v5042 = vld [vmem:[%s5041] sm:$0x3]
  %5043 = vrot.lane.b32.xlu0 %v4691, 17
  %v5044 = vpop.permute.xlu0 %5043
  %5045 = vrot.lane.b32.xlu0 %v4692, 17
  %v5046 = vpop.permute.xlu0 %5045
  %5047 = vrot.lane.b32.xlu0 %v4693, 17
  %v5048 = vpop.permute.xlu0 %5047
  %5049 = vrot.lane.b32.xlu0 %v4694, 17
  %v5050 = vpop.permute.xlu0 %5049
  %5051 = vrot.lane.b32.xlu0 %v4695, 17
  %v5052 = vpop.permute.xlu0 %5051
  %5053 = vrot.lane.b32.xlu0 %v4696, 17
  %v5054 = vpop.permute.xlu0 %5053
  %5055 = vrot.lane.b32.xlu0 %v4697, 17
  %v5056 = vpop.permute.xlu0 %5055
  %5057 = vrot.lane.b32.xlu0 %v4698, 17
  %v5058 = vpop.permute.xlu0 %5057
  %5059 = vrot.lane.b32.xlu0 %v4699, 17
  %v5060 = vpop.permute.xlu0 %5059
  %5061 = vrot.lane.b32.xlu0 %v4700, 17
  %v5062 = vpop.permute.xlu0 %5061
  %5063 = vrot.lane.b32.xlu0 %v4701, 17
  %v5064 = vpop.permute.xlu0 %5063
  %5065 = vrot.lane.b32.xlu0 %v4702, 17
  %v5066 = vpop.permute.xlu0 %5065
  %v5067 = vsel %vm556, %v5044, %v5046
  %v5068 = vsel %vm556, %v5046, %v5048
  %v5069 = vsel %vm556, %v5048, %v5050
  %v5070 = vsel %vm556, %v5050, %v5052
  %v5071 = vsel %vm556, %v5052, %v5054
  %v5072 = vsel %vm556, %v5056, %v5058
  %v5073 = vsel %vm556, %v5058, %v5060
  %v5074 = vsel %vm556, %v5060, %v5062
  %v5075 = vsel %vm556, %v5062, %v5064
  %v5076 = vsel %vm556, %v5064, %v5066
  %v5088 = vsel %vm2427, %v5042, 0
  %5090 = vmatprep.subr.bf16.mxu0 0
  %5091 = vmatpush1.bf16.msra.mxu0 0
  %5092 = vmatprep.subr.bf16.mxu0 0
  %5093 = vmatpush1.bf16.msra.mxu0 0
  %5094 = vmatprep.subr.bf16.mxu0 0
  %5095 = vmatpush1.bf16.msra.mxu0 0
  %5096 = vmatprep.subr.bf16.mxu0 0
  %5097 = vmatpush1.bf16.msra.mxu0 0
  %5098 = vmatprep.subr.bf16.mxu0 0
  %5099 = vmatpush1.bf16.msra.mxu0 0
  %5100 = vmatprep.subr.bf16.mxu0 0
  %5101 = vmatpush1.bf16.msra.mxu0 0
  %5102 = vmatprep.subr.bf16.mxu0 %v5073
  %5103 = vmatpush1.bf16.msra.mxu0 %v5072
  %5104 = vmatprep.subr.bf16.mxu0 %v5068
  %5105 = vmatpush1.bf16.msra.mxu0 %v5067
  %5106 = vmatprep.subr.bf16.mxu0 0
  %5107 = vmatpush2.bf16.msra.mxu0 0
  %5108 = vmatprep.subr.bf16.mxu0 0
  %5109 = vmatpush2.bf16.msra.mxu0 0
  %5110 = vmatprep.subr.bf16.mxu0 0
  %5111 = vmatpush2.bf16.msra.mxu0 0
  %5112 = vmatprep.subr.bf16.mxu0 0
  %5113 = vmatpush2.bf16.msra.mxu0 0
  %5114 = vmatprep.subr.bf16.mxu0 0
  %5115 = vmatpush2.bf16.msra.mxu0 0
  %5116 = vmatprep.subr.bf16.mxu0 0
  %5117 = vmatpush2.bf16.msra.mxu0 0
  %5118 = vmatprep.subr.bf16.mxu0 0
  %5119 = vmatpush2.bf16.msra.mxu0 0
  %5120 = vmatprep.subr.bf16.mxu0 0
  %5121 = vmatpush2.bf16.msra.mxu0 0
  %5122 = vmatprep.mubr.bf16.mxu0 0
  %5123 = vmatmul.mubr.bf16.gmra.mxu0 %v5088
  %v5124 = vpop.f32.mrf.mxu0
  %v5125 = vadd.f32 0.0, %v5124
  %v5126 = vpop.f32.mrf.mxu0
  %v5127 = vadd.f32 0.0, %v5126
  %v5128 = vpop.f32.mrf.mxu0
  %v5129 = vpop.f32.mrf.mxu0
  %5130 = vdwg.mxu0
  %5131 = vmatprep.subr.bf16.mxu0 0
  %5132 = vmatpush1.bf16.msra.mxu0 0
  %5133 = vmatprep.subr.bf16.mxu0 0
  %5134 = vmatpush1.bf16.msra.mxu0 0
  %5135 = vmatprep.subr.bf16.mxu0 0
  %5136 = vmatpush1.bf16.msra.mxu0 0
  %5137 = vmatprep.subr.bf16.mxu0 0
  %5138 = vmatpush1.bf16.msra.mxu0 0
  %5139 = vmatprep.subr.bf16.mxu0 0
  %5140 = vmatpush1.bf16.msra.mxu0 0
  %5141 = vmatprep.subr.bf16.mxu0 0
  %5142 = vmatpush1.bf16.msra.mxu0 0
  %5143 = vmatprep.subr.bf16.mxu0 %v5075
  %5144 = vmatpush1.bf16.msra.mxu0 %v5074
  %5145 = vmatprep.subr.bf16.mxu0 %v5070
  %5146 = vmatpush1.bf16.msra.mxu0 %v5069
  %5147 = vmatprep.subr.bf16.mxu0 0
  %5148 = vmatpush2.bf16.msra.mxu0 0
  %5149 = vmatprep.subr.bf16.mxu0 0
  %5150 = vmatpush2.bf16.msra.mxu0 0
  %5151 = vmatprep.subr.bf16.mxu0 0
  %5152 = vmatpush2.bf16.msra.mxu0 0
  %5153 = vmatprep.subr.bf16.mxu0 0
  %5154 = vmatpush2.bf16.msra.mxu0 0
  %5155 = vmatprep.subr.bf16.mxu0 0
  %5156 = vmatpush2.bf16.msra.mxu0 0
  %5157 = vmatprep.subr.bf16.mxu0 0
  %5158 = vmatpush2.bf16.msra.mxu0 0
  %5159 = vmatprep.subr.bf16.mxu0 0
  %5160 = vmatpush2.bf16.msra.mxu0 0
  %5161 = vmatprep.subr.bf16.mxu0 0
  %5162 = vmatpush2.bf16.msra.mxu0 0
  %5163 = vmatprep.mubr.bf16.mxu0 0
  %5164 = vmatmul.mubr.bf16.gmra.mxu0 %v5088
  %v5165 = vpop.f32.mrf.mxu0
  %v5166 = vadd.f32 0.0, %v5165
  %v5167 = vpop.f32.mrf.mxu0
  %v5168 = vadd.f32 0.0, %v5167
  %v5169 = vpop.f32.mrf.mxu0
  %v5170 = vpop.f32.mrf.mxu0
  %5171 = vdwg.mxu0
  %5172 = vmatprep.subr.bf16.mxu0 0
  %5173 = vmatpush1.bf16.msra.mxu0 0
  %5174 = vmatprep.subr.bf16.mxu0 0
  %5175 = vmatpush1.bf16.msra.mxu0 0
  %5176 = vmatprep.subr.bf16.mxu0 0
  %5177 = vmatpush1.bf16.msra.mxu0 0
  %5178 = vmatprep.subr.bf16.mxu0 0
  %5179 = vmatpush1.bf16.msra.mxu0 0
  %5180 = vmatprep.subr.bf16.mxu0 0
  %5181 = vmatpush1.bf16.msra.mxu0 0
  %5182 = vmatprep.subr.bf16.mxu0 0
  %5183 = vmatpush1.bf16.msra.mxu0 0
  %5184 = vmatprep.subr.bf16.mxu0 0
  %5185 = vmatpush1.bf16.msra.mxu0 %v5076
  %5186 = vmatprep.subr.bf16.mxu0 0
  %5187 = vmatpush1.bf16.msra.mxu0 %v5071
  %5188 = vmatprep.subr.bf16.mxu0 0
  %5189 = vmatpush2.bf16.msra.mxu0 0
  %5190 = vmatprep.subr.bf16.mxu0 0
  %5191 = vmatpush2.bf16.msra.mxu0 0
  %5192 = vmatprep.subr.bf16.mxu0 0
  %5193 = vmatpush2.bf16.msra.mxu0 0
  %5194 = vmatprep.subr.bf16.mxu0 0
  %5195 = vmatpush2.bf16.msra.mxu0 0
  %5196 = vmatprep.subr.bf16.mxu0 0
  %5197 = vmatpush2.bf16.msra.mxu0 0
  %5198 = vmatprep.subr.bf16.mxu0 0
  %5199 = vmatpush2.bf16.msra.mxu0 0
  %5200 = vmatprep.subr.bf16.mxu0 0
  %5201 = vmatpush2.bf16.msra.mxu0 0
  %5202 = vmatprep.subr.bf16.mxu0 0
  %5203 = vmatpush2.bf16.msra.mxu0 0
  %5204 = vmatprep.mubr.bf16.mxu0 0
  %5205 = vmatmul.mubr.bf16.gmra.mxu0 %v5088
  %v5206 = vpop.f32.mrf.mxu0
  %v5207 = vadd.f32 0.0, %v5206
  %v5208 = vpop.f32.mrf.mxu0
  %v5209 = vpop.f32.mrf.mxu0
  %v5210 = vpop.f32.mrf.mxu0
  %5211 = vdwg.mxu0
  %v5212 = vadd.f32 %v4954, %v5125
  %v5213 = vadd.f32 %v4956, %v5127
  %v5214 = vadd.f32 %v4995, %v5166
  %v5215 = vadd.f32 %v4997, %v5168
  %v5216 = vadd.f32 %v5036, %v5207
  %s5217 = scalar_lea.vmem %s6, 6
  %v5218 = vld [vmem:[%s5217] sm:$0x3]
  %5219 = vrot.lane.b32.xlu0 %v4691, 1
  %v5220 = vpop.permute.xlu0 %5219
  %5221 = vrot.lane.b32.xlu0 %v4692, 1
  %v5222 = vpop.permute.xlu0 %5221
  %5223 = vrot.lane.b32.xlu0 %v4693, 1
  %v5224 = vpop.permute.xlu0 %5223
  %5225 = vrot.lane.b32.xlu0 %v4694, 1
  %v5226 = vpop.permute.xlu0 %5225
  %5227 = vrot.lane.b32.xlu0 %v4695, 1
  %v5228 = vpop.permute.xlu0 %5227
  %5229 = vrot.lane.b32.xlu0 %v4696, 1
  %v5230 = vpop.permute.xlu0 %5229
  %5231 = vrot.lane.b32.xlu0 %v4697, 1
  %v5232 = vpop.permute.xlu0 %5231
  %5233 = vrot.lane.b32.xlu0 %v4698, 1
  %v5234 = vpop.permute.xlu0 %5233
  %5235 = vrot.lane.b32.xlu0 %v4699, 1
  %v5236 = vpop.permute.xlu0 %5235
  %5237 = vrot.lane.b32.xlu0 %v4700, 1
  %v5238 = vpop.permute.xlu0 %5237
  %5239 = vrot.lane.b32.xlu0 %v4701, 1
  %v5240 = vpop.permute.xlu0 %5239
  %5241 = vrot.lane.b32.xlu0 %v4702, 1
  %v5242 = vpop.permute.xlu0 %5241
  %v5243 = vsel %vm785, %v5220, %v5222
  %v5244 = vsel %vm785, %v5222, %v5224
  %v5245 = vsel %vm785, %v5224, %v5226
  %v5246 = vsel %vm785, %v5226, %v5228
  %v5247 = vsel %vm785, %v5228, %v5230
  %v5248 = vsel %vm785, %v5232, %v5234
  %v5249 = vsel %vm785, %v5234, %v5236
  %v5250 = vsel %vm785, %v5236, %v5238
  %v5251 = vsel %vm785, %v5238, %v5240
  %v5252 = vsel %vm785, %v5240, %v5242
  %v5264 = vsel %vm2427, %v5218, 0
  %5266 = vmatprep.subr.bf16.mxu0 0
  %5267 = vmatpush1.bf16.msra.mxu0 0
  %5268 = vmatprep.subr.bf16.mxu0 0
  %5269 = vmatpush1.bf16.msra.mxu0 0
  %5270 = vmatprep.subr.bf16.mxu0 0
  %5271 = vmatpush1.bf16.msra.mxu0 0
  %5272 = vmatprep.subr.bf16.mxu0 0
  %5273 = vmatpush1.bf16.msra.mxu0 0
  %5274 = vmatprep.subr.bf16.mxu0 0
  %5275 = vmatpush1.bf16.msra.mxu0 0
  %5276 = vmatprep.subr.bf16.mxu0 0
  %5277 = vmatpush1.bf16.msra.mxu0 0
  %5278 = vmatprep.subr.bf16.mxu0 %v5249
  %5279 = vmatpush1.bf16.msra.mxu0 %v5248
  %5280 = vmatprep.subr.bf16.mxu0 %v5244
  %5281 = vmatpush1.bf16.msra.mxu0 %v5243
  %5282 = vmatprep.subr.bf16.mxu0 0
  %5283 = vmatpush2.bf16.msra.mxu0 0
  %5284 = vmatprep.subr.bf16.mxu0 0
  %5285 = vmatpush2.bf16.msra.mxu0 0
  %5286 = vmatprep.subr.bf16.mxu0 0
  %5287 = vmatpush2.bf16.msra.mxu0 0
  %5288 = vmatprep.subr.bf16.mxu0 0
  %5289 = vmatpush2.bf16.msra.mxu0 0
  %5290 = vmatprep.subr.bf16.mxu0 0
  %5291 = vmatpush2.bf16.msra.mxu0 0
  %5292 = vmatprep.subr.bf16.mxu0 0
  %5293 = vmatpush2.bf16.msra.mxu0 0
  %5294 = vmatprep.subr.bf16.mxu0 0
  %5295 = vmatpush2.bf16.msra.mxu0 0
  %5296 = vmatprep.subr.bf16.mxu0 0
  %5297 = vmatpush2.bf16.msra.mxu0 0
  %5298 = vmatprep.mubr.bf16.mxu0 0
  %5299 = vmatmul.mubr.bf16.gmra.mxu0 %v5264
  %v5300 = vpop.f32.mrf.mxu0
  %v5301 = vadd.f32 0.0, %v5300
  %v5302 = vpop.f32.mrf.mxu0
  %v5303 = vadd.f32 0.0, %v5302
  %v5304 = vpop.f32.mrf.mxu0
  %v5305 = vpop.f32.mrf.mxu0
  %5306 = vdwg.mxu0
  %5307 = vmatprep.subr.bf16.mxu0 0
  %5308 = vmatpush1.bf16.msra.mxu0 0
  %5309 = vmatprep.subr.bf16.mxu0 0
  %5310 = vmatpush1.bf16.msra.mxu0 0
  %5311 = vmatprep.subr.bf16.mxu0 0
  %5312 = vmatpush1.bf16.msra.mxu0 0
  %5313 = vmatprep.subr.bf16.mxu0 0
  %5314 = vmatpush1.bf16.msra.mxu0 0
  %5315 = vmatprep.subr.bf16.mxu0 0
  %5316 = vmatpush1.bf16.msra.mxu0 0
  %5317 = vmatprep.subr.bf16.mxu0 0
  %5318 = vmatpush1.bf16.msra.mxu0 0
  %5319 = vmatprep.subr.bf16.mxu0 %v5251
  %5320 = vmatpush1.bf16.msra.mxu0 %v5250
  %5321 = vmatprep.subr.bf16.mxu0 %v5246
  %5322 = vmatpush1.bf16.msra.mxu0 %v5245
  %5323 = vmatprep.subr.bf16.mxu0 0
  %5324 = vmatpush2.bf16.msra.mxu0 0
  %5325 = vmatprep.subr.bf16.mxu0 0
  %5326 = vmatpush2.bf16.msra.mxu0 0
  %5327 = vmatprep.subr.bf16.mxu0 0
  %5328 = vmatpush2.bf16.msra.mxu0 0
  %5329 = vmatprep.subr.bf16.mxu0 0
  %5330 = vmatpush2.bf16.msra.mxu0 0
  %5331 = vmatprep.subr.bf16.mxu0 0
  %5332 = vmatpush2.bf16.msra.mxu0 0
  %5333 = vmatprep.subr.bf16.mxu0 0
  %5334 = vmatpush2.bf16.msra.mxu0 0
  %5335 = vmatprep.subr.bf16.mxu0 0
  %5336 = vmatpush2.bf16.msra.mxu0 0
  %5337 = vmatprep.subr.bf16.mxu0 0
  %5338 = vmatpush2.bf16.msra.mxu0 0
  %5339 = vmatprep.mubr.bf16.mxu0 0
  %5340 = vmatmul.mubr.bf16.gmra.mxu0 %v5264
  %v5341 = vpop.f32.mrf.mxu0
  %v5342 = vadd.f32 0.0, %v5341
  %v5343 = vpop.f32.mrf.mxu0
  %v5344 = vadd.f32 0.0, %v5343
  %v5345 = vpop.f32.mrf.mxu0
  %v5346 = vpop.f32.mrf.mxu0
  %5347 = vdwg.mxu0
  %5348 = vmatprep.subr.bf16.mxu0 0
  %5349 = vmatpush1.bf16.msra.mxu0 0
  %5350 = vmatprep.subr.bf16.mxu0 0
  %5351 = vmatpush1.bf16.msra.mxu0 0
  %5352 = vmatprep.subr.bf16.mxu0 0
  %5353 = vmatpush1.bf16.msra.mxu0 0
  %5354 = vmatprep.subr.bf16.mxu0 0
  %5355 = vmatpush1.bf16.msra.mxu0 0
  %5356 = vmatprep.subr.bf16.mxu0 0
  %5357 = vmatpush1.bf16.msra.mxu0 0
  %5358 = vmatprep.subr.bf16.mxu0 0
  %5359 = vmatpush1.bf16.msra.mxu0 0
  %5360 = vmatprep.subr.bf16.mxu0 0
  %5361 = vmatpush1.bf16.msra.mxu0 %v5252
  %5362 = vmatprep.subr.bf16.mxu0 0
  %5363 = vmatpush1.bf16.msra.mxu0 %v5247
  %5364 = vmatprep.subr.bf16.mxu0 0
  %5365 = vmatpush2.bf16.msra.mxu0 0
  %5366 = vmatprep.subr.bf16.mxu0 0
  %5367 = vmatpush2.bf16.msra.mxu0 0
  %5368 = vmatprep.subr.bf16.mxu0 0
  %5369 = vmatpush2.bf16.msra.mxu0 0
  %5370 = vmatprep.subr.bf16.mxu0 0
  %5371 = vmatpush2.bf16.msra.mxu0 0
  %5372 = vmatprep.subr.bf16.mxu0 0
  %5373 = vmatpush2.bf16.msra.mxu0 0
  %5374 = vmatprep.subr.bf16.mxu0 0
  %5375 = vmatpush2.bf16.msra.mxu0 0
  %5376 = vmatprep.subr.bf16.mxu0 0
  %5377 = vmatpush2.bf16.msra.mxu0 0
  %5378 = vmatprep.subr.bf16.mxu0 0
  %5379 = vmatpush2.bf16.msra.mxu0 0
  %5380 = vmatprep.mubr.bf16.mxu0 0
  %5381 = vmatmul.mubr.bf16.gmra.mxu0 %v5264
  %v5382 = vpop.f32.mrf.mxu0
  %v5383 = vadd.f32 0.0, %v5382
  %v5384 = vpop.f32.mrf.mxu0
  %v5385 = vpop.f32.mrf.mxu0
  %v5386 = vpop.f32.mrf.mxu0
  %5387 = vdwg.mxu0
  %v5388 = vadd.f32 %v5212, %v5301
  %v5389 = vadd.f32 %v5213, %v5303
  %v5390 = vadd.f32 %v5214, %v5342
  %v5391 = vadd.f32 %v5215, %v5344
  %v5392 = vadd.f32 %v5216, %v5383
  %v5393 = vld [vmem:[#allocation2 + $0x4] sm:$0xff]
  %v5394 = vld [vmem:[#allocation2 + $0xc] sm:$0xff]
  %v5395 = vld [vmem:[#allocation2 + $0x14] sm:$0xf]
  %v5396 = vld [vmem:[#allocation2 + $0x1c] sm:$0xff]
  %v5397 = vld [vmem:[#allocation2 + $0x24] sm:$0xff]
  %v5398 = vld [vmem:[#allocation2 + $0x2c] sm:$0xf]
  %v5399 = vld [vmem:[#allocation2 + $0x34] sm:$0xff]
  %v5400 = vld [vmem:[#allocation2 + $0x3c] sm:$0xff]
  %v5401 = vld [vmem:[#allocation2 + $0x44] sm:$0xf]
  %v5402 = vld [vmem:[#allocation2 + $0x4c] sm:$0xff]
  %v5403 = vld [vmem:[#allocation2 + $0x54] sm:$0xff]
  %v5404 = vld [vmem:[#allocation2 + $0x5c] sm:$0xf]
  %s5405 = scalar_lea.vmem %s6, 8
  %v5406 = vld [vmem:[%s5405] sm:$0x3]
  %v5419 = vunpack.c.l.b16 %v5393
  %v5420 = vunpack.c.h.b16 %v5393
  %v5421 = vunpack.c.l.b16 %v5394
  %v5422 = vunpack.c.h.b16 %v5394
  %v5423 = vunpack.c.l.b16 %v5395
  %v5424 = vunpack.c.l.b16 %v5396
  %v5425 = vunpack.c.h.b16 %v5396
  %v5426 = vunpack.c.l.b16 %v5397
  %v5427 = vunpack.c.h.b16 %v5397
  %v5428 = vunpack.c.l.b16 %v5398
  %v5429 = vunpack.c.l.b16 %v5399
  %v5430 = vunpack.c.h.b16 %v5399
  %v5431 = vunpack.c.l.b16 %v5400
  %v5432 = vunpack.c.h.b16 %v5400
  %v5433 = vunpack.c.l.b16 %v5401
  %v5434 = vunpack.c.l.b16 %v5402
  %v5435 = vunpack.c.h.b16 %v5402
  %v5436 = vunpack.c.l.b16 %v5403
  %v5437 = vunpack.c.h.b16 %v5403
  %v5438 = vunpack.c.l.b16 %v5404
  %v5439 = vpack.c.b16 %v5424, %v5419
  %v5440 = vpack.c.b16 %v5425, %v5420
  %v5441 = vpack.c.b16 %v5426, %v5421
  %v5442 = vpack.c.b16 %v5427, %v5422
  %v5443 = vpack.c.b16 %v5428, %v5423
  %v5444 = vpack.c.b16 %v5434, %v5429
  %v5445 = vpack.c.b16 %v5435, %v5430
  %v5446 = vpack.c.b16 %v5436, %v5431
  %v5447 = vpack.c.b16 %v5437, %v5432
  %v5448 = vpack.c.b16 %v5438, %v5433
  %v5460 = vsel %vm2427, %v5406, 0
  %5462 = vmatprep.subr.bf16.mxu0 0
  %5463 = vmatpush1.bf16.msra.mxu0 0
  %5464 = vmatprep.subr.bf16.mxu0 0
  %5465 = vmatpush1.bf16.msra.mxu0 0
  %5466 = vmatprep.subr.bf16.mxu0 0
  %5467 = vmatpush1.bf16.msra.mxu0 0
  %5468 = vmatprep.subr.bf16.mxu0 0
  %5469 = vmatpush1.bf16.msra.mxu0 0
  %5470 = vmatprep.subr.bf16.mxu0 0
  %5471 = vmatpush1.bf16.msra.mxu0 0
  %5472 = vmatprep.subr.bf16.mxu0 0
  %5473 = vmatpush1.bf16.msra.mxu0 0
  %5474 = vmatprep.subr.bf16.mxu0 %v5445
  %5475 = vmatpush1.bf16.msra.mxu0 %v5444
  %5476 = vmatprep.subr.bf16.mxu0 %v5440
  %5477 = vmatpush1.bf16.msra.mxu0 %v5439
  %5478 = vmatprep.subr.bf16.mxu0 0
  %5479 = vmatpush2.bf16.msra.mxu0 0
  %5480 = vmatprep.subr.bf16.mxu0 0
  %5481 = vmatpush2.bf16.msra.mxu0 0
  %5482 = vmatprep.subr.bf16.mxu0 0
  %5483 = vmatpush2.bf16.msra.mxu0 0
  %5484 = vmatprep.subr.bf16.mxu0 0
  %5485 = vmatpush2.bf16.msra.mxu0 0
  %5486 = vmatprep.subr.bf16.mxu0 0
  %5487 = vmatpush2.bf16.msra.mxu0 0
  %5488 = vmatprep.subr.bf16.mxu0 0
  %5489 = vmatpush2.bf16.msra.mxu0 0
  %5490 = vmatprep.subr.bf16.mxu0 0
  %5491 = vmatpush2.bf16.msra.mxu0 0
  %5492 = vmatprep.subr.bf16.mxu0 0
  %5493 = vmatpush2.bf16.msra.mxu0 0
  %5494 = vmatprep.mubr.bf16.mxu0 0
  %5495 = vmatmul.mubr.bf16.gmra.mxu0 %v5460
  %v5496 = vpop.f32.mrf.mxu0
  %v5497 = vadd.f32 0.0, %v5496
  %v5498 = vpop.f32.mrf.mxu0
  %v5499 = vadd.f32 0.0, %v5498
  %v5500 = vpop.f32.mrf.mxu0
  %v5501 = vpop.f32.mrf.mxu0
  %5502 = vdwg.mxu0
  %5503 = vmatprep.subr.bf16.mxu0 0
  %5504 = vmatpush1.bf16.msra.mxu0 0
  %5505 = vmatprep.subr.bf16.mxu0 0
  %5506 = vmatpush1.bf16.msra.mxu0 0
  %5507 = vmatprep.subr.bf16.mxu0 0
  %5508 = vmatpush1.bf16.msra.mxu0 0
  %5509 = vmatprep.subr.bf16.mxu0 0
  %5510 = vmatpush1.bf16.msra.mxu0 0
  %5511 = vmatprep.subr.bf16.mxu0 0
  %5512 = vmatpush1.bf16.msra.mxu0 0
  %5513 = vmatprep.subr.bf16.mxu0 0
  %5514 = vmatpush1.bf16.msra.mxu0 0
  %5515 = vmatprep.subr.bf16.mxu0 %v5447
  %5516 = vmatpush1.bf16.msra.mxu0 %v5446
  %5517 = vmatprep.subr.bf16.mxu0 %v5442
  %5518 = vmatpush1.bf16.msra.mxu0 %v5441
  %5519 = vmatprep.subr.bf16.mxu0 0
  %5520 = vmatpush2.bf16.msra.mxu0 0
  %5521 = vmatprep.subr.bf16.mxu0 0
  %5522 = vmatpush2.bf16.msra.mxu0 0
  %5523 = vmatprep.subr.bf16.mxu0 0
  %5524 = vmatpush2.bf16.msra.mxu0 0
  %5525 = vmatprep.subr.bf16.mxu0 0
  %5526 = vmatpush2.bf16.msra.mxu0 0
  %5527 = vmatprep.subr.bf16.mxu0 0
  %5528 = vmatpush2.bf16.msra.mxu0 0
  %5529 = vmatprep.subr.bf16.mxu0 0
  %5530 = vmatpush2.bf16.msra.mxu0 0
  %5531 = vmatprep.subr.bf16.mxu0 0
  %5532 = vmatpush2.bf16.msra.mxu0 0
  %5533 = vmatprep.subr.bf16.mxu0 0
  %5534 = vmatpush2.bf16.msra.mxu0 0
  %5535 = vmatprep.mubr.bf16.mxu0 0
  %5536 = vmatmul.mubr.bf16.gmra.mxu0 %v5460
  %v5537 = vpop.f32.mrf.mxu0
  %v5538 = vadd.f32 0.0, %v5537
  %v5539 = vpop.f32.mrf.mxu0
  %v5540 = vadd.f32 0.0, %v5539
  %v5541 = vpop.f32.mrf.mxu0
  %v5542 = vpop.f32.mrf.mxu0
  %5543 = vdwg.mxu0
  %5544 = vmatprep.subr.bf16.mxu0 0
  %5545 = vmatpush1.bf16.msra.mxu0 0
  %5546 = vmatprep.subr.bf16.mxu0 0
  %5547 = vmatpush1.bf16.msra.mxu0 0
  %5548 = vmatprep.subr.bf16.mxu0 0
  %5549 = vmatpush1.bf16.msra.mxu0 0
  %5550 = vmatprep.subr.bf16.mxu0 0
  %5551 = vmatpush1.bf16.msra.mxu0 0
  %5552 = vmatprep.subr.bf16.mxu0 0
  %5553 = vmatpush1.bf16.msra.mxu0 0
  %5554 = vmatprep.subr.bf16.mxu0 0
  %5555 = vmatpush1.bf16.msra.mxu0 0
  %5556 = vmatprep.subr.bf16.mxu0 0
  %5557 = vmatpush1.bf16.msra.mxu0 %v5448
  %5558 = vmatprep.subr.bf16.mxu0 0
  %5559 = vmatpush1.bf16.msra.mxu0 %v5443
  %5560 = vmatprep.subr.bf16.mxu0 0
  %5561 = vmatpush2.bf16.msra.mxu0 0
  %5562 = vmatprep.subr.bf16.mxu0 0
  %5563 = vmatpush2.bf16.msra.mxu0 0
  %5564 = vmatprep.subr.bf16.mxu0 0
  %5565 = vmatpush2.bf16.msra.mxu0 0
  %5566 = vmatprep.subr.bf16.mxu0 0
  %5567 = vmatpush2.bf16.msra.mxu0 0
  %5568 = vmatprep.subr.bf16.mxu0 0
  %5569 = vmatpush2.bf16.msra.mxu0 0
  %5570 = vmatprep.subr.bf16.mxu0 0
  %5571 = vmatpush2.bf16.msra.mxu0 0
  %5572 = vmatprep.subr.bf16.mxu0 0
  %5573 = vmatpush2.bf16.msra.mxu0 0
  %5574 = vmatprep.subr.bf16.mxu0 0
  %5575 = vmatpush2.bf16.msra.mxu0 0
  %5576 = vmatprep.mubr.bf16.mxu0 0
  %5577 = vmatmul.mubr.bf16.gmra.mxu0 %v5460
  %v5578 = vpop.f32.mrf.mxu0
  %v5579 = vadd.f32 0.0, %v5578
  %v5580 = vpop.f32.mrf.mxu0
  %v5581 = vpop.f32.mrf.mxu0
  %v5582 = vpop.f32.mrf.mxu0
  %5583 = vdwg.mxu0
  %v5584 = vadd.f32 %v5388, %v5497
  %v5585 = vadd.f32 %v5389, %v5499
  %v5586 = vadd.f32 %v5390, %v5538
  %v5587 = vadd.f32 %v5391, %v5540
  %v5588 = vadd.f32 %v5392, %v5579
  %s5589 = scalar_lea.vmem %s6, 10
  %v5590 = vld [vmem:[%s5589] sm:$0x3]
  %5591 = vrot.lane.b32.xlu0 %v5439, 127
  %v5592 = vpop.permute.xlu0 %5591
  %5593 = vrot.lane.b32.xlu0 %v5440, 127
  %v5594 = vpop.permute.xlu0 %5593
  %5595 = vrot.lane.b32.xlu0 %v5441, 127
  %v5596 = vpop.permute.xlu0 %5595
  %5597 = vrot.lane.b32.xlu0 %v5442, 127
  %v5598 = vpop.permute.xlu0 %5597
  %5599 = vrot.lane.b32.xlu0 %v5443, 127
  %v5600 = vpop.permute.xlu0 %5599
  %5601 = vrot.lane.b32.xlu0 %v5444, 127
  %v5602 = vpop.permute.xlu0 %5601
  %5603 = vrot.lane.b32.xlu0 %v5445, 127
  %v5604 = vpop.permute.xlu0 %5603
  %5605 = vrot.lane.b32.xlu0 %v5446, 127
  %v5606 = vpop.permute.xlu0 %5605
  %5607 = vrot.lane.b32.xlu0 %v5447, 127
  %v5608 = vpop.permute.xlu0 %5607
  %5609 = vrot.lane.b32.xlu0 %v5448, 127
  %v5610 = vpop.permute.xlu0 %5609
  %v5611 = vsel %vm1239, %v5592, %v5594
  %v5612 = vsel %vm1239, %v5594, %v5596
  %v5613 = vsel %vm1239, %v5596, %v5598
  %v5614 = vsel %vm1239, %v5598, %v5600
  %v5615 = vsel %vm1239, %v5602, %v5604
  %v5616 = vsel %vm1239, %v5604, %v5606
  %v5617 = vsel %vm1239, %v5606, %v5608
  %v5618 = vsel %vm1239, %v5608, %v5610
  %v5630 = vsel %vm2427, %v5590, 0
  %5632 = vmatprep.subr.bf16.mxu0 0
  %5633 = vmatpush1.bf16.msra.mxu0 0
  %5634 = vmatprep.subr.bf16.mxu0 0
  %5635 = vmatpush1.bf16.msra.mxu0 0
  %5636 = vmatprep.subr.bf16.mxu0 0
  %5637 = vmatpush1.bf16.msra.mxu0 0
  %5638 = vmatprep.subr.bf16.mxu0 0
  %5639 = vmatpush1.bf16.msra.mxu0 0
  %5640 = vmatprep.subr.bf16.mxu0 0
  %5641 = vmatpush1.bf16.msra.mxu0 0
  %5642 = vmatprep.subr.bf16.mxu0 0
  %5643 = vmatpush1.bf16.msra.mxu0 0
  %5644 = vmatprep.subr.bf16.mxu0 %v5616
  %5645 = vmatpush1.bf16.msra.mxu0 %v5615
  %5646 = vmatprep.subr.bf16.mxu0 %v5612
  %5647 = vmatpush1.bf16.msra.mxu0 %v5611
  %5648 = vmatprep.subr.bf16.mxu0 0
  %5649 = vmatpush2.bf16.msra.mxu0 0
  %5650 = vmatprep.subr.bf16.mxu0 0
  %5651 = vmatpush2.bf16.msra.mxu0 0
  %5652 = vmatprep.subr.bf16.mxu0 0
  %5653 = vmatpush2.bf16.msra.mxu0 0
  %5654 = vmatprep.subr.bf16.mxu0 0
  %5655 = vmatpush2.bf16.msra.mxu0 0
  %5656 = vmatprep.subr.bf16.mxu0 0
  %5657 = vmatpush2.bf16.msra.mxu0 0
  %5658 = vmatprep.subr.bf16.mxu0 0
  %5659 = vmatpush2.bf16.msra.mxu0 0
  %5660 = vmatprep.subr.bf16.mxu0 0
  %5661 = vmatpush2.bf16.msra.mxu0 0
  %5662 = vmatprep.subr.bf16.mxu0 0
  %5663 = vmatpush2.bf16.msra.mxu0 0
  %5664 = vmatprep.mubr.bf16.mxu0 0
  %5665 = vmatmul.mubr.bf16.gmra.mxu0 %v5630
  %v5666 = vpop.f32.mrf.mxu0
  %v5667 = vadd.f32 0.0, %v5666
  %v5668 = vpop.f32.mrf.mxu0
  %v5669 = vadd.f32 0.0, %v5668
  %v5670 = vpop.f32.mrf.mxu0
  %v5671 = vpop.f32.mrf.mxu0
  %5672 = vdwg.mxu0
  %5673 = vmatprep.subr.bf16.mxu0 0
  %5674 = vmatpush1.bf16.msra.mxu0 0
  %5675 = vmatprep.subr.bf16.mxu0 0
  %5676 = vmatpush1.bf16.msra.mxu0 0
  %5677 = vmatprep.subr.bf16.mxu0 0
  %5678 = vmatpush1.bf16.msra.mxu0 0
  %5679 = vmatprep.subr.bf16.mxu0 0
  %5680 = vmatpush1.bf16.msra.mxu0 0
  %5681 = vmatprep.subr.bf16.mxu0 0
  %5682 = vmatpush1.bf16.msra.mxu0 0
  %5683 = vmatprep.subr.bf16.mxu0 0
  %5684 = vmatpush1.bf16.msra.mxu0 0
  %5685 = vmatprep.subr.bf16.mxu0 %v5618
  %5686 = vmatpush1.bf16.msra.mxu0 %v5617
  %5687 = vmatprep.subr.bf16.mxu0 %v5614
  %5688 = vmatpush1.bf16.msra.mxu0 %v5613
  %5689 = vmatprep.subr.bf16.mxu0 0
  %5690 = vmatpush2.bf16.msra.mxu0 0
  %5691 = vmatprep.subr.bf16.mxu0 0
  %5692 = vmatpush2.bf16.msra.mxu0 0
  %5693 = vmatprep.subr.bf16.mxu0 0
  %5694 = vmatpush2.bf16.msra.mxu0 0
  %5695 = vmatprep.subr.bf16.mxu0 0
  %5696 = vmatpush2.bf16.msra.mxu0 0
  %5697 = vmatprep.subr.bf16.mxu0 0
  %5698 = vmatpush2.bf16.msra.mxu0 0
  %5699 = vmatprep.subr.bf16.mxu0 0
  %5700 = vmatpush2.bf16.msra.mxu0 0
  %5701 = vmatprep.subr.bf16.mxu0 0
  %5702 = vmatpush2.bf16.msra.mxu0 0
  %5703 = vmatprep.subr.bf16.mxu0 0
  %5704 = vmatpush2.bf16.msra.mxu0 0
  %5705 = vmatprep.mubr.bf16.mxu0 0
  %5706 = vmatmul.mubr.bf16.gmra.mxu0 %v5630
  %v5707 = vpop.f32.mrf.mxu0
  %v5708 = vadd.f32 0.0, %v5707
  %v5709 = vpop.f32.mrf.mxu0
  %v5710 = vadd.f32 0.0, %v5709
  %v5711 = vpop.f32.mrf.mxu0
  %v5712 = vpop.f32.mrf.mxu0
  %5713 = vdwg.mxu0
  %5714 = vmatprep.subr.bf16.mxu0 0
  %5715 = vmatpush1.bf16.msra.mxu0 0
  %5716 = vmatprep.subr.bf16.mxu0 0
  %5717 = vmatpush1.bf16.msra.mxu0 0
  %5718 = vmatprep.subr.bf16.mxu0 0
  %5719 = vmatpush1.bf16.msra.mxu0 0
  %5720 = vmatprep.subr.bf16.mxu0 0
  %5721 = vmatpush1.bf16.msra.mxu0 0
  %5722 = vmatprep.subr.bf16.mxu0 0
  %5723 = vmatpush1.bf16.msra.mxu0 0
  %5724 = vmatprep.subr.bf16.mxu0 0
  %5725 = vmatpush1.bf16.msra.mxu0 0
  %5726 = vmatprep.subr.bf16.mxu0 0
  %5727 = vmatpush1.bf16.msra.mxu0 %v5610
  %5728 = vmatprep.subr.bf16.mxu0 0
  %5729 = vmatpush1.bf16.msra.mxu0 %v5600
  %5730 = vmatprep.subr.bf16.mxu0 0
  %5731 = vmatpush2.bf16.msra.mxu0 0
  %5732 = vmatprep.subr.bf16.mxu0 0
  %5733 = vmatpush2.bf16.msra.mxu0 0
  %5734 = vmatprep.subr.bf16.mxu0 0
  %5735 = vmatpush2.bf16.msra.mxu0 0
  %5736 = vmatprep.subr.bf16.mxu0 0
  %5737 = vmatpush2.bf16.msra.mxu0 0
  %5738 = vmatprep.subr.bf16.mxu0 0
  %5739 = vmatpush2.bf16.msra.mxu0 0
  %5740 = vmatprep.subr.bf16.mxu0 0
  %5741 = vmatpush2.bf16.msra.mxu0 0
  %5742 = vmatprep.subr.bf16.mxu0 0
  %5743 = vmatpush2.bf16.msra.mxu0 0
  %5744 = vmatprep.subr.bf16.mxu0 0
  %5745 = vmatpush2.bf16.msra.mxu0 0
  %5746 = vmatprep.mubr.bf16.mxu0 0
  %5747 = vmatmul.mubr.bf16.gmra.mxu0 %v5630
  %v5748 = vpop.f32.mrf.mxu0
  %v5749 = vadd.f32 0.0, %v5748
  %v5750 = vpop.f32.mrf.mxu0
  %v5751 = vpop.f32.mrf.mxu0
  %v5752 = vpop.f32.mrf.mxu0
  %5753 = vdwg.mxu0
  %v5754 = vadd.f32 %v5584, %v5667
  %v5755 = vadd.f32 %v5585, %v5669
  %v5756 = vadd.f32 %v5586, %v5708
  %v5757 = vadd.f32 %v5587, %v5710
  %v5758 = vadd.f32 %v5588, %v5749
  %s5759 = scalar_lea.vmem %s6, 12
  %v5760 = vld [vmem:[%s5759] sm:$0x3]
  %5761 = vrot.lane.b32.xlu0 %v5439, 111
  %v5762 = vpop.permute.xlu0 %5761
  %5763 = vrot.lane.b32.xlu0 %v5440, 111
  %v5764 = vpop.permute.xlu0 %5763
  %5765 = vrot.lane.b32.xlu0 %v5441, 111
  %v5766 = vpop.permute.xlu0 %5765
  %5767 = vrot.lane.b32.xlu0 %v5442, 111
  %v5768 = vpop.permute.xlu0 %5767
  %5769 = vrot.lane.b32.xlu0 %v5443, 111
  %v5770 = vpop.permute.xlu0 %5769
  %5771 = vrot.lane.b32.xlu0 %v5444, 111
  %v5772 = vpop.permute.xlu0 %5771
  %5773 = vrot.lane.b32.xlu0 %v5445, 111
  %v5774 = vpop.permute.xlu0 %5773
  %5775 = vrot.lane.b32.xlu0 %v5446, 111
  %v5776 = vpop.permute.xlu0 %5775
  %5777 = vrot.lane.b32.xlu0 %v5447, 111
  %v5778 = vpop.permute.xlu0 %5777
  %5779 = vrot.lane.b32.xlu0 %v5448, 111
  %v5780 = vpop.permute.xlu0 %5779
  %v5781 = vsel %vm1465, %v5762, %v5764
  %v5782 = vsel %vm1465, %v5764, %v5766
  %v5783 = vsel %vm1465, %v5766, %v5768
  %v5784 = vsel %vm1465, %v5768, %v5770
  %v5785 = vsel %vm1465, %v5772, %v5774
  %v5786 = vsel %vm1465, %v5774, %v5776
  %v5787 = vsel %vm1465, %v5776, %v5778
  %v5788 = vsel %vm1465, %v5778, %v5780
  %v5800 = vsel %vm2427, %v5760, 0
  %5802 = vmatprep.subr.bf16.mxu0 0
  %5803 = vmatpush1.bf16.msra.mxu0 0
  %5804 = vmatprep.subr.bf16.mxu0 0
  %5805 = vmatpush1.bf16.msra.mxu0 0
  %5806 = vmatprep.subr.bf16.mxu0 0
  %5807 = vmatpush1.bf16.msra.mxu0 0
  %5808 = vmatprep.subr.bf16.mxu0 0
  %5809 = vmatpush1.bf16.msra.mxu0 0
  %5810 = vmatprep.subr.bf16.mxu0 0
  %5811 = vmatpush1.bf16.msra.mxu0 0
  %5812 = vmatprep.subr.bf16.mxu0 0
  %5813 = vmatpush1.bf16.msra.mxu0 0
  %5814 = vmatprep.subr.bf16.mxu0 %v5786
  %5815 = vmatpush1.bf16.msra.mxu0 %v5785
  %5816 = vmatprep.subr.bf16.mxu0 %v5782
  %5817 = vmatpush1.bf16.msra.mxu0 %v5781
  %5818 = vmatprep.subr.bf16.mxu0 0
  %5819 = vmatpush2.bf16.msra.mxu0 0
  %5820 = vmatprep.subr.bf16.mxu0 0
  %5821 = vmatpush2.bf16.msra.mxu0 0
  %5822 = vmatprep.subr.bf16.mxu0 0
  %5823 = vmatpush2.bf16.msra.mxu0 0
  %5824 = vmatprep.subr.bf16.mxu0 0
  %5825 = vmatpush2.bf16.msra.mxu0 0
  %5826 = vmatprep.subr.bf16.mxu0 0
  %5827 = vmatpush2.bf16.msra.mxu0 0
  %5828 = vmatprep.subr.bf16.mxu0 0
  %5829 = vmatpush2.bf16.msra.mxu0 0
  %5830 = vmatprep.subr.bf16.mxu0 0
  %5831 = vmatpush2.bf16.msra.mxu0 0
  %5832 = vmatprep.subr.bf16.mxu0 0
  %5833 = vmatpush2.bf16.msra.mxu0 0
  %5834 = vmatprep.mubr.bf16.mxu0 0
  %5835 = vmatmul.mubr.bf16.gmra.mxu0 %v5800
  %v5836 = vpop.f32.mrf.mxu0
  %v5837 = vadd.f32 0.0, %v5836
  %v5838 = vpop.f32.mrf.mxu0
  %v5839 = vadd.f32 0.0, %v5838
  %v5840 = vpop.f32.mrf.mxu0
  %v5841 = vpop.f32.mrf.mxu0
  %5842 = vdwg.mxu0
  %5843 = vmatprep.subr.bf16.mxu0 0
  %5844 = vmatpush1.bf16.msra.mxu0 0
  %5845 = vmatprep.subr.bf16.mxu0 0
  %5846 = vmatpush1.bf16.msra.mxu0 0
  %5847 = vmatprep.subr.bf16.mxu0 0
  %5848 = vmatpush1.bf16.msra.mxu0 0
  %5849 = vmatprep.subr.bf16.mxu0 0
  %5850 = vmatpush1.bf16.msra.mxu0 0
  %5851 = vmatprep.subr.bf16.mxu0 0
  %5852 = vmatpush1.bf16.msra.mxu0 0
  %5853 = vmatprep.subr.bf16.mxu0 0
  %5854 = vmatpush1.bf16.msra.mxu0 0
  %5855 = vmatprep.subr.bf16.mxu0 %v5788
  %5856 = vmatpush1.bf16.msra.mxu0 %v5787
  %5857 = vmatprep.subr.bf16.mxu0 %v5784
  %5858 = vmatpush1.bf16.msra.mxu0 %v5783
  %5859 = vmatprep.subr.bf16.mxu0 0
  %5860 = vmatpush2.bf16.msra.mxu0 0
  %5861 = vmatprep.subr.bf16.mxu0 0
  %5862 = vmatpush2.bf16.msra.mxu0 0
  %5863 = vmatprep.subr.bf16.mxu0 0
  %5864 = vmatpush2.bf16.msra.mxu0 0
  %5865 = vmatprep.subr.bf16.mxu0 0
  %5866 = vmatpush2.bf16.msra.mxu0 0
  %5867 = vmatprep.subr.bf16.mxu0 0
  %5868 = vmatpush2.bf16.msra.mxu0 0
  %5869 = vmatprep.subr.bf16.mxu0 0
  %5870 = vmatpush2.bf16.msra.mxu0 0
  %5871 = vmatprep.subr.bf16.mxu0 0
  %5872 = vmatpush2.bf16.msra.mxu0 0
  %5873 = vmatprep.subr.bf16.mxu0 0
  %5874 = vmatpush2.bf16.msra.mxu0 0
  %5875 = vmatprep.mubr.bf16.mxu0 0
  %5876 = vmatmul.mubr.bf16.gmra.mxu0 %v5800
  %v5877 = vpop.f32.mrf.mxu0
  %v5878 = vadd.f32 0.0, %v5877
  %v5879 = vpop.f32.mrf.mxu0
  %v5880 = vadd.f32 0.0, %v5879
  %v5881 = vpop.f32.mrf.mxu0
  %v5882 = vpop.f32.mrf.mxu0
  %5883 = vdwg.mxu0
  %5884 = vmatprep.subr.bf16.mxu0 0
  %5885 = vmatpush1.bf16.msra.mxu0 0
  %5886 = vmatprep.subr.bf16.mxu0 0
  %5887 = vmatpush1.bf16.msra.mxu0 0
  %5888 = vmatprep.subr.bf16.mxu0 0
  %5889 = vmatpush1.bf16.msra.mxu0 0
  %5890 = vmatprep.subr.bf16.mxu0 0
  %5891 = vmatpush1.bf16.msra.mxu0 0
  %5892 = vmatprep.subr.bf16.mxu0 0
  %5893 = vmatpush1.bf16.msra.mxu0 0
  %5894 = vmatprep.subr.bf16.mxu0 0
  %5895 = vmatpush1.bf16.msra.mxu0 0
  %5896 = vmatprep.subr.bf16.mxu0 0
  %5897 = vmatpush1.bf16.msra.mxu0 %v5780
  %5898 = vmatprep.subr.bf16.mxu0 0
  %5899 = vmatpush1.bf16.msra.mxu0 %v5770
  %5900 = vmatprep.subr.bf16.mxu0 0
  %5901 = vmatpush2.bf16.msra.mxu0 0
  %5902 = vmatprep.subr.bf16.mxu0 0
  %5903 = vmatpush2.bf16.msra.mxu0 0
  %5904 = vmatprep.subr.bf16.mxu0 0
  %5905 = vmatpush2.bf16.msra.mxu0 0
  %5906 = vmatprep.subr.bf16.mxu0 0
  %5907 = vmatpush2.bf16.msra.mxu0 0
  %5908 = vmatprep.subr.bf16.mxu0 0
  %5909 = vmatpush2.bf16.msra.mxu0 0
  %5910 = vmatprep.subr.bf16.mxu0 0
  %5911 = vmatpush2.bf16.msra.mxu0 0
  %5912 = vmatprep.subr.bf16.mxu0 0
  %5913 = vmatpush2.bf16.msra.mxu0 0
  %5914 = vmatprep.subr.bf16.mxu0 0
  %5915 = vmatpush2.bf16.msra.mxu0 0
  %5916 = vmatprep.mubr.bf16.mxu0 0
  %5917 = vmatmul.mubr.bf16.gmra.mxu0 %v5800
  %v5918 = vpop.f32.mrf.mxu0
  %v5919 = vadd.f32 0.0, %v5918
  %v5920 = vpop.f32.mrf.mxu0
  %v5921 = vpop.f32.mrf.mxu0
  %v5922 = vpop.f32.mrf.mxu0
  %5923 = vdwg.mxu0
  %v5924 = vadd.f32 %v5754, %v5837
  %v5925 = vadd.f32 %v5755, %v5839
  %v5926 = vadd.f32 %v5756, %v5878
  %v5927 = vadd.f32 %v5757, %v5880
  %v5928 = vadd.f32 %v5758, %v5919
  %s5929 = scalar_lea.vmem %s6, 14
  %v5930 = vld [vmem:[%s5929] sm:$0x3]
  %5931 = vrot.lane.b32.xlu0 %v5439, 110
  %v5932 = vpop.permute.xlu0 %5931
  %5933 = vrot.lane.b32.xlu0 %v5440, 110
  %v5934 = vpop.permute.xlu0 %5933
  %5935 = vrot.lane.b32.xlu0 %v5441, 110
  %v5936 = vpop.permute.xlu0 %5935
  %5937 = vrot.lane.b32.xlu0 %v5442, 110
  %v5938 = vpop.permute.xlu0 %5937
  %5939 = vrot.lane.b32.xlu0 %v5443, 110
  %v5940 = vpop.permute.xlu0 %5939
  %5941 = vrot.lane.b32.xlu0 %v5444, 110
  %v5942 = vpop.permute.xlu0 %5941
  %5943 = vrot.lane.b32.xlu0 %v5445, 110
  %v5944 = vpop.permute.xlu0 %5943
  %5945 = vrot.lane.b32.xlu0 %v5446, 110
  %v5946 = vpop.permute.xlu0 %5945
  %5947 = vrot.lane.b32.xlu0 %v5447, 110
  %v5948 = vpop.permute.xlu0 %5947
  %5949 = vrot.lane.b32.xlu0 %v5448, 110
  %v5950 = vpop.permute.xlu0 %5949
  %v5951 = vsel %vm1691, %v5932, %v5934
  %v5952 = vsel %vm1691, %v5934, %v5936
  %v5953 = vsel %vm1691, %v5936, %v5938
  %v5954 = vsel %vm1691, %v5938, %v5940
  %v5955 = vsel %vm1691, %v5942, %v5944
  %v5956 = vsel %vm1691, %v5944, %v5946
  %v5957 = vsel %vm1691, %v5946, %v5948
  %v5958 = vsel %vm1691, %v5948, %v5950
  %v5970 = vsel %vm2427, %v5930, 0
  %5972 = vmatprep.subr.bf16.mxu0 0
  %5973 = vmatpush1.bf16.msra.mxu0 0
  %5974 = vmatprep.subr.bf16.mxu0 0
  %5975 = vmatpush1.bf16.msra.mxu0 0
  %5976 = vmatprep.subr.bf16.mxu0 0
  %5977 = vmatpush1.bf16.msra.mxu0 0
  %5978 = vmatprep.subr.bf16.mxu0 0
  %5979 = vmatpush1.bf16.msra.mxu0 0
  %5980 = vmatprep.subr.bf16.mxu0 0
  %5981 = vmatpush1.bf16.msra.mxu0 0
  %5982 = vmatprep.subr.bf16.mxu0 0
  %5983 = vmatpush1.bf16.msra.mxu0 0
  %5984 = vmatprep.subr.bf16.mxu0 %v5956
  %5985 = vmatpush1.bf16.msra.mxu0 %v5955
  %5986 = vmatprep.subr.bf16.mxu0 %v5952
  %5987 = vmatpush1.bf16.msra.mxu0 %v5951
  %5988 = vmatprep.subr.bf16.mxu0 0
  %5989 = vmatpush2.bf16.msra.mxu0 0
  %5990 = vmatprep.subr.bf16.mxu0 0
  %5991 = vmatpush2.bf16.msra.mxu0 0
  %5992 = vmatprep.subr.bf16.mxu0 0
  %5993 = vmatpush2.bf16.msra.mxu0 0
  %5994 = vmatprep.subr.bf16.mxu0 0
  %5995 = vmatpush2.bf16.msra.mxu0 0
  %5996 = vmatprep.subr.bf16.mxu0 0
  %5997 = vmatpush2.bf16.msra.mxu0 0
  %5998 = vmatprep.subr.bf16.mxu0 0
  %5999 = vmatpush2.bf16.msra.mxu0 0
  %6000 = vmatprep.subr.bf16.mxu0 0
  %6001 = vmatpush2.bf16.msra.mxu0 0
  %6002 = vmatprep.subr.bf16.mxu0 0
  %6003 = vmatpush2.bf16.msra.mxu0 0
  %6004 = vmatprep.mubr.bf16.mxu0 0
  %6005 = vmatmul.mubr.bf16.gmra.mxu0 %v5970
  %v6006 = vpop.f32.mrf.mxu0
  %v6007 = vadd.f32 0.0, %v6006
  %v6008 = vpop.f32.mrf.mxu0
  %v6009 = vadd.f32 0.0, %v6008
  %v6010 = vpop.f32.mrf.mxu0
  %v6011 = vpop.f32.mrf.mxu0
  %6012 = vdwg.mxu0
  %6013 = vmatprep.subr.bf16.mxu0 0
  %6014 = vmatpush1.bf16.msra.mxu0 0
  %6015 = vmatprep.subr.bf16.mxu0 0
  %6016 = vmatpush1.bf16.msra.mxu0 0
  %6017 = vmatprep.subr.bf16.mxu0 0
  %6018 = vmatpush1.bf16.msra.mxu0 0
  %6019 = vmatprep.subr.bf16.mxu0 0
  %6020 = vmatpush1.bf16.msra.mxu0 0
  %6021 = vmatprep.subr.bf16.mxu0 0
  %6022 = vmatpush1.bf16.msra.mxu0 0
  %6023 = vmatprep.subr.bf16.mxu0 0
  %6024 = vmatpush1.bf16.msra.mxu0 0
  %6025 = vmatprep.subr.bf16.mxu0 %v5958
  %6026 = vmatpush1.bf16.msra.mxu0 %v5957
  %6027 = vmatprep.subr.bf16.mxu0 %v5954
  %6028 = vmatpush1.bf16.msra.mxu0 %v5953
  %6029 = vmatprep.subr.bf16.mxu0 0
  %6030 = vmatpush2.bf16.msra.mxu0 0
  %6031 = vmatprep.subr.bf16.mxu0 0
  %6032 = vmatpush2.bf16.msra.mxu0 0
  %6033 = vmatprep.subr.bf16.mxu0 0
  %6034 = vmatpush2.bf16.msra.mxu0 0
  %6035 = vmatprep.subr.bf16.mxu0 0
  %6036 = vmatpush2.bf16.msra.mxu0 0
  %6037 = vmatprep.subr.bf16.mxu0 0
  %6038 = vmatpush2.bf16.msra.mxu0 0
  %6039 = vmatprep.subr.bf16.mxu0 0
  %6040 = vmatpush2.bf16.msra.mxu0 0
  %6041 = vmatprep.subr.bf16.mxu0 0
  %6042 = vmatpush2.bf16.msra.mxu0 0
  %6043 = vmatprep.subr.bf16.mxu0 0
  %6044 = vmatpush2.bf16.msra.mxu0 0
  %6045 = vmatprep.mubr.bf16.mxu0 0
  %6046 = vmatmul.mubr.bf16.gmra.mxu0 %v5970
  %v6047 = vpop.f32.mrf.mxu0
  %v6048 = vadd.f32 0.0, %v6047
  %v6049 = vpop.f32.mrf.mxu0
  %v6050 = vadd.f32 0.0, %v6049
  %v6051 = vpop.f32.mrf.mxu0
  %v6052 = vpop.f32.mrf.mxu0
  %6053 = vdwg.mxu0
  %6054 = vmatprep.subr.bf16.mxu0 0
  %6055 = vmatpush1.bf16.msra.mxu0 0
  %6056 = vmatprep.subr.bf16.mxu0 0
  %6057 = vmatpush1.bf16.msra.mxu0 0
  %6058 = vmatprep.subr.bf16.mxu0 0
  %6059 = vmatpush1.bf16.msra.mxu0 0
  %6060 = vmatprep.subr.bf16.mxu0 0
  %6061 = vmatpush1.bf16.msra.mxu0 0
  %6062 = vmatprep.subr.bf16.mxu0 0
  %6063 = vmatpush1.bf16.msra.mxu0 0
  %6064 = vmatprep.subr.bf16.mxu0 0
  %6065 = vmatpush1.bf16.msra.mxu0 0
  %6066 = vmatprep.subr.bf16.mxu0 0
  %6067 = vmatpush1.bf16.msra.mxu0 %v5950
  %6068 = vmatprep.subr.bf16.mxu0 0
  %6069 = vmatpush1.bf16.msra.mxu0 %v5940
  %6070 = vmatprep.subr.bf16.mxu0 0
  %6071 = vmatpush2.bf16.msra.mxu0 0
  %6072 = vmatprep.subr.bf16.mxu0 0
  %6073 = vmatpush2.bf16.msra.mxu0 0
  %6074 = vmatprep.subr.bf16.mxu0 0
  %6075 = vmatpush2.bf16.msra.mxu0 0
  %6076 = vmatprep.subr.bf16.mxu0 0
  %6077 = vmatpush2.bf16.msra.mxu0 0
  %6078 = vmatprep.subr.bf16.mxu0 0
  %6079 = vmatpush2.bf16.msra.mxu0 0
  %6080 = vmatprep.subr.bf16.mxu0 0
  %6081 = vmatpush2.bf16.msra.mxu0 0
  %6082 = vmatprep.subr.bf16.mxu0 0
  %6083 = vmatpush2.bf16.msra.mxu0 0
  %6084 = vmatprep.subr.bf16.mxu0 0
  %6085 = vmatpush2.bf16.msra.mxu0 0
  %6086 = vmatprep.mubr.bf16.mxu0 0
  %6087 = vmatmul.mubr.bf16.gmra.mxu0 %v5970
  %v6088 = vpop.f32.mrf.mxu0
  %v6089 = vadd.f32 0.0, %v6088
  %v6090 = vpop.f32.mrf.mxu0
  %v6091 = vpop.f32.mrf.mxu0
  %v6092 = vpop.f32.mrf.mxu0
  %6093 = vdwg.mxu0
  %v6094 = vadd.f32 %v5924, %v6007
  %v6095 = vadd.f32 %v5925, %v6009
  %v6096 = vadd.f32 %v5926, %v6048
  %v6097 = vadd.f32 %v5927, %v6050
  %v6098 = vadd.f32 %v5928, %v6089
  %s6099 = scalar_lea.vmem %s6, 16
  %v6100 = vld [vmem:[%s6099] sm:$0x3]
  %6101 = vrot.lane.b32.xlu0 %v5439, 109
  %v6102 = vpop.permute.xlu0 %6101
  %6103 = vrot.lane.b32.xlu0 %v5440, 109
  %v6104 = vpop.permute.xlu0 %6103
  %6105 = vrot.lane.b32.xlu0 %v5441, 109
  %v6106 = vpop.permute.xlu0 %6105
  %6107 = vrot.lane.b32.xlu0 %v5442, 109
  %v6108 = vpop.permute.xlu0 %6107
  %6109 = vrot.lane.b32.xlu0 %v5443, 109
  %v6110 = vpop.permute.xlu0 %6109
  %6111 = vrot.lane.b32.xlu0 %v5444, 109
  %v6112 = vpop.permute.xlu0 %6111
  %6113 = vrot.lane.b32.xlu0 %v5445, 109
  %v6114 = vpop.permute.xlu0 %6113
  %6115 = vrot.lane.b32.xlu0 %v5446, 109
  %v6116 = vpop.permute.xlu0 %6115
  %6117 = vrot.lane.b32.xlu0 %v5447, 109
  %v6118 = vpop.permute.xlu0 %6117
  %6119 = vrot.lane.b32.xlu0 %v5448, 109
  %v6120 = vpop.permute.xlu0 %6119
  %v6121 = vsel %vm1917, %v6102, %v6104
  %v6122 = vsel %vm1917, %v6104, %v6106
  %v6123 = vsel %vm1917, %v6106, %v6108
  %v6124 = vsel %vm1917, %v6108, %v6110
  %v6125 = vsel %vm1917, %v6112, %v6114
  %v6126 = vsel %vm1917, %v6114, %v6116
  %v6127 = vsel %vm1917, %v6116, %v6118
  %v6128 = vsel %vm1917, %v6118, %v6120
  %v6140 = vsel %vm2427, %v6100, 0
  %6142 = vmatprep.subr.bf16.mxu0 0
  %6143 = vmatpush1.bf16.msra.mxu0 0
  %6144 = vmatprep.subr.bf16.mxu0 0
  %6145 = vmatpush1.bf16.msra.mxu0 0
  %6146 = vmatprep.subr.bf16.mxu0 0
  %6147 = vmatpush1.bf16.msra.mxu0 0
  %6148 = vmatprep.subr.bf16.mxu0 0
  %6149 = vmatpush1.bf16.msra.mxu0 0
  %6150 = vmatprep.subr.bf16.mxu0 0
  %6151 = vmatpush1.bf16.msra.mxu0 0
  %6152 = vmatprep.subr.bf16.mxu0 0
  %6153 = vmatpush1.bf16.msra.mxu0 0
  %6154 = vmatprep.subr.bf16.mxu0 %v6126
  %6155 = vmatpush1.bf16.msra.mxu0 %v6125
  %6156 = vmatprep.subr.bf16.mxu0 %v6122
  %6157 = vmatpush1.bf16.msra.mxu0 %v6121
  %6158 = vmatprep.subr.bf16.mxu0 0
  %6159 = vmatpush2.bf16.msra.mxu0 0
  %6160 = vmatprep.subr.bf16.mxu0 0
  %6161 = vmatpush2.bf16.msra.mxu0 0
  %6162 = vmatprep.subr.bf16.mxu0 0
  %6163 = vmatpush2.bf16.msra.mxu0 0
  %6164 = vmatprep.subr.bf16.mxu0 0
  %6165 = vmatpush2.bf16.msra.mxu0 0
  %6166 = vmatprep.subr.bf16.mxu0 0
  %6167 = vmatpush2.bf16.msra.mxu0 0
  %6168 = vmatprep.subr.bf16.mxu0 0
  %6169 = vmatpush2.bf16.msra.mxu0 0
  %6170 = vmatprep.subr.bf16.mxu0 0
  %6171 = vmatpush2.bf16.msra.mxu0 0
  %6172 = vmatprep.subr.bf16.mxu0 0
  %6173 = vmatpush2.bf16.msra.mxu0 0
  %6174 = vmatprep.mubr.bf16.mxu0 0
  %6175 = vmatmul.mubr.bf16.gmra.mxu0 %v6140
  %v6176 = vpop.f32.mrf.mxu0
  %v6177 = vadd.f32 0.0, %v6176
  %v6178 = vpop.f32.mrf.mxu0
  %v6179 = vadd.f32 0.0, %v6178
  %v6180 = vpop.f32.mrf.mxu0
  %v6181 = vpop.f32.mrf.mxu0
  %6182 = vdwg.mxu0
  %6183 = vmatprep.subr.bf16.mxu0 0
  %6184 = vmatpush1.bf16.msra.mxu0 0
  %6185 = vmatprep.subr.bf16.mxu0 0
  %6186 = vmatpush1.bf16.msra.mxu0 0
  %6187 = vmatprep.subr.bf16.mxu0 0
  %6188 = vmatpush1.bf16.msra.mxu0 0
  %6189 = vmatprep.subr.bf16.mxu0 0
  %6190 = vmatpush1.bf16.msra.mxu0 0
  %6191 = vmatprep.subr.bf16.mxu0 0
  %6192 = vmatpush1.bf16.msra.mxu0 0
  %6193 = vmatprep.subr.bf16.mxu0 0
  %6194 = vmatpush1.bf16.msra.mxu0 0
  %6195 = vmatprep.subr.bf16.mxu0 %v6128
  %6196 = vmatpush1.bf16.msra.mxu0 %v6127
  %6197 = vmatprep.subr.bf16.mxu0 %v6124
  %6198 = vmatpush1.bf16.msra.mxu0 %v6123
  %6199 = vmatprep.subr.bf16.mxu0 0
  %6200 = vmatpush2.bf16.msra.mxu0 0
  %6201 = vmatprep.subr.bf16.mxu0 0
  %6202 = vmatpush2.bf16.msra.mxu0 0
  %6203 = vmatprep.subr.bf16.mxu0 0
  %6204 = vmatpush2.bf16.msra.mxu0 0
  %6205 = vmatprep.subr.bf16.mxu0 0
  %6206 = vmatpush2.bf16.msra.mxu0 0
  %6207 = vmatprep.subr.bf16.mxu0 0
  %6208 = vmatpush2.bf16.msra.mxu0 0
  %6209 = vmatprep.subr.bf16.mxu0 0
  %6210 = vmatpush2.bf16.msra.mxu0 0
  %6211 = vmatprep.subr.bf16.mxu0 0
  %6212 = vmatpush2.bf16.msra.mxu0 0
  %6213 = vmatprep.subr.bf16.mxu0 0
  %6214 = vmatpush2.bf16.msra.mxu0 0
  %6215 = vmatprep.mubr.bf16.mxu0 0
  %6216 = vmatmul.mubr.bf16.gmra.mxu0 %v6140
  %v6217 = vpop.f32.mrf.mxu0
  %v6218 = vadd.f32 0.0, %v6217
  %v6219 = vpop.f32.mrf.mxu0
  %v6220 = vadd.f32 0.0, %v6219
  %v6221 = vpop.f32.mrf.mxu0
  %v6222 = vpop.f32.mrf.mxu0
  %6223 = vdwg.mxu0
  %6224 = vmatprep.subr.bf16.mxu0 0
  %6225 = vmatpush1.bf16.msra.mxu0 0
  %6226 = vmatprep.subr.bf16.mxu0 0
  %6227 = vmatpush1.bf16.msra.mxu0 0
  %6228 = vmatprep.subr.bf16.mxu0 0
  %6229 = vmatpush1.bf16.msra.mxu0 0
  %6230 = vmatprep.subr.bf16.mxu0 0
  %6231 = vmatpush1.bf16.msra.mxu0 0
  %6232 = vmatprep.subr.bf16.mxu0 0
  %6233 = vmatpush1.bf16.msra.mxu0 0
  %6234 = vmatprep.subr.bf16.mxu0 0
  %6235 = vmatpush1.bf16.msra.mxu0 0
  %6236 = vmatprep.subr.bf16.mxu0 0
  %6237 = vmatpush1.bf16.msra.mxu0 %v6120
  %6238 = vmatprep.subr.bf16.mxu0 0
  %6239 = vmatpush1.bf16.msra.mxu0 %v6110
  %6240 = vmatprep.subr.bf16.mxu0 0
  %6241 = vmatpush2.bf16.msra.mxu0 0
  %6242 = vmatprep.subr.bf16.mxu0 0
  %6243 = vmatpush2.bf16.msra.mxu0 0
  %6244 = vmatprep.subr.bf16.mxu0 0
  %6245 = vmatpush2.bf16.msra.mxu0 0
  %6246 = vmatprep.subr.bf16.mxu0 0
  %6247 = vmatpush2.bf16.msra.mxu0 0
  %6248 = vmatprep.subr.bf16.mxu0 0
  %6249 = vmatpush2.bf16.msra.mxu0 0
  %6250 = vmatprep.subr.bf16.mxu0 0
  %6251 = vmatpush2.bf16.msra.mxu0 0
  %6252 = vmatprep.subr.bf16.mxu0 0
  %6253 = vmatpush2.bf16.msra.mxu0 0
  %6254 = vmatprep.subr.bf16.mxu0 0
  %6255 = vmatpush2.bf16.msra.mxu0 0
  %6256 = vmatprep.mubr.bf16.mxu0 0
  %6257 = vmatmul.mubr.bf16.gmra.mxu0 %v6140
  %v6258 = vpop.f32.mrf.mxu0
  %v6259 = vadd.f32 0.0, %v6258
  %v6260 = vpop.f32.mrf.mxu0
  %v6261 = vpop.f32.mrf.mxu0
  %v6262 = vpop.f32.mrf.mxu0
  %6263 = vdwg.mxu0
  %v6264 = vadd.f32 %v6094, %v6177
  %v6265 = vadd.f32 %v6095, %v6179
  %v6266 = vadd.f32 %v6096, %v6218
  %v6267 = vadd.f32 %v6097, %v6220
  %v6268 = vadd.f32 %v6098, %v6259
  %v6269 = vld [vmem:[%s7] sm:$0x7]
  %6271 = vset.pattern.permute.xlu0 0
  %6272 = vperm.xlu0 %6271, %v6269
  %v6273 = vpop.permute.xlu0 %6272
  %v6275 = vadd.f32 %v6264, %v6273
  %v6276 = vadd.f32 %v6265, %v6273
  %v6277 = vadd.f32 %v6266, %v6273
  %v6278 = vadd.f32 %v6267, %v6273
  %v6279 = vadd.f32 %v6268, %v6273
  %v6280 = vld [vmem:[%s0] sm:$0x77]
  %v6281 = vld [vmem:[%s0 + $0x8] sm:$0x77]
  %v6282 = vld [vmem:[%s0 + $0x10] sm:$0x7]
  %v6285 = vcombine.high %v6280, %v6280
  %v6286 = vcombine.high %v6281, %v6281
  %v6289 = vadd.f32 %v6275, %v6280
  %v6290 = vadd.f32 %v6276, %v6285
  %v6291 = vadd.f32 %v6277, %v6281
  %v6292 = vadd.f32 %v6278, %v6286
  %v6293 = vadd.f32 %v6279, %v6282
  %v6298 = vcombine.low %v6289, %v6290
  %v6299 = vcombine.low %v6291, %v6292
  %6302 = vst [vmem:[%s8] sm:$0x77] %v6298
  %6303 = vst [vmem:[%s8 + $0x8] sm:$0x77] %v6299
  %vm6304 = vcmask 813056
  %6305 = vst.msk [vmem:[%s8 + $0x10] sm:$0x7] %vm6304, %v6293
  // Predicated region
  $region34: #{adfnet_forward.1} parent=0 // pred_check
    _
  $region35: #{adfnet_forward.1} parent=0 // pred_check_branch
    %6307 = sbr.rel (0) target = $region37
  $region36: #{adfnet_forward.1} parent=0 // pred_region
    _
  $region37: #{adfnet_forward.1} parent=0 // pred_fallthru
    _
  // Predicated region
  $region38: #{adfnet_forward.1} parent=0 // pred_check
    _
  $region39: #{adfnet_forward.1} parent=0 // pred_check_branch
    %6309 = sbr.rel (0) target = $region41
  $region40: #{adfnet_forward.1} parent=0 // pred_region
    _
  $region41: #{adfnet_forward.1} parent=0 // pred_fallthru
    _

</llo_original>
